<compile_context>
chip_gen: v6e
topology: v6e:2x2x1
jax: 0.10.0
libtpu: 0.0.40
codegen_flags: <defaults>
</compile_context>

<pallas_src>
import functools
import math

import jax
import jax.numpy as jnp
from jax.experimental import pallas as pl
from jax.experimental.pallas import tpu as pltpu

# Set to jnp.bfloat16 on v6e/v7x for ~2x MXU throughput (f32 accumulation is kept);
# keep f32 on v5e and whenever exact parity with the f32 reference matters.
MXU_DTYPE = jnp.float32
VMEM_LIMIT = 32 * 1024 * 1024   # safe scoped-VMEM cap on v5e/v6e/v7x


def _round_up(x, m):
    return (x + m - 1) // m * m


def _chunk_size(t, cap=32):
    """Largest divisor of t that is <= cap (timestep chunk for the GRU)."""
    for c in range(min(t, cap), 0, -1):
        if t % c == 0:
            return c
    return 1


def _gelu(x):
    c = math.sqrt(2.0 / math.pi)
    return 0.5 * x * (1.0 + jnp.tanh(c * (x + 0.044715 * x * x * x)))


# ----------------------------- Pallas kernels ------------------------------

def _matmul_kernel(*refs, apply_gelu, has_residual):
    if has_residual:
        x_ref, w_ref, b_ref, r_ref, o_ref, acc_ref = refs
    else:
        x_ref, w_ref, b_ref, o_ref, acc_ref = refs
        r_ref = None

    k = pl.program_id(2)
    nk = pl.num_programs(2)

    @pl.when(k == 0)
    def _():
        acc_ref[...] = jnp.zeros_like(acc_ref)

    acc_ref[...] += jnp.dot(x_ref[...].astype(MXU_DTYPE),
                            w_ref[...].astype(MXU_DTYPE),
                            preferred_element_type=jnp.float32)

    @pl.when(k == nk - 1)
    def _():
        acc = acc_ref[...] + b_ref[...].astype(jnp.float32)
        if apply_gelu:
            acc = _gelu(acc)
        if has_residual:
            acc = acc + r_ref[...].astype(jnp.float32)
        o_ref[...] = acc.astype(o_ref.dtype)


def matmul_bias(x, w, b, apply_gelu=False, residual=None):
    """x: (M, K), w: (K, N), b: (N,) -> (M, N) [+ residual].
    Tiled / pipelined / padded-to-128 output lanes."""
    M, K = x.shape
    _, N = w.shape

    tm = min(256, _round_up(M, 8))
    Mp = _round_up(M, tm)
    Np = _round_up(N, 128)
    tn = min(256, Np)
    Np = _round_up(Np, tn)
    if K <= 1024:
        kt, Kp = K, K
    else:
        kt = 512
        Kp = _round_up(K, kt)

    xp = x if (Mp == M and Kp == K) else jnp.pad(x, ((0, Mp - M), (0, Kp - K)))
    wp = w if (Kp == K and Np == N) else jnp.pad(w, ((0, Kp - K), (0, Np - N)))
    bp = b if Np == N else jnp.pad(b, (0, Np - N))

    has_residual = residual is not None
    in_specs = [pl.BlockSpec((tm, kt), lambda i, j, k: (i, k)),
                pl.BlockSpec((kt, tn), lambda i, j, k: (k, j)),
                pl.BlockSpec((1, tn), lambda i, j, k: (0, j))]
    operands = [xp, wp, bp.reshape(1, Np)]
    if has_residual:
        rp = residual
        if Mp != M or Np != N:
            rp = jnp.pad(residual, ((0, Mp - M), (0, Np - N)))
        in_specs.append(pl.BlockSpec((tm, tn), lambda i, j, k: (i, j)))
        operands.append(rp)

    grid = (Mp // tm, Np // tn, Kp // kt)
    kernel = functools.partial(_matmul_kernel, apply_gelu=apply_gelu,
                               has_residual=has_residual)
    out = pl.pallas_call(
        kernel,
        out_shape=jax.ShapeDtypeStruct((Mp, Np), x.dtype),
        grid=grid,
        in_specs=in_specs,
        out_specs=pl.BlockSpec((tm, tn), lambda i, j, k: (i, j)),
        scratch_shapes=[pltpu.VMEM((tm, tn), jnp.float32)],
        compiler_params=pltpu.CompilerParams(
            dimension_semantics=("parallel", "parallel", "arbitrary"),
            vmem_limit_bytes=VMEM_LIMIT),
    )(*operands)
    return out[:M, :N]


def _ln_gelu_kernel(x_ref, g_ref, b_ref, o_ref):
    x = x_ref[...].astype(jnp.float32)
    mean = jnp.mean(x, axis=-1, keepdims=True)
    var = jnp.mean(jnp.square(x - mean), axis=-1, keepdims=True)
    xhat = (x - mean) * jax.lax.rsqrt(var + 1e-5)
    y = xhat * g_ref[...].astype(jnp.float32) + b_ref[...].astype(jnp.float32)
    o_ref[...] = _gelu(y).astype(o_ref.dtype)


def layernorm_gelu(x2d, gamma, beta):
    """x2d: (M, F); LayerNorm over last dim followed by GELU.  Tiled over M."""
    M, F = x2d.shape
    tm = min(512, _round_up(M, 8))
    Mp = _round_up(M, tm)
    xp = x2d if Mp == M else jnp.pad(x2d, ((0, Mp - M), (0, 0)))
    out = pl.pallas_call(
        _ln_gelu_kernel,
        out_shape=jax.ShapeDtypeStruct((Mp, F), x2d.dtype),
        grid=(Mp // tm,),
        in_specs=[pl.BlockSpec((tm, F), lambda i: (i, 0)),
                  pl.BlockSpec((1, F), lambda i: (0, 0)),
                  pl.BlockSpec((1, F), lambda i: (0, 0))],
        out_specs=pl.BlockSpec((tm, F), lambda i: (i, 0)),
        compiler_params=pltpu.CompilerParams(
            dimension_semantics=("parallel",),
            vmem_limit_bytes=VMEM_LIMIT),
    )(xp, gamma.reshape(1, F), beta.reshape(1, F))
    return out[:M]


def _ln_gelu_matmul_kernel(x_ref, g_ref, be_ref, w_ref, b_ref, o_ref):
    x = x_ref[...].astype(jnp.float32)
    mean = jnp.mean(x, axis=-1, keepdims=True)
    var = jnp.mean(jnp.square(x - mean), axis=-1, keepdims=True)
    xhat = (x - mean) * jax.lax.rsqrt(var + 1e-5)
    y = _gelu(xhat * g_ref[...].astype(jnp.float32) + be_ref[...].astype(jnp.float32))
    acc = jnp.dot(y.astype(MXU_DTYPE), w_ref[...].astype(MXU_DTYPE),
                  preferred_element_type=jnp.float32)
    o_ref[...] = (acc + b_ref[...].astype(jnp.float32)).astype(o_ref.dtype)


def ln_gelu_matmul(x2d, gamma, beta, w, b):
    """gelu(LayerNorm(x)) @ w + b, fused.  x2d: (M, D), w: (D, N)."""
    M, D = x2d.shape
    _, N = w.shape
    Np = _round_up(N, 128)
    tn = min(256, Np)
    Np = _round_up(Np, tn)
    tm = min(256, _round_up(M, 8))
    Mp = _round_up(M, tm)

    xp = x2d if Mp == M else jnp.pad(x2d, ((0, Mp - M), (0, 0)))
    wp = w if Np == N else jnp.pad(w, ((0, 0), (0, Np - N)))
    bp = b if Np == N else jnp.pad(b, (0, Np - N))

    out = pl.pallas_call(
        _ln_gelu_matmul_kernel,
        out_shape=jax.ShapeDtypeStruct((Mp, Np), x2d.dtype),
        grid=(Mp // tm, Np // tn),
        in_specs=[pl.BlockSpec((tm, D), lambda i, j: (i, 0)),
                  pl.BlockSpec((1, D), lambda i, j: (0, 0)),
                  pl.BlockSpec((1, D), lambda i, j: (0, 0)),
                  pl.BlockSpec((D, tn), lambda i, j: (0, j)),
                  pl.BlockSpec((1, tn), lambda i, j: (0, j))],
        out_specs=pl.BlockSpec((tm, tn), lambda i, j: (i, j)),
        compiler_params=pltpu.CompilerParams(
            dimension_semantics=("parallel", "parallel"),
            vmem_limit_bytes=VMEM_LIMIT),
    )(xp, gamma.reshape(1, D), beta.reshape(1, D), wp, bp.reshape(1, Np))
    return out[:M, :N]


def _mlp_head_kernel(x_ref, w1_ref, b1_ref, w2_ref, b2_ref, o_ref):
    """Fused classifier head: gelu(x @ w1 + b1) @ w2 + b2 (weights fully in VMEM)."""
    x = x_ref[...].astype(MXU_DTYPE)
    h = jnp.dot(x, w1_ref[...].astype(MXU_DTYPE),
                preferred_element_type=jnp.float32) + b1_ref[...].astype(jnp.float32)
    h = _gelu(h)
    out = jnp.dot(h.astype(MXU_DTYPE), w2_ref[...].astype(MXU_DTYPE),
                  preferred_element_type=jnp.float32) + b2_ref[...].astype(jnp.float32)
    o_ref[...] = out.astype(o_ref.dtype)


def mlp_head(x2d, w1, b1, w2, b2):
    """x2d: (M, D), w1: (D, Hd), w2: (Hd, Nc) -> (M, Nc).  Single fused kernel."""
    M, D = x2d.shape
    Hd = w1.shape[1]
    Nc = w2.shape[1]
    Hp = _round_up(Hd, 128)
    Np = _round_up(Nc, 128)
    tm = min(512, _round_up(M, 8))
    Mp = _round_up(M, tm)

    xp = x2d if Mp == M else jnp.pad(x2d, ((0, Mp - M), (0, 0)))
    w1p = w1 if Hp == Hd else jnp.pad(w1, ((0, 0), (0, Hp - Hd)))
    b1p = b1 if Hp == Hd else jnp.pad(b1, (0, Hp - Hd))
    w2p = w2 if (Hp == Hd and Np == Nc) else jnp.pad(w2, ((0, Hp - Hd), (0, Np - Nc)))
    b2p = b2 if Np == Nc else jnp.pad(b2, (0, Np - Nc))

    out = pl.pallas_call(
        _mlp_head_kernel,
        out_shape=jax.ShapeDtypeStruct((Mp, Np), x2d.dtype),
        grid=(Mp // tm,),
        in_specs=[pl.BlockSpec((tm, D), lambda i: (i, 0)),
                  pl.BlockSpec((D, Hp), lambda i: (0, 0)),
                  pl.BlockSpec((1, Hp), lambda i: (0, 0)),
                  pl.BlockSpec((Hp, Np), lambda i: (0, 0)),
                  pl.BlockSpec((1, Np), lambda i: (0, 0))],
        out_specs=pl.BlockSpec((tm, Np), lambda i: (i, 0)),
        compiler_params=pltpu.CompilerParams(
            dimension_semantics=("parallel",),
            vmem_limit_bytes=VMEM_LIMIT),
    )(xp, w1p, b1p.reshape(1, Hp), w2p, b2p.reshape(1, Np))
    return out[:M, :Nc]


def _bigru_kernel(gx_ref, whh_ref, bhh_ref, out_ref, h_ref, *, tc):
    """grid = (direction, time-chunk).  One grid step processes tc timesteps."""
    d = pl.program_id(0)
    c = pl.program_id(1)

    @pl.when(c == 0)
    def _():
        h_ref[...] = jnp.zeros_like(h_ref)

    whh = whh_ref[...]                                   # (Hp, 3Hp)
    bhh = bhh_ref[...].astype(jnp.float32)               # (1, 3Hp)
    Hp = h_ref.shape[-1]
    rev = d == 1                                         # backward direction

    def step(i, carry):
        t = jnp.where(rev, tc - 1 - i, i)
        h = h_ref[...]
        gh = jnp.dot(h.astype(MXU_DTYPE), whh.astype(MXU_DTYPE),
                     preferred_element_type=jnp.float32) + bhh
        gx = gx_ref[t].astype(jnp.float32)               # (B, 3Hp), gate slices 128-aligned
        r = jax.nn.sigmoid(gx[:, :Hp] + gh[:, :Hp])
        z = jax.nn.sigmoid(gx[:, Hp:2 * Hp] + gh[:, Hp:2 * Hp])
        n = jnp.tanh(gx[:, 2 * Hp:] + r * gh[:, 2 * Hp:])
        h_new = (1.0 - z) * n + z * h
        h_ref[...] = h_new
        out_ref[t] = h_new.astype(out_ref.dtype)
        return carry

    jax.lax.fori_loop(0, tc, step, 0, unroll=True)


def bigru_scan(gx, whh, bhh):
    """gx: (2, T, B, 3Hp) input gates (fwd, bwd), whh: (2, Hp, 3Hp), bhh: (2, 1, 3Hp)
    -> (2, T, B, Hp) hidden states (backward direction already in natural time order)."""
    _, T, B, H3p = gx.shape
    Hp = H3p // 3
    tc = _chunk_size(T, 32)
    nc = T // tc

    def io_map(d, c):
        # forward: chunk c; backward: chunk nc-1-c (no HBM reverse copies needed)
        return (d, c + d * (nc - 1 - 2 * c), 0, 0)

    kernel = functools.partial(_bigru_kernel, tc=tc)
    return pl.pallas_call(
        kernel,
        out_shape=jax.ShapeDtypeStruct((2, T, B, Hp), gx.dtype),
        grid=(2, nc),
        in_specs=[pl.BlockSpec((None, tc, B, H3p), io_map),
                  pl.BlockSpec((None, Hp, H3p), lambda d, c: (d, 0, 0)),
                  pl.BlockSpec((None, 1, H3p), lambda d, c: (d, 0, 0))],
        out_specs=pl.BlockSpec((None, tc, B, Hp), io_map),
        scratch_shapes=[pltpu.VMEM((B, Hp), jnp.float32)],
        compiler_params=pltpu.CompilerParams(
            dimension_semantics=("parallel", "arbitrary"),
            vmem_limit_bytes=VMEM_LIMIT),
    )(gx, whh, bhh)


# ------------------------------- JAX glue ----------------------------------

def conv2d(x, w, b, stride, padding, residual=None):
    """NCHW conv as im2col (glue) + tiled Pallas matmul (OC padded to 128 lanes).
    If `residual` (NCHW, same shape as the output) is given, it is fused into the
    matmul epilogue."""
    N, C, Hh, W = x.shape
    OC, IC, K, _ = w.shape
    xp = jnp.pad(x, ((0, 0), (0, 0), (padding, padding), (padding, padding)))
    OH = (Hh + 2 * padding - K) // stride + 1
    OW = (W + 2 * padding - K) // stride + 1
    cols = []
    for kh in range(K):
        for kw in range(K):
            cols.append(xp[:, :, kh:kh + stride * OH:stride, kw:kw + stride * OW:stride])
    patches = jnp.stack(cols, axis=2)                       # (N, C, K*K, OH, OW)
    patches = patches.transpose(0, 3, 4, 1, 2).reshape(N * OH * OW, C * K * K)
    w_mat = w.reshape(OC, IC * K * K).T                     # (C*K*K, OC)
    add = None
    if residual is not None:
        add = residual.transpose(0, 2, 3, 1).reshape(N * OH * OW, OC)
    out = matmul_bias(patches, w_mat, b, residual=add)      # Pallas matmul (+res)
    return out.reshape(N, OH, OW, OC).transpose(0, 3, 1, 2)


def cnn_layernorm_gelu(x, gamma, beta):
    """CNNLayerNorm (LN over n_feats after transpose(2,3)) fused with the following GELU."""
    N, C, F, T = x.shape
    xt = x.transpose(0, 1, 3, 2).reshape(N * C * T, F)
    y = layernorm_gelu(xt, gamma, beta)
    return y.reshape(N, C, T, F).transpose(0, 1, 3, 2)


def rescnn_forward(x, p):
    residual = x
    x = cnn_layernorm_gelu(x, p['ln1_g'], p['ln1_b'])       # layer_norm1 + gelu (+dropout=id)
    x = conv2d(x, p['w1'], p['b1'], stride=1, padding=1)
    x = cnn_layernorm_gelu(x, p['ln2_g'], p['ln2_b'])       # layer_norm2 + gelu (+dropout=id)
    # second conv with the residual add fused into the matmul epilogue
    x = conv2d(x, p['w2'], p['b2'], stride=1, padding=1, residual=residual)
    return x


def bigru_forward(x, p, batch_first, H, Hp):
    """LayerNorm + GELU + BiGRU (both directions), matching nn.GRU semantics."""
    d0, d1, D = x.shape
    # fused LN + GELU + input-gate projection for BOTH directions: (d0*d1, 6*Hp)
    gx = ln_gelu_matmul(x.reshape(d0 * d1, D), p['ln_g'], p['ln_b'],
                        p['w_gate'], p['b_gate'])
    gx = gx.reshape(d0, d1, 2, 3 * Hp)
    if batch_first:
        gx = gx.transpose(2, 1, 0, 3)                       # (2, T, B, 3Hp)
    else:
        gx = gx.transpose(2, 0, 1, 3)                       # (2, T, B, 3Hp)
    out = bigru_scan(gx, p['whh'], p['bhh'])                # (2, T, B, Hp)
    h = jnp.concatenate([out[0, :, :, :H], out[1, :, :, :H]], axis=-1)   # (T, B, 2H)
    if batch_first:
        h = h.transpose(1, 0, 2)
    return h


def speech_model_forward(params, x, *, rnn_dim):
    H = rnn_dim
    Hp = _round_up(H, 128)
    # x: (N, 1, n_feats, time), NCHW like PyTorch.
    x = conv2d(x, params['cnn_w'], params['cnn_b'], stride=2, padding=1)
    for p in params['rescnn']:
        x = rescnn_forward(x, p)
    N, C, F, T = x.shape
    x = x.reshape(N, C * F, T).transpose(0, 2, 1)                       # (N, T, C*F)
    x = matmul_bias(x.reshape(N * T, C * F), params['fc_w'].T,
                    params['fc_b']).reshape(N, T, -1)
    for i, p in enumerate(params['birnn']):
        x = bigru_forward(x, p, batch_first=(i == 0), H=H, Hp=Hp)
    d0, d1, D = x.shape
    # fused classifier: Linear + GELU (+dropout=id) + Linear in one kernel
    out = mlp_head(x.reshape(d0 * d1, D), params['cls_w1'].T, params['cls_b1'],
                   params['cls_w2'].T, params['cls_b2'])
    return out.reshape(d0, d1, -1)


# ------------------------------ parameters ---------------------------------

def init_params(key, n_cnn_layers, n_rnn_layers, rnn_dim, n_class, n_feats):
    F = n_feats // 2
    keys = iter(jax.random.split(key, 128))

    def nrm(shape, scale=0.1):
        return (scale * jax.random.normal(next(keys), shape)).astype(jnp.float32)

    params = {
        'cnn_w': nrm((32, 1, 3, 3)), 'cnn_b': nrm((32,)),
        'fc_w': nrm((rnn_dim, F * 32)), 'fc_b': nrm((rnn_dim,)),
        'cls_w1': nrm((rnn_dim, rnn_dim * 2)), 'cls_b1': nrm((rnn_dim,)),
        'cls_w2': nrm((n_class, rnn_dim)), 'cls_b2': nrm((n_class,)),
        'rescnn': [], 'birnn': [],
    }
    for _ in range(n_cnn_layers):
        params['rescnn'].append({
            'ln1_g': jnp.ones((F,), jnp.float32), 'ln1_b': jnp.zeros((F,), jnp.float32),
            'w1': nrm((32, 32, 3, 3)), 'b1': nrm((32,)),
            'ln2_g': jnp.ones((F,), jnp.float32), 'ln2_b': jnp.zeros((F,), jnp.float32),
            'w2': nrm((32, 32, 3, 3)), 'b2': nrm((32,)),
        })
    for i in range(n_rnn_layers):
        in_dim = rnn_dim if i == 0 else rnn_dim * 2
        H = rnn_dim
        params['birnn'].append({
            'ln_g': jnp.ones((in_dim,), jnp.float32), 'ln_b': jnp.zeros((in_dim,), jnp.float32),
            'w_ih_f': nrm((3 * H, in_dim)), 'w_hh_f': nrm((3 * H, H)),
            'b_ih_f': nrm((3 * H,)), 'b_hh_f': nrm((3 * H,)),
            'w_ih_b': nrm((3 * H, in_dim)), 'w_hh_b': nrm((3 * H, H)),
            'b_ih_b': nrm((3 * H,)), 'b_hh_b': nrm((3 * H,)),
        })
    return params


def _pack_gate_cols(w_t, H, Hp):
    """w_t: (rows, 3H), gate columns [r|z|n] -> (rows, 3Hp), each gate at an Hp boundary."""
    rows = w_t.shape[0]
    out = jnp.zeros((rows, 3 * Hp), w_t.dtype)
    for g in range(3):
        out = out.at[:, g * Hp:g * Hp + H].set(w_t[:, g * H:(g + 1) * H])
    return out


def _pack_gate_vec(b, H, Hp):
    out = jnp.zeros((3 * Hp,), b.dtype)
    for g in range(3):
        out = out.at[g * Hp:g * Hp + H].set(b[g * H:(g + 1) * H])
    return out


def _pack_hh(w_hh, H, Hp):
    wt = _pack_gate_cols(w_hh.T, H, Hp)                    # (H, 3Hp)
    return jnp.pad(wt, ((0, Hp - H), (0, 0)))              # (Hp, 3Hp), zero rows keep h_pad = 0


def pack_params(raw, rnn_dim):
    """Repack raw (PyTorch-shaped) params into kernel-friendly padded/stacked layout."""
    H = rnn_dim
    Hp = _round_up(H, 128)
    packed = {k: raw[k] for k in ('cnn_w', 'cnn_b', 'fc_w', 'fc_b',
                                  'cls_w1', 'cls_b1', 'cls_w2', 'cls_b2')}
    packed['rescnn'] = raw['rescnn']
    packed['birnn'] = []
    for p in raw['birnn']:
        packed['birnn'].append({
            'ln_g': p['ln_g'], 'ln_b': p['ln_b'],
            # both directions' input-gate projections fused into one (D, 6Hp) matmul
            'w_gate': jnp.concatenate([_pack_gate_cols(p['w_ih_f'].T, H, Hp),
                                       _pack_gate_cols(p['w_ih_b'].T, H, Hp)], axis=1),
            'b_gate': jnp.concatenate([_pack_gate_vec(p['b_ih_f'], H, Hp),
                                       _pack_gate_vec(p['b_ih_b'], H, Hp)]),
            'whh': jnp.stack([_pack_hh(p['w_hh_f'], H, Hp),
                              _pack_hh(p['w_hh_b'], H, Hp)]),
            'bhh': jnp.stack([_pack_gate_vec(p['b_hh_f'], H, Hp),
                              _pack_gate_vec(p['b_hh_b'], H, Hp)]).reshape(2, 1, 3 * Hp),
        })
    return packed


# --------------------------------- main -------------------------------------

if __name__ == "__main__":
    key = jax.random.PRNGKey(0)
    k_x, k_p = jax.random.split(key)

    n_feats = 16          # spectrogram feature bins (halved to 8 by the first conv)
    time = 16             # input time steps (halved to 8 by the first conv)
    batch = 2
    rnn_dim = 32
    n_class = 10

    x = jax.random.normal(k_x, (batch, 1, n_feats, time), dtype=jnp.float32)
    raw_params = init_params(k_p, n_cnn_layers=2, n_rnn_layers=2,
                             rnn_dim=rnn_dim, n_class=n_class, n_feats=n_feats)
    params = pack_params(raw_params, rnn_dim)

    fwd = jax.jit(functools.partial(speech_model_forward, rnn_dim=rnn_dim))
    out = fwd(params, x)
    jax.block_until_ready(out)

    assert out.shape == (batch, time // 2, n_class), out.shape
    assert jnp.all(jnp.isfinite(out))
    print("KERNEL_OK")
</pallas_src>

<mosaic_0001>
module attributes {stable_mosaic.version = 11 : i64} {
  func.func @_matmul_kernel(%arg0: i32, %arg1: i32, %arg2: i32, %arg3: memref<128x9xf32, #tpu.memory_space<vmem>>, %arg4: memref<9x128xf32, #tpu.memory_space<vmem>>, %arg5: memref<1x128xf32, #tpu.memory_space<vmem>>, %arg6: memref<128x128xf32, #tpu.memory_space<vmem>>, %arg7: memref<128x128xf32, #tpu.memory_space<vmem>>) attributes {dimension_semantics = [#tpu.dimension_semantics<parallel>, #tpu.dimension_semantics<parallel>, #tpu.dimension_semantics<arbitrary>], iteration_bounds = array<i64: 1, 1, 1>, scalar_prefetch = 0 : i64, scratch_operands = 1 : i64, tpu.core_type = #tpu.core_type<tc>, window_params = [{transform_indices = @transform_0, window_bounds = array<i64: 128, 9>}, {transform_indices = @transform_1, window_bounds = array<i64: 9, 128>}, {transform_indices = @transform_2, window_bounds = array<i64: 1, 128>}, {transform_indices = @transform_3, window_bounds = array<i64: 128, 128>}]} {
    %c0_i32 = arith.constant 0 : i32
    %0 = arith.cmpi eq, %arg2, %c0_i32 : i32
    %1 = arith.extui %0 : i1 to i32
    %c0_i32_0 = arith.constant 0 : i32
    %2 = arith.cmpi ne, %1, %c0_i32_0 : i32
    scf.if %2 {
      %cst_10 = arith.constant 0.000000e+00 : f32
      %12 = vector.broadcast %cst_10 : f32 to vector<128x128xf32>
      %c0_11 = arith.constant 0 : index
      %c0_12 = arith.constant 0 : index
      %13 = vector.load %arg7[%c0_11, %c0_12] : memref<128x128xf32, #tpu.memory_space<vmem>>, vector<128x128xf32>
      tpu.vector_store %arg7[%c0_11, %c0_12], %12 {strides = array<i32>} : memref<128x128xf32, #tpu.memory_space<vmem>>, vector<128x128xf32>,
    } else {
    }
    %c0 = arith.constant 0 : index
    %c0_1 = arith.constant 0 : index
    %3 = vector.load %arg7[%c0, %c0_1] : memref<128x128xf32, #tpu.memory_space<vmem>>, vector<128x128xf32>
    %c0_2 = arith.constant 0 : index
    %c0_3 = arith.constant 0 : index
    %4 = vector.load %arg3[%c0_2, %c0_3] : memref<128x9xf32, #tpu.memory_space<vmem>>, vector<128x9xf32>
    %c0_4 = arith.constant 0 : index
    %c0_5 = arith.constant 0 : index
    %5 = vector.load %arg4[%c0_4, %c0_5] : memref<9x128xf32, #tpu.memory_space<vmem>>, vector<9x128xf32>
    %cst = arith.constant dense<0.000000e+00> : vector<128x128xf32>
    %6 = tpu.matmul %4, %5, %cst {dimension_numbers = #tpu.dot_dimension_numbers<[1], [0], [0], [1], [0, 0, 1, 1], [], []>} : vector<128x9xf32>, vector<9x128xf32>, vector<128x128xf32> -> vector<128x128xf32>
    %7 = arith.addf %3, %6 : vector<128x128xf32>
    %c0_6 = arith.constant 0 : index
    %c0_7 = arith.constant 0 : index
    %8 = vector.load %arg7[%c0_6, %c0_7] : memref<128x128xf32, #tpu.memory_space<vmem>>, vector<128x128xf32>
    tpu.vector_store %arg7[%c0_6, %c0_7], %7 {strides = array<i32>} : memref<128x128xf32, #tpu.memory_space<vmem>>, vector<128x128xf32>,
    %c0_i32_8 = arith.constant 0 : i32
    %9 = arith.cmpi eq, %arg2, %c0_i32_8 : i32
    %10 = arith.extui %9 : i1 to i32
    %c0_i32_9 = arith.constant 0 : i32
    %11 = arith.cmpi ne, %10, %c0_i32_9 : i32
    scf.if %11 {
      %c0_10 = arith.constant 0 : index
      %c0_11 = arith.constant 0 : index
      %12 = vector.load %arg7[%c0_10, %c0_11] : memref<128x128xf32, #tpu.memory_space<vmem>>, vector<128x128xf32>
      %c0_12 = arith.constant 0 : index
      %c0_13 = arith.constant 0 : index
      %13 = vector.load %arg5[%c0_12, %c0_13] : memref<1x128xf32, #tpu.memory_space<vmem>>, vector<1x128xf32>
      %14 = vector.broadcast %13 : vector<1x128xf32> to vector<128x128xf32>
      %15 = arith.addf %12, %14 : vector<128x128xf32>
      %c0_14 = arith.constant 0 : index
      %c0_15 = arith.constant 0 : index
      %16 = vector.load %arg6[%c0_14, %c0_15] : memref<128x128xf32, #tpu.memory_space<vmem>>, vector<128x128xf32>
      tpu.vector_store %arg6[%c0_14, %c0_15], %15 {strides = array<i32>} : memref<128x128xf32, #tpu.memory_space<vmem>>, vector<128x128xf32>,
    } else {
    }
    return
  }
  func.func @transform_0(%arg0: i32, %arg1: i32, %arg2: i32) -> (i32, i32) {
    %c0_i32 = arith.constant 0 : i32
    return %arg0, %arg2 : i32, i32
  }
  func.func @transform_1(%arg0: i32, %arg1: i32, %arg2: i32) -> (i32, i32) {
    %c0_i32 = arith.constant 0 : i32
    return %arg2, %arg1 : i32, i32
  }
  func.func @transform_2(%arg0: i32, %arg1: i32, %arg2: i32) -> (i32, i32) {
    %c0_i32 = arith.constant 0 : i32
    %c0_i32_0 = arith.constant 0 : i32
    return %c0_i32, %arg1 : i32, i32
  }
  func.func @transform_3(%arg0: i32, %arg1: i32, %arg2: i32) -> (i32, i32) {
    %c0_i32 = arith.constant 0 : i32
    return %arg0, %arg1 : i32, i32
  }
}

module attributes {stable_mosaic.version = 11 : i64} {
  func.func @_ln_gelu_kernel(%arg0: i32, %arg1: memref<512x8xf32, #tpu.memory_space<vmem>>, %arg2: memref<1x8xf32, #tpu.memory_space<vmem>>, %arg3: memref<1x8xf32, #tpu.memory_space<vmem>>, %arg4: memref<512x8xf32, #tpu.memory_space<vmem>>) attributes {dimension_semantics = [#tpu.dimension_semantics<parallel>], iteration_bounds = array<i64: 1>, scalar_prefetch = 0 : i64, scratch_operands = 0 : i64, tpu.core_type = #tpu.core_type<tc>, window_params = [{transform_indices = @transform_0, window_bounds = array<i64: 512, 8>}, {pipeline_mode = #tpu.pipeline_mode<synchronous>, transform_indices = @transform_1, window_bounds = array<i64: 1, 8>}, {pipeline_mode = #tpu.pipeline_mode<synchronous>, transform_indices = @transform_2, window_bounds = array<i64: 1, 8>}, {transform_indices = @transform_3, window_bounds = array<i64: 512, 8>}]} {
    %c0 = arith.constant 0 : index
    %c0_0 = arith.constant 0 : index
    %0 = vector.load %arg1[%c0, %c0_0] : memref<512x8xf32, #tpu.memory_space<vmem>>, vector<512x8xf32>
    %cst = arith.constant dense<0.000000e+00> : vector<512xf32>
    %1 = vector.multi_reduction <add>, %0, %cst [1] : vector<512x8xf32> to vector<512xf32>
    %2 = vector.shape_cast %1 : vector<512xf32> to vector<512x1xf32>
    %cst_1 = arith.constant 8.000000e+00 : f32
    %3 = vector.broadcast %cst_1 : f32 to vector<512x1xf32>
    %4 = arith.divf %2, %3 : vector<512x1xf32>
    %5 = vector.broadcast %4 : vector<512x1xf32> to vector<512x8xf32>
    %6 = arith.subf %0, %5 : vector<512x8xf32>
    %7 = arith.mulf %6, %6 : vector<512x8xf32>
    %cst_2 = arith.constant dense<0.000000e+00> : vector<512xf32>
    %8 = vector.multi_reduction <add>, %7, %cst_2 [1] : vector<512x8xf32> to vector<512xf32>
    %9 = vector.shape_cast %8 : vector<512xf32> to vector<512x1xf32>
    %cst_3 = arith.constant 8.000000e+00 : f32
    %10 = vector.broadcast %cst_3 : f32 to vector<512x1xf32>
    %11 = arith.divf %9, %10 : vector<512x1xf32>
    %12 = vector.broadcast %4 : vector<512x1xf32> to vector<512x8xf32>
    %13 = arith.subf %0, %12 : vector<512x8xf32>
    %cst_4 = arith.constant 9.99999974E-6 : f32
    %14 = vector.broadcast %cst_4 : f32 to vector<512x1xf32>
    %15 = arith.addf %11, %14 : vector<512x1xf32>
    %16 = math.rsqrt %15 : vector<512x1xf32>
    %17 = vector.broadcast %16 : vector<512x1xf32> to vector<512x8xf32>
    %18 = arith.mulf %13, %17 : vector<512x8xf32>
    %c0_5 = arith.constant 0 : index
    %c0_6 = arith.constant 0 : index
    %19 = vector.load %arg2[%c0_5, %c0_6] : memref<1x8xf32, #tpu.memory_space<vmem>>, vector<1x8xf32>
    %20 = vector.broadcast %19 : vector<1x8xf32> to vector<512x8xf32>
    %21 = arith.mulf %18, %20 : vector<512x8xf32>
    %c0_7 = arith.constant 0 : index
    %c0_8 = arith.constant 0 : index
    %22 = vector.load %arg3[%c0_7, %c0_8] : memref<1x8xf32, #tpu.memory_space<vmem>>, vector<1x8xf32>
    %23 = vector.broadcast %22 : vector<1x8xf32> to vector<512x8xf32>
    %24 = arith.addf %21, %23 : vector<512x8xf32>
    %cst_9 = arith.constant 5.000000e-01 : f32
    %25 = vector.broadcast %cst_9 : f32 to vector<512x8xf32>
    %26 = arith.mulf %25, %24 : vector<512x8xf32>
    %cst_10 = arith.constant 4.471500e-02 : f32
    %27 = vector.broadcast %cst_10 : f32 to vector<512x8xf32>
    %28 = arith.mulf %27, %24 : vector<512x8xf32>
    %29 = arith.mulf %28, %24 : vector<512x8xf32>
    %30 = arith.mulf %29, %24 : vector<512x8xf32>
    %31 = arith.addf %24, %30 : vector<512x8xf32>
    %cst_11 = arith.constant 0.797884583 : f32
    %32 = vector.broadcast %cst_11 : f32 to vector<512x8xf32>
    %33 = arith.mulf %32, %31 : vector<512x8xf32>
    %34 = math.tanh %33 : vector<512x8xf32>
    %cst_12 = arith.constant 1.000000e+00 : f32
    %35 = vector.broadcast %cst_12 : f32 to vector<512x8xf32>
    %36 = arith.addf %35, %34 : vector<512x8xf32>
    %37 = arith.mulf %26, %36 : vector<512x8xf32>
    %c0_13 = arith.constant 0 : index
    %c0_14 = arith.constant 0 : index
    %38 = vector.load %arg4[%c0_13, %c0_14] : memref<512x8xf32, #tpu.memory_space<vmem>>, vector<512x8xf32>
    tpu.vector_store %arg4[%c0_13, %c0_14], %37 {strides = array<i32>} : memref<512x8xf32, #tpu.memory_space<vmem>>, vector<512x8xf32>,
    return
  }
  func.func @transform_0(%arg0: i32) -> (i32, i32) {
    %c0_i32 = arith.constant 0 : i32
    %c0_i32_0 = arith.constant 0 : i32
    return %arg0, %c0_i32 : i32, i32
  }
  func.func @transform_1(%arg0: i32) -> (i32, i32) {
    %c0_i32 = arith.constant 0 : i32
    %c0_i32_0 = arith.constant 0 : i32
    %c0_i32_1 = arith.constant 0 : i32
    return %c0_i32, %c0_i32_0 : i32, i32
  }
  func.func @transform_2(%arg0: i32) -> (i32, i32) {
    %c0_i32 = arith.constant 0 : i32
    %c0_i32_0 = arith.constant 0 : i32
    %c0_i32_1 = arith.constant 0 : i32
    return %c0_i32, %c0_i32_0 : i32, i32
  }
  func.func @transform_3(%arg0: i32) -> (i32, i32) {
    %c0_i32 = arith.constant 0 : i32
    %c0_i32_0 = arith.constant 0 : i32
    return %arg0, %c0_i32 : i32, i32
  }
}

module attributes {stable_mosaic.version = 11 : i64} {
  func.func @_matmul_kernel(%arg0: i32, %arg1: i32, %arg2: i32, %arg3: memref<128x288xf32, #tpu.memory_space<vmem>>, %arg4: memref<288x128xf32, #tpu.memory_space<vmem>>, %arg5: memref<1x128xf32, #tpu.memory_space<vmem>>, %arg6: memref<128x128xf32, #tpu.memory_space<vmem>>, %arg7: memref<128x128xf32, #tpu.memory_space<vmem>>) attributes {dimension_semantics = [#tpu.dimension_semantics<parallel>, #tpu.dimension_semantics<parallel>, #tpu.dimension_semantics<arbitrary>], iteration_bounds = array<i64: 1, 1, 1>, scalar_prefetch = 0 : i64, scratch_operands = 1 : i64, tpu.core_type = #tpu.core_type<tc>, window_params = [{transform_indices = @transform_0, window_bounds = array<i64: 128, 288>}, {transform_indices = @transform_1, window_bounds = array<i64: 288, 128>}, {transform_indices = @transform_2, window_bounds = array<i64: 1, 128>}, {transform_indices = @transform_3, window_bounds = array<i64: 128, 128>}]} {
    %c0_i32 = arith.constant 0 : i32
    %0 = arith.cmpi eq, %arg2, %c0_i32 : i32
    %1 = arith.extui %0 : i1 to i32
    %c0_i32_0 = arith.constant 0 : i32
    %2 = arith.cmpi ne, %1, %c0_i32_0 : i32
    scf.if %2 {
      %cst_10 = arith.constant 0.000000e+00 : f32
      %12 = vector.broadcast %cst_10 : f32 to vector<128x128xf32>
      %c0_11 = arith.constant 0 : index
      %c0_12 = arith.constant 0 : index
      %13 = vector.load %arg7[%c0_11, %c0_12] : memref<128x128xf32, #tpu.memory_space<vmem>>, vector<128x128xf32>
      tpu.vector_store %arg7[%c0_11, %c0_12], %12 {strides = array<i32>} : memref<128x128xf32, #tpu.memory_space<vmem>>, vector<128x128xf32>,
    } else {
    }
    %c0 = arith.constant 0 : index
    %c0_1 = arith.constant 0 : index
    %3 = vector.load %arg7[%c0, %c0_1] : memref<128x128xf32, #tpu.memory_space<vmem>>, vector<128x128xf32>
    %c0_2 = arith.constant 0 : index
    %c0_3 = arith.constant 0 : index
    %4 = vector.load %arg3[%c0_2, %c0_3] : memref<128x288xf32, #tpu.memory_space<vmem>>, vector<128x288xf32>
    %c0_4 = arith.constant 0 : index
    %c0_5 = arith.constant 0 : index
    %5 = vector.load %arg4[%c0_4, %c0_5] : memref<288x128xf32, #tpu.memory_space<vmem>>, vector<288x128xf32>
    %cst = arith.constant dense<0.000000e+00> : vector<128x128xf32>
    %6 = tpu.matmul %4, %5, %cst {dimension_numbers = #tpu.dot_dimension_numbers<[1], [0], [0], [1], [0, 0, 1, 1], [], []>} : vector<128x288xf32>, vector<288x128xf32>, vector<128x128xf32> -> vector<128x128xf32>
    %7 = arith.addf %3, %6 : vector<128x128xf32>
    %c0_6 = arith.constant 0 : index
    %c0_7 = arith.constant 0 : index
    %8 = vector.load %arg7[%c0_6, %c0_7] : memref<128x128xf32, #tpu.memory_space<vmem>>, vector<128x128xf32>
    tpu.vector_store %arg7[%c0_6, %c0_7], %7 {strides = array<i32>} : memref<128x128xf32, #tpu.memory_space<vmem>>, vector<128x128xf32>,
    %c0_i32_8 = arith.constant 0 : i32
    %9 = arith.cmpi eq, %arg2, %c0_i32_8 : i32
    %10 = arith.extui %9 : i1 to i32
    %c0_i32_9 = arith.constant 0 : i32
    %11 = arith.cmpi ne, %10, %c0_i32_9 : i32
    scf.if %11 {
      %c0_10 = arith.constant 0 : index
      %c0_11 = arith.constant 0 : index
      %12 = vector.load %arg7[%c0_10, %c0_11] : memref<128x128xf32, #tpu.memory_space<vmem>>, vector<128x128xf32>
      %c0_12 = arith.constant 0 : index
      %c0_13 = arith.constant 0 : index
      %13 = vector.load %arg5[%c0_12, %c0_13] : memref<1x128xf32, #tpu.memory_space<vmem>>, vector<1x128xf32>
      %14 = vector.broadcast %13 : vector<1x128xf32> to vector<128x128xf32>
      %15 = arith.addf %12, %14 : vector<128x128xf32>
      %c0_14 = arith.constant 0 : index
      %c0_15 = arith.constant 0 : index
      %16 = vector.load %arg6[%c0_14, %c0_15] : memref<128x128xf32, #tpu.memory_space<vmem>>, vector<128x128xf32>
      tpu.vector_store %arg6[%c0_14, %c0_15], %15 {strides = array<i32>} : memref<128x128xf32, #tpu.memory_space<vmem>>, vector<128x128xf32>,
    } else {
    }
    return
  }
  func.func @transform_0(%arg0: i32, %arg1: i32, %arg2: i32) -> (i32, i32) {
    %c0_i32 = arith.constant 0 : i32
    return %arg0, %arg2 : i32, i32
  }
  func.func @transform_1(%arg0: i32, %arg1: i32, %arg2: i32) -> (i32, i32) {
    %c0_i32 = arith.constant 0 : i32
    return %arg2, %arg1 : i32, i32
  }
  func.func @transform_2(%arg0: i32, %arg1: i32, %arg2: i32) -> (i32, i32) {
    %c0_i32 = arith.constant 0 : i32
    %c0_i32_0 = arith.constant 0 : i32
    return %c0_i32, %arg1 : i32, i32
  }
  func.func @transform_3(%arg0: i32, %arg1: i32, %arg2: i32) -> (i32, i32) {
    %c0_i32 = arith.constant 0 : i32
    return %arg0, %arg1 : i32, i32
  }
}

module attributes {stable_mosaic.version = 11 : i64} {
  func.func @_ln_gelu_kernel(%arg0: i32, %arg1: memref<512x8xf32, #tpu.memory_space<vmem>>, %arg2: memref<1x8xf32, #tpu.memory_space<vmem>>, %arg3: memref<1x8xf32, #tpu.memory_space<vmem>>, %arg4: memref<512x8xf32, #tpu.memory_space<vmem>>) attributes {dimension_semantics = [#tpu.dimension_semantics<parallel>], iteration_bounds = array<i64: 1>, scalar_prefetch = 0 : i64, scratch_operands = 0 : i64, tpu.core_type = #tpu.core_type<tc>, window_params = [{transform_indices = @transform_0, window_bounds = array<i64: 512, 8>}, {pipeline_mode = #tpu.pipeline_mode<synchronous>, transform_indices = @transform_1, window_bounds = array<i64: 1, 8>}, {pipeline_mode = #tpu.pipeline_mode<synchronous>, transform_indices = @transform_2, window_bounds = array<i64: 1, 8>}, {transform_indices = @transform_3, window_bounds = array<i64: 512, 8>}]} {
    %c0 = arith.constant 0 : index
    %c0_0 = arith.constant 0 : index
    %0 = vector.load %arg1[%c0, %c0_0] : memref<512x8xf32, #tpu.memory_space<vmem>>, vector<512x8xf32>
    %cst = arith.constant dense<0.000000e+00> : vector<512xf32>
    %1 = vector.multi_reduction <add>, %0, %cst [1] : vector<512x8xf32> to vector<512xf32>
    %2 = vector.shape_cast %1 : vector<512xf32> to vector<512x1xf32>
    %cst_1 = arith.constant 8.000000e+00 : f32
    %3 = vector.broadcast %cst_1 : f32 to vector<512x1xf32>
    %4 = arith.divf %2, %3 : vector<512x1xf32>
    %5 = vector.broadcast %4 : vector<512x1xf32> to vector<512x8xf32>
    %6 = arith.subf %0, %5 : vector<512x8xf32>
    %7 = arith.mulf %6, %6 : vector<512x8xf32>
    %cst_2 = arith.constant dense<0.000000e+00> : vector<512xf32>
    %8 = vector.multi_reduction <add>, %7, %cst_2 [1] : vector<512x8xf32> to vector<512xf32>
    %9 = vector.shape_cast %8 : vector<512xf32> to vector<512x1xf32>
    %cst_3 = arith.constant 8.000000e+00 : f32
    %10 = vector.broadcast %cst_3 : f32 to vector<512x1xf32>
    %11 = arith.divf %9, %10 : vector<512x1xf32>
    %12 = vector.broadcast %4 : vector<512x1xf32> to vector<512x8xf32>
    %13 = arith.subf %0, %12 : vector<512x8xf32>
    %cst_4 = arith.constant 9.99999974E-6 : f32
    %14 = vector.broadcast %cst_4 : f32 to vector<512x1xf32>
    %15 = arith.addf %11, %14 : vector<512x1xf32>
    %16 = math.rsqrt %15 : vector<512x1xf32>
    %17 = vector.broadcast %16 : vector<512x1xf32> to vector<512x8xf32>
    %18 = arith.mulf %13, %17 : vector<512x8xf32>
    %c0_5 = arith.constant 0 : index
    %c0_6 = arith.constant 0 : index
    %19 = vector.load %arg2[%c0_5, %c0_6] : memref<1x8xf32, #tpu.memory_space<vmem>>, vector<1x8xf32>
    %20 = vector.broadcast %19 : vector<1x8xf32> to vector<512x8xf32>
    %21 = arith.mulf %18, %20 : vector<512x8xf32>
    %c0_7 = arith.constant 0 : index
    %c0_8 = arith.constant 0 : index
    %22 = vector.load %arg3[%c0_7, %c0_8] : memref<1x8xf32, #tpu.memory_space<vmem>>, vector<1x8xf32>
    %23 = vector.broadcast %22 : vector<1x8xf32> to vector<512x8xf32>
    %24 = arith.addf %21, %23 : vector<512x8xf32>
    %cst_9 = arith.constant 5.000000e-01 : f32
    %25 = vector.broadcast %cst_9 : f32 to vector<512x8xf32>
    %26 = arith.mulf %25, %24 : vector<512x8xf32>
    %cst_10 = arith.constant 4.471500e-02 : f32
    %27 = vector.broadcast %cst_10 : f32 to vector<512x8xf32>
    %28 = arith.mulf %27, %24 : vector<512x8xf32>
    %29 = arith.mulf %28, %24 : vector<512x8xf32>
    %30 = arith.mulf %29, %24 : vector<512x8xf32>
    %31 = arith.addf %24, %30 : vector<512x8xf32>
    %cst_11 = arith.constant 0.797884583 : f32
    %32 = vector.broadcast %cst_11 : f32 to vector<512x8xf32>
    %33 = arith.mulf %32, %31 : vector<512x8xf32>
    %34 = math.tanh %33 : vector<512x8xf32>
    %cst_12 = arith.constant 1.000000e+00 : f32
    %35 = vector.broadcast %cst_12 : f32 to vector<512x8xf32>
    %36 = arith.addf %35, %34 : vector<512x8xf32>
    %37 = arith.mulf %26, %36 : vector<512x8xf32>
    %c0_13 = arith.constant 0 : index
    %c0_14 = arith.constant 0 : index
    %38 = vector.load %arg4[%c0_13, %c0_14] : memref<512x8xf32, #tpu.memory_space<vmem>>, vector<512x8xf32>
    tpu.vector_store %arg4[%c0_13, %c0_14], %37 {strides = array<i32>} : memref<512x8xf32, #tpu.memory_space<vmem>>, vector<512x8xf32>,
    return
  }
  func.func @transform_0(%arg0: i32) -> (i32, i32) {
    %c0_i32 = arith.constant 0 : i32
    %c0_i32_0 = arith.constant 0 : i32
    return %arg0, %c0_i32 : i32, i32
  }
  func.func @transform_1(%arg0: i32) -> (i32, i32) {
    %c0_i32 = arith.constant 0 : i32
    %c0_i32_0 = arith.constant 0 : i32
    %c0_i32_1 = arith.constant 0 : i32
    return %c0_i32, %c0_i32_0 : i32, i32
  }
  func.func @transform_2(%arg0: i32) -> (i32, i32) {
    %c0_i32 = arith.constant 0 : i32
    %c0_i32_0 = arith.constant 0 : i32
    %c0_i32_1 = arith.constant 0 : i32
    return %c0_i32, %c0_i32_0 : i32, i32
  }
  func.func @transform_3(%arg0: i32) -> (i32, i32) {
    %c0_i32 = arith.constant 0 : i32
    %c0_i32_0 = arith.constant 0 : i32
    return %arg0, %c0_i32 : i32, i32
  }
}

module attributes {stable_mosaic.version = 11 : i64} {
  func.func @_matmul_kernel(%arg0: i32, %arg1: i32, %arg2: i32, %arg3: memref<128x288xf32, #tpu.memory_space<vmem>>, %arg4: memref<288x128xf32, #tpu.memory_space<vmem>>, %arg5: memref<1x128xf32, #tpu.memory_space<vmem>>, %arg6: memref<128x128xf32, #tpu.memory_space<vmem>>, %arg7: memref<128x128xf32, #tpu.memory_space<vmem>>, %arg8: memref<128x128xf32, #tpu.memory_space<vmem>>) attributes {dimension_semantics = [#tpu.dimension_semantics<parallel>, #tpu.dimension_semantics<parallel>, #tpu.dimension_semantics<arbitrary>], iteration_bounds = array<i64: 1, 1, 1>, scalar_prefetch = 0 : i64, scratch_operands = 1 : i64, tpu.core_type = #tpu.core_type<tc>, window_params = [{transform_indices = @transform_0, window_bounds = array<i64: 128, 288>}, {transform_indices = @transform_1, window_bounds = array<i64: 288, 128>}, {transform_indices = @transform_2, window_bounds = array<i64: 1, 128>}, {transform_indices = @transform_3, window_bounds = array<i64: 128, 128>}, {transform_indices = @transform_4, window_bounds = array<i64: 128, 128>}]} {
    %c0_i32 = arith.constant 0 : i32
    %0 = arith.cmpi eq, %arg2, %c0_i32 : i32
    %1 = arith.extui %0 : i1 to i32
    %c0_i32_0 = arith.constant 0 : i32
    %2 = arith.cmpi ne, %1, %c0_i32_0 : i32
    scf.if %2 {
      %cst_10 = arith.constant 0.000000e+00 : f32
      %12 = vector.broadcast %cst_10 : f32 to vector<128x128xf32>
      %c0_11 = arith.constant 0 : index
      %c0_12 = arith.constant 0 : index
      %13 = vector.load %arg8[%c0_11, %c0_12] : memref<128x128xf32, #tpu.memory_space<vmem>>, vector<128x128xf32>
      tpu.vector_store %arg8[%c0_11, %c0_12], %12 {strides = array<i32>} : memref<128x128xf32, #tpu.memory_space<vmem>>, vector<128x128xf32>,
    } else {
    }
    %c0 = arith.constant 0 : index
    %c0_1 = arith.constant 0 : index
    %3 = vector.load %arg8[%c0, %c0_1] : memref<128x128xf32, #tpu.memory_space<vmem>>, vector<128x128xf32>
    %c0_2 = arith.constant 0 : index
    %c0_3 = arith.constant 0 : index
    %4 = vector.load %arg3[%c0_2, %c0_3] : memref<128x288xf32, #tpu.memory_space<vmem>>, vector<128x288xf32>
    %c0_4 = arith.constant 0 : index
    %c0_5 = arith.constant 0 : index
    %5 = vector.load %arg4[%c0_4, %c0_5] : memref<288x128xf32, #tpu.memory_space<vmem>>, vector<288x128xf32>
    %cst = arith.constant dense<0.000000e+00> : vector<128x128xf32>
    %6 = tpu.matmul %4, %5, %cst {dimension_numbers = #tpu.dot_dimension_numbers<[1], [0], [0], [1], [0, 0, 1, 1], [], []>} : vector<128x288xf32>, vector<288x128xf32>, vector<128x128xf32> -> vector<128x128xf32>
    %7 = arith.addf %3, %6 : vector<128x128xf32>
    %c0_6 = arith.constant 0 : index
    %c0_7 = arith.constant 0 : index
    %8 = vector.load %arg8[%c0_6, %c0_7] : memref<128x128xf32, #tpu.memory_space<vmem>>, vector<128x128xf32>
    tpu.vector_store %arg8[%c0_6, %c0_7], %7 {strides = array<i32>} : memref<128x128xf32, #tpu.memory_space<vmem>>, vector<128x128xf32>,
    %c0_i32_8 = arith.constant 0 : i32
    %9 = arith.cmpi eq, %arg2, %c0_i32_8 : i32
    %10 = arith.extui %9 : i1 to i32
    %c0_i32_9 = arith.constant 0 : i32
    %11 = arith.cmpi ne, %10, %c0_i32_9 : i32
    scf.if %11 {
      %c0_10 = arith.constant 0 : index
      %c0_11 = arith.constant 0 : index
      %12 = vector.load %arg8[%c0_10, %c0_11] : memref<128x128xf32, #tpu.memory_space<vmem>>, vector<128x128xf32>
      %c0_12 = arith.constant 0 : index
      %c0_13 = arith.constant 0 : index
      %13 = vector.load %arg5[%c0_12, %c0_13] : memref<1x128xf32, #tpu.memory_space<vmem>>, vector<1x128xf32>
      %14 = vector.broadcast %13 : vector<1x128xf32> to vector<128x128xf32>
      %15 = arith.addf %12, %14 : vector<128x128xf32>
      %c0_14 = arith.constant 0 : index
      %c0_15 = arith.constant 0 : index
      %16 = vector.load %arg6[%c0_14, %c0_15] : memref<128x128xf32, #tpu.memory_space<vmem>>, vector<128x128xf32>
      %17 = arith.addf %15, %16 : vector<128x128xf32>
      %c0_16 = arith.constant 0 : index
      %c0_17 = arith.constant 0 : index
      %18 = vector.load %arg7[%c0_16, %c0_17] : memref<128x128xf32, #tpu.memory_space<vmem>>, vector<128x128xf32>
      tpu.vector_store %arg7[%c0_16, %c0_17], %17 {strides = array<i32>} : memref<128x128xf32, #tpu.memory_space<vmem>>, vector<128x128xf32>,
    } else {
    }
    return
  }
  func.func @transform_0(%arg0: i32, %arg1: i32, %arg2: i32) -> (i32, i32) {
    %c0_i32 = arith.constant 0 : i32
    return %arg0, %arg2 : i32, i32
  }
  func.func @transform_1(%arg0: i32, %arg1: i32, %arg2: i32) -> (i32, i32) {
    %c0_i32 = arith.constant 0 : i32
    return %arg2, %arg1 : i32, i32
  }
  func.func @transform_2(%arg0: i32, %arg1: i32, %arg2: i32) -> (i32, i32) {
    %c0_i32 = arith.constant 0 : i32
    %c0_i32_0 = arith.constant 0 : i32
    return %c0_i32, %arg1 : i32, i32
  }
  func.func @transform_3(%arg0: i32, %arg1: i32, %arg2: i32) -> (i32, i32) {
    %c0_i32 = arith.constant 0 : i32
    return %arg0, %arg1 : i32, i32
  }
  func.func @transform_4(%arg0: i32, %arg1: i32, %arg2: i32) -> (i32, i32) {
    %c0_i32 = arith.constant 0 : i32
    return %arg0, %arg1 : i32, i32
  }
}

module attributes {stable_mosaic.version = 11 : i64} {
  func.func @_matmul_kernel(%arg0: i32, %arg1: i32, %arg2: i32, %arg3: memref<16x256xf32, #tpu.memory_space<vmem>>, %arg4: memref<256x128xf32, #tpu.memory_space<vmem>>, %arg5: memref<1x128xf32, #tpu.memory_space<vmem>>, %arg6: memref<16x128xf32, #tpu.memory_space<vmem>>, %arg7: memref<16x128xf32, #tpu.memory_space<vmem>>) attributes {dimension_semantics = [#tpu.dimension_semantics<parallel>, #tpu.dimension_semantics<parallel>, #tpu.dimension_semantics<arbitrary>], iteration_bounds = array<i64: 1, 1, 1>, scalar_prefetch = 0 : i64, scratch_operands = 1 : i64, tpu.core_type = #tpu.core_type<tc>, window_params = [{transform_indices = @transform_0, window_bounds = array<i64: 16, 256>}, {transform_indices = @transform_1, window_bounds = array<i64: 256, 128>}, {transform_indices = @transform_2, window_bounds = array<i64: 1, 128>}, {transform_indices = @transform_3, window_bounds = array<i64: 16, 128>}]} {
    %c0_i32 = arith.constant 0 : i32
    %0 = arith.cmpi eq, %arg2, %c0_i32 : i32
    %1 = arith.extui %0 : i1 to i32
    %c0_i32_0 = arith.constant 0 : i32
    %2 = arith.cmpi ne, %1, %c0_i32_0 : i32
    scf.if %2 {
      %cst_10 = arith.constant 0.000000e+00 : f32
      %12 = vector.broadcast %cst_10 : f32 to vector<16x128xf32>
      %c0_11 = arith.constant 0 : index
      %c0_12 = arith.constant 0 : index
      %13 = vector.load %arg7[%c0_11, %c0_12] : memref<16x128xf32, #tpu.memory_space<vmem>>, vector<16x128xf32>
      tpu.vector_store %arg7[%c0_11, %c0_12], %12 {strides = array<i32>} : memref<16x128xf32, #tpu.memory_space<vmem>>, vector<16x128xf32>,
    } else {
    }
    %c0 = arith.constant 0 : index
    %c0_1 = arith.constant 0 : index
    %3 = vector.load %arg7[%c0, %c0_1] : memref<16x128xf32, #tpu.memory_space<vmem>>, vector<16x128xf32>
    %c0_2 = arith.constant 0 : index
    %c0_3 = arith.constant 0 : index
    %4 = vector.load %arg3[%c0_2, %c0_3] : memref<16x256xf32, #tpu.memory_space<vmem>>, vector<16x256xf32>
    %c0_4 = arith.constant 0 : index
    %c0_5 = arith.constant 0 : index
    %5 = vector.load %arg4[%c0_4, %c0_5] : memref<256x128xf32, #tpu.memory_space<vmem>>, vector<256x128xf32>
    %cst = arith.constant dense<0.000000e+00> : vector<16x128xf32>
    %6 = tpu.matmul %4, %5, %cst {dimension_numbers = #tpu.dot_dimension_numbers<[1], [0], [0], [1], [0, 0, 1, 1], [], []>} : vector<16x256xf32>, vector<256x128xf32>, vector<16x128xf32> -> vector<16x128xf32>
    %7 = arith.addf %3, %6 : vector<16x128xf32>
    %c0_6 = arith.constant 0 : index
    %c0_7 = arith.constant 0 : index
    %8 = vector.load %arg7[%c0_6, %c0_7] : memref<16x128xf32, #tpu.memory_space<vmem>>, vector<16x128xf32>
    tpu.vector_store %arg7[%c0_6, %c0_7], %7 {strides = array<i32>} : memref<16x128xf32, #tpu.memory_space<vmem>>, vector<16x128xf32>,
    %c0_i32_8 = arith.constant 0 : i32
    %9 = arith.cmpi eq, %arg2, %c0_i32_8 : i32
    %10 = arith.extui %9 : i1 to i32
    %c0_i32_9 = arith.constant 0 : i32
    %11 = arith.cmpi ne, %10, %c0_i32_9 : i32
    scf.if %11 {
      %c0_10 = arith.constant 0 : index
      %c0_11 = arith.constant 0 : index
      %12 = vector.load %arg7[%c0_10, %c0_11] : memref<16x128xf32, #tpu.memory_space<vmem>>, vector<16x128xf32>
      %c0_12 = arith.constant 0 : index
      %c0_13 = arith.constant 0 : index
      %13 = vector.load %arg5[%c0_12, %c0_13] : memref<1x128xf32, #tpu.memory_space<vmem>>, vector<1x128xf32>
      %14 = vector.broadcast %13 : vector<1x128xf32> to vector<16x128xf32>
      %15 = arith.addf %12, %14 : vector<16x128xf32>
      %c0_14 = arith.constant 0 : index
      %c0_15 = arith.constant 0 : index
      %16 = vector.load %arg6[%c0_14, %c0_15] : memref<16x128xf32, #tpu.memory_space<vmem>>, vector<16x128xf32>
      tpu.vector_store %arg6[%c0_14, %c0_15], %15 {strides = array<i32>} : memref<16x128xf32, #tpu.memory_space<vmem>>, vector<16x128xf32>,
    } else {
    }
    return
  }
  func.func @transform_0(%arg0: i32, %arg1: i32, %arg2: i32) -> (i32, i32) {
    %c0_i32 = arith.constant 0 : i32
    return %arg0, %arg2 : i32, i32
  }
  func.func @transform_1(%arg0: i32, %arg1: i32, %arg2: i32) -> (i32, i32) {
    %c0_i32 = arith.constant 0 : i32
    return %arg2, %arg1 : i32, i32
  }
  func.func @transform_2(%arg0: i32, %arg1: i32, %arg2: i32) -> (i32, i32) {
    %c0_i32 = arith.constant 0 : i32
    %c0_i32_0 = arith.constant 0 : i32
    return %c0_i32, %arg1 : i32, i32
  }
  func.func @transform_3(%arg0: i32, %arg1: i32, %arg2: i32) -> (i32, i32) {
    %c0_i32 = arith.constant 0 : i32
    return %arg0, %arg1 : i32, i32
  }
}

module attributes {stable_mosaic.version = 11 : i64} {
  func.func @_ln_gelu_matmul_kernel(%arg0: i32, %arg1: i32, %arg2: memref<16x32xf32, #tpu.memory_space<vmem>>, %arg3: memref<1x32xf32, #tpu.memory_space<vmem>>, %arg4: memref<1x32xf32, #tpu.memory_space<vmem>>, %arg5: memref<32x256xf32, #tpu.memory_space<vmem>>, %arg6: memref<1x256xf32, #tpu.memory_space<vmem>>, %arg7: memref<16x256xf32, #tpu.memory_space<vmem>>) attributes {dimension_semantics = [#tpu.dimension_semantics<parallel>, #tpu.dimension_semantics<parallel>], iteration_bounds = array<i64: 1, 3>, scalar_prefetch = 0 : i64, scratch_operands = 0 : i64, tpu.core_type = #tpu.core_type<tc>, window_params = [{transform_indices = @transform_0, window_bounds = array<i64: 16, 32>}, {pipeline_mode = #tpu.pipeline_mode<synchronous>, transform_indices = @transform_1, window_bounds = array<i64: 1, 32>}, {pipeline_mode = #tpu.pipeline_mode<synchronous>, transform_indices = @transform_2, window_bounds = array<i64: 1, 32>}, {transform_indices = @transform_3, window_bounds = array<i64: 32, 256>}, {transform_indices = @transform_4, window_bounds = array<i64: 1, 256>}, {transform_indices = @transform_5, window_bounds = array<i64: 16, 256>}]} {
    %c0 = arith.constant 0 : index
    %c0_0 = arith.constant 0 : index
    %0 = vector.load %arg2[%c0, %c0_0] : memref<16x32xf32, #tpu.memory_space<vmem>>, vector<16x32xf32>
    %cst = arith.constant dense<0.000000e+00> : vector<16xf32>
    %1 = vector.multi_reduction <add>, %0, %cst [1] : vector<16x32xf32> to vector<16xf32>
    %2 = vector.shape_cast %1 : vector<16xf32> to vector<16x1xf32>
    %cst_1 = arith.constant 3.200000e+01 : f32
    %3 = vector.broadcast %cst_1 : f32 to vector<16x1xf32>
    %4 = arith.divf %2, %3 : vector<16x1xf32>
    %5 = vector.broadcast %4 : vector<16x1xf32> to vector<16x32xf32>
    %6 = arith.subf %0, %5 : vector<16x32xf32>
    %7 = arith.mulf %6, %6 : vector<16x32xf32>
    %cst_2 = arith.constant dense<0.000000e+00> : vector<16xf32>
    %8 = vector.multi_reduction <add>, %7, %cst_2 [1] : vector<16x32xf32> to vector<16xf32>
    %9 = vector.shape_cast %8 : vector<16xf32> to vector<16x1xf32>
    %cst_3 = arith.constant 3.200000e+01 : f32
    %10 = vector.broadcast %cst_3 : f32 to vector<16x1xf32>
    %11 = arith.divf %9, %10 : vector<16x1xf32>
    %12 = vector.broadcast %4 : vector<16x1xf32> to vector<16x32xf32>
    %13 = arith.subf %0, %12 : vector<16x32xf32>
    %cst_4 = arith.constant 9.99999974E-6 : f32
    %14 = vector.broadcast %cst_4 : f32 to vector<16x1xf32>
    %15 = arith.addf %11, %14 : vector<16x1xf32>
    %16 = math.rsqrt %15 : vector<16x1xf32>
    %17 = vector.broadcast %16 : vector<16x1xf32> to vector<16x32xf32>
    %18 = arith.mulf %13, %17 : vector<16x32xf32>
    %c0_5 = arith.constant 0 : index
    %c0_6 = arith.constant 0 : index
    %19 = vector.load %arg3[%c0_5, %c0_6] : memref<1x32xf32, #tpu.memory_space<vmem>>, vector<1x32xf32>
    %20 = vector.broadcast %19 : vector<1x32xf32> to vector<16x32xf32>
    %21 = arith.mulf %18, %20 : vector<16x32xf32>
    %c0_7 = arith.constant 0 : index
    %c0_8 = arith.constant 0 : index
    %22 = vector.load %arg4[%c0_7, %c0_8] : memref<1x32xf32, #tpu.memory_space<vmem>>, vector<1x32xf32>
    %23 = vector.broadcast %22 : vector<1x32xf32> to vector<16x32xf32>
    %24 = arith.addf %21, %23 : vector<16x32xf32>
    %cst_9 = arith.constant 5.000000e-01 : f32
    %25 = vector.broadcast %cst_9 : f32 to vector<16x32xf32>
    %26 = arith.mulf %25, %24 : vector<16x32xf32>
    %cst_10 = arith.constant 4.471500e-02 : f32
    %27 = vector.broadcast %cst_10 : f32 to vector<16x32xf32>
    %28 = arith.mulf %27, %24 : vector<16x32xf32>
    %29 = arith.mulf %28, %24 : vector<16x32xf32>
    %30 = arith.mulf %29, %24 : vector<16x32xf32>
    %31 = arith.addf %24, %30 : vector<16x32xf32>
    %cst_11 = arith.constant 0.797884583 : f32
    %32 = vector.broadcast %cst_11 : f32 to vector<16x32xf32>
    %33 = arith.mulf %32, %31 : vector<16x32xf32>
    %34 = math.tanh %33 : vector<16x32xf32>
    %cst_12 = arith.constant 1.000000e+00 : f32
    %35 = vector.broadcast %cst_12 : f32 to vector<16x32xf32>
    %36 = arith.addf %35, %34 : vector<16x32xf32>
    %37 = arith.mulf %26, %36 : vector<16x32xf32>
    %c0_13 = arith.constant 0 : index
    %c0_14 = arith.constant 0 : index
    %38 = vector.load %arg5[%c0_13, %c0_14] : memref<32x256xf32, #tpu.memory_space<vmem>>, vector<32x256xf32>
    %cst_15 = arith.constant dense<0.000000e+00> : vector<16x256xf32>
    %39 = tpu.matmul %37, %38, %cst_15 {dimension_numbers = #tpu.dot_dimension_numbers<[1], [0], [0], [1], [0, 0, 1, 1], [], []>} : vector<16x32xf32>, vector<32x256xf32>, vector<16x256xf32> -> vector<16x256xf32>
    %c0_16 = arith.constant 0 : index
    %c0_17 = arith.constant 0 : index
    %40 = vector.load %arg6[%c0_16, %c0_17] : memref<1x256xf32, #tpu.memory_space<vmem>>, vector<1x256xf32>
    %41 = vector.broadcast %40 : vector<1x256xf32> to vector<16x256xf32>
    %42 = arith.addf %39, %41 : vector<16x256xf32>
    %c0_18 = arith.constant 0 : index
    %c0_19 = arith.constant 0 : index
    %43 = vector.load %arg7[%c0_18, %c0_19] : memref<16x256xf32, #tpu.memory_space<vmem>>, vector<16x256xf32>
    tpu.vector_store %arg7[%c0_18, %c0_19], %42 {strides = array<i32>} : memref<16x256xf32, #tpu.memory_space<vmem>>, vector<16x256xf32>,
    return
  }
  func.func @transform_0(%arg0: i32, %arg1: i32) -> (i32, i32) {
    %c0_i32 = arith.constant 0 : i32
    %c0_i32_0 = arith.constant 0 : i32
    return %arg0, %c0_i32 : i32, i32
  }
  func.func @transform_1(%arg0: i32, %arg1: i32) -> (i32, i32) {
    %c0_i32 = arith.constant 0 : i32
    %c0_i32_0 = arith.constant 0 : i32
    %c0_i32_1 = arith.constant 0 : i32
    return %c0_i32, %c0_i32_0 : i32, i32
  }
  func.func @transform_2(%arg0: i32, %arg1: i32) -> (i32, i32) {
    %c0_i32 = arith.constant 0 : i32
    %c0_i32_0 = arith.constant 0 : i32
    %c0_i32_1 = arith.constant 0 : i32
    return %c0_i32, %c0_i32_0 : i32, i32
  }
  func.func @transform_3(%arg0: i32, %arg1: i32) -> (i32, i32) {
    %c0_i32 = arith.constant 0 : i32
    %c0_i32_0 = arith.constant 0 : i32
    return %c0_i32, %arg1 : i32, i32
  }
  func.func @transform_4(%arg0: i32, %arg1: i32) -> (i32, i32) {
    %c0_i32 = arith.constant 0 : i32
    %c0_i32_0 = arith.constant 0 : i32
    return %c0_i32, %arg1 : i32, i32
  }
  func.func @transform_5(%arg0: i32, %arg1: i32) -> (i32, i32) {
    %c0_i32 = arith.constant 0 : i32
    return %arg0, %arg1 : i32, i32
  }
}

module attributes {stable_mosaic.version = 11 : i64} {
  func.func @_ln_gelu_matmul_kernel(%arg0: i32, %arg1: i32, %arg2: memref<16x64xf32, #tpu.memory_space<vmem>>, %arg3: memref<1x64xf32, #tpu.memory_space<vmem>>, %arg4: memref<1x64xf32, #tpu.memory_space<vmem>>, %arg5: memref<64x256xf32, #tpu.memory_space<vmem>>, %arg6: memref<1x256xf32, #tpu.memory_space<vmem>>, %arg7: memref<16x256xf32, #tpu.memory_space<vmem>>) attributes {dimension_semantics = [#tpu.dimension_semantics<parallel>, #tpu.dimension_semantics<parallel>], iteration_bounds = array<i64: 1, 3>, scalar_prefetch = 0 : i64, scratch_operands = 0 : i64, tpu.core_type = #tpu.core_type<tc>, window_params = [{transform_indices = @transform_0, window_bounds = array<i64: 16, 64>}, {pipeline_mode = #tpu.pipeline_mode<synchronous>, transform_indices = @transform_1, window_bounds = array<i64: 1, 64>}, {pipeline_mode = #tpu.pipeline_mode<synchronous>, transform_indices = @transform_2, window_bounds = array<i64: 1, 64>}, {transform_indices = @transform_3, window_bounds = array<i64: 64, 256>}, {transform_indices = @transform_4, window_bounds = array<i64: 1, 256>}, {transform_indices = @transform_5, window_bounds = array<i64: 16, 256>}]} {
    %c0 = arith.constant 0 : index
    %c0_0 = arith.constant 0 : index
    %0 = vector.load %arg2[%c0, %c0_0] : memref<16x64xf32, #tpu.memory_space<vmem>>, vector<16x64xf32>
    %cst = arith.constant dense<0.000000e+00> : vector<16xf32>
    %1 = vector.multi_reduction <add>, %0, %cst [1] : vector<16x64xf32> to vector<16xf32>
    %2 = vector.shape_cast %1 : vector<16xf32> to vector<16x1xf32>
    %cst_1 = arith.constant 6.400000e+01 : f32
    %3 = vector.broadcast %cst_1 : f32 to vector<16x1xf32>
    %4 = arith.divf %2, %3 : vector<16x1xf32>
    %5 = vector.broadcast %4 : vector<16x1xf32> to vector<16x64xf32>
    %6 = arith.subf %0, %5 : vector<16x64xf32>
    %7 = arith.mulf %6, %6 : vector<16x64xf32>
    %cst_2 = arith.constant dense<0.000000e+00> : vector<16xf32>
    %8 = vector.multi_reduction <add>, %7, %cst_2 [1] : vector<16x64xf32> to vector<16xf32>
    %9 = vector.shape_cast %8 : vector<16xf32> to vector<16x1xf32>
    %cst_3 = arith.constant 6.400000e+01 : f32
    %10 = vector.broadcast %cst_3 : f32 to vector<16x1xf32>
    %11 = arith.divf %9, %10 : vector<16x1xf32>
    %12 = vector.broadcast %4 : vector<16x1xf32> to vector<16x64xf32>
    %13 = arith.subf %0, %12 : vector<16x64xf32>
    %cst_4 = arith.constant 9.99999974E-6 : f32
    %14 = vector.broadcast %cst_4 : f32 to vector<16x1xf32>
    %15 = arith.addf %11, %14 : vector<16x1xf32>
    %16 = math.rsqrt %15 : vector<16x1xf32>
    %17 = vector.broadcast %16 : vector<16x1xf32> to vector<16x64xf32>
    %18 = arith.mulf %13, %17 : vector<16x64xf32>
    %c0_5 = arith.constant 0 : index
    %c0_6 = arith.constant 0 : index
    %19 = vector.load %arg3[%c0_5, %c0_6] : memref<1x64xf32, #tpu.memory_space<vmem>>, vector<1x64xf32>
    %20 = vector.broadcast %19 : vector<1x64xf32> to vector<16x64xf32>
    %21 = arith.mulf %18, %20 : vector<16x64xf32>
    %c0_7 = arith.constant 0 : index
    %c0_8 = arith.constant 0 : index
    %22 = vector.load %arg4[%c0_7, %c0_8] : memref<1x64xf32, #tpu.memory_space<vmem>>, vector<1x64xf32>
    %23 = vector.broadcast %22 : vector<1x64xf32> to vector<16x64xf32>
    %24 = arith.addf %21, %23 : vector<16x64xf32>
    %cst_9 = arith.constant 5.000000e-01 : f32
    %25 = vector.broadcast %cst_9 : f32 to vector<16x64xf32>
    %26 = arith.mulf %25, %24 : vector<16x64xf32>
    %cst_10 = arith.constant 4.471500e-02 : f32
    %27 = vector.broadcast %cst_10 : f32 to vector<16x64xf32>
    %28 = arith.mulf %27, %24 : vector<16x64xf32>
    %29 = arith.mulf %28, %24 : vector<16x64xf32>
    %30 = arith.mulf %29, %24 : vector<16x64xf32>
    %31 = arith.addf %24, %30 : vector<16x64xf32>
    %cst_11 = arith.constant 0.797884583 : f32
    %32 = vector.broadcast %cst_11 : f32 to vector<16x64xf32>
    %33 = arith.mulf %32, %31 : vector<16x64xf32>
    %34 = math.tanh %33 : vector<16x64xf32>
    %cst_12 = arith.constant 1.000000e+00 : f32
    %35 = vector.broadcast %cst_12 : f32 to vector<16x64xf32>
    %36 = arith.addf %35, %34 : vector<16x64xf32>
    %37 = arith.mulf %26, %36 : vector<16x64xf32>
    %c0_13 = arith.constant 0 : index
    %c0_14 = arith.constant 0 : index
    %38 = vector.load %arg5[%c0_13, %c0_14] : memref<64x256xf32, #tpu.memory_space<vmem>>, vector<64x256xf32>
    %cst_15 = arith.constant dense<0.000000e+00> : vector<16x256xf32>
    %39 = tpu.matmul %37, %38, %cst_15 {dimension_numbers = #tpu.dot_dimension_numbers<[1], [0], [0], [1], [0, 0, 1, 1], [], []>} : vector<16x64xf32>, vector<64x256xf32>, vector<16x256xf32> -> vector<16x256xf32>
    %c0_16 = arith.constant 0 : index
    %c0_17 = arith.constant 0 : index
    %40 = vector.load %arg6[%c0_16, %c0_17] : memref<1x256xf32, #tpu.memory_space<vmem>>, vector<1x256xf32>
    %41 = vector.broadcast %40 : vector<1x256xf32> to vector<16x256xf32>
    %42 = arith.addf %39, %41 : vector<16x256xf32>
    %c0_18 = arith.constant 0 : index
    %c0_19 = arith.constant 0 : index
    %43 = vector.load %arg7[%c0_18, %c0_19] : memref<16x256xf32, #tpu.memory_space<vmem>>, vector<16x256xf32>
    tpu.vector_store %arg7[%c0_18, %c0_19], %42 {strides = array<i32>} : memref<16x256xf32, #tpu.memory_space<vmem>>, vector<16x256xf32>,
    return
  }
  func.func @transform_0(%arg0: i32, %arg1: i32) -> (i32, i32) {
    %c0_i32 = arith.constant 0 : i32
    %c0_i32_0 = arith.constant 0 : i32
    return %arg0, %c0_i32 : i32, i32
  }
  func.func @transform_1(%arg0: i32, %arg1: i32) -> (i32, i32) {
    %c0_i32 = arith.constant 0 : i32
    %c0_i32_0 = arith.constant 0 : i32
    %c0_i32_1 = arith.constant 0 : i32
    return %c0_i32, %c0_i32_0 : i32, i32
  }
  func.func @transform_2(%arg0: i32, %arg1: i32) -> (i32, i32) {
    %c0_i32 = arith.constant 0 : i32
    %c0_i32_0 = arith.constant 0 : i32
    %c0_i32_1 = arith.constant 0 : i32
    return %c0_i32, %c0_i32_0 : i32, i32
  }
  func.func @transform_3(%arg0: i32, %arg1: i32) -> (i32, i32) {
    %c0_i32 = arith.constant 0 : i32
    %c0_i32_0 = arith.constant 0 : i32
    return %c0_i32, %arg1 : i32, i32
  }
  func.func @transform_4(%arg0: i32, %arg1: i32) -> (i32, i32) {
    %c0_i32 = arith.constant 0 : i32
    %c0_i32_0 = arith.constant 0 : i32
    return %c0_i32, %arg1 : i32, i32
  }
  func.func @transform_5(%arg0: i32, %arg1: i32) -> (i32, i32) {
    %c0_i32 = arith.constant 0 : i32
    return %arg0, %arg1 : i32, i32
  }
}

module attributes {stable_mosaic.version = 11 : i64} {
  func.func @_bigru_kernel(%arg0: i32, %arg1: i32, %arg2: memref<1x8x2x384xf32, #tpu.memory_space<vmem>>, %arg3: memref<1x128x384xf32, #tpu.memory_space<vmem>>, %arg4: memref<1x1x384xf32, #tpu.memory_space<vmem>>, %arg5: memref<1x8x2x128xf32, #tpu.memory_space<vmem>>, %arg6: memref<2x128xf32, #tpu.memory_space<vmem>>) attributes {dimension_semantics = [#tpu.dimension_semantics<parallel>, #tpu.dimension_semantics<arbitrary>], iteration_bounds = array<i64: 2, 1>, scalar_prefetch = 0 : i64, scratch_operands = 1 : i64, tpu.core_type = #tpu.core_type<tc>, window_params = [{transform_indices = @transform_0, window_bounds = array<i64: 1, 8, 2, 384>}, {transform_indices = @transform_1, window_bounds = array<i64: 1, 128, 384>}, {transform_indices = @transform_2, window_bounds = array<i64: 1, 1, 384>}, {transform_indices = @transform_3, window_bounds = array<i64: 1, 8, 2, 128>}]} {
    %c0_i32 = arith.constant 0 : i32
    %0 = arith.cmpi eq, %arg1, %c0_i32 : i32
    %1 = arith.extui %0 : i1 to i32
    %c0_i32_0 = arith.constant 0 : i32
    %2 = arith.cmpi ne, %1, %c0_i32_0 : i32
    scf.if %2 {
      %cst_127 = arith.constant 0.000000e+00 : f32
      %328 = vector.broadcast %cst_127 : f32 to vector<2x128xf32>
      %c0_128 = arith.constant 0 : index
      %c0_129 = arith.constant 0 : index
      %329 = vector.load %arg6[%c0_128, %c0_129] : memref<2x128xf32, #tpu.memory_space<vmem>>, vector<2x128xf32>
      tpu.vector_store %arg6[%c0_128, %c0_129], %328 {strides = array<i32>} : memref<2x128xf32, #tpu.memory_space<vmem>>, vector<2x128xf32>,
    } else {
    }
    %c0 = arith.constant 0 : index
    %c0_1 = arith.constant 0 : index
    %c0_2 = arith.constant 0 : index
    %3 = vector.load %arg3[%c0, %c0_1, %c0_2] : memref<1x128x384xf32, #tpu.memory_space<vmem>>, vector<1x128x384xf32>
    %4 = vector.shape_cast %3 : vector<1x128x384xf32> to vector<128x384xf32>
    %c0_3 = arith.constant 0 : index
    %c0_4 = arith.constant 0 : index
    %c0_5 = arith.constant 0 : index
    %5 = vector.load %arg4[%c0_3, %c0_4, %c0_5] : memref<1x1x384xf32, #tpu.memory_space<vmem>>, vector<1x1x384xf32>
    %6 = vector.shape_cast %5 : vector<1x1x384xf32> to vector<1x384xf32>
    %c1_i32 = arith.constant 1 : i32
    %7 = arith.cmpi eq, %arg0, %c1_i32 : i32
    %c0_i32_6 = arith.constant 0 : i32
    %c7_i32 = arith.constant 7 : i32
    %8 = arith.subi %c7_i32, %c0_i32_6 : i32
    %9 = arith.select %7, %8, %c0_i32_6 : i32
    %c0_7 = arith.constant 0 : index
    %c0_8 = arith.constant 0 : index
    %10 = vector.load %arg6[%c0_7, %c0_8] : memref<2x128xf32, #tpu.memory_space<vmem>>, vector<2x128xf32>
    %cst = arith.constant dense<0.000000e+00> : vector<2x384xf32>
    %11 = tpu.matmul %10, %4, %cst {dimension_numbers = #tpu.dot_dimension_numbers<[1], [0], [0], [1], [0, 0, 1, 1], [], []>} : vector<2x128xf32>, vector<128x384xf32>, vector<2x384xf32> -> vector<2x384xf32>
    %12 = vector.broadcast %6 : vector<1x384xf32> to vector<2x384xf32>
    %13 = arith.addf %11, %12 : vector<2x384xf32>
    %c0_9 = arith.constant 0 : index
    %14 = arith.index_cast %9 : i32 to index
    %c0_10 = arith.constant 0 : index
    %c0_11 = arith.constant 0 : index
    %15 = vector.load %arg2[%c0_9, %14, %c0_10, %c0_11] : memref<1x8x2x384xf32, #tpu.memory_space<vmem>>, vector<1x1x2x384xf32>
    %16 = vector.shape_cast %15 : vector<1x1x2x384xf32> to vector<2x384xf32>
    %17 = vector.extract_strided_slice %16 {offsets = [0, 0], sizes = [2, 128], strides = [1, 1]} : vector<2x384xf32> to vector<2x128xf32>
    %18 = vector.extract_strided_slice %13 {offsets = [0, 0], sizes = [2, 128], strides = [1, 1]} : vector<2x384xf32> to vector<2x128xf32>
    %19 = arith.addf %17, %18 : vector<2x128xf32>
    %20 = arith.negf %19 : vector<2x128xf32>
    %21 = math.exp %20 : vector<2x128xf32>
    %cst_12 = arith.constant 1.000000e+00 : f32
    %22 = vector.broadcast %cst_12 : f32 to vector<2x128xf32>
    %23 = arith.addf %22, %21 : vector<2x128xf32>
    %24 = arith.divf %22, %23 : vector<2x128xf32>
    %25 = vector.extract_strided_slice %16 {offsets = [0, 128], sizes = [2, 128], strides = [1, 1]} : vector<2x384xf32> to vector<2x128xf32>
    %26 = vector.extract_strided_slice %13 {offsets = [0, 128], sizes = [2, 128], strides = [1, 1]} : vector<2x384xf32> to vector<2x128xf32>
    %27 = arith.addf %25, %26 : vector<2x128xf32>
    %28 = arith.negf %27 : vector<2x128xf32>
    %29 = math.exp %28 : vector<2x128xf32>
    %cst_13 = arith.constant 1.000000e+00 : f32
    %30 = vector.broadcast %cst_13 : f32 to vector<2x128xf32>
    %31 = arith.addf %30, %29 : vector<2x128xf32>
    %32 = arith.divf %30, %31 : vector<2x128xf32>
    %33 = vector.extract_strided_slice %16 {offsets = [0, 256], sizes = [2, 128], strides = [1, 1]} : vector<2x384xf32> to vector<2x128xf32>
    %34 = vector.extract_strided_slice %13 {offsets = [0, 256], sizes = [2, 128], strides = [1, 1]} : vector<2x384xf32> to vector<2x128xf32>
    %35 = arith.mulf %24, %34 : vector<2x128xf32>
    %36 = arith.addf %33, %35 : vector<2x128xf32>
    %37 = math.tanh %36 : vector<2x128xf32>
    %cst_14 = arith.constant 1.000000e+00 : f32
    %38 = vector.broadcast %cst_14 : f32 to vector<2x128xf32>
    %39 = arith.subf %38, %32 : vector<2x128xf32>
    %40 = arith.mulf %39, %37 : vector<2x128xf32>
    %41 = arith.mulf %32, %10 : vector<2x128xf32>
    %42 = arith.addf %40, %41 : vector<2x128xf32>
    %c0_15 = arith.constant 0 : index
    %c0_16 = arith.constant 0 : index
    %43 = vector.load %arg6[%c0_15, %c0_16] : memref<2x128xf32, #tpu.memory_space<vmem>>, vector<2x128xf32>
    tpu.vector_store %arg6[%c0_15, %c0_16], %42 {strides = array<i32>} : memref<2x128xf32, #tpu.memory_space<vmem>>, vector<2x128xf32>,
    %c0_17 = arith.constant 0 : index
    %44 = arith.index_cast %9 : i32 to index
    %c0_18 = arith.constant 0 : index
    %c0_19 = arith.constant 0 : index
    %45 = vector.load %arg5[%c0_17, %44, %c0_18, %c0_19] : memref<1x8x2x128xf32, #tpu.memory_space<vmem>>, vector<1x1x2x128xf32>
    %46 = vector.shape_cast %45 : vector<1x1x2x128xf32> to vector<2x128xf32>
    %47 = vector.shape_cast %42 : vector<2x128xf32> to vector<1x1x2x128xf32>
    tpu.vector_store %arg5[%c0_17, %44, %c0_18, %c0_19], %47 {strides = array<i32>} : memref<1x8x2x128xf32, #tpu.memory_space<vmem>>, vector<1x1x2x128xf32>,
    %c1_i32_20 = arith.constant 1 : i32
    %c7_i32_21 = arith.constant 7 : i32
    %48 = arith.subi %c7_i32_21, %c1_i32_20 : i32
    %49 = arith.select %7, %48, %c1_i32_20 : i32
    %c0_22 = arith.constant 0 : index
    %c0_23 = arith.constant 0 : index
    %50 = vector.load %arg6[%c0_22, %c0_23] : memref<2x128xf32, #tpu.memory_space<vmem>>, vector<2x128xf32>
    %cst_24 = arith.constant dense<0.000000e+00> : vector<2x384xf32>
    %51 = tpu.matmul %50, %4, %cst_24 {dimension_numbers = #tpu.dot_dimension_numbers<[1], [0], [0], [1], [0, 0, 1, 1], [], []>} : vector<2x128xf32>, vector<128x384xf32>, vector<2x384xf32> -> vector<2x384xf32>
    %52 = vector.broadcast %6 : vector<1x384xf32> to vector<2x384xf32>
    %53 = arith.addf %51, %52 : vector<2x384xf32>
    %c0_25 = arith.constant 0 : index
    %54 = arith.index_cast %49 : i32 to index
    %c0_26 = arith.constant 0 : index
    %c0_27 = arith.constant 0 : index
    %55 = vector.load %arg2[%c0_25, %54, %c0_26, %c0_27] : memref<1x8x2x384xf32, #tpu.memory_space<vmem>>, vector<1x1x2x384xf32>
    %56 = vector.shape_cast %55 : vector<1x1x2x384xf32> to vector<2x384xf32>
    %57 = vector.extract_strided_slice %56 {offsets = [0, 0], sizes = [2, 128], strides = [1, 1]} : vector<2x384xf32> to vector<2x128xf32>
    %58 = vector.extract_strided_slice %53 {offsets = [0, 0], sizes = [2, 128], strides = [1, 1]} : vector<2x384xf32> to vector<2x128xf32>
    %59 = arith.addf %57, %58 : vector<2x128xf32>
    %60 = arith.negf %59 : vector<2x128xf32>
    %61 = math.exp %60 : vector<2x128xf32>
    %cst_28 = arith.constant 1.000000e+00 : f32
    %62 = vector.broadcast %cst_28 : f32 to vector<2x128xf32>
    %63 = arith.addf %62, %61 : vector<2x128xf32>
    %64 = arith.divf %62, %63 : vector<2x128xf32>
    %65 = vector.extract_strided_slice %56 {offsets = [0, 128], sizes = [2, 128], strides = [1, 1]} : vector<2x384xf32> to vector<2x128xf32>
    %66 = vector.extract_strided_slice %53 {offsets = [0, 128], sizes = [2, 128], strides = [1, 1]} : vector<2x384xf32> to vector<2x128xf32>
    %67 = arith.addf %65, %66 : vector<2x128xf32>
    %68 = arith.negf %67 : vector<2x128xf32>
    %69 = math.exp %68 : vector<2x128xf32>
    %cst_29 = arith.constant 1.000000e+00 : f32
    %70 = vector.broadcast %cst_29 : f32 to vector<2x128xf32>
    %71 = arith.addf %70, %69 : vector<2x128xf32>
    %72 = arith.divf %70, %71 : vector<2x128xf32>
    %73 = vector.extract_strided_slice %56 {offsets = [0, 256], sizes = [2, 128], strides = [1, 1]} : vector<2x384xf32> to vector<2x128xf32>
    %74 = vector.extract_strided_slice %53 {offsets = [0, 256], sizes = [2, 128], strides = [1, 1]} : vector<2x384xf32> to vector<2x128xf32>
    %75 = arith.mulf %64, %74 : vector<2x128xf32>
    %76 = arith.addf %73, %75 : vector<2x128xf32>
    %77 = math.tanh %76 : vector<2x128xf32>
    %cst_30 = arith.constant 1.000000e+00 : f32
    %78 = vector.broadcast %cst_30 : f32 to vector<2x128xf32>
    %79 = arith.subf %78, %72 : vector<2x128xf32>
    %80 = arith.mulf %79, %77 : vector<2x128xf32>
    %81 = arith.mulf %72, %50 : vector<2x128xf32>
    %82 = arith.addf %80, %81 : vector<2x128xf32>
    %c0_31 = arith.constant 0 : index
    %c0_32 = arith.constant 0 : index
    %83 = vector.load %arg6[%c0_31, %c0_32] : memref<2x128xf32, #tpu.memory_space<vmem>>, vector<2x128xf32>
    tpu.vector_store %arg6[%c0_31, %c0_32], %82 {strides = array<i32>} : memref<2x128xf32, #tpu.memory_space<vmem>>, vector<2x128xf32>,
    %c0_33 = arith.constant 0 : index
    %84 = arith.index_cast %49 : i32 to index
    %c0_34 = arith.constant 0 : index
    %c0_35 = arith.constant 0 : index
    %85 = vector.load %arg5[%c0_33, %84, %c0_34, %c0_35] : memref<1x8x2x128xf32, #tpu.memory_space<vmem>>, vector<1x1x2x128xf32>
    %86 = vector.shape_cast %85 : vector<1x1x2x128xf32> to vector<2x128xf32>
    %87 = vector.shape_cast %82 : vector<2x128xf32> to vector<1x1x2x128xf32>
    tpu.vector_store %arg5[%c0_33, %84, %c0_34, %c0_35], %87 {strides = array<i32>} : memref<1x8x2x128xf32, #tpu.memory_space<vmem>>, vector<1x1x2x128xf32>,
    %c2_i32 = arith.constant 2 : i32
    %c7_i32_36 = arith.constant 7 : i32
    %88 = arith.subi %c7_i32_36, %c2_i32 : i32
    %89 = arith.select %7, %88, %c2_i32 : i32
    %c0_37 = arith.constant 0 : index
    %c0_38 = arith.constant 0 : index
    %90 = vector.load %arg6[%c0_37, %c0_38] : memref<2x128xf32, #tpu.memory_space<vmem>>, vector<2x128xf32>
    %cst_39 = arith.constant dense<0.000000e+00> : vector<2x384xf32>
    %91 = tpu.matmul %90, %4, %cst_39 {dimension_numbers = #tpu.dot_dimension_numbers<[1], [0], [0], [1], [0, 0, 1, 1], [], []>} : vector<2x128xf32>, vector<128x384xf32>, vector<2x384xf32> -> vector<2x384xf32>
    %92 = vector.broadcast %6 : vector<1x384xf32> to vector<2x384xf32>
    %93 = arith.addf %91, %92 : vector<2x384xf32>
    %c0_40 = arith.constant 0 : index
    %94 = arith.index_cast %89 : i32 to index
    %c0_41 = arith.constant 0 : index
    %c0_42 = arith.constant 0 : index
    %95 = vector.load %arg2[%c0_40, %94, %c0_41, %c0_42] : memref<1x8x2x384xf32, #tpu.memory_space<vmem>>, vector<1x1x2x384xf32>
    %96 = vector.shape_cast %95 : vector<1x1x2x384xf32> to vector<2x384xf32>
    %97 = vector.extract_strided_slice %96 {offsets = [0, 0], sizes = [2, 128], strides = [1, 1]} : vector<2x384xf32> to vector<2x128xf32>
    %98 = vector.extract_strided_slice %93 {offsets = [0, 0], sizes = [2, 128], strides = [1, 1]} : vector<2x384xf32> to vector<2x128xf32>
    %99 = arith.addf %97, %98 : vector<2x128xf32>
    %100 = arith.negf %99 : vector<2x128xf32>
    %101 = math.exp %100 : vector<2x128xf32>
    %cst_43 = arith.constant 1.000000e+00 : f32
    %102 = vector.broadcast %cst_43 : f32 to vector<2x128xf32>
    %103 = arith.addf %102, %101 : vector<2x128xf32>
    %104 = arith.divf %102, %103 : vector<2x128xf32>
    %105 = vector.extract_strided_slice %96 {offsets = [0, 128], sizes = [2, 128], strides = [1, 1]} : vector<2x384xf32> to vector<2x128xf32>
    %106 = vector.extract_strided_slice %93 {offsets = [0, 128], sizes = [2, 128], strides = [1, 1]} : vector<2x384xf32> to vector<2x128xf32>
    %107 = arith.addf %105, %106 : vector<2x128xf32>
    %108 = arith.negf %107 : vector<2x128xf32>
    %109 = math.exp %108 : vector<2x128xf32>
    %cst_44 = arith.constant 1.000000e+00 : f32
    %110 = vector.broadcast %cst_44 : f32 to vector<2x128xf32>
    %111 = arith.addf %110, %109 : vector<2x128xf32>
    %112 = arith.divf %110, %111 : vector<2x128xf32>
    %113 = vector.extract_strided_slice %96 {offsets = [0, 256], sizes = [2, 128], strides = [1, 1]} : vector<2x384xf32> to vector<2x128xf32>
    %114 = vector.extract_strided_slice %93 {offsets = [0, 256], sizes = [2, 128], strides = [1, 1]} : vector<2x384xf32> to vector<2x128xf32>
    %115 = arith.mulf %104, %114 : vector<2x128xf32>
    %116 = arith.addf %113, %115 : vector<2x128xf32>
    %117 = math.tanh %116 : vector<2x128xf32>
    %cst_45 = arith.constant 1.000000e+00 : f32
    %118 = vector.broadcast %cst_45 : f32 to vector<2x128xf32>
    %119 = arith.subf %118, %112 : vector<2x128xf32>
    %120 = arith.mulf %119, %117 : vector<2x128xf32>
    %121 = arith.mulf %112, %90 : vector<2x128xf32>
    %122 = arith.addf %120, %121 : vector<2x128xf32>
    %c0_46 = arith.constant 0 : index
    %c0_47 = arith.constant 0 : index
    %123 = vector.load %arg6[%c0_46, %c0_47] : memref<2x128xf32, #tpu.memory_space<vmem>>, vector<2x128xf32>
    tpu.vector_store %arg6[%c0_46, %c0_47], %122 {strides = array<i32>} : memref<2x128xf32, #tpu.memory_space<vmem>>, vector<2x128xf32>,
    %c0_48 = arith.constant 0 : index
    %124 = arith.index_cast %89 : i32 to index
    %c0_49 = arith.constant 0 : index
    %c0_50 = arith.constant 0 : index
    %125 = vector.load %arg5[%c0_48, %124, %c0_49, %c0_50] : memref<1x8x2x128xf32, #tpu.memory_space<vmem>>, vector<1x1x2x128xf32>
    %126 = vector.shape_cast %125 : vector<1x1x2x128xf32> to vector<2x128xf32>
    %127 = vector.shape_cast %122 : vector<2x128xf32> to vector<1x1x2x128xf32>
    tpu.vector_store %arg5[%c0_48, %124, %c0_49, %c0_50], %127 {strides = array<i32>} : memref<1x8x2x128xf32, #tpu.memory_space<vmem>>, vector<1x1x2x128xf32>,
    %c3_i32 = arith.constant 3 : i32
    %c7_i32_51 = arith.constant 7 : i32
    %128 = arith.subi %c7_i32_51, %c3_i32 : i32
    %129 = arith.select %7, %128, %c3_i32 : i32
    %c0_52 = arith.constant 0 : index
    %c0_53 = arith.constant 0 : index
    %130 = vector.load %arg6[%c0_52, %c0_53] : memref<2x128xf32, #tpu.memory_space<vmem>>, vector<2x128xf32>
    %cst_54 = arith.constant dense<0.000000e+00> : vector<2x384xf32>
    %131 = tpu.matmul %130, %4, %cst_54 {dimension_numbers = #tpu.dot_dimension_numbers<[1], [0], [0], [1], [0, 0, 1, 1], [], []>} : vector<2x128xf32>, vector<128x384xf32>, vector<2x384xf32> -> vector<2x384xf32>
    %132 = vector.broadcast %6 : vector<1x384xf32> to vector<2x384xf32>
    %133 = arith.addf %131, %132 : vector<2x384xf32>
    %c0_55 = arith.constant 0 : index
    %134 = arith.index_cast %129 : i32 to index
    %c0_56 = arith.constant 0 : index
    %c0_57 = arith.constant 0 : index
    %135 = vector.load %arg2[%c0_55, %134, %c0_56, %c0_57] : memref<1x8x2x384xf32, #tpu.memory_space<vmem>>, vector<1x1x2x384xf32>
    %136 = vector.shape_cast %135 : vector<1x1x2x384xf32> to vector<2x384xf32>
    %137 = vector.extract_strided_slice %136 {offsets = [0, 0], sizes = [2, 128], strides = [1, 1]} : vector<2x384xf32> to vector<2x128xf32>
    %138 = vector.extract_strided_slice %133 {offsets = [0, 0], sizes = [2, 128], strides = [1, 1]} : vector<2x384xf32> to vector<2x128xf32>
    %139 = arith.addf %137, %138 : vector<2x128xf32>
    %140 = arith.negf %139 : vector<2x128xf32>
    %141 = math.exp %140 : vector<2x128xf32>
    %cst_58 = arith.constant 1.000000e+00 : f32
    %142 = vector.broadcast %cst_58 : f32 to vector<2x128xf32>
    %143 = arith.addf %142, %141 : vector<2x128xf32>
    %144 = arith.divf %142, %143 : vector<2x128xf32>
    %145 = vector.extract_strided_slice %136 {offsets = [0, 128], sizes = [2, 128], strides = [1, 1]} : vector<2x384xf32> to vector<2x128xf32>
    %146 = vector.extract_strided_slice %133 {offsets = [0, 128], sizes = [2, 128], strides = [1, 1]} : vector<2x384xf32> to vector<2x128xf32>
    %147 = arith.addf %145, %146 : vector<2x128xf32>
    %148 = arith.negf %147 : vector<2x128xf32>
    %149 = math.exp %148 : vector<2x128xf32>
    %cst_59 = arith.constant 1.000000e+00 : f32
    %150 = vector.broadcast %cst_59 : f32 to vector<2x128xf32>
    %151 = arith.addf %150, %149 : vector<2x128xf32>
    %152 = arith.divf %150, %151 : vector<2x128xf32>
    %153 = vector.extract_strided_slice %136 {offsets = [0, 256], sizes = [2, 128], strides = [1, 1]} : vector<2x384xf32> to vector<2x128xf32>
    %154 = vector.extract_strided_slice %133 {offsets = [0, 256], sizes = [2, 128], strides = [1, 1]} : vector<2x384xf32> to vector<2x128xf32>
    %155 = arith.mulf %144, %154 : vector<2x128xf32>
    %156 = arith.addf %153, %155 : vector<2x128xf32>
    %157 = math.tanh %156 : vector<2x128xf32>
    %cst_60 = arith.constant 1.000000e+00 : f32
    %158 = vector.broadcast %cst_60 : f32 to vector<2x128xf32>
    %159 = arith.subf %158, %152 : vector<2x128xf32>
    %160 = arith.mulf %159, %157 : vector<2x128xf32>
    %161 = arith.mulf %152, %130 : vector<2x128xf32>
    %162 = arith.addf %160, %161 : vector<2x128xf32>
    %c0_61 = arith.constant 0 : index
    %c0_62 = arith.constant 0 : index
    %163 = vector.load %arg6[%c0_61, %c0_62] : memref<2x128xf32, #tpu.memory_space<vmem>>, vector<2x128xf32>
    tpu.vector_store %arg6[%c0_61, %c0_62], %162 {strides = array<i32>} : memref<2x128xf32, #tpu.memory_space<vmem>>, vector<2x128xf32>,
    %c0_63 = arith.constant 0 : index
    %164 = arith.index_cast %129 : i32 to index
    %c0_64 = arith.constant 0 : index
    %c0_65 = arith.constant 0 : index
    %165 = vector.load %arg5[%c0_63, %164, %c0_64, %c0_65] : memref<1x8x2x128xf32, #tpu.memory_space<vmem>>, vector<1x1x2x128xf32>
    %166 = vector.shape_cast %165 : vector<1x1x2x128xf32> to vector<2x128xf32>
    %167 = vector.shape_cast %162 : vector<2x128xf32> to vector<1x1x2x128xf32>
    tpu.vector_store %arg5[%c0_63, %164, %c0_64, %c0_65], %167 {strides = array<i32>} : memref<1x8x2x128xf32, #tpu.memory_space<vmem>>, vector<1x1x2x128xf32>,
    %c4_i32 = arith.constant 4 : i32
    %c7_i32_66 = arith.constant 7 : i32
    %168 = arith.subi %c7_i32_66, %c4_i32 : i32
    %169 = arith.select %7, %168, %c4_i32 : i32
    %c0_67 = arith.constant 0 : index
    %c0_68 = arith.constant 0 : index
    %170 = vector.load %arg6[%c0_67, %c0_68] : memref<2x128xf32, #tpu.memory_space<vmem>>, vector<2x128xf32>
    %cst_69 = arith.constant dense<0.000000e+00> : vector<2x384xf32>
    %171 = tpu.matmul %170, %4, %cst_69 {dimension_numbers = #tpu.dot_dimension_numbers<[1], [0], [0], [1], [0, 0, 1, 1], [], []>} : vector<2x128xf32>, vector<128x384xf32>, vector<2x384xf32> -> vector<2x384xf32>
    %172 = vector.broadcast %6 : vector<1x384xf32> to vector<2x384xf32>
    %173 = arith.addf %171, %172 : vector<2x384xf32>
    %c0_70 = arith.constant 0 : index
    %174 = arith.index_cast %169 : i32 to index
    %c0_71 = arith.constant 0 : index
    %c0_72 = arith.constant 0 : index
    %175 = vector.load %arg2[%c0_70, %174, %c0_71, %c0_72] : memref<1x8x2x384xf32, #tpu.memory_space<vmem>>, vector<1x1x2x384xf32>
    %176 = vector.shape_cast %175 : vector<1x1x2x384xf32> to vector<2x384xf32>
    %177 = vector.extract_strided_slice %176 {offsets = [0, 0], sizes = [2, 128], strides = [1, 1]} : vector<2x384xf32> to vector<2x128xf32>
    %178 = vector.extract_strided_slice %173 {offsets = [0, 0], sizes = [2, 128], strides = [1, 1]} : vector<2x384xf32> to vector<2x128xf32>
    %179 = arith.addf %177, %178 : vector<2x128xf32>
    %180 = arith.negf %179 : vector<2x128xf32>
    %181 = math.exp %180 : vector<2x128xf32>
    %cst_73 = arith.constant 1.000000e+00 : f32
    %182 = vector.broadcast %cst_73 : f32 to vector<2x128xf32>
    %183 = arith.addf %182, %181 : vector<2x128xf32>
    %184 = arith.divf %182, %183 : vector<2x128xf32>
    %185 = vector.extract_strided_slice %176 {offsets = [0, 128], sizes = [2, 128], strides = [1, 1]} : vector<2x384xf32> to vector<2x128xf32>
    %186 = vector.extract_strided_slice %173 {offsets = [0, 128], sizes = [2, 128], strides = [1, 1]} : vector<2x384xf32> to vector<2x128xf32>
    %187 = arith.addf %185, %186 : vector<2x128xf32>
    %188 = arith.negf %187 : vector<2x128xf32>
    %189 = math.exp %188 : vector<2x128xf32>
    %cst_74 = arith.constant 1.000000e+00 : f32
    %190 = vector.broadcast %cst_74 : f32 to vector<2x128xf32>
    %191 = arith.addf %190, %189 : vector<2x128xf32>
    %192 = arith.divf %190, %191 : vector<2x128xf32>
    %193 = vector.extract_strided_slice %176 {offsets = [0, 256], sizes = [2, 128], strides = [1, 1]} : vector<2x384xf32> to vector<2x128xf32>
    %194 = vector.extract_strided_slice %173 {offsets = [0, 256], sizes = [2, 128], strides = [1, 1]} : vector<2x384xf32> to vector<2x128xf32>
    %195 = arith.mulf %184, %194 : vector<2x128xf32>
    %196 = arith.addf %193, %195 : vector<2x128xf32>
    %197 = math.tanh %196 : vector<2x128xf32>
    %cst_75 = arith.constant 1.000000e+00 : f32
    %198 = vector.broadcast %cst_75 : f32 to vector<2x128xf32>
    %199 = arith.subf %198, %192 : vector<2x128xf32>
    %200 = arith.mulf %199, %197 : vector<2x128xf32>
    %201 = arith.mulf %192, %170 : vector<2x128xf32>
    %202 = arith.addf %200, %201 : vector<2x128xf32>
    %c0_76 = arith.constant 0 : index
    %c0_77 = arith.constant 0 : index
    %203 = vector.load %arg6[%c0_76, %c0_77] : memref<2x128xf32, #tpu.memory_space<vmem>>, vector<2x128xf32>
    tpu.vector_store %arg6[%c0_76, %c0_77], %202 {strides = array<i32>} : memref<2x128xf32, #tpu.memory_space<vmem>>, vector<2x128xf32>,
    %c0_78 = arith.constant 0 : index
    %204 = arith.index_cast %169 : i32 to index
    %c0_79 = arith.constant 0 : index
    %c0_80 = arith.constant 0 : index
    %205 = vector.load %arg5[%c0_78, %204, %c0_79, %c0_80] : memref<1x8x2x128xf32, #tpu.memory_space<vmem>>, vector<1x1x2x128xf32>
    %206 = vector.shape_cast %205 : vector<1x1x2x128xf32> to vector<2x128xf32>
    %207 = vector.shape_cast %202 : vector<2x128xf32> to vector<1x1x2x128xf32>
    tpu.vector_store %arg5[%c0_78, %204, %c0_79, %c0_80], %207 {strides = array<i32>} : memref<1x8x2x128xf32, #tpu.memory_space<vmem>>, vector<1x1x2x128xf32>,
    %c5_i32 = arith.constant 5 : i32
    %c7_i32_81 = arith.constant 7 : i32
    %208 = arith.subi %c7_i32_81, %c5_i32 : i32
    %209 = arith.select %7, %208, %c5_i32 : i32
    %c0_82 = arith.constant 0 : index
    %c0_83 = arith.constant 0 : index
    %210 = vector.load %arg6[%c0_82, %c0_83] : memref<2x128xf32, #tpu.memory_space<vmem>>, vector<2x128xf32>
    %cst_84 = arith.constant dense<0.000000e+00> : vector<2x384xf32>
    %211 = tpu.matmul %210, %4, %cst_84 {dimension_numbers = #tpu.dot_dimension_numbers<[1], [0], [0], [1], [0, 0, 1, 1], [], []>} : vector<2x128xf32>, vector<128x384xf32>, vector<2x384xf32> -> vector<2x384xf32>
    %212 = vector.broadcast %6 : vector<1x384xf32> to vector<2x384xf32>
    %213 = arith.addf %211, %212 : vector<2x384xf32>
    %c0_85 = arith.constant 0 : index
    %214 = arith.index_cast %209 : i32 to index
    %c0_86 = arith.constant 0 : index
    %c0_87 = arith.constant 0 : index
    %215 = vector.load %arg2[%c0_85, %214, %c0_86, %c0_87] : memref<1x8x2x384xf32, #tpu.memory_space<vmem>>, vector<1x1x2x384xf32>
    %216 = vector.shape_cast %215 : vector<1x1x2x384xf32> to vector<2x384xf32>
    %217 = vector.extract_strided_slice %216 {offsets = [0, 0], sizes = [2, 128], strides = [1, 1]} : vector<2x384xf32> to vector<2x128xf32>
    %218 = vector.extract_strided_slice %213 {offsets = [0, 0], sizes = [2, 128], strides = [1, 1]} : vector<2x384xf32> to vector<2x128xf32>
    %219 = arith.addf %217, %218 : vector<2x128xf32>
    %220 = arith.negf %219 : vector<2x128xf32>
    %221 = math.exp %220 : vector<2x128xf32>
    %cst_88 = arith.constant 1.000000e+00 : f32
    %222 = vector.broadcast %cst_88 : f32 to vector<2x128xf32>
    %223 = arith.addf %222, %221 : vector<2x128xf32>
    %224 = arith.divf %222, %223 : vector<2x128xf32>
    %225 = vector.extract_strided_slice %216 {offsets = [0, 128], sizes = [2, 128], strides = [1, 1]} : vector<2x384xf32> to vector<2x128xf32>
    %226 = vector.extract_strided_slice %213 {offsets = [0, 128], sizes = [2, 128], strides = [1, 1]} : vector<2x384xf32> to vector<2x128xf32>
    %227 = arith.addf %225, %226 : vector<2x128xf32>
    %228 = arith.negf %227 : vector<2x128xf32>
    %229 = math.exp %228 : vector<2x128xf32>
    %cst_89 = arith.constant 1.000000e+00 : f32
    %230 = vector.broadcast %cst_89 : f32 to vector<2x128xf32>
    %231 = arith.addf %230, %229 : vector<2x128xf32>
    %232 = arith.divf %230, %231 : vector<2x128xf32>
    %233 = vector.extract_strided_slice %216 {offsets = [0, 256], sizes = [2, 128], strides = [1, 1]} : vector<2x384xf32> to vector<2x128xf32>
    %234 = vector.extract_strided_slice %213 {offsets = [0, 256], sizes = [2, 128], strides = [1, 1]} : vector<2x384xf32> to vector<2x128xf32>
    %235 = arith.mulf %224, %234 : vector<2x128xf32>
    %236 = arith.addf %233, %235 : vector<2x128xf32>
    %237 = math.tanh %236 : vector<2x128xf32>
    %cst_90 = arith.constant 1.000000e+00 : f32
    %238 = vector.broadcast %cst_90 : f32 to vector<2x128xf32>
    %239 = arith.subf %238, %232 : vector<2x128xf32>
    %240 = arith.mulf %239, %237 : vector<2x128xf32>
    %241 = arith.mulf %232, %210 : vector<2x128xf32>
    %242 = arith.addf %240, %241 : vector<2x128xf32>
    %c0_91 = arith.constant 0 : index
    %c0_92 = arith.constant 0 : index
    %243 = vector.load %arg6[%c0_91, %c0_92] : memref<2x128xf32, #tpu.memory_space<vmem>>, vector<2x128xf32>
    tpu.vector_store %arg6[%c0_91, %c0_92], %242 {strides = array<i32>} : memref<2x128xf32, #tpu.memory_space<vmem>>, vector<2x128xf32>,
    %c0_93 = arith.constant 0 : index
    %244 = arith.index_cast %209 : i32 to index
    %c0_94 = arith.constant 0 : index
    %c0_95 = arith.constant 0 : index
    %245 = vector.load %arg5[%c0_93, %244, %c0_94, %c0_95] : memref<1x8x2x128xf32, #tpu.memory_space<vmem>>, vector<1x1x2x128xf32>
    %246 = vector.shape_cast %245 : vector<1x1x2x128xf32> to vector<2x128xf32>
    %247 = vector.shape_cast %242 : vector<2x128xf32> to vector<1x1x2x128xf32>
    tpu.vector_store %arg5[%c0_93, %244, %c0_94, %c0_95], %247 {strides = array<i32>} : memref<1x8x2x128xf32, #tpu.memory_space<vmem>>, vector<1x1x2x128xf32>,
    %c6_i32 = arith.constant 6 : i32
    %c7_i32_96 = arith.constant 7 : i32
    %248 = arith.subi %c7_i32_96, %c6_i32 : i32
    %249 = arith.select %7, %248, %c6_i32 : i32
    %c0_97 = arith.constant 0 : index
    %c0_98 = arith.constant 0 : index
    %250 = vector.load %arg6[%c0_97, %c0_98] : memref<2x128xf32, #tpu.memory_space<vmem>>, vector<2x128xf32>
    %cst_99 = arith.constant dense<0.000000e+00> : vector<2x384xf32>
    %251 = tpu.matmul %250, %4, %cst_99 {dimension_numbers = #tpu.dot_dimension_numbers<[1], [0], [0], [1], [0, 0, 1, 1], [], []>} : vector<2x128xf32>, vector<128x384xf32>, vector<2x384xf32> -> vector<2x384xf32>
    %252 = vector.broadcast %6 : vector<1x384xf32> to vector<2x384xf32>
    %253 = arith.addf %251, %252 : vector<2x384xf32>
    %c0_100 = arith.constant 0 : index
    %254 = arith.index_cast %249 : i32 to index
    %c0_101 = arith.constant 0 : index
    %c0_102 = arith.constant 0 : index
    %255 = vector.load %arg2[%c0_100, %254, %c0_101, %c0_102] : memref<1x8x2x384xf32, #tpu.memory_space<vmem>>, vector<1x1x2x384xf32>
    %256 = vector.shape_cast %255 : vector<1x1x2x384xf32> to vector<2x384xf32>
    %257 = vector.extract_strided_slice %256 {offsets = [0, 0], sizes = [2, 128], strides = [1, 1]} : vector<2x384xf32> to vector<2x128xf32>
    %258 = vector.extract_strided_slice %253 {offsets = [0, 0], sizes = [2, 128], strides = [1, 1]} : vector<2x384xf32> to vector<2x128xf32>
    %259 = arith.addf %257, %258 : vector<2x128xf32>
    %260 = arith.negf %259 : vector<2x128xf32>
    %261 = math.exp %260 : vector<2x128xf32>
    %cst_103 = arith.constant 1.000000e+00 : f32
    %262 = vector.broadcast %cst_103 : f32 to vector<2x128xf32>
    %263 = arith.addf %262, %261 : vector<2x128xf32>
    %264 = arith.divf %262, %263 : vector<2x128xf32>
    %265 = vector.extract_strided_slice %256 {offsets = [0, 128], sizes = [2, 128], strides = [1, 1]} : vector<2x384xf32> to vector<2x128xf32>
    %266 = vector.extract_strided_slice %253 {offsets = [0, 128], sizes = [2, 128], strides = [1, 1]} : vector<2x384xf32> to vector<2x128xf32>
    %267 = arith.addf %265, %266 : vector<2x128xf32>
    %268 = arith.negf %267 : vector<2x128xf32>
    %269 = math.exp %268 : vector<2x128xf32>
    %cst_104 = arith.constant 1.000000e+00 : f32
    %270 = vector.broadcast %cst_104 : f32 to vector<2x128xf32>
    %271 = arith.addf %270, %269 : vector<2x128xf32>
    %272 = arith.divf %270, %271 : vector<2x128xf32>
    %273 = vector.extract_strided_slice %256 {offsets = [0, 256], sizes = [2, 128], strides = [1, 1]} : vector<2x384xf32> to vector<2x128xf32>
    %274 = vector.extract_strided_slice %253 {offsets = [0, 256], sizes = [2, 128], strides = [1, 1]} : vector<2x384xf32> to vector<2x128xf32>
    %275 = arith.mulf %264, %274 : vector<2x128xf32>
    %276 = arith.addf %273, %275 : vector<2x128xf32>
    %277 = math.tanh %276 : vector<2x128xf32>
    %cst_105 = arith.constant 1.000000e+00 : f32
    %278 = vector.broadcast %cst_105 : f32 to vector<2x128xf32>
    %279 = arith.subf %278, %272 : vector<2x128xf32>
    %280 = arith.mulf %279, %277 : vector<2x128xf32>
    %281 = arith.mulf %272, %250 : vector<2x128xf32>
    %282 = arith.addf %280, %281 : vector<2x128xf32>
    %c0_106 = arith.constant 0 : index
    %c0_107 = arith.constant 0 : index
    %283 = vector.load %arg6[%c0_106, %c0_107] : memref<2x128xf32, #tpu.memory_space<vmem>>, vector<2x128xf32>
    tpu.vector_store %arg6[%c0_106, %c0_107], %282 {strides = array<i32>} : memref<2x128xf32, #tpu.memory_space<vmem>>, vector<2x128xf32>,
    %c0_108 = arith.constant 0 : index
    %284 = arith.index_cast %249 : i32 to index
    %c0_109 = arith.constant 0 : index
    %c0_110 = arith.constant 0 : index
    %285 = vector.load %arg5[%c0_108, %284, %c0_109, %c0_110] : memref<1x8x2x128xf32, #tpu.memory_space<vmem>>, vector<1x1x2x128xf32>
    %286 = vector.shape_cast %285 : vector<1x1x2x128xf32> to vector<2x128xf32>
    %287 = vector.shape_cast %282 : vector<2x128xf32> to vector<1x1x2x128xf32>
    tpu.vector_store %arg5[%c0_108, %284, %c0_109, %c0_110], %287 {strides = array<i32>} : memref<1x8x2x128xf32, #tpu.memory_space<vmem>>, vector<1x1x2x128xf32>,
    %c7_i32_111 = arith.constant 7 : i32
    %c7_i32_112 = arith.constant 7 : i32
    %288 = arith.subi %c7_i32_112, %c7_i32_111 : i32
    %289 = arith.select %7, %288, %c7_i32_111 : i32
    %c0_113 = arith.constant 0 : index
    %c0_114 = arith.constant 0 : index
    %290 = vector.load %arg6[%c0_113, %c0_114] : memref<2x128xf32, #tpu.memory_space<vmem>>, vector<2x128xf32>
    %cst_115 = arith.constant dense<0.000000e+00> : vector<2x384xf32>
    %291 = tpu.matmul %290, %4, %cst_115 {dimension_numbers = #tpu.dot_dimension_numbers<[1], [0], [0], [1], [0, 0, 1, 1], [], []>} : vector<2x128xf32>, vector<128x384xf32>, vector<2x384xf32> -> vector<2x384xf32>
    %292 = vector.broadcast %6 : vector<1x384xf32> to vector<2x384xf32>
    %293 = arith.addf %291, %292 : vector<2x384xf32>
    %c0_116 = arith.constant 0 : index
    %294 = arith.index_cast %289 : i32 to index
    %c0_117 = arith.constant 0 : index
    %c0_118 = arith.constant 0 : index
    %295 = vector.load %arg2[%c0_116, %294, %c0_117, %c0_118] : memref<1x8x2x384xf32, #tpu.memory_space<vmem>>, vector<1x1x2x384xf32>
    %296 = vector.shape_cast %295 : vector<1x1x2x384xf32> to vector<2x384xf32>
    %297 = vector.extract_strided_slice %296 {offsets = [0, 0], sizes = [2, 128], strides = [1, 1]} : vector<2x384xf32> to vector<2x128xf32>
    %298 = vector.extract_strided_slice %293 {offsets = [0, 0], sizes = [2, 128], strides = [1, 1]} : vector<2x384xf32> to vector<2x128xf32>
    %299 = arith.addf %297, %298 : vector<2x128xf32>
    %300 = arith.negf %299 : vector<2x128xf32>
    %301 = math.exp %300 : vector<2x128xf32>
    %cst_119 = arith.constant 1.000000e+00 : f32
    %302 = vector.broadcast %cst_119 : f32 to vector<2x128xf32>
    %303 = arith.addf %302, %301 : vector<2x128xf32>
    %304 = arith.divf %302, %303 : vector<2x128xf32>
    %305 = vector.extract_strided_slice %296 {offsets = [0, 128], sizes = [2, 128], strides = [1, 1]} : vector<2x384xf32> to vector<2x128xf32>
    %306 = vector.extract_strided_slice %293 {offsets = [0, 128], sizes = [2, 128], strides = [1, 1]} : vector<2x384xf32> to vector<2x128xf32>
    %307 = arith.addf %305, %306 : vector<2x128xf32>
    %308 = arith.negf %307 : vector<2x128xf32>
    %309 = math.exp %308 : vector<2x128xf32>
    %cst_120 = arith.constant 1.000000e+00 : f32
    %310 = vector.broadcast %cst_120 : f32 to vector<2x128xf32>
    %311 = arith.addf %310, %309 : vector<2x128xf32>
    %312 = arith.divf %310, %311 : vector<2x128xf32>
    %313 = vector.extract_strided_slice %296 {offsets = [0, 256], sizes = [2, 128], strides = [1, 1]} : vector<2x384xf32> to vector<2x128xf32>
    %314 = vector.extract_strided_slice %293 {offsets = [0, 256], sizes = [2, 128], strides = [1, 1]} : vector<2x384xf32> to vector<2x128xf32>
    %315 = arith.mulf %304, %314 : vector<2x128xf32>
    %316 = arith.addf %313, %315 : vector<2x128xf32>
    %317 = math.tanh %316 : vector<2x128xf32>
    %cst_121 = arith.constant 1.000000e+00 : f32
    %318 = vector.broadcast %cst_121 : f32 to vector<2x128xf32>
    %319 = arith.subf %318, %312 : vector<2x128xf32>
    %320 = arith.mulf %319, %317 : vector<2x128xf32>
    %321 = arith.mulf %312, %290 : vector<2x128xf32>
    %322 = arith.addf %320, %321 : vector<2x128xf32>
    %c0_122 = arith.constant 0 : index
    %c0_123 = arith.constant 0 : index
    %323 = vector.load %arg6[%c0_122, %c0_123] : memref<2x128xf32, #tpu.memory_space<vmem>>, vector<2x128xf32>
    tpu.vector_store %arg6[%c0_122, %c0_123], %322 {strides = array<i32>} : memref<2x128xf32, #tpu.memory_space<vmem>>, vector<2x128xf32>,
    %c0_124 = arith.constant 0 : index
    %324 = arith.index_cast %289 : i32 to index
    %c0_125 = arith.constant 0 : index
    %c0_126 = arith.constant 0 : index
    %325 = vector.load %arg5[%c0_124, %324, %c0_125, %c0_126] : memref<1x8x2x128xf32, #tpu.memory_space<vmem>>, vector<1x1x2x128xf32>
    %326 = vector.shape_cast %325 : vector<1x1x2x128xf32> to vector<2x128xf32>
    %327 = vector.shape_cast %322 : vector<2x128xf32> to vector<1x1x2x128xf32>
    tpu.vector_store %arg5[%c0_124, %324, %c0_125, %c0_126], %327 {strides = array<i32>} : memref<1x8x2x128xf32, #tpu.memory_space<vmem>>, vector<1x1x2x128xf32>,
    %c8_i32 = arith.constant 8 : i32
    return
  }
  func.func @transform_0(%arg0: i32, %arg1: i32) -> (i32, i32, i32, i32) {
    %c2_i32 = arith.constant 2 : i32
    %0 = arith.muli %c2_i32, %arg1 : i32
    %c0_i32 = arith.constant 0 : i32
    %1 = arith.subi %c0_i32, %0 : i32
    %2 = arith.muli %arg0, %1 : i32
    %3 = arith.addi %arg1, %2 : i32
    %c0_i32_0 = arith.constant 0 : i32
    %c0_i32_1 = arith.constant 0 : i32
    %c0_i32_2 = arith.constant 0 : i32
    return %arg0, %3, %c0_i32_0, %c0_i32_1 : i32, i32, i32, i32
  }
  func.func @transform_1(%arg0: i32, %arg1: i32) -> (i32, i32, i32) {
    %c0_i32 = arith.constant 0 : i32
    %c0_i32_0 = arith.constant 0 : i32
    %c0_i32_1 = arith.constant 0 : i32
    return %arg0, %c0_i32, %c0_i32_0 : i32, i32, i32
  }
  func.func @transform_2(%arg0: i32, %arg1: i32) -> (i32, i32, i32) {
    %c0_i32 = arith.constant 0 : i32
    %c0_i32_0 = arith.constant 0 : i32
    %c0_i32_1 = arith.constant 0 : i32
    return %arg0, %c0_i32, %c0_i32_0 : i32, i32, i32
  }
  func.func @transform_3(%arg0: i32, %arg1: i32) -> (i32, i32, i32, i32) {
    %c2_i32 = arith.constant 2 : i32
    %0 = arith.muli %c2_i32, %arg1 : i32
    %c0_i32 = arith.constant 0 : i32
    %1 = arith.subi %c0_i32, %0 : i32
    %2 = arith.muli %arg0, %1 : i32
    %3 = arith.addi %arg1, %2 : i32
    %c0_i32_0 = arith.constant 0 : i32
    %c0_i32_1 = arith.constant 0 : i32
    %c0_i32_2 = arith.constant 0 : i32
    return %arg0, %3, %c0_i32_0, %c0_i32_1 : i32, i32, i32, i32
  }
}

module attributes {stable_mosaic.version = 11 : i64} {
  func.func @_bigru_kernel(%arg0: i32, %arg1: i32, %arg2: memref<1x2x8x384xf32, #tpu.memory_space<vmem>>, %arg3: memref<1x128x384xf32, #tpu.memory_space<vmem>>, %arg4: memref<1x1x384xf32, #tpu.memory_space<vmem>>, %arg5: memref<1x2x8x128xf32, #tpu.memory_space<vmem>>, %arg6: memref<8x128xf32, #tpu.memory_space<vmem>>) attributes {dimension_semantics = [#tpu.dimension_semantics<parallel>, #tpu.dimension_semantics<arbitrary>], iteration_bounds = array<i64: 2, 1>, scalar_prefetch = 0 : i64, scratch_operands = 1 : i64, tpu.core_type = #tpu.core_type<tc>, window_params = [{transform_indices = @transform_0, window_bounds = array<i64: 1, 2, 8, 384>}, {transform_indices = @transform_1, window_bounds = array<i64: 1, 128, 384>}, {transform_indices = @transform_2, window_bounds = array<i64: 1, 1, 384>}, {transform_indices = @transform_3, window_bounds = array<i64: 1, 2, 8, 128>}]} {
    %c0_i32 = arith.constant 0 : i32
    %0 = arith.cmpi eq, %arg1, %c0_i32 : i32
    %1 = arith.extui %0 : i1 to i32
    %c0_i32_0 = arith.constant 0 : i32
    %2 = arith.cmpi ne, %1, %c0_i32_0 : i32
    scf.if %2 {
      %cst_37 = arith.constant 0.000000e+00 : f32
      %88 = vector.broadcast %cst_37 : f32 to vector<8x128xf32>
      %c0_38 = arith.constant 0 : index
      %c0_39 = arith.constant 0 : index
      %89 = vector.load %arg6[%c0_38, %c0_39] : memref<8x128xf32, #tpu.memory_space<vmem>>, vector<8x128xf32>
      tpu.vector_store %arg6[%c0_38, %c0_39], %88 {strides = array<i32>} : memref<8x128xf32, #tpu.memory_space<vmem>>, vector<8x128xf32>,
    } else {
    }
    %c0 = arith.constant 0 : index
    %c0_1 = arith.constant 0 : index
    %c0_2 = arith.constant 0 : index
    %3 = vector.load %arg3[%c0, %c0_1, %c0_2] : memref<1x128x384xf32, #tpu.memory_space<vmem>>, vector<1x128x384xf32>
    %4 = vector.shape_cast %3 : vector<1x128x384xf32> to vector<128x384xf32>
    %c0_3 = arith.constant 0 : index
    %c0_4 = arith.constant 0 : index
    %c0_5 = arith.constant 0 : index
    %5 = vector.load %arg4[%c0_3, %c0_4, %c0_5] : memref<1x1x384xf32, #tpu.memory_space<vmem>>, vector<1x1x384xf32>
    %6 = vector.shape_cast %5 : vector<1x1x384xf32> to vector<1x384xf32>
    %c1_i32 = arith.constant 1 : i32
    %7 = arith.cmpi eq, %arg0, %c1_i32 : i32
    %c0_i32_6 = arith.constant 0 : i32
    %c1_i32_7 = arith.constant 1 : i32
    %8 = arith.subi %c1_i32_7, %c0_i32_6 : i32
    %9 = arith.select %7, %8, %c0_i32_6 : i32
    %c0_8 = arith.constant 0 : index
    %c0_9 = arith.constant 0 : index
    %10 = vector.load %arg6[%c0_8, %c0_9] : memref<8x128xf32, #tpu.memory_space<vmem>>, vector<8x128xf32>
    %cst = arith.constant dense<0.000000e+00> : vector<8x384xf32>
    %11 = tpu.matmul %10, %4, %cst {dimension_numbers = #tpu.dot_dimension_numbers<[1], [0], [0], [1], [0, 0, 1, 1], [], []>} : vector<8x128xf32>, vector<128x384xf32>, vector<8x384xf32> -> vector<8x384xf32>
    %12 = vector.broadcast %6 : vector<1x384xf32> to vector<8x384xf32>
    %13 = arith.addf %11, %12 : vector<8x384xf32>
    %c0_10 = arith.constant 0 : index
    %14 = arith.index_cast %9 : i32 to index
    %c0_11 = arith.constant 0 : index
    %c0_12 = arith.constant 0 : index
    %15 = vector.load %arg2[%c0_10, %14, %c0_11, %c0_12] : memref<1x2x8x384xf32, #tpu.memory_space<vmem>>, vector<1x1x8x384xf32>
    %16 = vector.shape_cast %15 : vector<1x1x8x384xf32> to vector<8x384xf32>
    %17 = vector.extract_strided_slice %16 {offsets = [0, 0], sizes = [8, 128], strides = [1, 1]} : vector<8x384xf32> to vector<8x128xf32>
    %18 = vector.extract_strided_slice %13 {offsets = [0, 0], sizes = [8, 128], strides = [1, 1]} : vector<8x384xf32> to vector<8x128xf32>
    %19 = arith.addf %17, %18 : vector<8x128xf32>
    %20 = arith.negf %19 : vector<8x128xf32>
    %21 = math.exp %20 : vector<8x128xf32>
    %cst_13 = arith.constant 1.000000e+00 : f32
    %22 = vector.broadcast %cst_13 : f32 to vector<8x128xf32>
    %23 = arith.addf %22, %21 : vector<8x128xf32>
    %24 = arith.divf %22, %23 : vector<8x128xf32>
    %25 = vector.extract_strided_slice %16 {offsets = [0, 128], sizes = [8, 128], strides = [1, 1]} : vector<8x384xf32> to vector<8x128xf32>
    %26 = vector.extract_strided_slice %13 {offsets = [0, 128], sizes = [8, 128], strides = [1, 1]} : vector<8x384xf32> to vector<8x128xf32>
    %27 = arith.addf %25, %26 : vector<8x128xf32>
    %28 = arith.negf %27 : vector<8x128xf32>
    %29 = math.exp %28 : vector<8x128xf32>
    %cst_14 = arith.constant 1.000000e+00 : f32
    %30 = vector.broadcast %cst_14 : f32 to vector<8x128xf32>
    %31 = arith.addf %30, %29 : vector<8x128xf32>
    %32 = arith.divf %30, %31 : vector<8x128xf32>
    %33 = vector.extract_strided_slice %16 {offsets = [0, 256], sizes = [8, 128], strides = [1, 1]} : vector<8x384xf32> to vector<8x128xf32>
    %34 = vector.extract_strided_slice %13 {offsets = [0, 256], sizes = [8, 128], strides = [1, 1]} : vector<8x384xf32> to vector<8x128xf32>
    %35 = arith.mulf %24, %34 : vector<8x128xf32>
    %36 = arith.addf %33, %35 : vector<8x128xf32>
    %37 = math.tanh %36 : vector<8x128xf32>
    %cst_15 = arith.constant 1.000000e+00 : f32
    %38 = vector.broadcast %cst_15 : f32 to vector<8x128xf32>
    %39 = arith.subf %38, %32 : vector<8x128xf32>
    %40 = arith.mulf %39, %37 : vector<8x128xf32>
    %41 = arith.mulf %32, %10 : vector<8x128xf32>
    %42 = arith.addf %40, %41 : vector<8x128xf32>
    %c0_16 = arith.constant 0 : index
    %c0_17 = arith.constant 0 : index
    %43 = vector.load %arg6[%c0_16, %c0_17] : memref<8x128xf32, #tpu.memory_space<vmem>>, vector<8x128xf32>
    tpu.vector_store %arg6[%c0_16, %c0_17], %42 {strides = array<i32>} : memref<8x128xf32, #tpu.memory_space<vmem>>, vector<8x128xf32>,
    %c0_18 = arith.constant 0 : index
    %44 = arith.index_cast %9 : i32 to index
    %c0_19 = arith.constant 0 : index
    %c0_20 = arith.constant 0 : index
    %45 = vector.load %arg5[%c0_18, %44, %c0_19, %c0_20] : memref<1x2x8x128xf32, #tpu.memory_space<vmem>>, vector<1x1x8x128xf32>
    %46 = vector.shape_cast %45 : vector<1x1x8x128xf32> to vector<8x128xf32>
    %47 = vector.shape_cast %42 : vector<8x128xf32> to vector<1x1x8x128xf32>
    tpu.vector_store %arg5[%c0_18, %44, %c0_19, %c0_20], %47 {strides = array<i32>} : memref<1x2x8x128xf32, #tpu.memory_space<vmem>>, vector<1x1x8x128xf32>,
    %c1_i32_21 = arith.constant 1 : i32
    %c1_i32_22 = arith.constant 1 : i32
    %48 = arith.subi %c1_i32_22, %c1_i32_21 : i32
    %49 = arith.select %7, %48, %c1_i32_21 : i32
    %c0_23 = arith.constant 0 : index
    %c0_24 = arith.constant 0 : index
    %50 = vector.load %arg6[%c0_23, %c0_24] : memref<8x128xf32, #tpu.memory_space<vmem>>, vector<8x128xf32>
    %cst_25 = arith.constant dense<0.000000e+00> : vector<8x384xf32>
    %51 = tpu.matmul %50, %4, %cst_25 {dimension_numbers = #tpu.dot_dimension_numbers<[1], [0], [0], [1], [0, 0, 1, 1], [], []>} : vector<8x128xf32>, vector<128x384xf32>, vector<8x384xf32> -> vector<8x384xf32>
    %52 = vector.broadcast %6 : vector<1x384xf32> to vector<8x384xf32>
    %53 = arith.addf %51, %52 : vector<8x384xf32>
    %c0_26 = arith.constant 0 : index
    %54 = arith.index_cast %49 : i32 to index
    %c0_27 = arith.constant 0 : index
    %c0_28 = arith.constant 0 : index
    %55 = vector.load %arg2[%c0_26, %54, %c0_27, %c0_28] : memref<1x2x8x384xf32, #tpu.memory_space<vmem>>, vector<1x1x8x384xf32>
    %56 = vector.shape_cast %55 : vector<1x1x8x384xf32> to vector<8x384xf32>
    %57 = vector.extract_strided_slice %56 {offsets = [0, 0], sizes = [8, 128], strides = [1, 1]} : vector<8x384xf32> to vector<8x128xf32>
    %58 = vector.extract_strided_slice %53 {offsets = [0, 0], sizes = [8, 128], strides = [1, 1]} : vector<8x384xf32> to vector<8x128xf32>
    %59 = arith.addf %57, %58 : vector<8x128xf32>
    %60 = arith.negf %59 : vector<8x128xf32>
    %61 = math.exp %60 : vector<8x128xf32>
    %cst_29 = arith.constant 1.000000e+00 : f32
    %62 = vector.broadcast %cst_29 : f32 to vector<8x128xf32>
    %63 = arith.addf %62, %61 : vector<8x128xf32>
    %64 = arith.divf %62, %63 : vector<8x128xf32>
    %65 = vector.extract_strided_slice %56 {offsets = [0, 128], sizes = [8, 128], strides = [1, 1]} : vector<8x384xf32> to vector<8x128xf32>
    %66 = vector.extract_strided_slice %53 {offsets = [0, 128], sizes = [8, 128], strides = [1, 1]} : vector<8x384xf32> to vector<8x128xf32>
    %67 = arith.addf %65, %66 : vector<8x128xf32>
    %68 = arith.negf %67 : vector<8x128xf32>
    %69 = math.exp %68 : vector<8x128xf32>
    %cst_30 = arith.constant 1.000000e+00 : f32
    %70 = vector.broadcast %cst_30 : f32 to vector<8x128xf32>
    %71 = arith.addf %70, %69 : vector<8x128xf32>
    %72 = arith.divf %70, %71 : vector<8x128xf32>
    %73 = vector.extract_strided_slice %56 {offsets = [0, 256], sizes = [8, 128], strides = [1, 1]} : vector<8x384xf32> to vector<8x128xf32>
    %74 = vector.extract_strided_slice %53 {offsets = [0, 256], sizes = [8, 128], strides = [1, 1]} : vector<8x384xf32> to vector<8x128xf32>
    %75 = arith.mulf %64, %74 : vector<8x128xf32>
    %76 = arith.addf %73, %75 : vector<8x128xf32>
    %77 = math.tanh %76 : vector<8x128xf32>
    %cst_31 = arith.constant 1.000000e+00 : f32
    %78 = vector.broadcast %cst_31 : f32 to vector<8x128xf32>
    %79 = arith.subf %78, %72 : vector<8x128xf32>
    %80 = arith.mulf %79, %77 : vector<8x128xf32>
    %81 = arith.mulf %72, %50 : vector<8x128xf32>
    %82 = arith.addf %80, %81 : vector<8x128xf32>
    %c0_32 = arith.constant 0 : index
    %c0_33 = arith.constant 0 : index
    %83 = vector.load %arg6[%c0_32, %c0_33] : memref<8x128xf32, #tpu.memory_space<vmem>>, vector<8x128xf32>
    tpu.vector_store %arg6[%c0_32, %c0_33], %82 {strides = array<i32>} : memref<8x128xf32, #tpu.memory_space<vmem>>, vector<8x128xf32>,
    %c0_34 = arith.constant 0 : index
    %84 = arith.index_cast %49 : i32 to index
    %c0_35 = arith.constant 0 : index
    %c0_36 = arith.constant 0 : index
    %85 = vector.load %arg5[%c0_34, %84, %c0_35, %c0_36] : memref<1x2x8x128xf32, #tpu.memory_space<vmem>>, vector<1x1x8x128xf32>
    %86 = vector.shape_cast %85 : vector<1x1x8x128xf32> to vector<8x128xf32>
    %87 = vector.shape_cast %82 : vector<8x128xf32> to vector<1x1x8x128xf32>
    tpu.vector_store %arg5[%c0_34, %84, %c0_35, %c0_36], %87 {strides = array<i32>} : memref<1x2x8x128xf32, #tpu.memory_space<vmem>>, vector<1x1x8x128xf32>,
    %c2_i32 = arith.constant 2 : i32
    return
  }
  func.func @transform_0(%arg0: i32, %arg1: i32) -> (i32, i32, i32, i32) {
    %c2_i32 = arith.constant 2 : i32
    %0 = arith.muli %c2_i32, %arg1 : i32
    %c0_i32 = arith.constant 0 : i32
    %1 = arith.subi %c0_i32, %0 : i32
    %2 = arith.muli %arg0, %1 : i32
    %3 = arith.addi %arg1, %2 : i32
    %c0_i32_0 = arith.constant 0 : i32
    %c0_i32_1 = arith.constant 0 : i32
    %c0_i32_2 = arith.constant 0 : i32
    return %arg0, %3, %c0_i32_0, %c0_i32_1 : i32, i32, i32, i32
  }
  func.func @transform_1(%arg0: i32, %arg1: i32) -> (i32, i32, i32) {
    %c0_i32 = arith.constant 0 : i32
    %c0_i32_0 = arith.constant 0 : i32
    %c0_i32_1 = arith.constant 0 : i32
    return %arg0, %c0_i32, %c0_i32_0 : i32, i32, i32
  }
  func.func @transform_2(%arg0: i32, %arg1: i32) -> (i32, i32, i32) {
    %c0_i32 = arith.constant 0 : i32
    %c0_i32_0 = arith.constant 0 : i32
    %c0_i32_1 = arith.constant 0 : i32
    return %arg0, %c0_i32, %c0_i32_0 : i32, i32, i32
  }
  func.func @transform_3(%arg0: i32, %arg1: i32) -> (i32, i32, i32, i32) {
    %c2_i32 = arith.constant 2 : i32
    %0 = arith.muli %c2_i32, %arg1 : i32
    %c0_i32 = arith.constant 0 : i32
    %1 = arith.subi %c0_i32, %0 : i32
    %2 = arith.muli %arg0, %1 : i32
    %3 = arith.addi %arg1, %2 : i32
    %c0_i32_0 = arith.constant 0 : i32
    %c0_i32_1 = arith.constant 0 : i32
    %c0_i32_2 = arith.constant 0 : i32
    return %arg0, %3, %c0_i32_0, %c0_i32_1 : i32, i32, i32, i32
  }
}

module attributes {stable_mosaic.version = 11 : i64} {
  func.func @_mlp_head_kernel(%arg0: i32, %arg1: memref<16x64xf32, #tpu.memory_space<vmem>>, %arg2: memref<64x128xf32, #tpu.memory_space<vmem>>, %arg3: memref<1x128xf32, #tpu.memory_space<vmem>>, %arg4: memref<128x128xf32, #tpu.memory_space<vmem>>, %arg5: memref<1x128xf32, #tpu.memory_space<vmem>>, %arg6: memref<16x128xf32, #tpu.memory_space<vmem>>) attributes {dimension_semantics = [#tpu.dimension_semantics<parallel>], iteration_bounds = array<i64: 1>, scalar_prefetch = 0 : i64, scratch_operands = 0 : i64, tpu.core_type = #tpu.core_type<tc>, window_params = [{transform_indices = @transform_0, window_bounds = array<i64: 16, 64>}, {pipeline_mode = #tpu.pipeline_mode<synchronous>, transform_indices = @transform_1, window_bounds = array<i64: 64, 128>}, {pipeline_mode = #tpu.pipeline_mode<synchronous>, transform_indices = @transform_2, window_bounds = array<i64: 1, 128>}, {pipeline_mode = #tpu.pipeline_mode<synchronous>, transform_indices = @transform_3, window_bounds = array<i64: 128, 128>}, {pipeline_mode = #tpu.pipeline_mode<synchronous>, transform_indices = @transform_4, window_bounds = array<i64: 1, 128>}, {transform_indices = @transform_5, window_bounds = array<i64: 16, 128>}]} {
    %c0 = arith.constant 0 : index
    %c0_0 = arith.constant 0 : index
    %0 = vector.load %arg1[%c0, %c0_0] : memref<16x64xf32, #tpu.memory_space<vmem>>, vector<16x64xf32>
    %c0_1 = arith.constant 0 : index
    %c0_2 = arith.constant 0 : index
    %1 = vector.load %arg2[%c0_1, %c0_2] : memref<64x128xf32, #tpu.memory_space<vmem>>, vector<64x128xf32>
    %cst = arith.constant dense<0.000000e+00> : vector<16x128xf32>
    %2 = tpu.matmul %0, %1, %cst {dimension_numbers = #tpu.dot_dimension_numbers<[1], [0], [0], [1], [0, 0, 1, 1], [], []>} : vector<16x64xf32>, vector<64x128xf32>, vector<16x128xf32> -> vector<16x128xf32>
    %c0_3 = arith.constant 0 : index
    %c0_4 = arith.constant 0 : index
    %3 = vector.load %arg3[%c0_3, %c0_4] : memref<1x128xf32, #tpu.memory_space<vmem>>, vector<1x128xf32>
    %4 = vector.broadcast %3 : vector<1x128xf32> to vector<16x128xf32>
    %5 = arith.addf %2, %4 : vector<16x128xf32>
    %cst_5 = arith.constant 5.000000e-01 : f32
    %6 = vector.broadcast %cst_5 : f32 to vector<16x128xf32>
    %7 = arith.mulf %6, %5 : vector<16x128xf32>
    %cst_6 = arith.constant 4.471500e-02 : f32
    %8 = vector.broadcast %cst_6 : f32 to vector<16x128xf32>
    %9 = arith.mulf %8, %5 : vector<16x128xf32>
    %10 = arith.mulf %9, %5 : vector<16x128xf32>
    %11 = arith.mulf %10, %5 : vector<16x128xf32>
    %12 = arith.addf %5, %11 : vector<16x128xf32>
    %cst_7 = arith.constant 0.797884583 : f32
    %13 = vector.broadcast %cst_7 : f32 to vector<16x128xf32>
    %14 = arith.mulf %13, %12 : vector<16x128xf32>
    %15 = math.tanh %14 : vector<16x128xf32>
    %cst_8 = arith.constant 1.000000e+00 : f32
    %16 = vector.broadcast %cst_8 : f32 to vector<16x128xf32>
    %17 = arith.addf %16, %15 : vector<16x128xf32>
    %18 = arith.mulf %7, %17 : vector<16x128xf32>
    %c0_9 = arith.constant 0 : index
    %c0_10 = arith.constant 0 : index
    %19 = vector.load %arg4[%c0_9, %c0_10] : memref<128x128xf32, #tpu.memory_space<vmem>>, vector<128x128xf32>
    %cst_11 = arith.constant dense<0.000000e+00> : vector<16x128xf32>
    %20 = tpu.matmul %18, %19, %cst_11 {dimension_numbers = #tpu.dot_dimension_numbers<[1], [0], [0], [1], [0, 0, 1, 1], [], []>} : vector<16x128xf32>, vector<128x128xf32>, vector<16x128xf32> -> vector<16x128xf32>
    %c0_12 = arith.constant 0 : index
    %c0_13 = arith.constant 0 : index
    %21 = vector.load %arg5[%c0_12, %c0_13] : memref<1x128xf32, #tpu.memory_space<vmem>>, vector<1x128xf32>
    %22 = vector.broadcast %21 : vector<1x128xf32> to vector<16x128xf32>
    %23 = arith.addf %20, %22 : vector<16x128xf32>
    %c0_14 = arith.constant 0 : index
    %c0_15 = arith.constant 0 : index
    %24 = vector.load %arg6[%c0_14, %c0_15] : memref<16x128xf32, #tpu.memory_space<vmem>>, vector<16x128xf32>
    tpu.vector_store %arg6[%c0_14, %c0_15], %23 {strides = array<i32>} : memref<16x128xf32, #tpu.memory_space<vmem>>, vector<16x128xf32>,
    return
  }
  func.func @transform_0(%arg0: i32) -> (i32, i32) {
    %c0_i32 = arith.constant 0 : i32
    %c0_i32_0 = arith.constant 0 : i32
    return %arg0, %c0_i32 : i32, i32
  }
  func.func @transform_1(%arg0: i32) -> (i32, i32) {
    %c0_i32 = arith.constant 0 : i32
    %c0_i32_0 = arith.constant 0 : i32
    %c0_i32_1 = arith.constant 0 : i32
    return %c0_i32, %c0_i32_0 : i32, i32
  }
  func.func @transform_2(%arg0: i32) -> (i32, i32) {
    %c0_i32 = arith.constant 0 : i32
    %c0_i32_0 = arith.constant 0 : i32
    %c0_i32_1 = arith.constant 0 : i32
    return %c0_i32, %c0_i32_0 : i32, i32
  }
  func.func @transform_3(%arg0: i32) -> (i32, i32) {
    %c0_i32 = arith.constant 0 : i32
    %c0_i32_0 = arith.constant 0 : i32
    %c0_i32_1 = arith.constant 0 : i32
    return %c0_i32, %c0_i32_0 : i32, i32
  }
  func.func @transform_4(%arg0: i32) -> (i32, i32) {
    %c0_i32 = arith.constant 0 : i32
    %c0_i32_0 = arith.constant 0 : i32
    %c0_i32_1 = arith.constant 0 : i32
    return %c0_i32, %c0_i32_0 : i32, i32
  }
  func.func @transform_5(%arg0: i32) -> (i32, i32) {
    %c0_i32 = arith.constant 0 : i32
    %c0_i32_0 = arith.constant 0 : i32
    return %arg0, %c0_i32 : i32, i32
  }
}

</mosaic_0001>

<llo_original>
// kernel: speech_model_forward.15
$region0: #{speech_model_forward.15}
  #allocation0 [shape = 'u32[]', space=smem, size = 0x4, offset = 0x4, fixed_abs, tag = 'smem constant byte address 0x4 - core index']
  #allocation1 [shape = 'u32[144,128]{1,0:T(1,128)}', space=vmem, size = 0x12000, scoped, tag = 'internal scratch']
  #allocation2 [shape = 'f32[128,128]{1,0:T(8,128)}', space=vmem, size = 0x10000, scoped, tag = 'scratch operand']
  %s0 = inlined_call_operand.vmem [shape: f32[128,9], index: 0, kind: input, shape index: {}]
  %s1 = inlined_call_operand.vmem [shape: f32[9,128], index: 1, kind: input, shape index: {}]
  %s2 = inlined_call_operand.vmem [shape: f32[1,128], index: 2, kind: input, shape index: {}]
  %s3 = inlined_call_operand.vmem [shape: f32[128,128], index: 3, kind: output, shape index: {}]
  %s4 = sld [smem:[#allocation0]]
  $region30: #{speech_model_forward.15} parent=0
    _
  %s6 = ssub.s32 1, %s4
  %s7 = scalar_select 0, %s6, %s4
  // Predicated region
  $region2: #{speech_model_forward.15} parent=0 // pred_check
    _
  $region3: #{speech_model_forward.15} parent=0 // pred_check_branch
    %9 = sbr.rel (0) target = $region5
  $region4: #{speech_model_forward.15} parent=0 // pred_region
    _
  $region5: #{speech_model_forward.15} parent=0 // pred_fallthru
    _
  // Predicated region
  $region6: #{speech_model_forward.15} parent=0 // pred_check
    _
  $region7: #{speech_model_forward.15} parent=0 // pred_check_branch
    %11 = sbr.rel (0) target = $region9
  $region8: #{speech_model_forward.15} parent=0 // pred_region
    _
  $region9: #{speech_model_forward.15} parent=0 // pred_fallthru
    _
  // Predicated region
  $region10: #{speech_model_forward.15} parent=0 // pred_check
    _
  $region11: #{speech_model_forward.15} parent=0 // pred_check_branch
    %13 = sbr.rel (0) target = $region13
  $region12: #{speech_model_forward.15} parent=0 // pred_region
    _
  $region13: #{speech_model_forward.15} parent=0 // pred_fallthru
    _
  %p14 = scmp.eq.s32.totalorder 0, 0
  // Predicated region
  $region14: #{speech_model_forward.15} parent=0 // pred_check
    %p15 = pneg %p14
  $region15: #{speech_model_forward.15} parent=0 // pred_check_branch
    %17 = sbr.rel (%p15) target = $region17
  $region16: #{speech_model_forward.15} parent=0 // pred_region
    %18 = vst [vmem:[#allocation2] sm:$0xff] 0.0
    %19 = vst [vmem:[#allocation2 + $0x8] sm:$0xff] 0.0
    %20 = vst [vmem:[#allocation2 + $0x10] sm:$0xff] 0.0
    %21 = vst [vmem:[#allocation2 + $0x18] sm:$0xff] 0.0
    %22 = vst [vmem:[#allocation2 + $0x20] sm:$0xff] 0.0
    %23 = vst [vmem:[#allocation2 + $0x28] sm:$0xff] 0.0
    %24 = vst [vmem:[#allocation2 + $0x30] sm:$0xff] 0.0
    %25 = vst [vmem:[#allocation2 + $0x38] sm:$0xff] 0.0
    %26 = vst [vmem:[#allocation2 + $0x40] sm:$0xff] 0.0
    %27 = vst [vmem:[#allocation2 + $0x48] sm:$0xff] 0.0
    %28 = vst [vmem:[#allocation2 + $0x50] sm:$0xff] 0.0
    %29 = vst [vmem:[#allocation2 + $0x58] sm:$0xff] 0.0
    %30 = vst [vmem:[#allocation2 + $0x60] sm:$0xff] 0.0
    %31 = vst [vmem:[#allocation2 + $0x68] sm:$0xff] 0.0
    %32 = vst [vmem:[#allocation2 + $0x70] sm:$0xff] 0.0
    %33 = vst [vmem:[#allocation2 + $0x78] sm:$0xff] 0.0
  $region17: #{speech_model_forward.15} parent=0 // pred_fallthru
    _
  %v34 = vld [vmem:[#allocation2] sm:$0xff]
  %v35 = vld [vmem:[#allocation2 + $0x8] sm:$0xff]
  %v36 = vld [vmem:[#allocation2 + $0x10] sm:$0xff]
  %v37 = vld [vmem:[#allocation2 + $0x18] sm:$0xff]
  %v38 = vld [vmem:[#allocation2 + $0x20] sm:$0xff]
  %v39 = vld [vmem:[#allocation2 + $0x28] sm:$0xff]
  %v40 = vld [vmem:[#allocation2 + $0x30] sm:$0xff]
  %v41 = vld [vmem:[#allocation2 + $0x38] sm:$0xff]
  %v42 = vld [vmem:[#allocation2 + $0x40] sm:$0xff]
  %v43 = vld [vmem:[#allocation2 + $0x48] sm:$0xff]
  %v44 = vld [vmem:[#allocation2 + $0x50] sm:$0xff]
  %v45 = vld [vmem:[#allocation2 + $0x58] sm:$0xff]
  %v46 = vld [vmem:[#allocation2 + $0x60] sm:$0xff]
  %v47 = vld [vmem:[#allocation2 + $0x68] sm:$0xff]
  %v48 = vld [vmem:[#allocation2 + $0x70] sm:$0xff]
  %v49 = vld [vmem:[#allocation2 + $0x78] sm:$0xff]
  %v50 = vld [vmem:[%s0] sm:$0xff]
  %v51 = vld [vmem:[%s0 + $0x8] sm:$0xff]
  %v52 = vld [vmem:[%s0 + $0x10] sm:$0xff]
  %v53 = vld [vmem:[%s0 + $0x18] sm:$0xff]
  %v54 = vld [vmem:[%s0 + $0x20] sm:$0xff]
  %v55 = vld [vmem:[%s0 + $0x28] sm:$0xff]
  %v56 = vld [vmem:[%s0 + $0x30] sm:$0xff]
  %v57 = vld [vmem:[%s0 + $0x38] sm:$0xff]
  %v58 = vld [vmem:[%s0 + $0x40] sm:$0xff]
  %v59 = vld [vmem:[%s0 + $0x48] sm:$0xff]
  %v60 = vld [vmem:[%s0 + $0x50] sm:$0xff]
  %v61 = vld [vmem:[%s0 + $0x58] sm:$0xff]
  %v62 = vld [vmem:[%s0 + $0x60] sm:$0xff]
  %v63 = vld [vmem:[%s0 + $0x68] sm:$0xff]
  %v64 = vld [vmem:[%s0 + $0x70] sm:$0xff]
  %v65 = vld [vmem:[%s0 + $0x78] sm:$0xff]
  %v66 = vld [vmem:[%s1] sm:$0xff]
  %v67 = vld [vmem:[%s1 + $0x8] sm:$0x1]
  %vm68 = vcmask 72704
  %v70 = vsel %vm68, %v50, 0
  %v73 = vsel %vm68, %v51, 0
  %v76 = vsel %vm68, %v52, 0
  %v79 = vsel %vm68, %v53, 0
  %v82 = vsel %vm68, %v54, 0
  %v85 = vsel %vm68, %v55, 0
  %v88 = vsel %vm68, %v56, 0
  %v91 = vsel %vm68, %v57, 0
  %v94 = vsel %vm68, %v58, 0
  %v97 = vsel %vm68, %v59, 0
  %v100 = vsel %vm68, %v60, 0
  %v103 = vsel %vm68, %v61, 0
  %v106 = vsel %vm68, %v62, 0
  %v109 = vsel %vm68, %v63, 0
  %v112 = vsel %vm68, %v64, 0
  %v115 = vsel %vm68, %v65, 0
  %vm117 = vcmask 1040384
  %v119 = vsel %vm117, %v67, 0
  %121 = vmatprep.subr.mxu0 0.0
  %122 = vmatpush1.msra.mxu0 0.0
  %123 = vmatprep.subr.mxu0 0.0
  %124 = vmatpush1.msra.mxu0 0.0
  %125 = vmatprep.subr.mxu0 0.0
  %126 = vmatpush1.msra.mxu0 0.0
  %127 = vmatprep.subr.mxu0 0.0
  %128 = vmatpush1.msra.mxu0 0.0
  %129 = vmatprep.subr.mxu0 0.0
  %130 = vmatpush1.msra.mxu0 0.0
  %131 = vmatprep.subr.mxu0 0.0
  %132 = vmatpush1.msra.mxu0 0.0
  %133 = vmatprep.subr.mxu0 0.0
  %134 = vmatpush1.msra.mxu0 0.0
  %135 = vmatprep.subr.mxu0 0.0
  %136 = vmatpush1.msra.mxu0 0.0
  %137 = vmatprep.subr.mxu0 0.0
  %138 = vmatpush1.msra.mxu0 0.0
  %139 = vmatprep.subr.mxu0 0.0
  %140 = vmatpush1.msra.mxu0 0.0
  %141 = vmatprep.subr.mxu0 0.0
  %142 = vmatpush1.msra.mxu0 0.0
  %143 = vmatprep.subr.mxu0 0.0
  %144 = vmatpush1.msra.mxu0 0.0
  %145 = vmatprep.subr.mxu0 0.0
  %146 = vmatpush1.msra.mxu0 0.0
  %147 = vmatprep.subr.mxu0 0.0
  %148 = vmatpush1.msra.mxu0 0.0
  %149 = vmatprep.subr.mxu0 0.0
  %150 = vmatpush1.msra.mxu0 %v119
  %151 = vmatprep.subr.mxu0 0.0
  %152 = vmatpush1.msra.mxu0 %v66
  %153 = vmatprep.subr.mxu0 0.0
  %154 = vmatpush2.msra.mxu0 0.0
  %155 = vmatprep.subr.mxu0 0.0
  %156 = vmatpush2.msra.mxu0 0.0
  %157 = vmatprep.subr.mxu0 0.0
  %158 = vmatpush2.msra.mxu0 0.0
  %159 = vmatprep.subr.mxu0 0.0
  %160 = vmatpush2.msra.mxu0 0.0
  %161 = vmatprep.subr.mxu0 0.0
  %162 = vmatpush2.msra.mxu0 0.0
  %163 = vmatprep.subr.mxu0 0.0
  %164 = vmatpush2.msra.mxu0 0.0
  %165 = vmatprep.subr.mxu0 0.0
  %166 = vmatpush2.msra.mxu0 0.0
  %167 = vmatprep.subr.mxu0 0.0
  %168 = vmatpush2.msra.mxu0 0.0
  %169 = vmatprep.subr.mxu0 0.0
  %170 = vmatpush2.msra.mxu0 0.0
  %171 = vmatprep.subr.mxu0 0.0
  %172 = vmatpush2.msra.mxu0 0.0
  %173 = vmatprep.subr.mxu0 0.0
  %174 = vmatpush2.msra.mxu0 0.0
  %175 = vmatprep.subr.mxu0 0.0
  %176 = vmatpush2.msra.mxu0 0.0
  %177 = vmatprep.subr.mxu0 0.0
  %178 = vmatpush2.msra.mxu0 0.0
  %179 = vmatprep.subr.mxu0 0.0
  %180 = vmatpush2.msra.mxu0 0.0
  %181 = vmatprep.subr.mxu0 0.0
  %182 = vmatpush2.msra.mxu0 0.0
  %183 = vmatprep.subr.mxu0 0.0
  %184 = vmatpush2.msra.mxu0 0.0
  %185 = vmatprep.mubr.f32.mxu0 0.0
  %186 = vmatmul.mubr.f32.gmra.mxu0 %v70
  %v187 = vpop.f32.mrf.mxu0
  %v188 = vadd.f32 0.0, %v187
  %v189 = vpop.f32.mrf.mxu0
  %190 = vmatprep.mubr.f32.mxu0 0.0
  %191 = vmatmul.mubr.f32.gmra.mxu0 %v73
  %v192 = vpop.f32.mrf.mxu0
  %v193 = vadd.f32 0.0, %v192
  %v194 = vpop.f32.mrf.mxu0
  %195 = vmatprep.mubr.f32.mxu0 0.0
  %196 = vmatmul.mubr.f32.gmra.mxu0 %v76
  %v197 = vpop.f32.mrf.mxu0
  %v198 = vadd.f32 0.0, %v197
  %v199 = vpop.f32.mrf.mxu0
  %200 = vmatprep.mubr.f32.mxu0 0.0
  %201 = vmatmul.mubr.f32.gmra.mxu0 %v79
  %v202 = vpop.f32.mrf.mxu0
  %v203 = vadd.f32 0.0, %v202
  %v204 = vpop.f32.mrf.mxu0
  %205 = vmatprep.mubr.f32.mxu0 0.0
  %206 = vmatmul.mubr.f32.gmra.mxu0 %v82
  %v207 = vpop.f32.mrf.mxu0
  %v208 = vadd.f32 0.0, %v207
  %v209 = vpop.f32.mrf.mxu0
  %210 = vmatprep.mubr.f32.mxu0 0.0
  %211 = vmatmul.mubr.f32.gmra.mxu0 %v85
  %v212 = vpop.f32.mrf.mxu0
  %v213 = vadd.f32 0.0, %v212
  %v214 = vpop.f32.mrf.mxu0
  %215 = vmatprep.mubr.f32.mxu0 0.0
  %216 = vmatmul.mubr.f32.gmra.mxu0 %v88
  %v217 = vpop.f32.mrf.mxu0
  %v218 = vadd.f32 0.0, %v217
  %v219 = vpop.f32.mrf.mxu0
  %220 = vmatprep.mubr.f32.mxu0 0.0
  %221 = vmatmul.mubr.f32.gmra.mxu0 %v91
  %v222 = vpop.f32.mrf.mxu0
  %v223 = vadd.f32 0.0, %v222
  %v224 = vpop.f32.mrf.mxu0
  %225 = vmatprep.mubr.f32.mxu0 0.0
  %226 = vmatmul.mubr.f32.gmra.mxu0 %v94
  %v227 = vpop.f32.mrf.mxu0
  %v228 = vadd.f32 0.0, %v227
  %v229 = vpop.f32.mrf.mxu0
  %230 = vmatprep.mubr.f32.mxu0 0.0
  %231 = vmatmul.mubr.f32.gmra.mxu0 %v97
  %v232 = vpop.f32.mrf.mxu0
  %v233 = vadd.f32 0.0, %v232
  %v234 = vpop.f32.mrf.mxu0
  %235 = vmatprep.mubr.f32.mxu0 0.0
  %236 = vmatmul.mubr.f32.gmra.mxu0 %v100
  %v237 = vpop.f32.mrf.mxu0
  %v238 = vadd.f32 0.0, %v237
  %v239 = vpop.f32.mrf.mxu0
  %240 = vmatprep.mubr.f32.mxu0 0.0
  %241 = vmatmul.mubr.f32.gmra.mxu0 %v103
  %v242 = vpop.f32.mrf.mxu0
  %v243 = vadd.f32 0.0, %v242
  %v244 = vpop.f32.mrf.mxu0
  %245 = vmatprep.mubr.f32.mxu0 0.0
  %246 = vmatmul.mubr.f32.gmra.mxu0 %v106
  %v247 = vpop.f32.mrf.mxu0
  %v248 = vadd.f32 0.0, %v247
  %v249 = vpop.f32.mrf.mxu0
  %250 = vmatprep.mubr.f32.mxu0 0.0
  %251 = vmatmul.mubr.f32.gmra.mxu0 %v109
  %v252 = vpop.f32.mrf.mxu0
  %v253 = vadd.f32 0.0, %v252
  %v254 = vpop.f32.mrf.mxu0
  %255 = vmatprep.mubr.f32.mxu0 0.0
  %256 = vmatmul.mubr.f32.gmra.mxu0 %v112
  %v257 = vpop.f32.mrf.mxu0
  %v258 = vadd.f32 0.0, %v257
  %v259 = vpop.f32.mrf.mxu0
  %260 = vmatprep.mubr.f32.mxu0 0.0
  %261 = vmatmul.mubr.f32.gmra.mxu0 %v115
  %v262 = vpop.f32.mrf.mxu0
  %v263 = vadd.f32 0.0, %v262
  %v264 = vpop.f32.mrf.mxu0
  %265 = vdwg.mxu0
  %v266 = vadd.f32 %v34, %v188
  %v267 = vadd.f32 %v35, %v193
  %v268 = vadd.f32 %v36, %v198
  %v269 = vadd.f32 %v37, %v203
  %v270 = vadd.f32 %v38, %v208
  %v271 = vadd.f32 %v39, %v213
  %v272 = vadd.f32 %v40, %v218
  %v273 = vadd.f32 %v41, %v223
  %v274 = vadd.f32 %v42, %v228
  %v275 = vadd.f32 %v43, %v233
  %v276 = vadd.f32 %v44, %v238
  %v277 = vadd.f32 %v45, %v243
  %v278 = vadd.f32 %v46, %v248
  %v279 = vadd.f32 %v47, %v253
  %v280 = vadd.f32 %v48, %v258
  %v281 = vadd.f32 %v49, %v263
  %282 = vst [vmem:[#allocation2] sm:$0xff] %v266
  %283 = vst [vmem:[#allocation2 + $0x8] sm:$0xff] %v267
  %284 = vst [vmem:[#allocation2 + $0x10] sm:$0xff] %v268
  %285 = vst [vmem:[#allocation2 + $0x18] sm:$0xff] %v269
  %286 = vst [vmem:[#allocation2 + $0x20] sm:$0xff] %v270
  %287 = vst [vmem:[#allocation2 + $0x28] sm:$0xff] %v271
  %288 = vst [vmem:[#allocation2 + $0x30] sm:$0xff] %v272
  %289 = vst [vmem:[#allocation2 + $0x38] sm:$0xff] %v273
  %290 = vst [vmem:[#allocation2 + $0x40] sm:$0xff] %v274
  %291 = vst [vmem:[#allocation2 + $0x48] sm:$0xff] %v275
  %292 = vst [vmem:[#allocation2 + $0x50] sm:$0xff] %v276
  %293 = vst [vmem:[#allocation2 + $0x58] sm:$0xff] %v277
  %294 = vst [vmem:[#allocation2 + $0x60] sm:$0xff] %v278
  %295 = vst [vmem:[#allocation2 + $0x68] sm:$0xff] %v279
  %296 = vst [vmem:[#allocation2 + $0x70] sm:$0xff] %v280
  %297 = vst [vmem:[#allocation2 + $0x78] sm:$0xff] %v281
  // Predicated region
  $region18: #{speech_model_forward.15} parent=0 // pred_check
    %p298 = pneg %p14
  $region19: #{speech_model_forward.15} parent=0 // pred_check_branch
    %300 = sbr.rel (%p298) target = $region21
  $region20: #{speech_model_forward.15} parent=0 // pred_region
    %v301 = vld [vmem:[#allocation2] sm:$0xff]
    %v302 = vld [vmem:[#allocation2 + $0x8] sm:$0xff]
    %v303 = vld [vmem:[#allocation2 + $0x10] sm:$0xff]
    %v304 = vld [vmem:[#allocation2 + $0x18] sm:$0xff]
    %v305 = vld [vmem:[#allocation2 + $0x20] sm:$0xff]
    %v306 = vld [vmem:[#allocation2 + $0x28] sm:$0xff]
    %v307 = vld [vmem:[#allocation2 + $0x30] sm:$0xff]
    %v308 = vld [vmem:[#allocation2 + $0x38] sm:$0xff]
    %v309 = vld [vmem:[#allocation2 + $0x40] sm:$0xff]
    %v310 = vld [vmem:[#allocation2 + $0x48] sm:$0xff]
    %v311 = vld [vmem:[#allocation2 + $0x50] sm:$0xff]
    %v312 = vld [vmem:[#allocation2 + $0x58] sm:$0xff]
    %v313 = vld [vmem:[#allocation2 + $0x60] sm:$0xff]
    %v314 = vld [vmem:[#allocation2 + $0x68] sm:$0xff]
    %v315 = vld [vmem:[#allocation2 + $0x70] sm:$0xff]
    %v316 = vld [vmem:[#allocation2 + $0x78] sm:$0xff]
    %v317 = vld [vmem:[%s2] sm:$0x1]
    %v319 = vlaneseq
    %v320 = vshrl.u32 %v319, 7
    %v321 = vsub.s32 0, %v320
    %v322 = vrot.slane %v317, %v321
    %v324 = vadd.f32 %v301, %v322
    %v325 = vadd.f32 %v302, %v322
    %v326 = vadd.f32 %v303, %v322
    %v327 = vadd.f32 %v304, %v322
    %v328 = vadd.f32 %v305, %v322
    %v329 = vadd.f32 %v306, %v322
    %v330 = vadd.f32 %v307, %v322
    %v331 = vadd.f32 %v308, %v322
    %v332 = vadd.f32 %v309, %v322
    %v333 = vadd.f32 %v310, %v322
    %v334 = vadd.f32 %v311, %v322
    %v335 = vadd.f32 %v312, %v322
    %v336 = vadd.f32 %v313, %v322
    %v337 = vadd.f32 %v314, %v322
    %v338 = vadd.f32 %v315, %v322
    %v339 = vadd.f32 %v316, %v322
    %340 = vst [vmem:[%s3] sm:$0xff] %v324
    %341 = vst [vmem:[%s3 + $0x8] sm:$0xff] %v325
    %342 = vst [vmem:[%s3 + $0x10] sm:$0xff] %v326
    %343 = vst [vmem:[%s3 + $0x18] sm:$0xff] %v327
    %344 = vst [vmem:[%s3 + $0x20] sm:$0xff] %v328
    %345 = vst [vmem:[%s3 + $0x28] sm:$0xff] %v329
    %346 = vst [vmem:[%s3 + $0x30] sm:$0xff] %v330
    %347 = vst [vmem:[%s3 + $0x38] sm:$0xff] %v331
    %348 = vst [vmem:[%s3 + $0x40] sm:$0xff] %v332
    %349 = vst [vmem:[%s3 + $0x48] sm:$0xff] %v333
    %350 = vst [vmem:[%s3 + $0x50] sm:$0xff] %v334
    %351 = vst [vmem:[%s3 + $0x58] sm:$0xff] %v335
    %352 = vst [vmem:[%s3 + $0x60] sm:$0xff] %v336
    %353 = vst [vmem:[%s3 + $0x68] sm:$0xff] %v337
    %354 = vst [vmem:[%s3 + $0x70] sm:$0xff] %v338
    %355 = vst [vmem:[%s3 + $0x78] sm:$0xff] %v339
  $region21: #{speech_model_forward.15} parent=0 // pred_fallthru
    _
  // Predicated region
  $region22: #{speech_model_forward.15} parent=0 // pred_check
    _
  $region23: #{speech_model_forward.15} parent=0 // pred_check_branch
    %357 = sbr.rel (0) target = $region25
  $region24: #{speech_model_forward.15} parent=0 // pred_region
    _
  $region25: #{speech_model_forward.15} parent=0 // pred_fallthru
    _
  // Predicated region
  $region26: #{speech_model_forward.15} parent=0 // pred_check
    _
  $region27: #{speech_model_forward.15} parent=0 // pred_check_branch
    %359 = sbr.rel (0) target = $region29
  $region28: #{speech_model_forward.15} parent=0 // pred_region
    _
  $region29: #{speech_model_forward.15} parent=0 // pred_fallthru
    _

// kernel: speech_model_forward.16
$region0: #{speech_model_forward.16}
  #allocation0 [shape = 'u32[]', space=smem, size = 0x4, offset = 0x4, fixed_abs, tag = 'smem constant byte address 0x4 - core index']
  #allocation1 [shape = 'u32[144,128]{1,0:T(1,128)}', space=vmem, size = 0x12000, scoped, tag = 'internal scratch']
  %s0 = inlined_call_operand.vmem [shape: f32[512,8], index: 0, kind: input, shape index: {}]
  %s1 = inlined_call_operand.hbm [shape: f32[1,8], index: 1, kind: input, shape index: {}]
  %s2 = inlined_call_operand.hbm [shape: f32[1,8], index: 2, kind: input, shape index: {}]
  %s3 = inlined_call_operand.vmem [shape: f32[512,8], index: 3, kind: output, shape index: {}]
  %s4 = sld [smem:[#allocation0]]
  $region30: #{speech_model_forward.16} parent=0
    _
  %s6 = ssub.s32 1, %s4
  %s7 = scalar_select 0, %s6, %s4
  $region1: #{speech_model_forward.16} parent=0
    #allocation2 [shape = 'u8[512]{0}', space=vmem, size = 0x400, scoped, tag = 'input window, operand 1, single buffered']
    #allocation3 [shape = 's32[1]{0}', space=sflag, size = 0x4, scoped, tag = 'scoped memory for speech_model_forward.16']
    #allocation4 [shape = 'u8[512]{0}', space=vmem, size = 0x400, scoped, tag = 'input window, operand 2, single buffered']
    #allocation5 [shape = 's32[1]{0}', space=sflag, size = 0x4, scoped, tag = 'scoped memory for speech_model_forward.16']
    %8 = vsyncpa [#allocation3], 0
    %9 = vsyncpa [#allocation5], 0
    // Predicated region
    $region2: #{speech_model_forward.16} parent=1 // pred_check
      _
    $region3: #{speech_model_forward.16} parent=1 // pred_check_branch
      %11 = sbr.rel (0) target = $region5
    $region4: #{speech_model_forward.16} parent=1 // pred_region
      _
    $region5: #{speech_model_forward.16} parent=1 // pred_fallthru
      _
    // Predicated region
    $region6: #{speech_model_forward.16} parent=1 // pred_check
      _
    $region7: #{speech_model_forward.16} parent=1 // pred_check_branch
      %13 = sbr.rel (0) target = $region9
    $region8: #{speech_model_forward.16} parent=1 // pred_region
      %s15 = ssub.s32 16, 16
      %16 = vsyncadd [#allocation3], %s15
      %s18 = sshll.u32 [#allocation2], 4
      %s19 = int_to_ptr.vmem [resolvable:$true] %s18
      %21 = dma.hbm_to_vmem [thread:$0]  %s1, 16, %s19, [#allocation3]
    $region9: #{speech_model_forward.16} parent=1 // pred_fallthru
      _
    // Predicated region
    $region10: #{speech_model_forward.16} parent=1 // pred_check
      _
    $region11: #{speech_model_forward.16} parent=1 // pred_check_branch
      %23 = sbr.rel (0) target = $region13
    $region12: #{speech_model_forward.16} parent=1 // pred_region
      %s25 = ssub.s32 16, 16
      %26 = vsyncadd [#allocation5], %s25
      %s28 = sshll.u32 [#allocation4], 4
      %s29 = int_to_ptr.vmem [resolvable:$true] %s28
      %31 = dma.hbm_to_vmem [thread:$0]  %s2, 16, %s29, [#allocation5]
    $region13: #{speech_model_forward.16} parent=1 // pred_fallthru
      _
    // Predicated region
    $region14: #{speech_model_forward.16} parent=1 // pred_check
      _
    $region15: #{speech_model_forward.16} parent=1 // pred_check_branch
      %33 = sbr.rel (0) target = $region17
    $region16: #{speech_model_forward.16} parent=1 // pred_region
      %34 = dma.done [#allocation3], 16
    $region17: #{speech_model_forward.16} parent=1 // pred_fallthru
      _
    // Predicated region
    $region18: #{speech_model_forward.16} parent=1 // pred_check
      _
    $region19: #{speech_model_forward.16} parent=1 // pred_check_branch
      %36 = sbr.rel (0) target = $region21
    $region20: #{speech_model_forward.16} parent=1 // pred_region
      %37 = dma.done [#allocation5], 16
    $region21: #{speech_model_forward.16} parent=1 // pred_fallthru
      _
    %v38 = vld [vmem:[%s0] sm:$0xff]
    %v39 = vld [vmem:[%s0 + $0x8] sm:$0xff]
    %v40 = vld [vmem:[%s0 + $0x10] sm:$0xff]
    %v41 = vld [vmem:[%s0 + $0x18] sm:$0xff]
    %v42 = vld [vmem:[%s0 + $0x20] sm:$0xff]
    %v43 = vld [vmem:[%s0 + $0x28] sm:$0xff]
    %v44 = vld [vmem:[%s0 + $0x30] sm:$0xff]
    %v45 = vld [vmem:[%s0 + $0x38] sm:$0xff]
    %v46 = vld [vmem:[%s0 + $0x40] sm:$0xff]
    %v47 = vld [vmem:[%s0 + $0x48] sm:$0xff]
    %v48 = vld [vmem:[%s0 + $0x50] sm:$0xff]
    %v49 = vld [vmem:[%s0 + $0x58] sm:$0xff]
    %v50 = vld [vmem:[%s0 + $0x60] sm:$0xff]
    %v51 = vld [vmem:[%s0 + $0x68] sm:$0xff]
    %v52 = vld [vmem:[%s0 + $0x70] sm:$0xff]
    %v53 = vld [vmem:[%s0 + $0x78] sm:$0xff]
    %v54 = vld [vmem:[%s0 + $0x80] sm:$0xff]
    %v55 = vld [vmem:[%s0 + $0x88] sm:$0xff]
    %v56 = vld [vmem:[%s0 + $0x90] sm:$0xff]
    %v57 = vld [vmem:[%s0 + $0x98] sm:$0xff]
    %v58 = vld [vmem:[%s0 + $0xa0] sm:$0xff]
    %v59 = vld [vmem:[%s0 + $0xa8] sm:$0xff]
    %v60 = vld [vmem:[%s0 + $0xb0] sm:$0xff]
    %v61 = vld [vmem:[%s0 + $0xb8] sm:$0xff]
    %v62 = vld [vmem:[%s0 + $0xc0] sm:$0xff]
    %v63 = vld [vmem:[%s0 + $0xc8] sm:$0xff]
    %v64 = vld [vmem:[%s0 + $0xd0] sm:$0xff]
    %v65 = vld [vmem:[%s0 + $0xd8] sm:$0xff]
    %v66 = vld [vmem:[%s0 + $0xe0] sm:$0xff]
    %v67 = vld [vmem:[%s0 + $0xe8] sm:$0xff]
    %v68 = vld [vmem:[%s0 + $0xf0] sm:$0xff]
    %v69 = vld [vmem:[%s0 + $0xf8] sm:$0xff]
    %v70 = vld [vmem:[%s0 + $0x100] sm:$0xff]
    %v71 = vld [vmem:[%s0 + $0x108] sm:$0xff]
    %v72 = vld [vmem:[%s0 + $0x110] sm:$0xff]
    %v73 = vld [vmem:[%s0 + $0x118] sm:$0xff]
    %v74 = vld [vmem:[%s0 + $0x120] sm:$0xff]
    %v75 = vld [vmem:[%s0 + $0x128] sm:$0xff]
    %v76 = vld [vmem:[%s0 + $0x130] sm:$0xff]
    %v77 = vld [vmem:[%s0 + $0x138] sm:$0xff]
    %v78 = vld [vmem:[%s0 + $0x140] sm:$0xff]
    %v79 = vld [vmem:[%s0 + $0x148] sm:$0xff]
    %v80 = vld [vmem:[%s0 + $0x150] sm:$0xff]
    %v81 = vld [vmem:[%s0 + $0x158] sm:$0xff]
    %v82 = vld [vmem:[%s0 + $0x160] sm:$0xff]
    %v83 = vld [vmem:[%s0 + $0x168] sm:$0xff]
    %v84 = vld [vmem:[%s0 + $0x170] sm:$0xff]
    %v85 = vld [vmem:[%s0 + $0x178] sm:$0xff]
    %v86 = vld [vmem:[%s0 + $0x180] sm:$0xff]
    %v87 = vld [vmem:[%s0 + $0x188] sm:$0xff]
    %v88 = vld [vmem:[%s0 + $0x190] sm:$0xff]
    %v89 = vld [vmem:[%s0 + $0x198] sm:$0xff]
    %v90 = vld [vmem:[%s0 + $0x1a0] sm:$0xff]
    %v91 = vld [vmem:[%s0 + $0x1a8] sm:$0xff]
    %v92 = vld [vmem:[%s0 + $0x1b0] sm:$0xff]
    %v93 = vld [vmem:[%s0 + $0x1b8] sm:$0xff]
    %v94 = vld [vmem:[%s0 + $0x1c0] sm:$0xff]
    %v95 = vld [vmem:[%s0 + $0x1c8] sm:$0xff]
    %v96 = vld [vmem:[%s0 + $0x1d0] sm:$0xff]
    %v97 = vld [vmem:[%s0 + $0x1d8] sm:$0xff]
    %v98 = vld [vmem:[%s0 + $0x1e0] sm:$0xff]
    %v99 = vld [vmem:[%s0 + $0x1e8] sm:$0xff]
    %v100 = vld [vmem:[%s0 + $0x1f0] sm:$0xff]
    %v101 = vld [vmem:[%s0 + $0x1f8] sm:$0xff]
    %vm102 = vcmask 64512
    %v103 = vsel %vm102, %v38, 0.0
    %104 = vadd.xlane.f32.xlu0 %v103
    %v105 = vpop.xlane.xlu0 %104
    %v106 = vsel %vm102, %v39, 0.0
    %107 = vadd.xlane.f32.xlu0 %v106
    %v108 = vpop.xlane.xlu0 %107
    %v109 = vsel %vm102, %v40, 0.0
    %110 = vadd.xlane.f32.xlu0 %v109
    %v111 = vpop.xlane.xlu0 %110
    %v112 = vsel %vm102, %v41, 0.0
    %113 = vadd.xlane.f32.xlu0 %v112
    %v114 = vpop.xlane.xlu0 %113
    %v115 = vsel %vm102, %v42, 0.0
    %116 = vadd.xlane.f32.xlu0 %v115
    %v117 = vpop.xlane.xlu0 %116
    %v118 = vsel %vm102, %v43, 0.0
    %119 = vadd.xlane.f32.xlu0 %v118
    %v120 = vpop.xlane.xlu0 %119
    %v121 = vsel %vm102, %v44, 0.0
    %122 = vadd.xlane.f32.xlu0 %v121
    %v123 = vpop.xlane.xlu0 %122
    %v124 = vsel %vm102, %v45, 0.0
    %125 = vadd.xlane.f32.xlu0 %v124
    %v126 = vpop.xlane.xlu0 %125
    %v127 = vsel %vm102, %v46, 0.0
    %128 = vadd.xlane.f32.xlu0 %v127
    %v129 = vpop.xlane.xlu0 %128
    %v130 = vsel %vm102, %v47, 0.0
    %131 = vadd.xlane.f32.xlu0 %v130
    %v132 = vpop.xlane.xlu0 %131
    %v133 = vsel %vm102, %v48, 0.0
    %134 = vadd.xlane.f32.xlu0 %v133
    %v135 = vpop.xlane.xlu0 %134
    %v136 = vsel %vm102, %v49, 0.0
    %137 = vadd.xlane.f32.xlu0 %v136
    %v138 = vpop.xlane.xlu0 %137
    %v139 = vsel %vm102, %v50, 0.0
    %140 = vadd.xlane.f32.xlu0 %v139
    %v141 = vpop.xlane.xlu0 %140
    %v142 = vsel %vm102, %v51, 0.0
    %143 = vadd.xlane.f32.xlu0 %v142
    %v144 = vpop.xlane.xlu0 %143
    %v145 = vsel %vm102, %v52, 0.0
    %146 = vadd.xlane.f32.xlu0 %v145
    %v147 = vpop.xlane.xlu0 %146
    %v148 = vsel %vm102, %v53, 0.0
    %149 = vadd.xlane.f32.xlu0 %v148
    %v150 = vpop.xlane.xlu0 %149
    %v151 = vsel %vm102, %v54, 0.0
    %152 = vadd.xlane.f32.xlu0 %v151
    %v153 = vpop.xlane.xlu0 %152
    %v154 = vsel %vm102, %v55, 0.0
    %155 = vadd.xlane.f32.xlu0 %v154
    %v156 = vpop.xlane.xlu0 %155
    %v157 = vsel %vm102, %v56, 0.0
    %158 = vadd.xlane.f32.xlu0 %v157
    %v159 = vpop.xlane.xlu0 %158
    %v160 = vsel %vm102, %v57, 0.0
    %161 = vadd.xlane.f32.xlu0 %v160
    %v162 = vpop.xlane.xlu0 %161
    %v163 = vsel %vm102, %v58, 0.0
    %164 = vadd.xlane.f32.xlu0 %v163
    %v165 = vpop.xlane.xlu0 %164
    %v166 = vsel %vm102, %v59, 0.0
    %167 = vadd.xlane.f32.xlu0 %v166
    %v168 = vpop.xlane.xlu0 %167
    %v169 = vsel %vm102, %v60, 0.0
    %170 = vadd.xlane.f32.xlu0 %v169
    %v171 = vpop.xlane.xlu0 %170
    %v172 = vsel %vm102, %v61, 0.0
    %173 = vadd.xlane.f32.xlu0 %v172
    %v174 = vpop.xlane.xlu0 %173
    %v175 = vsel %vm102, %v62, 0.0
    %176 = vadd.xlane.f32.xlu0 %v175
    %v177 = vpop.xlane.xlu0 %176
    %v178 = vsel %vm102, %v63, 0.0
    %179 = vadd.xlane.f32.xlu0 %v178
    %v180 = vpop.xlane.xlu0 %179
    %v181 = vsel %vm102, %v64, 0.0
    %182 = vadd.xlane.f32.xlu0 %v181
    %v183 = vpop.xlane.xlu0 %182
    %v184 = vsel %vm102, %v65, 0.0
    %185 = vadd.xlane.f32.xlu0 %v184
    %v186 = vpop.xlane.xlu0 %185
    %v187 = vsel %vm102, %v66, 0.0
    %188 = vadd.xlane.f32.xlu0 %v187
    %v189 = vpop.xlane.xlu0 %188
    %v190 = vsel %vm102, %v67, 0.0
    %191 = vadd.xlane.f32.xlu0 %v190
    %v192 = vpop.xlane.xlu0 %191
    %v193 = vsel %vm102, %v68, 0.0
    %194 = vadd.xlane.f32.xlu0 %v193
    %v195 = vpop.xlane.xlu0 %194
    %v196 = vsel %vm102, %v69, 0.0
    %197 = vadd.xlane.f32.xlu0 %v196
    %v198 = vpop.xlane.xlu0 %197
    %v199 = vsel %vm102, %v70, 0.0
    %200 = vadd.xlane.f32.xlu0 %v199
    %v201 = vpop.xlane.xlu0 %200
    %v202 = vsel %vm102, %v71, 0.0
    %203 = vadd.xlane.f32.xlu0 %v202
    %v204 = vpop.xlane.xlu0 %203
    %v205 = vsel %vm102, %v72, 0.0
    %206 = vadd.xlane.f32.xlu0 %v205
    %v207 = vpop.xlane.xlu0 %206
    %v208 = vsel %vm102, %v73, 0.0
    %209 = vadd.xlane.f32.xlu0 %v208
    %v210 = vpop.xlane.xlu0 %209
    %v211 = vsel %vm102, %v74, 0.0
    %212 = vadd.xlane.f32.xlu0 %v211
    %v213 = vpop.xlane.xlu0 %212
    %v214 = vsel %vm102, %v75, 0.0
    %215 = vadd.xlane.f32.xlu0 %v214
    %v216 = vpop.xlane.xlu0 %215
    %v217 = vsel %vm102, %v76, 0.0
    %218 = vadd.xlane.f32.xlu0 %v217
    %v219 = vpop.xlane.xlu0 %218
    %v220 = vsel %vm102, %v77, 0.0
    %221 = vadd.xlane.f32.xlu0 %v220
    %v222 = vpop.xlane.xlu0 %221
    %v223 = vsel %vm102, %v78, 0.0
    %224 = vadd.xlane.f32.xlu0 %v223
    %v225 = vpop.xlane.xlu0 %224
    %v226 = vsel %vm102, %v79, 0.0
    %227 = vadd.xlane.f32.xlu0 %v226
    %v228 = vpop.xlane.xlu0 %227
    %v229 = vsel %vm102, %v80, 0.0
    %230 = vadd.xlane.f32.xlu0 %v229
    %v231 = vpop.xlane.xlu0 %230
    %v232 = vsel %vm102, %v81, 0.0
    %233 = vadd.xlane.f32.xlu0 %v232
    %v234 = vpop.xlane.xlu0 %233
    %v235 = vsel %vm102, %v82, 0.0
    %236 = vadd.xlane.f32.xlu0 %v235
    %v237 = vpop.xlane.xlu0 %236
    %v238 = vsel %vm102, %v83, 0.0
    %239 = vadd.xlane.f32.xlu0 %v238
    %v240 = vpop.xlane.xlu0 %239
    %v241 = vsel %vm102, %v84, 0.0
    %242 = vadd.xlane.f32.xlu0 %v241
    %v243 = vpop.xlane.xlu0 %242
    %v244 = vsel %vm102, %v85, 0.0
    %245 = vadd.xlane.f32.xlu0 %v244
    %v246 = vpop.xlane.xlu0 %245
    %v247 = vsel %vm102, %v86, 0.0
    %248 = vadd.xlane.f32.xlu0 %v247
    %v249 = vpop.xlane.xlu0 %248
    %v250 = vsel %vm102, %v87, 0.0
    %251 = vadd.xlane.f32.xlu0 %v250
    %v252 = vpop.xlane.xlu0 %251
    %v253 = vsel %vm102, %v88, 0.0
    %254 = vadd.xlane.f32.xlu0 %v253
    %v255 = vpop.xlane.xlu0 %254
    %v256 = vsel %vm102, %v89, 0.0
    %257 = vadd.xlane.f32.xlu0 %v256
    %v258 = vpop.xlane.xlu0 %257
    %v259 = vsel %vm102, %v90, 0.0
    %260 = vadd.xlane.f32.xlu0 %v259
    %v261 = vpop.xlane.xlu0 %260
    %v262 = vsel %vm102, %v91, 0.0
    %263 = vadd.xlane.f32.xlu0 %v262
    %v264 = vpop.xlane.xlu0 %263
    %v265 = vsel %vm102, %v92, 0.0
    %266 = vadd.xlane.f32.xlu0 %v265
    %v267 = vpop.xlane.xlu0 %266
    %v268 = vsel %vm102, %v93, 0.0
    %269 = vadd.xlane.f32.xlu0 %v268
    %v270 = vpop.xlane.xlu0 %269
    %v271 = vsel %vm102, %v94, 0.0
    %272 = vadd.xlane.f32.xlu0 %v271
    %v273 = vpop.xlane.xlu0 %272
    %v274 = vsel %vm102, %v95, 0.0
    %275 = vadd.xlane.f32.xlu0 %v274
    %v276 = vpop.xlane.xlu0 %275
    %v277 = vsel %vm102, %v96, 0.0
    %278 = vadd.xlane.f32.xlu0 %v277
    %v279 = vpop.xlane.xlu0 %278
    %v280 = vsel %vm102, %v97, 0.0
    %281 = vadd.xlane.f32.xlu0 %v280
    %v282 = vpop.xlane.xlu0 %281
    %v283 = vsel %vm102, %v98, 0.0
    %284 = vadd.xlane.f32.xlu0 %v283
    %v285 = vpop.xlane.xlu0 %284
    %v286 = vsel %vm102, %v99, 0.0
    %287 = vadd.xlane.f32.xlu0 %v286
    %v288 = vpop.xlane.xlu0 %287
    %v289 = vsel %vm102, %v100, 0.0
    %290 = vadd.xlane.f32.xlu0 %v289
    %v291 = vpop.xlane.xlu0 %290
    %v292 = vsel %vm102, %v101, 0.0
    %293 = vadd.xlane.f32.xlu0 %v292
    %v294 = vpop.xlane.xlu0 %293
    %v295 = vrcp.pop 8.0
    %v296 = vmul.f32 %v105, %v295
    %v297 = vmul.f32 %v108, %v295
    %v298 = vmul.f32 %v111, %v295
    %v299 = vmul.f32 %v114, %v295
    %v300 = vmul.f32 %v117, %v295
    %v301 = vmul.f32 %v120, %v295
    %v302 = vmul.f32 %v123, %v295
    %v303 = vmul.f32 %v126, %v295
    %v304 = vmul.f32 %v129, %v295
    %v305 = vmul.f32 %v132, %v295
    %v306 = vmul.f32 %v135, %v295
    %v307 = vmul.f32 %v138, %v295
    %v308 = vmul.f32 %v141, %v295
    %v309 = vmul.f32 %v144, %v295
    %v310 = vmul.f32 %v147, %v295
    %v311 = vmul.f32 %v150, %v295
    %v312 = vmul.f32 %v153, %v295
    %v313 = vmul.f32 %v156, %v295
    %v314 = vmul.f32 %v159, %v295
    %v315 = vmul.f32 %v162, %v295
    %v316 = vmul.f32 %v165, %v295
    %v317 = vmul.f32 %v168, %v295
    %v318 = vmul.f32 %v171, %v295
    %v319 = vmul.f32 %v174, %v295
    %v320 = vmul.f32 %v177, %v295
    %v321 = vmul.f32 %v180, %v295
    %v322 = vmul.f32 %v183, %v295
    %v323 = vmul.f32 %v186, %v295
    %v324 = vmul.f32 %v189, %v295
    %v325 = vmul.f32 %v192, %v295
    %v326 = vmul.f32 %v195, %v295
    %v327 = vmul.f32 %v198, %v295
    %v328 = vmul.f32 %v201, %v295
    %v329 = vmul.f32 %v204, %v295
    %v330 = vmul.f32 %v207, %v295
    %v331 = vmul.f32 %v210, %v295
    %v332 = vmul.f32 %v213, %v295
    %v333 = vmul.f32 %v216, %v295
    %v334 = vmul.f32 %v219, %v295
    %v335 = vmul.f32 %v222, %v295
    %v336 = vmul.f32 %v225, %v295
    %v337 = vmul.f32 %v228, %v295
    %v338 = vmul.f32 %v231, %v295
    %v339 = vmul.f32 %v234, %v295
    %v340 = vmul.f32 %v237, %v295
    %v341 = vmul.f32 %v240, %v295
    %v342 = vmul.f32 %v243, %v295
    %v343 = vmul.f32 %v246, %v295
    %v344 = vmul.f32 %v249, %v295
    %v345 = vmul.f32 %v252, %v295
    %v346 = vmul.f32 %v255, %v295
    %v347 = vmul.f32 %v258, %v295
    %v348 = vmul.f32 %v261, %v295
    %v349 = vmul.f32 %v264, %v295
    %v350 = vmul.f32 %v267, %v295
    %v351 = vmul.f32 %v270, %v295
    %v352 = vmul.f32 %v273, %v295
    %v353 = vmul.f32 %v276, %v295
    %v354 = vmul.f32 %v279, %v295
    %v355 = vmul.f32 %v282, %v295
    %v356 = vmul.f32 %v285, %v295
    %v357 = vmul.f32 %v288, %v295
    %v358 = vmul.f32 %v291, %v295
    %v359 = vmul.f32 %v294, %v295
    %v360 = vsub.f32 %v38, %v296
    %v361 = vsub.f32 %v39, %v297
    %v362 = vsub.f32 %v40, %v298
    %v363 = vsub.f32 %v41, %v299
    %v364 = vsub.f32 %v42, %v300
    %v365 = vsub.f32 %v43, %v301
    %v366 = vsub.f32 %v44, %v302
    %v367 = vsub.f32 %v45, %v303
    %v368 = vsub.f32 %v46, %v304
    %v369 = vsub.f32 %v47, %v305
    %v370 = vsub.f32 %v48, %v306
    %v371 = vsub.f32 %v49, %v307
    %v372 = vsub.f32 %v50, %v308
    %v373 = vsub.f32 %v51, %v309
    %v374 = vsub.f32 %v52, %v310
    %v375 = vsub.f32 %v53, %v311
    %v376 = vsub.f32 %v54, %v312
    %v377 = vsub.f32 %v55, %v313
    %v378 = vsub.f32 %v56, %v314
    %v379 = vsub.f32 %v57, %v315
    %v380 = vsub.f32 %v58, %v316
    %v381 = vsub.f32 %v59, %v317
    %v382 = vsub.f32 %v60, %v318
    %v383 = vsub.f32 %v61, %v319
    %v384 = vsub.f32 %v62, %v320
    %v385 = vsub.f32 %v63, %v321
    %v386 = vsub.f32 %v64, %v322
    %v387 = vsub.f32 %v65, %v323
    %v388 = vsub.f32 %v66, %v324
    %v389 = vsub.f32 %v67, %v325
    %v390 = vsub.f32 %v68, %v326
    %v391 = vsub.f32 %v69, %v327
    %v392 = vsub.f32 %v70, %v328
    %v393 = vsub.f32 %v71, %v329
    %v394 = vsub.f32 %v72, %v330
    %v395 = vsub.f32 %v73, %v331
    %v396 = vsub.f32 %v74, %v332
    %v397 = vsub.f32 %v75, %v333
    %v398 = vsub.f32 %v76, %v334
    %v399 = vsub.f32 %v77, %v335
    %v400 = vsub.f32 %v78, %v336
    %v401 = vsub.f32 %v79, %v337
    %v402 = vsub.f32 %v80, %v338
    %v403 = vsub.f32 %v81, %v339
    %v404 = vsub.f32 %v82, %v340
    %v405 = vsub.f32 %v83, %v341
    %v406 = vsub.f32 %v84, %v342
    %v407 = vsub.f32 %v85, %v343
    %v408 = vsub.f32 %v86, %v344
    %v409 = vsub.f32 %v87, %v345
    %v410 = vsub.f32 %v88, %v346
    %v411 = vsub.f32 %v89, %v347
    %v412 = vsub.f32 %v90, %v348
    %v413 = vsub.f32 %v91, %v349
    %v414 = vsub.f32 %v92, %v350
    %v415 = vsub.f32 %v93, %v351
    %v416 = vsub.f32 %v94, %v352
    %v417 = vsub.f32 %v95, %v353
    %v418 = vsub.f32 %v96, %v354
    %v419 = vsub.f32 %v97, %v355
    %v420 = vsub.f32 %v98, %v356
    %v421 = vsub.f32 %v99, %v357
    %v422 = vsub.f32 %v100, %v358
    %v423 = vsub.f32 %v101, %v359
    %v424 = vmul.f32 %v360, %v360
    %v425 = vmul.f32 %v361, %v361
    %v426 = vmul.f32 %v362, %v362
    %v427 = vmul.f32 %v363, %v363
    %v428 = vmul.f32 %v364, %v364
    %v429 = vmul.f32 %v365, %v365
    %v430 = vmul.f32 %v366, %v366
    %v431 = vmul.f32 %v367, %v367
    %v432 = vmul.f32 %v368, %v368
    %v433 = vmul.f32 %v369, %v369
    %v434 = vmul.f32 %v370, %v370
    %v435 = vmul.f32 %v371, %v371
    %v436 = vmul.f32 %v372, %v372
    %v437 = vmul.f32 %v373, %v373
    %v438 = vmul.f32 %v374, %v374
    %v439 = vmul.f32 %v375, %v375
    %v440 = vmul.f32 %v376, %v376
    %v441 = vmul.f32 %v377, %v377
    %v442 = vmul.f32 %v378, %v378
    %v443 = vmul.f32 %v379, %v379
    %v444 = vmul.f32 %v380, %v380
    %v445 = vmul.f32 %v381, %v381
    %v446 = vmul.f32 %v382, %v382
    %v447 = vmul.f32 %v383, %v383
    %v448 = vmul.f32 %v384, %v384
    %v449 = vmul.f32 %v385, %v385
    %v450 = vmul.f32 %v386, %v386
    %v451 = vmul.f32 %v387, %v387
    %v452 = vmul.f32 %v388, %v388
    %v453 = vmul.f32 %v389, %v389
    %v454 = vmul.f32 %v390, %v390
    %v455 = vmul.f32 %v391, %v391
    %v456 = vmul.f32 %v392, %v392
    %v457 = vmul.f32 %v393, %v393
    %v458 = vmul.f32 %v394, %v394
    %v459 = vmul.f32 %v395, %v395
    %v460 = vmul.f32 %v396, %v396
    %v461 = vmul.f32 %v397, %v397
    %v462 = vmul.f32 %v398, %v398
    %v463 = vmul.f32 %v399, %v399
    %v464 = vmul.f32 %v400, %v400
    %v465 = vmul.f32 %v401, %v401
    %v466 = vmul.f32 %v402, %v402
    %v467 = vmul.f32 %v403, %v403
    %v468 = vmul.f32 %v404, %v404
    %v469 = vmul.f32 %v405, %v405
    %v470 = vmul.f32 %v406, %v406
    %v471 = vmul.f32 %v407, %v407
    %v472 = vmul.f32 %v408, %v408
    %v473 = vmul.f32 %v409, %v409
    %v474 = vmul.f32 %v410, %v410
    %v475 = vmul.f32 %v411, %v411
    %v476 = vmul.f32 %v412, %v412
    %v477 = vmul.f32 %v413, %v413
    %v478 = vmul.f32 %v414, %v414
    %v479 = vmul.f32 %v415, %v415
    %v480 = vmul.f32 %v416, %v416
    %v481 = vmul.f32 %v417, %v417
    %v482 = vmul.f32 %v418, %v418
    %v483 = vmul.f32 %v419, %v419
    %v484 = vmul.f32 %v420, %v420
    %v485 = vmul.f32 %v421, %v421
    %v486 = vmul.f32 %v422, %v422
    %v487 = vmul.f32 %v423, %v423
    %v488 = vsel %vm102, %v424, 0.0
    %489 = vadd.xlane.f32.xlu0 %v488
    %v490 = vpop.xlane.xlu0 %489
    %v491 = vsel %vm102, %v425, 0.0
    %492 = vadd.xlane.f32.xlu0 %v491
    %v493 = vpop.xlane.xlu0 %492
    %v494 = vsel %vm102, %v426, 0.0
    %495 = vadd.xlane.f32.xlu0 %v494
    %v496 = vpop.xlane.xlu0 %495
    %v497 = vsel %vm102, %v427, 0.0
    %498 = vadd.xlane.f32.xlu0 %v497
    %v499 = vpop.xlane.xlu0 %498
    %v500 = vsel %vm102, %v428, 0.0
    %501 = vadd.xlane.f32.xlu0 %v500
    %v502 = vpop.xlane.xlu0 %501
    %v503 = vsel %vm102, %v429, 0.0
    %504 = vadd.xlane.f32.xlu0 %v503
    %v505 = vpop.xlane.xlu0 %504
    %v506 = vsel %vm102, %v430, 0.0
    %507 = vadd.xlane.f32.xlu0 %v506
    %v508 = vpop.xlane.xlu0 %507
    %v509 = vsel %vm102, %v431, 0.0
    %510 = vadd.xlane.f32.xlu0 %v509
    %v511 = vpop.xlane.xlu0 %510
    %v512 = vsel %vm102, %v432, 0.0
    %513 = vadd.xlane.f32.xlu0 %v512
    %v514 = vpop.xlane.xlu0 %513
    %v515 = vsel %vm102, %v433, 0.0
    %516 = vadd.xlane.f32.xlu0 %v515
    %v517 = vpop.xlane.xlu0 %516
    %v518 = vsel %vm102, %v434, 0.0
    %519 = vadd.xlane.f32.xlu0 %v518
    %v520 = vpop.xlane.xlu0 %519
    %v521 = vsel %vm102, %v435, 0.0
    %522 = vadd.xlane.f32.xlu0 %v521
    %v523 = vpop.xlane.xlu0 %522
    %v524 = vsel %vm102, %v436, 0.0
    %525 = vadd.xlane.f32.xlu0 %v524
    %v526 = vpop.xlane.xlu0 %525
    %v527 = vsel %vm102, %v437, 0.0
    %528 = vadd.xlane.f32.xlu0 %v527
    %v529 = vpop.xlane.xlu0 %528
    %v530 = vsel %vm102, %v438, 0.0
    %531 = vadd.xlane.f32.xlu0 %v530
    %v532 = vpop.xlane.xlu0 %531
    %v533 = vsel %vm102, %v439, 0.0
    %534 = vadd.xlane.f32.xlu0 %v533
    %v535 = vpop.xlane.xlu0 %534
    %v536 = vsel %vm102, %v440, 0.0
    %537 = vadd.xlane.f32.xlu0 %v536
    %v538 = vpop.xlane.xlu0 %537
    %v539 = vsel %vm102, %v441, 0.0
    %540 = vadd.xlane.f32.xlu0 %v539
    %v541 = vpop.xlane.xlu0 %540
    %v542 = vsel %vm102, %v442, 0.0
    %543 = vadd.xlane.f32.xlu0 %v542
    %v544 = vpop.xlane.xlu0 %543
    %v545 = vsel %vm102, %v443, 0.0
    %546 = vadd.xlane.f32.xlu0 %v545
    %v547 = vpop.xlane.xlu0 %546
    %v548 = vsel %vm102, %v444, 0.0
    %549 = vadd.xlane.f32.xlu0 %v548
    %v550 = vpop.xlane.xlu0 %549
    %v551 = vsel %vm102, %v445, 0.0
    %552 = vadd.xlane.f32.xlu0 %v551
    %v553 = vpop.xlane.xlu0 %552
    %v554 = vsel %vm102, %v446, 0.0
    %555 = vadd.xlane.f32.xlu0 %v554
    %v556 = vpop.xlane.xlu0 %555
    %v557 = vsel %vm102, %v447, 0.0
    %558 = vadd.xlane.f32.xlu0 %v557
    %v559 = vpop.xlane.xlu0 %558
    %v560 = vsel %vm102, %v448, 0.0
    %561 = vadd.xlane.f32.xlu0 %v560
    %v562 = vpop.xlane.xlu0 %561
    %v563 = vsel %vm102, %v449, 0.0
    %564 = vadd.xlane.f32.xlu0 %v563
    %v565 = vpop.xlane.xlu0 %564
    %v566 = vsel %vm102, %v450, 0.0
    %567 = vadd.xlane.f32.xlu0 %v566
    %v568 = vpop.xlane.xlu0 %567
    %v569 = vsel %vm102, %v451, 0.0
    %570 = vadd.xlane.f32.xlu0 %v569
    %v571 = vpop.xlane.xlu0 %570
    %v572 = vsel %vm102, %v452, 0.0
    %573 = vadd.xlane.f32.xlu0 %v572
    %v574 = vpop.xlane.xlu0 %573
    %v575 = vsel %vm102, %v453, 0.0
    %576 = vadd.xlane.f32.xlu0 %v575
    %v577 = vpop.xlane.xlu0 %576
    %v578 = vsel %vm102, %v454, 0.0
    %579 = vadd.xlane.f32.xlu0 %v578
    %v580 = vpop.xlane.xlu0 %579
    %v581 = vsel %vm102, %v455, 0.0
    %582 = vadd.xlane.f32.xlu0 %v581
    %v583 = vpop.xlane.xlu0 %582
    %v584 = vsel %vm102, %v456, 0.0
    %585 = vadd.xlane.f32.xlu0 %v584
    %v586 = vpop.xlane.xlu0 %585
    %v587 = vsel %vm102, %v457, 0.0
    %588 = vadd.xlane.f32.xlu0 %v587
    %v589 = vpop.xlane.xlu0 %588
    %v590 = vsel %vm102, %v458, 0.0
    %591 = vadd.xlane.f32.xlu0 %v590
    %v592 = vpop.xlane.xlu0 %591
    %v593 = vsel %vm102, %v459, 0.0
    %594 = vadd.xlane.f32.xlu0 %v593
    %v595 = vpop.xlane.xlu0 %594
    %v596 = vsel %vm102, %v460, 0.0
    %597 = vadd.xlane.f32.xlu0 %v596
    %v598 = vpop.xlane.xlu0 %597
    %v599 = vsel %vm102, %v461, 0.0
    %600 = vadd.xlane.f32.xlu0 %v599
    %v601 = vpop.xlane.xlu0 %600
    %v602 = vsel %vm102, %v462, 0.0
    %603 = vadd.xlane.f32.xlu0 %v602
    %v604 = vpop.xlane.xlu0 %603
    %v605 = vsel %vm102, %v463, 0.0
    %606 = vadd.xlane.f32.xlu0 %v605
    %v607 = vpop.xlane.xlu0 %606
    %v608 = vsel %vm102, %v464, 0.0
    %609 = vadd.xlane.f32.xlu0 %v608
    %v610 = vpop.xlane.xlu0 %609
    %v611 = vsel %vm102, %v465, 0.0
    %612 = vadd.xlane.f32.xlu0 %v611
    %v613 = vpop.xlane.xlu0 %612
    %v614 = vsel %vm102, %v466, 0.0
    %615 = vadd.xlane.f32.xlu0 %v614
    %v616 = vpop.xlane.xlu0 %615
    %v617 = vsel %vm102, %v467, 0.0
    %618 = vadd.xlane.f32.xlu0 %v617
    %v619 = vpop.xlane.xlu0 %618
    %v620 = vsel %vm102, %v468, 0.0
    %621 = vadd.xlane.f32.xlu0 %v620
    %v622 = vpop.xlane.xlu0 %621
    %v623 = vsel %vm102, %v469, 0.0
    %624 = vadd.xlane.f32.xlu0 %v623
    %v625 = vpop.xlane.xlu0 %624
    %v626 = vsel %vm102, %v470, 0.0
    %627 = vadd.xlane.f32.xlu0 %v626
    %v628 = vpop.xlane.xlu0 %627
    %v629 = vsel %vm102, %v471, 0.0
    %630 = vadd.xlane.f32.xlu0 %v629
    %v631 = vpop.xlane.xlu0 %630
    %v632 = vsel %vm102, %v472, 0.0
    %633 = vadd.xlane.f32.xlu0 %v632
    %v634 = vpop.xlane.xlu0 %633
    %v635 = vsel %vm102, %v473, 0.0
    %636 = vadd.xlane.f32.xlu0 %v635
    %v637 = vpop.xlane.xlu0 %636
    %v638 = vsel %vm102, %v474, 0.0
    %639 = vadd.xlane.f32.xlu0 %v638
    %v640 = vpop.xlane.xlu0 %639
    %v641 = vsel %vm102, %v475, 0.0
    %642 = vadd.xlane.f32.xlu0 %v641
    %v643 = vpop.xlane.xlu0 %642
    %v644 = vsel %vm102, %v476, 0.0
    %645 = vadd.xlane.f32.xlu0 %v644
    %v646 = vpop.xlane.xlu0 %645
    %v647 = vsel %vm102, %v477, 0.0
    %648 = vadd.xlane.f32.xlu0 %v647
    %v649 = vpop.xlane.xlu0 %648
    %v650 = vsel %vm102, %v478, 0.0
    %651 = vadd.xlane.f32.xlu0 %v650
    %v652 = vpop.xlane.xlu0 %651
    %v653 = vsel %vm102, %v479, 0.0
    %654 = vadd.xlane.f32.xlu0 %v653
    %v655 = vpop.xlane.xlu0 %654
    %v656 = vsel %vm102, %v480, 0.0
    %657 = vadd.xlane.f32.xlu0 %v656
    %v658 = vpop.xlane.xlu0 %657
    %v659 = vsel %vm102, %v481, 0.0
    %660 = vadd.xlane.f32.xlu0 %v659
    %v661 = vpop.xlane.xlu0 %660
    %v662 = vsel %vm102, %v482, 0.0
    %663 = vadd.xlane.f32.xlu0 %v662
    %v664 = vpop.xlane.xlu0 %663
    %v665 = vsel %vm102, %v483, 0.0
    %666 = vadd.xlane.f32.xlu0 %v665
    %v667 = vpop.xlane.xlu0 %666
    %v668 = vsel %vm102, %v484, 0.0
    %669 = vadd.xlane.f32.xlu0 %v668
    %v670 = vpop.xlane.xlu0 %669
    %v671 = vsel %vm102, %v485, 0.0
    %672 = vadd.xlane.f32.xlu0 %v671
    %v673 = vpop.xlane.xlu0 %672
    %v674 = vsel %vm102, %v486, 0.0
    %675 = vadd.xlane.f32.xlu0 %v674
    %v676 = vpop.xlane.xlu0 %675
    %v677 = vsel %vm102, %v487, 0.0
    %678 = vadd.xlane.f32.xlu0 %v677
    %v679 = vpop.xlane.xlu0 %678
    %v680 = vmul.f32 %v490, %v295
    %v681 = vmul.f32 %v493, %v295
    %v682 = vmul.f32 %v496, %v295
    %v683 = vmul.f32 %v499, %v295
    %v684 = vmul.f32 %v502, %v295
    %v685 = vmul.f32 %v505, %v295
    %v686 = vmul.f32 %v508, %v295
    %v687 = vmul.f32 %v511, %v295
    %v688 = vmul.f32 %v514, %v295
    %v689 = vmul.f32 %v517, %v295
    %v690 = vmul.f32 %v520, %v295
    %v691 = vmul.f32 %v523, %v295
    %v692 = vmul.f32 %v526, %v295
    %v693 = vmul.f32 %v529, %v295
    %v694 = vmul.f32 %v532, %v295
    %v695 = vmul.f32 %v535, %v295
    %v696 = vmul.f32 %v538, %v295
    %v697 = vmul.f32 %v541, %v295
    %v698 = vmul.f32 %v544, %v295
    %v699 = vmul.f32 %v547, %v295
    %v700 = vmul.f32 %v550, %v295
    %v701 = vmul.f32 %v553, %v295
    %v702 = vmul.f32 %v556, %v295
    %v703 = vmul.f32 %v559, %v295
    %v704 = vmul.f32 %v562, %v295
    %v705 = vmul.f32 %v565, %v295
    %v706 = vmul.f32 %v568, %v295
    %v707 = vmul.f32 %v571, %v295
    %v708 = vmul.f32 %v574, %v295
    %v709 = vmul.f32 %v577, %v295
    %v710 = vmul.f32 %v580, %v295
    %v711 = vmul.f32 %v583, %v295
    %v712 = vmul.f32 %v586, %v295
    %v713 = vmul.f32 %v589, %v295
    %v714 = vmul.f32 %v592, %v295
    %v715 = vmul.f32 %v595, %v295
    %v716 = vmul.f32 %v598, %v295
    %v717 = vmul.f32 %v601, %v295
    %v718 = vmul.f32 %v604, %v295
    %v719 = vmul.f32 %v607, %v295
    %v720 = vmul.f32 %v610, %v295
    %v721 = vmul.f32 %v613, %v295
    %v722 = vmul.f32 %v616, %v295
    %v723 = vmul.f32 %v619, %v295
    %v724 = vmul.f32 %v622, %v295
    %v725 = vmul.f32 %v625, %v295
    %v726 = vmul.f32 %v628, %v295
    %v727 = vmul.f32 %v631, %v295
    %v728 = vmul.f32 %v634, %v295
    %v729 = vmul.f32 %v637, %v295
    %v730 = vmul.f32 %v640, %v295
    %v731 = vmul.f32 %v643, %v295
    %v732 = vmul.f32 %v646, %v295
    %v733 = vmul.f32 %v649, %v295
    %v734 = vmul.f32 %v652, %v295
    %v735 = vmul.f32 %v655, %v295
    %v736 = vmul.f32 %v658, %v295
    %v737 = vmul.f32 %v661, %v295
    %v738 = vmul.f32 %v664, %v295
    %v739 = vmul.f32 %v667, %v295
    %v740 = vmul.f32 %v670, %v295
    %v741 = vmul.f32 %v673, %v295
    %v742 = vmul.f32 %v676, %v295
    %v743 = vmul.f32 %v679, %v295
    %v744 = vadd.f32 %v680, 1e-05
    %v745 = vadd.f32 %v681, 1e-05
    %v746 = vadd.f32 %v682, 1e-05
    %v747 = vadd.f32 %v683, 1e-05
    %v748 = vadd.f32 %v684, 1e-05
    %v749 = vadd.f32 %v685, 1e-05
    %v750 = vadd.f32 %v686, 1e-05
    %v751 = vadd.f32 %v687, 1e-05
    %v752 = vadd.f32 %v688, 1e-05
    %v753 = vadd.f32 %v689, 1e-05
    %v754 = vadd.f32 %v690, 1e-05
    %v755 = vadd.f32 %v691, 1e-05
    %v756 = vadd.f32 %v692, 1e-05
    %v757 = vadd.f32 %v693, 1e-05
    %v758 = vadd.f32 %v694, 1e-05
    %v759 = vadd.f32 %v695, 1e-05
    %v760 = vadd.f32 %v696, 1e-05
    %v761 = vadd.f32 %v697, 1e-05
    %v762 = vadd.f32 %v698, 1e-05
    %v763 = vadd.f32 %v699, 1e-05
    %v764 = vadd.f32 %v700, 1e-05
    %v765 = vadd.f32 %v701, 1e-05
    %v766 = vadd.f32 %v702, 1e-05
    %v767 = vadd.f32 %v703, 1e-05
    %v768 = vadd.f32 %v704, 1e-05
    %v769 = vadd.f32 %v705, 1e-05
    %v770 = vadd.f32 %v706, 1e-05
    %v771 = vadd.f32 %v707, 1e-05
    %v772 = vadd.f32 %v708, 1e-05
    %v773 = vadd.f32 %v709, 1e-05
    %v774 = vadd.f32 %v710, 1e-05
    %v775 = vadd.f32 %v711, 1e-05
    %v776 = vadd.f32 %v712, 1e-05
    %v777 = vadd.f32 %v713, 1e-05
    %v778 = vadd.f32 %v714, 1e-05
    %v779 = vadd.f32 %v715, 1e-05
    %v780 = vadd.f32 %v716, 1e-05
    %v781 = vadd.f32 %v717, 1e-05
    %v782 = vadd.f32 %v718, 1e-05
    %v783 = vadd.f32 %v719, 1e-05
    %v784 = vadd.f32 %v720, 1e-05
    %v785 = vadd.f32 %v721, 1e-05
    %v786 = vadd.f32 %v722, 1e-05
    %v787 = vadd.f32 %v723, 1e-05
    %v788 = vadd.f32 %v724, 1e-05
    %v789 = vadd.f32 %v725, 1e-05
    %v790 = vadd.f32 %v726, 1e-05
    %v791 = vadd.f32 %v727, 1e-05
    %v792 = vadd.f32 %v728, 1e-05
    %v793 = vadd.f32 %v729, 1e-05
    %v794 = vadd.f32 %v730, 1e-05
    %v795 = vadd.f32 %v731, 1e-05
    %v796 = vadd.f32 %v732, 1e-05
    %v797 = vadd.f32 %v733, 1e-05
    %v798 = vadd.f32 %v734, 1e-05
    %v799 = vadd.f32 %v735, 1e-05
    %v800 = vadd.f32 %v736, 1e-05
    %v801 = vadd.f32 %v737, 1e-05
    %v802 = vadd.f32 %v738, 1e-05
    %v803 = vadd.f32 %v739, 1e-05
    %v804 = vadd.f32 %v740, 1e-05
    %v805 = vadd.f32 %v741, 1e-05
    %v806 = vadd.f32 %v742, 1e-05
    %v807 = vadd.f32 %v743, 1e-05
    %v808 = vrsqrt.pop %v744
    %v809 = vrsqrt.pop %v745
    %v810 = vrsqrt.pop %v746
    %v811 = vrsqrt.pop %v747
    %v812 = vrsqrt.pop %v748
    %v813 = vrsqrt.pop %v749
    %v814 = vrsqrt.pop %v750
    %v815 = vrsqrt.pop %v751
    %v816 = vrsqrt.pop %v752
    %v817 = vrsqrt.pop %v753
    %v818 = vrsqrt.pop %v754
    %v819 = vrsqrt.pop %v755
    %v820 = vrsqrt.pop %v756
    %v821 = vrsqrt.pop %v757
    %v822 = vrsqrt.pop %v758
    %v823 = vrsqrt.pop %v759
    %v824 = vrsqrt.pop %v760
    %v825 = vrsqrt.pop %v761
    %v826 = vrsqrt.pop %v762
    %v827 = vrsqrt.pop %v763
    %v828 = vrsqrt.pop %v764
    %v829 = vrsqrt.pop %v765
    %v830 = vrsqrt.pop %v766
    %v831 = vrsqrt.pop %v767
    %v832 = vrsqrt.pop %v768
    %v833 = vrsqrt.pop %v769
    %v834 = vrsqrt.pop %v770
    %v835 = vrsqrt.pop %v771
    %v836 = vrsqrt.pop %v772
    %v837 = vrsqrt.pop %v773
    %v838 = vrsqrt.pop %v774
    %v839 = vrsqrt.pop %v775
    %v840 = vrsqrt.pop %v776
    %v841 = vrsqrt.pop %v777
    %v842 = vrsqrt.pop %v778
    %v843 = vrsqrt.pop %v779
    %v844 = vrsqrt.pop %v780
    %v845 = vrsqrt.pop %v781
    %v846 = vrsqrt.pop %v782
    %v847 = vrsqrt.pop %v783
    %v848 = vrsqrt.pop %v784
    %v849 = vrsqrt.pop %v785
    %v850 = vrsqrt.pop %v786
    %v851 = vrsqrt.pop %v787
    %v852 = vrsqrt.pop %v788
    %v853 = vrsqrt.pop %v789
    %v854 = vrsqrt.pop %v790
    %v855 = vrsqrt.pop %v791
    %v856 = vrsqrt.pop %v792
    %v857 = vrsqrt.pop %v793
    %v858 = vrsqrt.pop %v794
    %v859 = vrsqrt.pop %v795
    %v860 = vrsqrt.pop %v796
    %v861 = vrsqrt.pop %v797
    %v862 = vrsqrt.pop %v798
    %v863 = vrsqrt.pop %v799
    %v864 = vrsqrt.pop %v800
    %v865 = vrsqrt.pop %v801
    %v866 = vrsqrt.pop %v802
    %v867 = vrsqrt.pop %v803
    %v868 = vrsqrt.pop %v804
    %v869 = vrsqrt.pop %v805
    %v870 = vrsqrt.pop %v806
    %v871 = vrsqrt.pop %v807
    %v872 = vmul.f32 %v360, %v808
    %v873 = vmul.f32 %v361, %v809
    %v874 = vmul.f32 %v362, %v810
    %v875 = vmul.f32 %v363, %v811
    %v876 = vmul.f32 %v364, %v812
    %v877 = vmul.f32 %v365, %v813
    %v878 = vmul.f32 %v366, %v814
    %v879 = vmul.f32 %v367, %v815
    %v880 = vmul.f32 %v368, %v816
    %v881 = vmul.f32 %v369, %v817
    %v882 = vmul.f32 %v370, %v818
    %v883 = vmul.f32 %v371, %v819
    %v884 = vmul.f32 %v372, %v820
    %v885 = vmul.f32 %v373, %v821
    %v886 = vmul.f32 %v374, %v822
    %v887 = vmul.f32 %v375, %v823
    %v888 = vmul.f32 %v376, %v824
    %v889 = vmul.f32 %v377, %v825
    %v890 = vmul.f32 %v378, %v826
    %v891 = vmul.f32 %v379, %v827
    %v892 = vmul.f32 %v380, %v828
    %v893 = vmul.f32 %v381, %v829
    %v894 = vmul.f32 %v382, %v830
    %v895 = vmul.f32 %v383, %v831
    %v896 = vmul.f32 %v384, %v832
    %v897 = vmul.f32 %v385, %v833
    %v898 = vmul.f32 %v386, %v834
    %v899 = vmul.f32 %v387, %v835
    %v900 = vmul.f32 %v388, %v836
    %v901 = vmul.f32 %v389, %v837
    %v902 = vmul.f32 %v390, %v838
    %v903 = vmul.f32 %v391, %v839
    %v904 = vmul.f32 %v392, %v840
    %v905 = vmul.f32 %v393, %v841
    %v906 = vmul.f32 %v394, %v842
    %v907 = vmul.f32 %v395, %v843
    %v908 = vmul.f32 %v396, %v844
    %v909 = vmul.f32 %v397, %v845
    %v910 = vmul.f32 %v398, %v846
    %v911 = vmul.f32 %v399, %v847
    %v912 = vmul.f32 %v400, %v848
    %v913 = vmul.f32 %v401, %v849
    %v914 = vmul.f32 %v402, %v850
    %v915 = vmul.f32 %v403, %v851
    %v916 = vmul.f32 %v404, %v852
    %v917 = vmul.f32 %v405, %v853
    %v918 = vmul.f32 %v406, %v854
    %v919 = vmul.f32 %v407, %v855
    %v920 = vmul.f32 %v408, %v856
    %v921 = vmul.f32 %v409, %v857
    %v922 = vmul.f32 %v410, %v858
    %v923 = vmul.f32 %v411, %v859
    %v924 = vmul.f32 %v412, %v860
    %v925 = vmul.f32 %v413, %v861
    %v926 = vmul.f32 %v414, %v862
    %v927 = vmul.f32 %v415, %v863
    %v928 = vmul.f32 %v416, %v864
    %v929 = vmul.f32 %v417, %v865
    %v930 = vmul.f32 %v418, %v866
    %v931 = vmul.f32 %v419, %v867
    %v932 = vmul.f32 %v420, %v868
    %v933 = vmul.f32 %v421, %v869
    %v934 = vmul.f32 %v422, %v870
    %v935 = vmul.f32 %v423, %v871
    %v936 = vld [vmem:[#allocation2] sm:$0x1]
    %v938 = vlaneseq
    %v939 = vshrl.u32 %v938, 7
    %v940 = vsub.s32 0, %v939
    %v941 = vrot.slane %v936, %v940
    %v943 = vmul.f32 %v872, %v941
    %v944 = vmul.f32 %v873, %v941
    %v945 = vmul.f32 %v874, %v941
    %v946 = vmul.f32 %v875, %v941
    %v947 = vmul.f32 %v876, %v941
    %v948 = vmul.f32 %v877, %v941
    %v949 = vmul.f32 %v878, %v941
    %v950 = vmul.f32 %v879, %v941
    %v951 = vmul.f32 %v880, %v941
    %v952 = vmul.f32 %v881, %v941
    %v953 = vmul.f32 %v882, %v941
    %v954 = vmul.f32 %v883, %v941
    %v955 = vmul.f32 %v884, %v941
    %v956 = vmul.f32 %v885, %v941
    %v957 = vmul.f32 %v886, %v941
    %v958 = vmul.f32 %v887, %v941
    %v959 = vmul.f32 %v888, %v941
    %v960 = vmul.f32 %v889, %v941
    %v961 = vmul.f32 %v890, %v941
    %v962 = vmul.f32 %v891, %v941
    %v963 = vmul.f32 %v892, %v941
    %v964 = vmul.f32 %v893, %v941
    %v965 = vmul.f32 %v894, %v941
    %v966 = vmul.f32 %v895, %v941
    %v967 = vmul.f32 %v896, %v941
    %v968 = vmul.f32 %v897, %v941
    %v969 = vmul.f32 %v898, %v941
    %v970 = vmul.f32 %v899, %v941
    %v971 = vmul.f32 %v900, %v941
    %v972 = vmul.f32 %v901, %v941
    %v973 = vmul.f32 %v902, %v941
    %v974 = vmul.f32 %v903, %v941
    %v975 = vmul.f32 %v904, %v941
    %v976 = vmul.f32 %v905, %v941
    %v977 = vmul.f32 %v906, %v941
    %v978 = vmul.f32 %v907, %v941
    %v979 = vmul.f32 %v908, %v941
    %v980 = vmul.f32 %v909, %v941
    %v981 = vmul.f32 %v910, %v941
    %v982 = vmul.f32 %v911, %v941
    %v983 = vmul.f32 %v912, %v941
    %v984 = vmul.f32 %v913, %v941
    %v985 = vmul.f32 %v914, %v941
    %v986 = vmul.f32 %v915, %v941
    %v987 = vmul.f32 %v916, %v941
    %v988 = vmul.f32 %v917, %v941
    %v989 = vmul.f32 %v918, %v941
    %v990 = vmul.f32 %v919, %v941
    %v991 = vmul.f32 %v920, %v941
    %v992 = vmul.f32 %v921, %v941
    %v993 = vmul.f32 %v922, %v941
    %v994 = vmul.f32 %v923, %v941
    %v995 = vmul.f32 %v924, %v941
    %v996 = vmul.f32 %v925, %v941
    %v997 = vmul.f32 %v926, %v941
    %v998 = vmul.f32 %v927, %v941
    %v999 = vmul.f32 %v928, %v941
    %v1000 = vmul.f32 %v929, %v941
    %v1001 = vmul.f32 %v930, %v941
    %v1002 = vmul.f32 %v931, %v941
    %v1003 = vmul.f32 %v932, %v941
    %v1004 = vmul.f32 %v933, %v941
    %v1005 = vmul.f32 %v934, %v941
    %v1006 = vmul.f32 %v935, %v941
    %v1007 = vld [vmem:[#allocation4] sm:$0x1]
    %v1009 = vlaneseq
    %v1010 = vshrl.u32 %v1009, 7
    %v1011 = vsub.s32 0, %v1010
    %v1012 = vrot.slane %v1007, %v1011
    %v1014 = vadd.f32 %v943, %v1012
    %v1015 = vadd.f32 %v944, %v1012
    %v1016 = vadd.f32 %v945, %v1012
    %v1017 = vadd.f32 %v946, %v1012
    %v1018 = vadd.f32 %v947, %v1012
    %v1019 = vadd.f32 %v948, %v1012
    %v1020 = vadd.f32 %v949, %v1012
    %v1021 = vadd.f32 %v950, %v1012
    %v1022 = vadd.f32 %v951, %v1012
    %v1023 = vadd.f32 %v952, %v1012
    %v1024 = vadd.f32 %v953, %v1012
    %v1025 = vadd.f32 %v954, %v1012
    %v1026 = vadd.f32 %v955, %v1012
    %v1027 = vadd.f32 %v956, %v1012
    %v1028 = vadd.f32 %v957, %v1012
    %v1029 = vadd.f32 %v958, %v1012
    %v1030 = vadd.f32 %v959, %v1012
    %v1031 = vadd.f32 %v960, %v1012
    %v1032 = vadd.f32 %v961, %v1012
    %v1033 = vadd.f32 %v962, %v1012
    %v1034 = vadd.f32 %v963, %v1012
    %v1035 = vadd.f32 %v964, %v1012
    %v1036 = vadd.f32 %v965, %v1012
    %v1037 = vadd.f32 %v966, %v1012
    %v1038 = vadd.f32 %v967, %v1012
    %v1039 = vadd.f32 %v968, %v1012
    %v1040 = vadd.f32 %v969, %v1012
    %v1041 = vadd.f32 %v970, %v1012
    %v1042 = vadd.f32 %v971, %v1012
    %v1043 = vadd.f32 %v972, %v1012
    %v1044 = vadd.f32 %v973, %v1012
    %v1045 = vadd.f32 %v974, %v1012
    %v1046 = vadd.f32 %v975, %v1012
    %v1047 = vadd.f32 %v976, %v1012
    %v1048 = vadd.f32 %v977, %v1012
    %v1049 = vadd.f32 %v978, %v1012
    %v1050 = vadd.f32 %v979, %v1012
    %v1051 = vadd.f32 %v980, %v1012
    %v1052 = vadd.f32 %v981, %v1012
    %v1053 = vadd.f32 %v982, %v1012
    %v1054 = vadd.f32 %v983, %v1012
    %v1055 = vadd.f32 %v984, %v1012
    %v1056 = vadd.f32 %v985, %v1012
    %v1057 = vadd.f32 %v986, %v1012
    %v1058 = vadd.f32 %v987, %v1012
    %v1059 = vadd.f32 %v988, %v1012
    %v1060 = vadd.f32 %v989, %v1012
    %v1061 = vadd.f32 %v990, %v1012
    %v1062 = vadd.f32 %v991, %v1012
    %v1063 = vadd.f32 %v992, %v1012
    %v1064 = vadd.f32 %v993, %v1012
    %v1065 = vadd.f32 %v994, %v1012
    %v1066 = vadd.f32 %v995, %v1012
    %v1067 = vadd.f32 %v996, %v1012
    %v1068 = vadd.f32 %v997, %v1012
    %v1069 = vadd.f32 %v998, %v1012
    %v1070 = vadd.f32 %v999, %v1012
    %v1071 = vadd.f32 %v1000, %v1012
    %v1072 = vadd.f32 %v1001, %v1012
    %v1073 = vadd.f32 %v1002, %v1012
    %v1074 = vadd.f32 %v1003, %v1012
    %v1075 = vadd.f32 %v1004, %v1012
    %v1076 = vadd.f32 %v1005, %v1012
    %v1077 = vadd.f32 %v1006, %v1012
    %v1078 = vmul.f32 %v1014, 0.5
    %v1079 = vmul.f32 %v1015, 0.5
    %v1080 = vmul.f32 %v1016, 0.5
    %v1081 = vmul.f32 %v1017, 0.5
    %v1082 = vmul.f32 %v1018, 0.5
    %v1083 = vmul.f32 %v1019, 0.5
    %v1084 = vmul.f32 %v1020, 0.5
    %v1085 = vmul.f32 %v1021, 0.5
    %v1086 = vmul.f32 %v1022, 0.5
    %v1087 = vmul.f32 %v1023, 0.5
    %v1088 = vmul.f32 %v1024, 0.5
    %v1089 = vmul.f32 %v1025, 0.5
    %v1090 = vmul.f32 %v1026, 0.5
    %v1091 = vmul.f32 %v1027, 0.5
    %v1092 = vmul.f32 %v1028, 0.5
    %v1093 = vmul.f32 %v1029, 0.5
    %v1094 = vmul.f32 %v1030, 0.5
    %v1095 = vmul.f32 %v1031, 0.5
    %v1096 = vmul.f32 %v1032, 0.5
    %v1097 = vmul.f32 %v1033, 0.5
    %v1098 = vmul.f32 %v1034, 0.5
    %v1099 = vmul.f32 %v1035, 0.5
    %v1100 = vmul.f32 %v1036, 0.5
    %v1101 = vmul.f32 %v1037, 0.5
    %v1102 = vmul.f32 %v1038, 0.5
    %v1103 = vmul.f32 %v1039, 0.5
    %v1104 = vmul.f32 %v1040, 0.5
    %v1105 = vmul.f32 %v1041, 0.5
    %v1106 = vmul.f32 %v1042, 0.5
    %v1107 = vmul.f32 %v1043, 0.5
    %v1108 = vmul.f32 %v1044, 0.5
    %v1109 = vmul.f32 %v1045, 0.5
    %v1110 = vmul.f32 %v1046, 0.5
    %v1111 = vmul.f32 %v1047, 0.5
    %v1112 = vmul.f32 %v1048, 0.5
    %v1113 = vmul.f32 %v1049, 0.5
    %v1114 = vmul.f32 %v1050, 0.5
    %v1115 = vmul.f32 %v1051, 0.5
    %v1116 = vmul.f32 %v1052, 0.5
    %v1117 = vmul.f32 %v1053, 0.5
    %v1118 = vmul.f32 %v1054, 0.5
    %v1119 = vmul.f32 %v1055, 0.5
    %v1120 = vmul.f32 %v1056, 0.5
    %v1121 = vmul.f32 %v1057, 0.5
    %v1122 = vmul.f32 %v1058, 0.5
    %v1123 = vmul.f32 %v1059, 0.5
    %v1124 = vmul.f32 %v1060, 0.5
    %v1125 = vmul.f32 %v1061, 0.5
    %v1126 = vmul.f32 %v1062, 0.5
    %v1127 = vmul.f32 %v1063, 0.5
    %v1128 = vmul.f32 %v1064, 0.5
    %v1129 = vmul.f32 %v1065, 0.5
    %v1130 = vmul.f32 %v1066, 0.5
    %v1131 = vmul.f32 %v1067, 0.5
    %v1132 = vmul.f32 %v1068, 0.5
    %v1133 = vmul.f32 %v1069, 0.5
    %v1134 = vmul.f32 %v1070, 0.5
    %v1135 = vmul.f32 %v1071, 0.5
    %v1136 = vmul.f32 %v1072, 0.5
    %v1137 = vmul.f32 %v1073, 0.5
    %v1138 = vmul.f32 %v1074, 0.5
    %v1139 = vmul.f32 %v1075, 0.5
    %v1140 = vmul.f32 %v1076, 0.5
    %v1141 = vmul.f32 %v1077, 0.5
    %v1142 = vmul.f32 %v1014, 0.044715
    %v1143 = vmul.f32 %v1015, 0.044715
    %v1144 = vmul.f32 %v1016, 0.044715
    %v1145 = vmul.f32 %v1017, 0.044715
    %v1146 = vmul.f32 %v1018, 0.044715
    %v1147 = vmul.f32 %v1019, 0.044715
    %v1148 = vmul.f32 %v1020, 0.044715
    %v1149 = vmul.f32 %v1021, 0.044715
    %v1150 = vmul.f32 %v1022, 0.044715
    %v1151 = vmul.f32 %v1023, 0.044715
    %v1152 = vmul.f32 %v1024, 0.044715
    %v1153 = vmul.f32 %v1025, 0.044715
    %v1154 = vmul.f32 %v1026, 0.044715
    %v1155 = vmul.f32 %v1027, 0.044715
    %v1156 = vmul.f32 %v1028, 0.044715
    %v1157 = vmul.f32 %v1029, 0.044715
    %v1158 = vmul.f32 %v1030, 0.044715
    %v1159 = vmul.f32 %v1031, 0.044715
    %v1160 = vmul.f32 %v1032, 0.044715
    %v1161 = vmul.f32 %v1033, 0.044715
    %v1162 = vmul.f32 %v1034, 0.044715
    %v1163 = vmul.f32 %v1035, 0.044715
    %v1164 = vmul.f32 %v1036, 0.044715
    %v1165 = vmul.f32 %v1037, 0.044715
    %v1166 = vmul.f32 %v1038, 0.044715
    %v1167 = vmul.f32 %v1039, 0.044715
    %v1168 = vmul.f32 %v1040, 0.044715
    %v1169 = vmul.f32 %v1041, 0.044715
    %v1170 = vmul.f32 %v1042, 0.044715
    %v1171 = vmul.f32 %v1043, 0.044715
    %v1172 = vmul.f32 %v1044, 0.044715
    %v1173 = vmul.f32 %v1045, 0.044715
    %v1174 = vmul.f32 %v1046, 0.044715
    %v1175 = vmul.f32 %v1047, 0.044715
    %v1176 = vmul.f32 %v1048, 0.044715
    %v1177 = vmul.f32 %v1049, 0.044715
    %v1178 = vmul.f32 %v1050, 0.044715
    %v1179 = vmul.f32 %v1051, 0.044715
    %v1180 = vmul.f32 %v1052, 0.044715
    %v1181 = vmul.f32 %v1053, 0.044715
    %v1182 = vmul.f32 %v1054, 0.044715
    %v1183 = vmul.f32 %v1055, 0.044715
    %v1184 = vmul.f32 %v1056, 0.044715
    %v1185 = vmul.f32 %v1057, 0.044715
    %v1186 = vmul.f32 %v1058, 0.044715
    %v1187 = vmul.f32 %v1059, 0.044715
    %v1188 = vmul.f32 %v1060, 0.044715
    %v1189 = vmul.f32 %v1061, 0.044715
    %v1190 = vmul.f32 %v1062, 0.044715
    %v1191 = vmul.f32 %v1063, 0.044715
    %v1192 = vmul.f32 %v1064, 0.044715
    %v1193 = vmul.f32 %v1065, 0.044715
    %v1194 = vmul.f32 %v1066, 0.044715
    %v1195 = vmul.f32 %v1067, 0.044715
    %v1196 = vmul.f32 %v1068, 0.044715
    %v1197 = vmul.f32 %v1069, 0.044715
    %v1198 = vmul.f32 %v1070, 0.044715
    %v1199 = vmul.f32 %v1071, 0.044715
    %v1200 = vmul.f32 %v1072, 0.044715
    %v1201 = vmul.f32 %v1073, 0.044715
    %v1202 = vmul.f32 %v1074, 0.044715
    %v1203 = vmul.f32 %v1075, 0.044715
    %v1204 = vmul.f32 %v1076, 0.044715
    %v1205 = vmul.f32 %v1077, 0.044715
    %v1206 = vmul.f32 %v1142, %v1014
    %v1207 = vmul.f32 %v1143, %v1015
    %v1208 = vmul.f32 %v1144, %v1016
    %v1209 = vmul.f32 %v1145, %v1017
    %v1210 = vmul.f32 %v1146, %v1018
    %v1211 = vmul.f32 %v1147, %v1019
    %v1212 = vmul.f32 %v1148, %v1020
    %v1213 = vmul.f32 %v1149, %v1021
    %v1214 = vmul.f32 %v1150, %v1022
    %v1215 = vmul.f32 %v1151, %v1023
    %v1216 = vmul.f32 %v1152, %v1024
    %v1217 = vmul.f32 %v1153, %v1025
    %v1218 = vmul.f32 %v1154, %v1026
    %v1219 = vmul.f32 %v1155, %v1027
    %v1220 = vmul.f32 %v1156, %v1028
    %v1221 = vmul.f32 %v1157, %v1029
    %v1222 = vmul.f32 %v1158, %v1030
    %v1223 = vmul.f32 %v1159, %v1031
    %v1224 = vmul.f32 %v1160, %v1032
    %v1225 = vmul.f32 %v1161, %v1033
    %v1226 = vmul.f32 %v1162, %v1034
    %v1227 = vmul.f32 %v1163, %v1035
    %v1228 = vmul.f32 %v1164, %v1036
    %v1229 = vmul.f32 %v1165, %v1037
    %v1230 = vmul.f32 %v1166, %v1038
    %v1231 = vmul.f32 %v1167, %v1039
    %v1232 = vmul.f32 %v1168, %v1040
    %v1233 = vmul.f32 %v1169, %v1041
    %v1234 = vmul.f32 %v1170, %v1042
    %v1235 = vmul.f32 %v1171, %v1043
    %v1236 = vmul.f32 %v1172, %v1044
    %v1237 = vmul.f32 %v1173, %v1045
    %v1238 = vmul.f32 %v1174, %v1046
    %v1239 = vmul.f32 %v1175, %v1047
    %v1240 = vmul.f32 %v1176, %v1048
    %v1241 = vmul.f32 %v1177, %v1049
    %v1242 = vmul.f32 %v1178, %v1050
    %v1243 = vmul.f32 %v1179, %v1051
    %v1244 = vmul.f32 %v1180, %v1052
    %v1245 = vmul.f32 %v1181, %v1053
    %v1246 = vmul.f32 %v1182, %v1054
    %v1247 = vmul.f32 %v1183, %v1055
    %v1248 = vmul.f32 %v1184, %v1056
    %v1249 = vmul.f32 %v1185, %v1057
    %v1250 = vmul.f32 %v1186, %v1058
    %v1251 = vmul.f32 %v1187, %v1059
    %v1252 = vmul.f32 %v1188, %v1060
    %v1253 = vmul.f32 %v1189, %v1061
    %v1254 = vmul.f32 %v1190, %v1062
    %v1255 = vmul.f32 %v1191, %v1063
    %v1256 = vmul.f32 %v1192, %v1064
    %v1257 = vmul.f32 %v1193, %v1065
    %v1258 = vmul.f32 %v1194, %v1066
    %v1259 = vmul.f32 %v1195, %v1067
    %v1260 = vmul.f32 %v1196, %v1068
    %v1261 = vmul.f32 %v1197, %v1069
    %v1262 = vmul.f32 %v1198, %v1070
    %v1263 = vmul.f32 %v1199, %v1071
    %v1264 = vmul.f32 %v1200, %v1072
    %v1265 = vmul.f32 %v1201, %v1073
    %v1266 = vmul.f32 %v1202, %v1074
    %v1267 = vmul.f32 %v1203, %v1075
    %v1268 = vmul.f32 %v1204, %v1076
    %v1269 = vmul.f32 %v1205, %v1077
    %v1270 = vmul.f32 %v1206, %v1014
    %v1271 = vmul.f32 %v1207, %v1015
    %v1272 = vmul.f32 %v1208, %v1016
    %v1273 = vmul.f32 %v1209, %v1017
    %v1274 = vmul.f32 %v1210, %v1018
    %v1275 = vmul.f32 %v1211, %v1019
    %v1276 = vmul.f32 %v1212, %v1020
    %v1277 = vmul.f32 %v1213, %v1021
    %v1278 = vmul.f32 %v1214, %v1022
    %v1279 = vmul.f32 %v1215, %v1023
    %v1280 = vmul.f32 %v1216, %v1024
    %v1281 = vmul.f32 %v1217, %v1025
    %v1282 = vmul.f32 %v1218, %v1026
    %v1283 = vmul.f32 %v1219, %v1027
    %v1284 = vmul.f32 %v1220, %v1028
    %v1285 = vmul.f32 %v1221, %v1029
    %v1286 = vmul.f32 %v1222, %v1030
    %v1287 = vmul.f32 %v1223, %v1031
    %v1288 = vmul.f32 %v1224, %v1032
    %v1289 = vmul.f32 %v1225, %v1033
    %v1290 = vmul.f32 %v1226, %v1034
    %v1291 = vmul.f32 %v1227, %v1035
    %v1292 = vmul.f32 %v1228, %v1036
    %v1293 = vmul.f32 %v1229, %v1037
    %v1294 = vmul.f32 %v1230, %v1038
    %v1295 = vmul.f32 %v1231, %v1039
    %v1296 = vmul.f32 %v1232, %v1040
    %v1297 = vmul.f32 %v1233, %v1041
    %v1298 = vmul.f32 %v1234, %v1042
    %v1299 = vmul.f32 %v1235, %v1043
    %v1300 = vmul.f32 %v1236, %v1044
    %v1301 = vmul.f32 %v1237, %v1045
    %v1302 = vmul.f32 %v1238, %v1046
    %v1303 = vmul.f32 %v1239, %v1047
    %v1304 = vmul.f32 %v1240, %v1048
    %v1305 = vmul.f32 %v1241, %v1049
    %v1306 = vmul.f32 %v1242, %v1050
    %v1307 = vmul.f32 %v1243, %v1051
    %v1308 = vmul.f32 %v1244, %v1052
    %v1309 = vmul.f32 %v1245, %v1053
    %v1310 = vmul.f32 %v1246, %v1054
    %v1311 = vmul.f32 %v1247, %v1055
    %v1312 = vmul.f32 %v1248, %v1056
    %v1313 = vmul.f32 %v1249, %v1057
    %v1314 = vmul.f32 %v1250, %v1058
    %v1315 = vmul.f32 %v1251, %v1059
    %v1316 = vmul.f32 %v1252, %v1060
    %v1317 = vmul.f32 %v1253, %v1061
    %v1318 = vmul.f32 %v1254, %v1062
    %v1319 = vmul.f32 %v1255, %v1063
    %v1320 = vmul.f32 %v1256, %v1064
    %v1321 = vmul.f32 %v1257, %v1065
    %v1322 = vmul.f32 %v1258, %v1066
    %v1323 = vmul.f32 %v1259, %v1067
    %v1324 = vmul.f32 %v1260, %v1068
    %v1325 = vmul.f32 %v1261, %v1069
    %v1326 = vmul.f32 %v1262, %v1070
    %v1327 = vmul.f32 %v1263, %v1071
    %v1328 = vmul.f32 %v1264, %v1072
    %v1329 = vmul.f32 %v1265, %v1073
    %v1330 = vmul.f32 %v1266, %v1074
    %v1331 = vmul.f32 %v1267, %v1075
    %v1332 = vmul.f32 %v1268, %v1076
    %v1333 = vmul.f32 %v1269, %v1077
    %v1334 = vadd.f32 %v1014, %v1270
    %v1335 = vadd.f32 %v1015, %v1271
    %v1336 = vadd.f32 %v1016, %v1272
    %v1337 = vadd.f32 %v1017, %v1273
    %v1338 = vadd.f32 %v1018, %v1274
    %v1339 = vadd.f32 %v1019, %v1275
    %v1340 = vadd.f32 %v1020, %v1276
    %v1341 = vadd.f32 %v1021, %v1277
    %v1342 = vadd.f32 %v1022, %v1278
    %v1343 = vadd.f32 %v1023, %v1279
    %v1344 = vadd.f32 %v1024, %v1280
    %v1345 = vadd.f32 %v1025, %v1281
    %v1346 = vadd.f32 %v1026, %v1282
    %v1347 = vadd.f32 %v1027, %v1283
    %v1348 = vadd.f32 %v1028, %v1284
    %v1349 = vadd.f32 %v1029, %v1285
    %v1350 = vadd.f32 %v1030, %v1286
    %v1351 = vadd.f32 %v1031, %v1287
    %v1352 = vadd.f32 %v1032, %v1288
    %v1353 = vadd.f32 %v1033, %v1289
    %v1354 = vadd.f32 %v1034, %v1290
    %v1355 = vadd.f32 %v1035, %v1291
    %v1356 = vadd.f32 %v1036, %v1292
    %v1357 = vadd.f32 %v1037, %v1293
    %v1358 = vadd.f32 %v1038, %v1294
    %v1359 = vadd.f32 %v1039, %v1295
    %v1360 = vadd.f32 %v1040, %v1296
    %v1361 = vadd.f32 %v1041, %v1297
    %v1362 = vadd.f32 %v1042, %v1298
    %v1363 = vadd.f32 %v1043, %v1299
    %v1364 = vadd.f32 %v1044, %v1300
    %v1365 = vadd.f32 %v1045, %v1301
    %v1366 = vadd.f32 %v1046, %v1302
    %v1367 = vadd.f32 %v1047, %v1303
    %v1368 = vadd.f32 %v1048, %v1304
    %v1369 = vadd.f32 %v1049, %v1305
    %v1370 = vadd.f32 %v1050, %v1306
    %v1371 = vadd.f32 %v1051, %v1307
    %v1372 = vadd.f32 %v1052, %v1308
    %v1373 = vadd.f32 %v1053, %v1309
    %v1374 = vadd.f32 %v1054, %v1310
    %v1375 = vadd.f32 %v1055, %v1311
    %v1376 = vadd.f32 %v1056, %v1312
    %v1377 = vadd.f32 %v1057, %v1313
    %v1378 = vadd.f32 %v1058, %v1314
    %v1379 = vadd.f32 %v1059, %v1315
    %v1380 = vadd.f32 %v1060, %v1316
    %v1381 = vadd.f32 %v1061, %v1317
    %v1382 = vadd.f32 %v1062, %v1318
    %v1383 = vadd.f32 %v1063, %v1319
    %v1384 = vadd.f32 %v1064, %v1320
    %v1385 = vadd.f32 %v1065, %v1321
    %v1386 = vadd.f32 %v1066, %v1322
    %v1387 = vadd.f32 %v1067, %v1323
    %v1388 = vadd.f32 %v1068, %v1324
    %v1389 = vadd.f32 %v1069, %v1325
    %v1390 = vadd.f32 %v1070, %v1326
    %v1391 = vadd.f32 %v1071, %v1327
    %v1392 = vadd.f32 %v1072, %v1328
    %v1393 = vadd.f32 %v1073, %v1329
    %v1394 = vadd.f32 %v1074, %v1330
    %v1395 = vadd.f32 %v1075, %v1331
    %v1396 = vadd.f32 %v1076, %v1332
    %v1397 = vadd.f32 %v1077, %v1333
    %v1398 = vmul.f32 %v1334, 0.7978846
    %v1399 = vmul.f32 %v1335, 0.7978846
    %v1400 = vmul.f32 %v1336, 0.7978846
    %v1401 = vmul.f32 %v1337, 0.7978846
    %v1402 = vmul.f32 %v1338, 0.7978846
    %v1403 = vmul.f32 %v1339, 0.7978846
    %v1404 = vmul.f32 %v1340, 0.7978846
    %v1405 = vmul.f32 %v1341, 0.7978846
    %v1406 = vmul.f32 %v1342, 0.7978846
    %v1407 = vmul.f32 %v1343, 0.7978846
    %v1408 = vmul.f32 %v1344, 0.7978846
    %v1409 = vmul.f32 %v1345, 0.7978846
    %v1410 = vmul.f32 %v1346, 0.7978846
    %v1411 = vmul.f32 %v1347, 0.7978846
    %v1412 = vmul.f32 %v1348, 0.7978846
    %v1413 = vmul.f32 %v1349, 0.7978846
    %v1414 = vmul.f32 %v1350, 0.7978846
    %v1415 = vmul.f32 %v1351, 0.7978846
    %v1416 = vmul.f32 %v1352, 0.7978846
    %v1417 = vmul.f32 %v1353, 0.7978846
    %v1418 = vmul.f32 %v1354, 0.7978846
    %v1419 = vmul.f32 %v1355, 0.7978846
    %v1420 = vmul.f32 %v1356, 0.7978846
    %v1421 = vmul.f32 %v1357, 0.7978846
    %v1422 = vmul.f32 %v1358, 0.7978846
    %v1423 = vmul.f32 %v1359, 0.7978846
    %v1424 = vmul.f32 %v1360, 0.7978846
    %v1425 = vmul.f32 %v1361, 0.7978846
    %v1426 = vmul.f32 %v1362, 0.7978846
    %v1427 = vmul.f32 %v1363, 0.7978846
    %v1428 = vmul.f32 %v1364, 0.7978846
    %v1429 = vmul.f32 %v1365, 0.7978846
    %v1430 = vmul.f32 %v1366, 0.7978846
    %v1431 = vmul.f32 %v1367, 0.7978846
    %v1432 = vmul.f32 %v1368, 0.7978846
    %v1433 = vmul.f32 %v1369, 0.7978846
    %v1434 = vmul.f32 %v1370, 0.7978846
    %v1435 = vmul.f32 %v1371, 0.7978846
    %v1436 = vmul.f32 %v1372, 0.7978846
    %v1437 = vmul.f32 %v1373, 0.7978846
    %v1438 = vmul.f32 %v1374, 0.7978846
    %v1439 = vmul.f32 %v1375, 0.7978846
    %v1440 = vmul.f32 %v1376, 0.7978846
    %v1441 = vmul.f32 %v1377, 0.7978846
    %v1442 = vmul.f32 %v1378, 0.7978846
    %v1443 = vmul.f32 %v1379, 0.7978846
    %v1444 = vmul.f32 %v1380, 0.7978846
    %v1445 = vmul.f32 %v1381, 0.7978846
    %v1446 = vmul.f32 %v1382, 0.7978846
    %v1447 = vmul.f32 %v1383, 0.7978846
    %v1448 = vmul.f32 %v1384, 0.7978846
    %v1449 = vmul.f32 %v1385, 0.7978846
    %v1450 = vmul.f32 %v1386, 0.7978846
    %v1451 = vmul.f32 %v1387, 0.7978846
    %v1452 = vmul.f32 %v1388, 0.7978846
    %v1453 = vmul.f32 %v1389, 0.7978846
    %v1454 = vmul.f32 %v1390, 0.7978846
    %v1455 = vmul.f32 %v1391, 0.7978846
    %v1456 = vmul.f32 %v1392, 0.7978846
    %v1457 = vmul.f32 %v1393, 0.7978846
    %v1458 = vmul.f32 %v1394, 0.7978846
    %v1459 = vmul.f32 %v1395, 0.7978846
    %v1460 = vmul.f32 %v1396, 0.7978846
    %v1461 = vmul.f32 %v1397, 0.7978846
    %v1462 = vtanh.pop %v1398
    %v1463 = vtanh.pop %v1399
    %v1464 = vtanh.pop %v1400
    %v1465 = vtanh.pop %v1401
    %v1466 = vtanh.pop %v1402
    %v1467 = vtanh.pop %v1403
    %v1468 = vtanh.pop %v1404
    %v1469 = vtanh.pop %v1405
    %v1470 = vtanh.pop %v1406
    %v1471 = vtanh.pop %v1407
    %v1472 = vtanh.pop %v1408
    %v1473 = vtanh.pop %v1409
    %v1474 = vtanh.pop %v1410
    %v1475 = vtanh.pop %v1411
    %v1476 = vtanh.pop %v1412
    %v1477 = vtanh.pop %v1413
    %v1478 = vtanh.pop %v1414
    %v1479 = vtanh.pop %v1415
    %v1480 = vtanh.pop %v1416
    %v1481 = vtanh.pop %v1417
    %v1482 = vtanh.pop %v1418
    %v1483 = vtanh.pop %v1419
    %v1484 = vtanh.pop %v1420
    %v1485 = vtanh.pop %v1421
    %v1486 = vtanh.pop %v1422
    %v1487 = vtanh.pop %v1423
    %v1488 = vtanh.pop %v1424
    %v1489 = vtanh.pop %v1425
    %v1490 = vtanh.pop %v1426
    %v1491 = vtanh.pop %v1427
    %v1492 = vtanh.pop %v1428
    %v1493 = vtanh.pop %v1429
    %v1494 = vtanh.pop %v1430
    %v1495 = vtanh.pop %v1431
    %v1496 = vtanh.pop %v1432
    %v1497 = vtanh.pop %v1433
    %v1498 = vtanh.pop %v1434
    %v1499 = vtanh.pop %v1435
    %v1500 = vtanh.pop %v1436
    %v1501 = vtanh.pop %v1437
    %v1502 = vtanh.pop %v1438
    %v1503 = vtanh.pop %v1439
    %v1504 = vtanh.pop %v1440
    %v1505 = vtanh.pop %v1441
    %v1506 = vtanh.pop %v1442
    %v1507 = vtanh.pop %v1443
    %v1508 = vtanh.pop %v1444
    %v1509 = vtanh.pop %v1445
    %v1510 = vtanh.pop %v1446
    %v1511 = vtanh.pop %v1447
    %v1512 = vtanh.pop %v1448
    %v1513 = vtanh.pop %v1449
    %v1514 = vtanh.pop %v1450
    %v1515 = vtanh.pop %v1451
    %v1516 = vtanh.pop %v1452
    %v1517 = vtanh.pop %v1453
    %v1518 = vtanh.pop %v1454
    %v1519 = vtanh.pop %v1455
    %v1520 = vtanh.pop %v1456
    %v1521 = vtanh.pop %v1457
    %v1522 = vtanh.pop %v1458
    %v1523 = vtanh.pop %v1459
    %v1524 = vtanh.pop %v1460
    %v1525 = vtanh.pop %v1461
    %v1526 = vadd.f32 %v1462, 1.0
    %v1527 = vadd.f32 %v1463, 1.0
    %v1528 = vadd.f32 %v1464, 1.0
    %v1529 = vadd.f32 %v1465, 1.0
    %v1530 = vadd.f32 %v1466, 1.0
    %v1531 = vadd.f32 %v1467, 1.0
    %v1532 = vadd.f32 %v1468, 1.0
    %v1533 = vadd.f32 %v1469, 1.0
    %v1534 = vadd.f32 %v1470, 1.0
    %v1535 = vadd.f32 %v1471, 1.0
    %v1536 = vadd.f32 %v1472, 1.0
    %v1537 = vadd.f32 %v1473, 1.0
    %v1538 = vadd.f32 %v1474, 1.0
    %v1539 = vadd.f32 %v1475, 1.0
    %v1540 = vadd.f32 %v1476, 1.0
    %v1541 = vadd.f32 %v1477, 1.0
    %v1542 = vadd.f32 %v1478, 1.0
    %v1543 = vadd.f32 %v1479, 1.0
    %v1544 = vadd.f32 %v1480, 1.0
    %v1545 = vadd.f32 %v1481, 1.0
    %v1546 = vadd.f32 %v1482, 1.0
    %v1547 = vadd.f32 %v1483, 1.0
    %v1548 = vadd.f32 %v1484, 1.0
    %v1549 = vadd.f32 %v1485, 1.0
    %v1550 = vadd.f32 %v1486, 1.0
    %v1551 = vadd.f32 %v1487, 1.0
    %v1552 = vadd.f32 %v1488, 1.0
    %v1553 = vadd.f32 %v1489, 1.0
    %v1554 = vadd.f32 %v1490, 1.0
    %v1555 = vadd.f32 %v1491, 1.0
    %v1556 = vadd.f32 %v1492, 1.0
    %v1557 = vadd.f32 %v1493, 1.0
    %v1558 = vadd.f32 %v1494, 1.0
    %v1559 = vadd.f32 %v1495, 1.0
    %v1560 = vadd.f32 %v1496, 1.0
    %v1561 = vadd.f32 %v1497, 1.0
    %v1562 = vadd.f32 %v1498, 1.0
    %v1563 = vadd.f32 %v1499, 1.0
    %v1564 = vadd.f32 %v1500, 1.0
    %v1565 = vadd.f32 %v1501, 1.0
    %v1566 = vadd.f32 %v1502, 1.0
    %v1567 = vadd.f32 %v1503, 1.0
    %v1568 = vadd.f32 %v1504, 1.0
    %v1569 = vadd.f32 %v1505, 1.0
    %v1570 = vadd.f32 %v1506, 1.0
    %v1571 = vadd.f32 %v1507, 1.0
    %v1572 = vadd.f32 %v1508, 1.0
    %v1573 = vadd.f32 %v1509, 1.0
    %v1574 = vadd.f32 %v1510, 1.0
    %v1575 = vadd.f32 %v1511, 1.0
    %v1576 = vadd.f32 %v1512, 1.0
    %v1577 = vadd.f32 %v1513, 1.0
    %v1578 = vadd.f32 %v1514, 1.0
    %v1579 = vadd.f32 %v1515, 1.0
    %v1580 = vadd.f32 %v1516, 1.0
    %v1581 = vadd.f32 %v1517, 1.0
    %v1582 = vadd.f32 %v1518, 1.0
    %v1583 = vadd.f32 %v1519, 1.0
    %v1584 = vadd.f32 %v1520, 1.0
    %v1585 = vadd.f32 %v1521, 1.0
    %v1586 = vadd.f32 %v1522, 1.0
    %v1587 = vadd.f32 %v1523, 1.0
    %v1588 = vadd.f32 %v1524, 1.0
    %v1589 = vadd.f32 %v1525, 1.0
    %v1590 = vmul.f32 %v1078, %v1526
    %v1591 = vmul.f32 %v1079, %v1527
    %v1592 = vmul.f32 %v1080, %v1528
    %v1593 = vmul.f32 %v1081, %v1529
    %v1594 = vmul.f32 %v1082, %v1530
    %v1595 = vmul.f32 %v1083, %v1531
    %v1596 = vmul.f32 %v1084, %v1532
    %v1597 = vmul.f32 %v1085, %v1533
    %v1598 = vmul.f32 %v1086, %v1534
    %v1599 = vmul.f32 %v1087, %v1535
    %v1600 = vmul.f32 %v1088, %v1536
    %v1601 = vmul.f32 %v1089, %v1537
    %v1602 = vmul.f32 %v1090, %v1538
    %v1603 = vmul.f32 %v1091, %v1539
    %v1604 = vmul.f32 %v1092, %v1540
    %v1605 = vmul.f32 %v1093, %v1541
    %v1606 = vmul.f32 %v1094, %v1542
    %v1607 = vmul.f32 %v1095, %v1543
    %v1608 = vmul.f32 %v1096, %v1544
    %v1609 = vmul.f32 %v1097, %v1545
    %v1610 = vmul.f32 %v1098, %v1546
    %v1611 = vmul.f32 %v1099, %v1547
    %v1612 = vmul.f32 %v1100, %v1548
    %v1613 = vmul.f32 %v1101, %v1549
    %v1614 = vmul.f32 %v1102, %v1550
    %v1615 = vmul.f32 %v1103, %v1551
    %v1616 = vmul.f32 %v1104, %v1552
    %v1617 = vmul.f32 %v1105, %v1553
    %v1618 = vmul.f32 %v1106, %v1554
    %v1619 = vmul.f32 %v1107, %v1555
    %v1620 = vmul.f32 %v1108, %v1556
    %v1621 = vmul.f32 %v1109, %v1557
    %v1622 = vmul.f32 %v1110, %v1558
    %v1623 = vmul.f32 %v1111, %v1559
    %v1624 = vmul.f32 %v1112, %v1560
    %v1625 = vmul.f32 %v1113, %v1561
    %v1626 = vmul.f32 %v1114, %v1562
    %v1627 = vmul.f32 %v1115, %v1563
    %v1628 = vmul.f32 %v1116, %v1564
    %v1629 = vmul.f32 %v1117, %v1565
    %v1630 = vmul.f32 %v1118, %v1566
    %v1631 = vmul.f32 %v1119, %v1567
    %v1632 = vmul.f32 %v1120, %v1568
    %v1633 = vmul.f32 %v1121, %v1569
    %v1634 = vmul.f32 %v1122, %v1570
    %v1635 = vmul.f32 %v1123, %v1571
    %v1636 = vmul.f32 %v1124, %v1572
    %v1637 = vmul.f32 %v1125, %v1573
    %v1638 = vmul.f32 %v1126, %v1574
    %v1639 = vmul.f32 %v1127, %v1575
    %v1640 = vmul.f32 %v1128, %v1576
    %v1641 = vmul.f32 %v1129, %v1577
    %v1642 = vmul.f32 %v1130, %v1578
    %v1643 = vmul.f32 %v1131, %v1579
    %v1644 = vmul.f32 %v1132, %v1580
    %v1645 = vmul.f32 %v1133, %v1581
    %v1646 = vmul.f32 %v1134, %v1582
    %v1647 = vmul.f32 %v1135, %v1583
    %v1648 = vmul.f32 %v1136, %v1584
    %v1649 = vmul.f32 %v1137, %v1585
    %v1650 = vmul.f32 %v1138, %v1586
    %v1651 = vmul.f32 %v1139, %v1587
    %v1652 = vmul.f32 %v1140, %v1588
    %v1653 = vmul.f32 %v1141, %v1589
    %1654 = vst.msk [vmem:[%s3] sm:$0xff] %vm102, %v1590
    %1655 = vst.msk [vmem:[%s3 + $0x8] sm:$0xff] %vm102, %v1591
    %1656 = vst.msk [vmem:[%s3 + $0x10] sm:$0xff] %vm102, %v1592
    %1657 = vst.msk [vmem:[%s3 + $0x18] sm:$0xff] %vm102, %v1593
    %1658 = vst.msk [vmem:[%s3 + $0x20] sm:$0xff] %vm102, %v1594
    %1659 = vst.msk [vmem:[%s3 + $0x28] sm:$0xff] %vm102, %v1595
    %1660 = vst.msk [vmem:[%s3 + $0x30] sm:$0xff] %vm102, %v1596
    %1661 = vst.msk [vmem:[%s3 + $0x38] sm:$0xff] %vm102, %v1597
    %1662 = vst.msk [vmem:[%s3 + $0x40] sm:$0xff] %vm102, %v1598
    %1663 = vst.msk [vmem:[%s3 + $0x48] sm:$0xff] %vm102, %v1599
    %1664 = vst.msk [vmem:[%s3 + $0x50] sm:$0xff] %vm102, %v1600
    %1665 = vst.msk [vmem:[%s3 + $0x58] sm:$0xff] %vm102, %v1601
    %1666 = vst.msk [vmem:[%s3 + $0x60] sm:$0xff] %vm102, %v1602
    %1667 = vst.msk [vmem:[%s3 + $0x68] sm:$0xff] %vm102, %v1603
    %1668 = vst.msk [vmem:[%s3 + $0x70] sm:$0xff] %vm102, %v1604
    %1669 = vst.msk [vmem:[%s3 + $0x78] sm:$0xff] %vm102, %v1605
    %1670 = vst.msk [vmem:[%s3 + $0x80] sm:$0xff] %vm102, %v1606
    %1671 = vst.msk [vmem:[%s3 + $0x88] sm:$0xff] %vm102, %v1607
    %1672 = vst.msk [vmem:[%s3 + $0x90] sm:$0xff] %vm102, %v1608
    %1673 = vst.msk [vmem:[%s3 + $0x98] sm:$0xff] %vm102, %v1609
    %1674 = vst.msk [vmem:[%s3 + $0xa0] sm:$0xff] %vm102, %v1610
    %1675 = vst.msk [vmem:[%s3 + $0xa8] sm:$0xff] %vm102, %v1611
    %1676 = vst.msk [vmem:[%s3 + $0xb0] sm:$0xff] %vm102, %v1612
    %1677 = vst.msk [vmem:[%s3 + $0xb8] sm:$0xff] %vm102, %v1613
    %1678 = vst.msk [vmem:[%s3 + $0xc0] sm:$0xff] %vm102, %v1614
    %1679 = vst.msk [vmem:[%s3 + $0xc8] sm:$0xff] %vm102, %v1615
    %1680 = vst.msk [vmem:[%s3 + $0xd0] sm:$0xff] %vm102, %v1616
    %1681 = vst.msk [vmem:[%s3 + $0xd8] sm:$0xff] %vm102, %v1617
    %1682 = vst.msk [vmem:[%s3 + $0xe0] sm:$0xff] %vm102, %v1618
    %1683 = vst.msk [vmem:[%s3 + $0xe8] sm:$0xff] %vm102, %v1619
    %1684 = vst.msk [vmem:[%s3 + $0xf0] sm:$0xff] %vm102, %v1620
    %1685 = vst.msk [vmem:[%s3 + $0xf8] sm:$0xff] %vm102, %v1621
    %1686 = vst.msk [vmem:[%s3 + $0x100] sm:$0xff] %vm102, %v1622
    %1687 = vst.msk [vmem:[%s3 + $0x108] sm:$0xff] %vm102, %v1623
    %1688 = vst.msk [vmem:[%s3 + $0x110] sm:$0xff] %vm102, %v1624
    %1689 = vst.msk [vmem:[%s3 + $0x118] sm:$0xff] %vm102, %v1625
    %1690 = vst.msk [vmem:[%s3 + $0x120] sm:$0xff] %vm102, %v1626
    %1691 = vst.msk [vmem:[%s3 + $0x128] sm:$0xff] %vm102, %v1627
    %1692 = vst.msk [vmem:[%s3 + $0x130] sm:$0xff] %vm102, %v1628
    %1693 = vst.msk [vmem:[%s3 + $0x138] sm:$0xff] %vm102, %v1629
    %1694 = vst.msk [vmem:[%s3 + $0x140] sm:$0xff] %vm102, %v1630
    %1695 = vst.msk [vmem:[%s3 + $0x148] sm:$0xff] %vm102, %v1631
    %1696 = vst.msk [vmem:[%s3 + $0x150] sm:$0xff] %vm102, %v1632
    %1697 = vst.msk [vmem:[%s3 + $0x158] sm:$0xff] %vm102, %v1633
    %1698 = vst.msk [vmem:[%s3 + $0x160] sm:$0xff] %vm102, %v1634
    %1699 = vst.msk [vmem:[%s3 + $0x168] sm:$0xff] %vm102, %v1635
    %1700 = vst.msk [vmem:[%s3 + $0x170] sm:$0xff] %vm102, %v1636
    %1701 = vst.msk [vmem:[%s3 + $0x178] sm:$0xff] %vm102, %v1637
    %1702 = vst.msk [vmem:[%s3 + $0x180] sm:$0xff] %vm102, %v1638
    %1703 = vst.msk [vmem:[%s3 + $0x188] sm:$0xff] %vm102, %v1639
    %1704 = vst.msk [vmem:[%s3 + $0x190] sm:$0xff] %vm102, %v1640
    %1705 = vst.msk [vmem:[%s3 + $0x198] sm:$0xff] %vm102, %v1641
    %1706 = vst.msk [vmem:[%s3 + $0x1a0] sm:$0xff] %vm102, %v1642
    %1707 = vst.msk [vmem:[%s3 + $0x1a8] sm:$0xff] %vm102, %v1643
    %1708 = vst.msk [vmem:[%s3 + $0x1b0] sm:$0xff] %vm102, %v1644
    %1709 = vst.msk [vmem:[%s3 + $0x1b8] sm:$0xff] %vm102, %v1645
    %1710 = vst.msk [vmem:[%s3 + $0x1c0] sm:$0xff] %vm102, %v1646
    %1711 = vst.msk [vmem:[%s3 + $0x1c8] sm:$0xff] %vm102, %v1647
    %1712 = vst.msk [vmem:[%s3 + $0x1d0] sm:$0xff] %vm102, %v1648
    %1713 = vst.msk [vmem:[%s3 + $0x1d8] sm:$0xff] %vm102, %v1649
    %1714 = vst.msk [vmem:[%s3 + $0x1e0] sm:$0xff] %vm102, %v1650
    %1715 = vst.msk [vmem:[%s3 + $0x1e8] sm:$0xff] %vm102, %v1651
    %1716 = vst.msk [vmem:[%s3 + $0x1f0] sm:$0xff] %vm102, %v1652
    %1717 = vst.msk [vmem:[%s3 + $0x1f8] sm:$0xff] %vm102, %v1653
    // Predicated region
    $region22: #{speech_model_forward.16} parent=1 // pred_check
      _
    $region23: #{speech_model_forward.16} parent=1 // pred_check_branch
      %1719 = sbr.rel (0) target = $region25
    $region24: #{speech_model_forward.16} parent=1 // pred_region
      _
    $region25: #{speech_model_forward.16} parent=1 // pred_fallthru
      _
    // Predicated region
    $region26: #{speech_model_forward.16} parent=1 // pred_check
      _
    $region27: #{speech_model_forward.16} parent=1 // pred_check_branch
      %1721 = sbr.rel (0) target = $region29
    $region28: #{speech_model_forward.16} parent=1 // pred_region
      _
    $region29: #{speech_model_forward.16} parent=1 // pred_fallthru
      _
    %1722 = vsyncpa [#allocation3], 1
    %1723 = vsyncpa [#allocation5], 1

// kernel: speech_model_forward.17
$region0: #{speech_model_forward.17}
  #allocation0 [shape = 'u32[]', space=smem, size = 0x4, offset = 0x4, fixed_abs, tag = 'smem constant byte address 0x4 - core index']
  #allocation1 [shape = 'u32[144,128]{1,0:T(1,128)}', space=vmem, size = 0x12000, scoped, tag = 'internal scratch']
  #allocation2 [shape = 'f32[128,128]{1,0:T(8,128)}', space=vmem, size = 0x10000, scoped, tag = 'scratch operand']
  %s0 = inlined_call_operand.vmem [shape: f32[128,288], index: 0, kind: input, shape index: {}]
  %s1 = inlined_call_operand.vmem [shape: f32[288,128], index: 1, kind: input, shape index: {}]
  %s2 = inlined_call_operand.vmem [shape: f32[1,128], index: 2, kind: input, shape index: {}]
  %s3 = inlined_call_operand.vmem [shape: f32[128,128], index: 3, kind: output, shape index: {}]
  %s4 = sld [smem:[#allocation0]]
  $region30: #{speech_model_forward.17} parent=0
    _
  %s6 = ssub.s32 1, %s4
  %s7 = scalar_select 0, %s6, %s4
  // Predicated region
  $region2: #{speech_model_forward.17} parent=0 // pred_check
    _
  $region3: #{speech_model_forward.17} parent=0 // pred_check_branch
    %9 = sbr.rel (0) target = $region5
  $region4: #{speech_model_forward.17} parent=0 // pred_region
    _
  $region5: #{speech_model_forward.17} parent=0 // pred_fallthru
    _
  // Predicated region
  $region6: #{speech_model_forward.17} parent=0 // pred_check
    _
  $region7: #{speech_model_forward.17} parent=0 // pred_check_branch
    %11 = sbr.rel (0) target = $region9
  $region8: #{speech_model_forward.17} parent=0 // pred_region
    _
  $region9: #{speech_model_forward.17} parent=0 // pred_fallthru
    _
  // Predicated region
  $region10: #{speech_model_forward.17} parent=0 // pred_check
    _
  $region11: #{speech_model_forward.17} parent=0 // pred_check_branch
    %13 = sbr.rel (0) target = $region13
  $region12: #{speech_model_forward.17} parent=0 // pred_region
    _
  $region13: #{speech_model_forward.17} parent=0 // pred_fallthru
    _
  %p14 = scmp.eq.s32.totalorder 0, 0
  // Predicated region
  $region14: #{speech_model_forward.17} parent=0 // pred_check
    %p15 = pneg %p14
  $region15: #{speech_model_forward.17} parent=0 // pred_check_branch
    %17 = sbr.rel (%p15) target = $region17
  $region16: #{speech_model_forward.17} parent=0 // pred_region
    %18 = vst [vmem:[#allocation2] sm:$0xff] 0.0
    %19 = vst [vmem:[#allocation2 + $0x8] sm:$0xff] 0.0
    %20 = vst [vmem:[#allocation2 + $0x10] sm:$0xff] 0.0
    %21 = vst [vmem:[#allocation2 + $0x18] sm:$0xff] 0.0
    %22 = vst [vmem:[#allocation2 + $0x20] sm:$0xff] 0.0
    %23 = vst [vmem:[#allocation2 + $0x28] sm:$0xff] 0.0
    %24 = vst [vmem:[#allocation2 + $0x30] sm:$0xff] 0.0
    %25 = vst [vmem:[#allocation2 + $0x38] sm:$0xff] 0.0
    %26 = vst [vmem:[#allocation2 + $0x40] sm:$0xff] 0.0
    %27 = vst [vmem:[#allocation2 + $0x48] sm:$0xff] 0.0
    %28 = vst [vmem:[#allocation2 + $0x50] sm:$0xff] 0.0
    %29 = vst [vmem:[#allocation2 + $0x58] sm:$0xff] 0.0
    %30 = vst [vmem:[#allocation2 + $0x60] sm:$0xff] 0.0
    %31 = vst [vmem:[#allocation2 + $0x68] sm:$0xff] 0.0
    %32 = vst [vmem:[#allocation2 + $0x70] sm:$0xff] 0.0
    %33 = vst [vmem:[#allocation2 + $0x78] sm:$0xff] 0.0
  $region17: #{speech_model_forward.17} parent=0 // pred_fallthru
    _
  %v34 = vld [vmem:[#allocation2] sm:$0xff]
  %v35 = vld [vmem:[#allocation2 + $0x8] sm:$0xff]
  %v36 = vld [vmem:[#allocation2 + $0x10] sm:$0xff]
  %v37 = vld [vmem:[#allocation2 + $0x18] sm:$0xff]
  %v38 = vld [vmem:[#allocation2 + $0x20] sm:$0xff]
  %v39 = vld [vmem:[#allocation2 + $0x28] sm:$0xff]
  %v40 = vld [vmem:[#allocation2 + $0x30] sm:$0xff]
  %v41 = vld [vmem:[#allocation2 + $0x38] sm:$0xff]
  %v42 = vld [vmem:[#allocation2 + $0x40] sm:$0xff]
  %v43 = vld [vmem:[#allocation2 + $0x48] sm:$0xff]
  %v44 = vld [vmem:[#allocation2 + $0x50] sm:$0xff]
  %v45 = vld [vmem:[#allocation2 + $0x58] sm:$0xff]
  %v46 = vld [vmem:[#allocation2 + $0x60] sm:$0xff]
  %v47 = vld [vmem:[#allocation2 + $0x68] sm:$0xff]
  %v48 = vld [vmem:[#allocation2 + $0x70] sm:$0xff]
  %v49 = vld [vmem:[#allocation2 + $0x78] sm:$0xff]
  %v50 = vld [vmem:[%s0] sm:$0xff]
  %v51 = vld [vmem:[%s0 + $0x8] sm:$0xff]
  %v52 = vld [vmem:[%s0 + $0x10] sm:$0xff]
  %v53 = vld [vmem:[%s0 + $0x18] sm:$0xff]
  %v54 = vld [vmem:[%s0 + $0x20] sm:$0xff]
  %v55 = vld [vmem:[%s0 + $0x28] sm:$0xff]
  %v56 = vld [vmem:[%s0 + $0x30] sm:$0xff]
  %v57 = vld [vmem:[%s0 + $0x38] sm:$0xff]
  %v58 = vld [vmem:[%s0 + $0x40] sm:$0xff]
  %v59 = vld [vmem:[%s0 + $0x48] sm:$0xff]
  %v60 = vld [vmem:[%s0 + $0x50] sm:$0xff]
  %v61 = vld [vmem:[%s0 + $0x58] sm:$0xff]
  %v62 = vld [vmem:[%s0 + $0x60] sm:$0xff]
  %v63 = vld [vmem:[%s0 + $0x68] sm:$0xff]
  %v64 = vld [vmem:[%s0 + $0x70] sm:$0xff]
  %v65 = vld [vmem:[%s0 + $0x78] sm:$0xff]
  %v66 = vld [vmem:[%s0 + $0x80] sm:$0xff]
  %v67 = vld [vmem:[%s0 + $0x88] sm:$0xff]
  %v68 = vld [vmem:[%s0 + $0x90] sm:$0xff]
  %v69 = vld [vmem:[%s0 + $0x98] sm:$0xff]
  %v70 = vld [vmem:[%s0 + $0xa0] sm:$0xff]
  %v71 = vld [vmem:[%s0 + $0xa8] sm:$0xff]
  %v72 = vld [vmem:[%s0 + $0xb0] sm:$0xff]
  %v73 = vld [vmem:[%s0 + $0xb8] sm:$0xff]
  %v74 = vld [vmem:[%s0 + $0xc0] sm:$0xff]
  %v75 = vld [vmem:[%s0 + $0xc8] sm:$0xff]
  %v76 = vld [vmem:[%s0 + $0xd0] sm:$0xff]
  %v77 = vld [vmem:[%s0 + $0xd8] sm:$0xff]
  %v78 = vld [vmem:[%s0 + $0xe0] sm:$0xff]
  %v79 = vld [vmem:[%s0 + $0xe8] sm:$0xff]
  %v80 = vld [vmem:[%s0 + $0xf0] sm:$0xff]
  %v81 = vld [vmem:[%s0 + $0xf8] sm:$0xff]
  %v82 = vld [vmem:[%s0 + $0x100] sm:$0xff]
  %v83 = vld [vmem:[%s0 + $0x108] sm:$0xff]
  %v84 = vld [vmem:[%s0 + $0x110] sm:$0xff]
  %v85 = vld [vmem:[%s0 + $0x118] sm:$0xff]
  %v86 = vld [vmem:[%s0 + $0x120] sm:$0xff]
  %v87 = vld [vmem:[%s0 + $0x128] sm:$0xff]
  %v88 = vld [vmem:[%s0 + $0x130] sm:$0xff]
  %v89 = vld [vmem:[%s0 + $0x138] sm:$0xff]
  %v90 = vld [vmem:[%s0 + $0x140] sm:$0xff]
  %v91 = vld [vmem:[%s0 + $0x148] sm:$0xff]
  %v92 = vld [vmem:[%s0 + $0x150] sm:$0xff]
  %v93 = vld [vmem:[%s0 + $0x158] sm:$0xff]
  %v94 = vld [vmem:[%s0 + $0x160] sm:$0xff]
  %v95 = vld [vmem:[%s0 + $0x168] sm:$0xff]
  %v96 = vld [vmem:[%s0 + $0x170] sm:$0xff]
  %v97 = vld [vmem:[%s0 + $0x178] sm:$0xff]
  %v98 = vld [vmem:[%s1] sm:$0xff]
  %v99 = vld [vmem:[%s1 + $0x8] sm:$0xff]
  %v100 = vld [vmem:[%s1 + $0x10] sm:$0xff]
  %v101 = vld [vmem:[%s1 + $0x18] sm:$0xff]
  %v102 = vld [vmem:[%s1 + $0x20] sm:$0xff]
  %v103 = vld [vmem:[%s1 + $0x28] sm:$0xff]
  %v104 = vld [vmem:[%s1 + $0x30] sm:$0xff]
  %v105 = vld [vmem:[%s1 + $0x38] sm:$0xff]
  %v106 = vld [vmem:[%s1 + $0x40] sm:$0xff]
  %v107 = vld [vmem:[%s1 + $0x48] sm:$0xff]
  %v108 = vld [vmem:[%s1 + $0x50] sm:$0xff]
  %v109 = vld [vmem:[%s1 + $0x58] sm:$0xff]
  %v110 = vld [vmem:[%s1 + $0x60] sm:$0xff]
  %v111 = vld [vmem:[%s1 + $0x68] sm:$0xff]
  %v112 = vld [vmem:[%s1 + $0x70] sm:$0xff]
  %v113 = vld [vmem:[%s1 + $0x78] sm:$0xff]
  %v114 = vld [vmem:[%s1 + $0x80] sm:$0xff]
  %v115 = vld [vmem:[%s1 + $0x88] sm:$0xff]
  %v116 = vld [vmem:[%s1 + $0x90] sm:$0xff]
  %v117 = vld [vmem:[%s1 + $0x98] sm:$0xff]
  %v118 = vld [vmem:[%s1 + $0xa0] sm:$0xff]
  %v119 = vld [vmem:[%s1 + $0xa8] sm:$0xff]
  %v120 = vld [vmem:[%s1 + $0xb0] sm:$0xff]
  %v121 = vld [vmem:[%s1 + $0xb8] sm:$0xff]
  %v122 = vld [vmem:[%s1 + $0xc0] sm:$0xff]
  %v123 = vld [vmem:[%s1 + $0xc8] sm:$0xff]
  %v124 = vld [vmem:[%s1 + $0xd0] sm:$0xff]
  %v125 = vld [vmem:[%s1 + $0xd8] sm:$0xff]
  %v126 = vld [vmem:[%s1 + $0xe0] sm:$0xff]
  %v127 = vld [vmem:[%s1 + $0xe8] sm:$0xff]
  %v128 = vld [vmem:[%s1 + $0xf0] sm:$0xff]
  %v129 = vld [vmem:[%s1 + $0xf8] sm:$0xff]
  %v130 = vld [vmem:[%s1 + $0x100] sm:$0xff]
  %v131 = vld [vmem:[%s1 + $0x108] sm:$0xff]
  %v132 = vld [vmem:[%s1 + $0x110] sm:$0xff]
  %v133 = vld [vmem:[%s1 + $0x118] sm:$0xff]
  %vm134 = vcmask 261120
  %v136 = vsel %vm134, %v52, 0
  %v139 = vsel %vm134, %v55, 0
  %v142 = vsel %vm134, %v58, 0
  %v145 = vsel %vm134, %v61, 0
  %v148 = vsel %vm134, %v64, 0
  %v151 = vsel %vm134, %v67, 0
  %v154 = vsel %vm134, %v70, 0
  %v157 = vsel %vm134, %v73, 0
  %v160 = vsel %vm134, %v76, 0
  %v163 = vsel %vm134, %v79, 0
  %v166 = vsel %vm134, %v82, 0
  %v169 = vsel %vm134, %v85, 0
  %v172 = vsel %vm134, %v88, 0
  %v175 = vsel %vm134, %v91, 0
  %v178 = vsel %vm134, %v94, 0
  %v181 = vsel %vm134, %v97, 0
  %183 = vmatprep.subr.mxu0 0.0
  %184 = vmatpush1.msra.mxu0 %v113
  %185 = vmatprep.subr.mxu0 0.0
  %186 = vmatpush1.msra.mxu0 %v112
  %187 = vmatprep.subr.mxu0 0.0
  %188 = vmatpush1.msra.mxu0 %v111
  %189 = vmatprep.subr.mxu0 0.0
  %190 = vmatpush1.msra.mxu0 %v110
  %191 = vmatprep.subr.mxu0 0.0
  %192 = vmatpush1.msra.mxu0 %v109
  %193 = vmatprep.subr.mxu0 0.0
  %194 = vmatpush1.msra.mxu0 %v108
  %195 = vmatprep.subr.mxu0 0.0
  %196 = vmatpush1.msra.mxu0 %v107
  %197 = vmatprep.subr.mxu0 0.0
  %198 = vmatpush1.msra.mxu0 %v106
  %199 = vmatprep.subr.mxu0 0.0
  %200 = vmatpush1.msra.mxu0 %v105
  %201 = vmatprep.subr.mxu0 0.0
  %202 = vmatpush1.msra.mxu0 %v104
  %203 = vmatprep.subr.mxu0 0.0
  %204 = vmatpush1.msra.mxu0 %v103
  %205 = vmatprep.subr.mxu0 0.0
  %206 = vmatpush1.msra.mxu0 %v102
  %207 = vmatprep.subr.mxu0 0.0
  %208 = vmatpush1.msra.mxu0 %v101
  %209 = vmatprep.subr.mxu0 0.0
  %210 = vmatpush1.msra.mxu0 %v100
  %211 = vmatprep.subr.mxu0 0.0
  %212 = vmatpush1.msra.mxu0 %v99
  %213 = vmatprep.subr.mxu0 0.0
  %214 = vmatpush1.msra.mxu0 %v98
  %215 = vmatprep.subr.mxu0 0.0
  %216 = vmatpush2.msra.mxu0 %v129
  %217 = vmatprep.subr.mxu0 0.0
  %218 = vmatpush2.msra.mxu0 %v128
  %219 = vmatprep.subr.mxu0 0.0
  %220 = vmatpush2.msra.mxu0 %v127
  %221 = vmatprep.subr.mxu0 0.0
  %222 = vmatpush2.msra.mxu0 %v126
  %223 = vmatprep.subr.mxu0 0.0
  %224 = vmatpush2.msra.mxu0 %v125
  %225 = vmatprep.subr.mxu0 0.0
  %226 = vmatpush2.msra.mxu0 %v124
  %227 = vmatprep.subr.mxu0 0.0
  %228 = vmatpush2.msra.mxu0 %v123
  %229 = vmatprep.subr.mxu0 0.0
  %230 = vmatpush2.msra.mxu0 %v122
  %231 = vmatprep.subr.mxu0 0.0
  %232 = vmatpush2.msra.mxu0 %v121
  %233 = vmatprep.subr.mxu0 0.0
  %234 = vmatpush2.msra.mxu0 %v120
  %235 = vmatprep.subr.mxu0 0.0
  %236 = vmatpush2.msra.mxu0 %v119
  %237 = vmatprep.subr.mxu0 0.0
  %238 = vmatpush2.msra.mxu0 %v118
  %239 = vmatprep.subr.mxu0 0.0
  %240 = vmatpush2.msra.mxu0 %v117
  %241 = vmatprep.subr.mxu0 0.0
  %242 = vmatpush2.msra.mxu0 %v116
  %243 = vmatprep.subr.mxu0 0.0
  %244 = vmatpush2.msra.mxu0 %v115
  %245 = vmatprep.subr.mxu0 0.0
  %246 = vmatpush2.msra.mxu0 %v114
  %247 = vmatprep.mubr.f32.mxu0 %v51
  %248 = vmatmul.mubr.f32.gmra.mxu0 %v50
  %v249 = vpop.f32.mrf.mxu0
  %v250 = vadd.f32 0.0, %v249
  %v251 = vpop.f32.mrf.mxu0
  %252 = vmatprep.mubr.f32.mxu0 %v54
  %253 = vmatmul.mubr.f32.gmra.mxu0 %v53
  %v254 = vpop.f32.mrf.mxu0
  %v255 = vadd.f32 0.0, %v254
  %v256 = vpop.f32.mrf.mxu0
  %257 = vmatprep.mubr.f32.mxu0 %v57
  %258 = vmatmul.mubr.f32.gmra.mxu0 %v56
  %v259 = vpop.f32.mrf.mxu0
  %v260 = vadd.f32 0.0, %v259
  %v261 = vpop.f32.mrf.mxu0
  %262 = vmatprep.mubr.f32.mxu0 %v60
  %263 = vmatmul.mubr.f32.gmra.mxu0 %v59
  %v264 = vpop.f32.mrf.mxu0
  %v265 = vadd.f32 0.0, %v264
  %v266 = vpop.f32.mrf.mxu0
  %267 = vmatprep.mubr.f32.mxu0 %v63
  %268 = vmatmul.mubr.f32.gmra.mxu0 %v62
  %v269 = vpop.f32.mrf.mxu0
  %v270 = vadd.f32 0.0, %v269
  %v271 = vpop.f32.mrf.mxu0
  %272 = vmatprep.mubr.f32.mxu0 %v66
  %273 = vmatmul.mubr.f32.gmra.mxu0 %v65
  %v274 = vpop.f32.mrf.mxu0
  %v275 = vadd.f32 0.0, %v274
  %v276 = vpop.f32.mrf.mxu0
  %277 = vmatprep.mubr.f32.mxu0 %v69
  %278 = vmatmul.mubr.f32.gmra.mxu0 %v68
  %v279 = vpop.f32.mrf.mxu0
  %v280 = vadd.f32 0.0, %v279
  %v281 = vpop.f32.mrf.mxu0
  %282 = vmatprep.mubr.f32.mxu0 %v72
  %283 = vmatmul.mubr.f32.gmra.mxu0 %v71
  %v284 = vpop.f32.mrf.mxu0
  %v285 = vadd.f32 0.0, %v284
  %v286 = vpop.f32.mrf.mxu0
  %287 = vmatprep.mubr.f32.mxu0 %v75
  %288 = vmatmul.mubr.f32.gmra.mxu0 %v74
  %v289 = vpop.f32.mrf.mxu0
  %v290 = vadd.f32 0.0, %v289
  %v291 = vpop.f32.mrf.mxu0
  %292 = vmatprep.mubr.f32.mxu0 %v78
  %293 = vmatmul.mubr.f32.gmra.mxu0 %v77
  %v294 = vpop.f32.mrf.mxu0
  %v295 = vadd.f32 0.0, %v294
  %v296 = vpop.f32.mrf.mxu0
  %297 = vmatprep.mubr.f32.mxu0 %v81
  %298 = vmatmul.mubr.f32.gmra.mxu0 %v80
  %v299 = vpop.f32.mrf.mxu0
  %v300 = vadd.f32 0.0, %v299
  %v301 = vpop.f32.mrf.mxu0
  %302 = vmatprep.mubr.f32.mxu0 %v84
  %303 = vmatmul.mubr.f32.gmra.mxu0 %v83
  %v304 = vpop.f32.mrf.mxu0
  %v305 = vadd.f32 0.0, %v304
  %v306 = vpop.f32.mrf.mxu0
  %307 = vmatprep.mubr.f32.mxu0 %v87
  %308 = vmatmul.mubr.f32.gmra.mxu0 %v86
  %v309 = vpop.f32.mrf.mxu0
  %v310 = vadd.f32 0.0, %v309
  %v311 = vpop.f32.mrf.mxu0
  %312 = vmatprep.mubr.f32.mxu0 %v90
  %313 = vmatmul.mubr.f32.gmra.mxu0 %v89
  %v314 = vpop.f32.mrf.mxu0
  %v315 = vadd.f32 0.0, %v314
  %v316 = vpop.f32.mrf.mxu0
  %317 = vmatprep.mubr.f32.mxu0 %v93
  %318 = vmatmul.mubr.f32.gmra.mxu0 %v92
  %v319 = vpop.f32.mrf.mxu0
  %v320 = vadd.f32 0.0, %v319
  %v321 = vpop.f32.mrf.mxu0
  %322 = vmatprep.mubr.f32.mxu0 %v96
  %323 = vmatmul.mubr.f32.gmra.mxu0 %v95
  %v324 = vpop.f32.mrf.mxu0
  %v325 = vadd.f32 0.0, %v324
  %v326 = vpop.f32.mrf.mxu0
  %327 = vdwg.mxu0
  %328 = vmatprep.subr.mxu0 0.0
  %329 = vmatpush1.msra.mxu0 0.0
  %330 = vmatprep.subr.mxu0 0.0
  %331 = vmatpush1.msra.mxu0 0.0
  %332 = vmatprep.subr.mxu0 0.0
  %333 = vmatpush1.msra.mxu0 0.0
  %334 = vmatprep.subr.mxu0 0.0
  %335 = vmatpush1.msra.mxu0 0.0
  %336 = vmatprep.subr.mxu0 0.0
  %337 = vmatpush1.msra.mxu0 0.0
  %338 = vmatprep.subr.mxu0 0.0
  %339 = vmatpush1.msra.mxu0 0.0
  %340 = vmatprep.subr.mxu0 0.0
  %341 = vmatpush1.msra.mxu0 0.0
  %342 = vmatprep.subr.mxu0 0.0
  %343 = vmatpush1.msra.mxu0 0.0
  %344 = vmatprep.subr.mxu0 0.0
  %345 = vmatpush1.msra.mxu0 0.0
  %346 = vmatprep.subr.mxu0 0.0
  %347 = vmatpush1.msra.mxu0 0.0
  %348 = vmatprep.subr.mxu0 0.0
  %349 = vmatpush1.msra.mxu0 0.0
  %350 = vmatprep.subr.mxu0 0.0
  %351 = vmatpush1.msra.mxu0 0.0
  %352 = vmatprep.subr.mxu0 0.0
  %353 = vmatpush1.msra.mxu0 %v133
  %354 = vmatprep.subr.mxu0 0.0
  %355 = vmatpush1.msra.mxu0 %v132
  %356 = vmatprep.subr.mxu0 0.0
  %357 = vmatpush1.msra.mxu0 %v131
  %358 = vmatprep.subr.mxu0 0.0
  %359 = vmatpush1.msra.mxu0 %v130
  %360 = vmatprep.subr.mxu0 0.0
  %361 = vmatpush2.msra.mxu0 0.0
  %362 = vmatprep.subr.mxu0 0.0
  %363 = vmatpush2.msra.mxu0 0.0
  %364 = vmatprep.subr.mxu0 0.0
  %365 = vmatpush2.msra.mxu0 0.0
  %366 = vmatprep.subr.mxu0 0.0
  %367 = vmatpush2.msra.mxu0 0.0
  %368 = vmatprep.subr.mxu0 0.0
  %369 = vmatpush2.msra.mxu0 0.0
  %370 = vmatprep.subr.mxu0 0.0
  %371 = vmatpush2.msra.mxu0 0.0
  %372 = vmatprep.subr.mxu0 0.0
  %373 = vmatpush2.msra.mxu0 0.0
  %374 = vmatprep.subr.mxu0 0.0
  %375 = vmatpush2.msra.mxu0 0.0
  %376 = vmatprep.subr.mxu0 0.0
  %377 = vmatpush2.msra.mxu0 0.0
  %378 = vmatprep.subr.mxu0 0.0
  %379 = vmatpush2.msra.mxu0 0.0
  %380 = vmatprep.subr.mxu0 0.0
  %381 = vmatpush2.msra.mxu0 0.0
  %382 = vmatprep.subr.mxu0 0.0
  %383 = vmatpush2.msra.mxu0 0.0
  %384 = vmatprep.subr.mxu0 0.0
  %385 = vmatpush2.msra.mxu0 0.0
  %386 = vmatprep.subr.mxu0 0.0
  %387 = vmatpush2.msra.mxu0 0.0
  %388 = vmatprep.subr.mxu0 0.0
  %389 = vmatpush2.msra.mxu0 0.0
  %390 = vmatprep.subr.mxu0 0.0
  %391 = vmatpush2.msra.mxu0 0.0
  %392 = vmatprep.mubr.f32.mxu0 0.0
  %393 = vmatmul.mubr.f32.gmra.mxu0 %v136
  %v394 = vpop.f32.mrf.mxu0
  %v395 = vadd.f32 %v250, %v394
  %v396 = vpop.f32.mrf.mxu0
  %397 = vmatprep.mubr.f32.mxu0 0.0
  %398 = vmatmul.mubr.f32.gmra.mxu0 %v139
  %v399 = vpop.f32.mrf.mxu0
  %v400 = vadd.f32 %v255, %v399
  %v401 = vpop.f32.mrf.mxu0
  %402 = vmatprep.mubr.f32.mxu0 0.0
  %403 = vmatmul.mubr.f32.gmra.mxu0 %v142
  %v404 = vpop.f32.mrf.mxu0
  %v405 = vadd.f32 %v260, %v404
  %v406 = vpop.f32.mrf.mxu0
  %407 = vmatprep.mubr.f32.mxu0 0.0
  %408 = vmatmul.mubr.f32.gmra.mxu0 %v145
  %v409 = vpop.f32.mrf.mxu0
  %v410 = vadd.f32 %v265, %v409
  %v411 = vpop.f32.mrf.mxu0
  %412 = vmatprep.mubr.f32.mxu0 0.0
  %413 = vmatmul.mubr.f32.gmra.mxu0 %v148
  %v414 = vpop.f32.mrf.mxu0
  %v415 = vadd.f32 %v270, %v414
  %v416 = vpop.f32.mrf.mxu0
  %417 = vmatprep.mubr.f32.mxu0 0.0
  %418 = vmatmul.mubr.f32.gmra.mxu0 %v151
  %v419 = vpop.f32.mrf.mxu0
  %v420 = vadd.f32 %v275, %v419
  %v421 = vpop.f32.mrf.mxu0
  %422 = vmatprep.mubr.f32.mxu0 0.0
  %423 = vmatmul.mubr.f32.gmra.mxu0 %v154
  %v424 = vpop.f32.mrf.mxu0
  %v425 = vadd.f32 %v280, %v424
  %v426 = vpop.f32.mrf.mxu0
  %427 = vmatprep.mubr.f32.mxu0 0.0
  %428 = vmatmul.mubr.f32.gmra.mxu0 %v157
  %v429 = vpop.f32.mrf.mxu0
  %v430 = vadd.f32 %v285, %v429
  %v431 = vpop.f32.mrf.mxu0
  %432 = vmatprep.mubr.f32.mxu0 0.0
  %433 = vmatmul.mubr.f32.gmra.mxu0 %v160
  %v434 = vpop.f32.mrf.mxu0
  %v435 = vadd.f32 %v290, %v434
  %v436 = vpop.f32.mrf.mxu0
  %437 = vmatprep.mubr.f32.mxu0 0.0
  %438 = vmatmul.mubr.f32.gmra.mxu0 %v163
  %v439 = vpop.f32.mrf.mxu0
  %v440 = vadd.f32 %v295, %v439
  %v441 = vpop.f32.mrf.mxu0
  %442 = vmatprep.mubr.f32.mxu0 0.0
  %443 = vmatmul.mubr.f32.gmra.mxu0 %v166
  %v444 = vpop.f32.mrf.mxu0
  %v445 = vadd.f32 %v300, %v444
  %v446 = vpop.f32.mrf.mxu0
  %447 = vmatprep.mubr.f32.mxu0 0.0
  %448 = vmatmul.mubr.f32.gmra.mxu0 %v169
  %v449 = vpop.f32.mrf.mxu0
  %v450 = vadd.f32 %v305, %v449
  %v451 = vpop.f32.mrf.mxu0
  %452 = vmatprep.mubr.f32.mxu0 0.0
  %453 = vmatmul.mubr.f32.gmra.mxu0 %v172
  %v454 = vpop.f32.mrf.mxu0
  %v455 = vadd.f32 %v310, %v454
  %v456 = vpop.f32.mrf.mxu0
  %457 = vmatprep.mubr.f32.mxu0 0.0
  %458 = vmatmul.mubr.f32.gmra.mxu0 %v175
  %v459 = vpop.f32.mrf.mxu0
  %v460 = vadd.f32 %v315, %v459
  %v461 = vpop.f32.mrf.mxu0
  %462 = vmatprep.mubr.f32.mxu0 0.0
  %463 = vmatmul.mubr.f32.gmra.mxu0 %v178
  %v464 = vpop.f32.mrf.mxu0
  %v465 = vadd.f32 %v320, %v464
  %v466 = vpop.f32.mrf.mxu0
  %467 = vmatprep.mubr.f32.mxu0 0.0
  %468 = vmatmul.mubr.f32.gmra.mxu0 %v181
  %v469 = vpop.f32.mrf.mxu0
  %v470 = vadd.f32 %v325, %v469
  %v471 = vpop.f32.mrf.mxu0
  %472 = vdwg.mxu0
  %v473 = vadd.f32 %v34, %v395
  %v474 = vadd.f32 %v35, %v400
  %v475 = vadd.f32 %v36, %v405
  %v476 = vadd.f32 %v37, %v410
  %v477 = vadd.f32 %v38, %v415
  %v478 = vadd.f32 %v39, %v420
  %v479 = vadd.f32 %v40, %v425
  %v480 = vadd.f32 %v41, %v430
  %v481 = vadd.f32 %v42, %v435
  %v482 = vadd.f32 %v43, %v440
  %v483 = vadd.f32 %v44, %v445
  %v484 = vadd.f32 %v45, %v450
  %v485 = vadd.f32 %v46, %v455
  %v486 = vadd.f32 %v47, %v460
  %v487 = vadd.f32 %v48, %v465
  %v488 = vadd.f32 %v49, %v470
  %489 = vst [vmem:[#allocation2] sm:$0xff] %v473
  %490 = vst [vmem:[#allocation2 + $0x8] sm:$0xff] %v474
  %491 = vst [vmem:[#allocation2 + $0x10] sm:$0xff] %v475
  %492 = vst [vmem:[#allocation2 + $0x18] sm:$0xff] %v476
  %493 = vst [vmem:[#allocation2 + $0x20] sm:$0xff] %v477
  %494 = vst [vmem:[#allocation2 + $0x28] sm:$0xff] %v478
  %495 = vst [vmem:[#allocation2 + $0x30] sm:$0xff] %v479
  %496 = vst [vmem:[#allocation2 + $0x38] sm:$0xff] %v480
  %497 = vst [vmem:[#allocation2 + $0x40] sm:$0xff] %v481
  %498 = vst [vmem:[#allocation2 + $0x48] sm:$0xff] %v482
  %499 = vst [vmem:[#allocation2 + $0x50] sm:$0xff] %v483
  %500 = vst [vmem:[#allocation2 + $0x58] sm:$0xff] %v484
  %501 = vst [vmem:[#allocation2 + $0x60] sm:$0xff] %v485
  %502 = vst [vmem:[#allocation2 + $0x68] sm:$0xff] %v486
  %503 = vst [vmem:[#allocation2 + $0x70] sm:$0xff] %v487
  %504 = vst [vmem:[#allocation2 + $0x78] sm:$0xff] %v488
  // Predicated region
  $region18: #{speech_model_forward.17} parent=0 // pred_check
    %p505 = pneg %p14
  $region19: #{speech_model_forward.17} parent=0 // pred_check_branch
    %507 = sbr.rel (%p505) target = $region21
  $region20: #{speech_model_forward.17} parent=0 // pred_region
    %v508 = vld [vmem:[#allocation2] sm:$0xff]
    %v509 = vld [vmem:[#allocation2 + $0x8] sm:$0xff]
    %v510 = vld [vmem:[#allocation2 + $0x10] sm:$0xff]
    %v511 = vld [vmem:[#allocation2 + $0x18] sm:$0xff]
    %v512 = vld [vmem:[#allocation2 + $0x20] sm:$0xff]
    %v513 = vld [vmem:[#allocation2 + $0x28] sm:$0xff]
    %v514 = vld [vmem:[#allocation2 + $0x30] sm:$0xff]
    %v515 = vld [vmem:[#allocation2 + $0x38] sm:$0xff]
    %v516 = vld [vmem:[#allocation2 + $0x40] sm:$0xff]
    %v517 = vld [vmem:[#allocation2 + $0x48] sm:$0xff]
    %v518 = vld [vmem:[#allocation2 + $0x50] sm:$0xff]
    %v519 = vld [vmem:[#allocation2 + $0x58] sm:$0xff]
    %v520 = vld [vmem:[#allocation2 + $0x60] sm:$0xff]
    %v521 = vld [vmem:[#allocation2 + $0x68] sm:$0xff]
    %v522 = vld [vmem:[#allocation2 + $0x70] sm:$0xff]
    %v523 = vld [vmem:[#allocation2 + $0x78] sm:$0xff]
    %v524 = vld [vmem:[%s2] sm:$0x1]
    %v526 = vlaneseq
    %v527 = vshrl.u32 %v526, 7
    %v528 = vsub.s32 0, %v527
    %v529 = vrot.slane %v524, %v528
    %v531 = vadd.f32 %v508, %v529
    %v532 = vadd.f32 %v509, %v529
    %v533 = vadd.f32 %v510, %v529
    %v534 = vadd.f32 %v511, %v529
    %v535 = vadd.f32 %v512, %v529
    %v536 = vadd.f32 %v513, %v529
    %v537 = vadd.f32 %v514, %v529
    %v538 = vadd.f32 %v515, %v529
    %v539 = vadd.f32 %v516, %v529
    %v540 = vadd.f32 %v517, %v529
    %v541 = vadd.f32 %v518, %v529
    %v542 = vadd.f32 %v519, %v529
    %v543 = vadd.f32 %v520, %v529
    %v544 = vadd.f32 %v521, %v529
    %v545 = vadd.f32 %v522, %v529
    %v546 = vadd.f32 %v523, %v529
    %547 = vst [vmem:[%s3] sm:$0xff] %v531
    %548 = vst [vmem:[%s3 + $0x8] sm:$0xff] %v532
    %549 = vst [vmem:[%s3 + $0x10] sm:$0xff] %v533
    %550 = vst [vmem:[%s3 + $0x18] sm:$0xff] %v534
    %551 = vst [vmem:[%s3 + $0x20] sm:$0xff] %v535
    %552 = vst [vmem:[%s3 + $0x28] sm:$0xff] %v536
    %553 = vst [vmem:[%s3 + $0x30] sm:$0xff] %v537
    %554 = vst [vmem:[%s3 + $0x38] sm:$0xff] %v538
    %555 = vst [vmem:[%s3 + $0x40] sm:$0xff] %v539
    %556 = vst [vmem:[%s3 + $0x48] sm:$0xff] %v540
    %557 = vst [vmem:[%s3 + $0x50] sm:$0xff] %v541
    %558 = vst [vmem:[%s3 + $0x58] sm:$0xff] %v542
    %559 = vst [vmem:[%s3 + $0x60] sm:$0xff] %v543
    %560 = vst [vmem:[%s3 + $0x68] sm:$0xff] %v544
    %561 = vst [vmem:[%s3 + $0x70] sm:$0xff] %v545
    %562 = vst [vmem:[%s3 + $0x78] sm:$0xff] %v546
  $region21: #{speech_model_forward.17} parent=0 // pred_fallthru
    _
  // Predicated region
  $region22: #{speech_model_forward.17} parent=0 // pred_check
    _
  $region23: #{speech_model_forward.17} parent=0 // pred_check_branch
    %564 = sbr.rel (0) target = $region25
  $region24: #{speech_model_forward.17} parent=0 // pred_region
    _
  $region25: #{speech_model_forward.17} parent=0 // pred_fallthru
    _
  // Predicated region
  $region26: #{speech_model_forward.17} parent=0 // pred_check
    _
  $region27: #{speech_model_forward.17} parent=0 // pred_check_branch
    %566 = sbr.rel (0) target = $region29
  $region28: #{speech_model_forward.17} parent=0 // pred_region
    _
  $region29: #{speech_model_forward.17} parent=0 // pred_fallthru
    _

// kernel: speech_model_forward.18
$region0: #{speech_model_forward.18}
  #allocation0 [shape = 'u32[]', space=smem, size = 0x4, offset = 0x4, fixed_abs, tag = 'smem constant byte address 0x4 - core index']
  #allocation1 [shape = 'u32[144,128]{1,0:T(1,128)}', space=vmem, size = 0x12000, scoped, tag = 'internal scratch']
  %s0 = inlined_call_operand.vmem [shape: f32[512,8], index: 0, kind: input, shape index: {}]
  %s1 = inlined_call_operand.vmem [shape: f32[1,8], index: 1, kind: input, shape index: {}]
  %s2 = inlined_call_operand.vmem [shape: f32[1,8], index: 2, kind: input, shape index: {}]
  %s3 = inlined_call_operand.vmem [shape: f32[512,8], index: 3, kind: output, shape index: {}]
  %s4 = sld [smem:[#allocation0]]
  $region22: #{speech_model_forward.18} parent=0
    _
  %s6 = ssub.s32 1, %s4
  %s7 = scalar_select 0, %s6, %s4
  // Predicated region
  $region2: #{speech_model_forward.18} parent=0 // pred_check
    _
  $region3: #{speech_model_forward.18} parent=0 // pred_check_branch
    %9 = sbr.rel (0) target = $region5
  $region4: #{speech_model_forward.18} parent=0 // pred_region
    _
  $region5: #{speech_model_forward.18} parent=0 // pred_fallthru
    _
  // Predicated region
  $region6: #{speech_model_forward.18} parent=0 // pred_check
    _
  $region7: #{speech_model_forward.18} parent=0 // pred_check_branch
    %11 = sbr.rel (0) target = $region9
  $region8: #{speech_model_forward.18} parent=0 // pred_region
    _
  $region9: #{speech_model_forward.18} parent=0 // pred_fallthru
    _
  // Predicated region
  $region10: #{speech_model_forward.18} parent=0 // pred_check
    _
  $region11: #{speech_model_forward.18} parent=0 // pred_check_branch
    %13 = sbr.rel (0) target = $region13
  $region12: #{speech_model_forward.18} parent=0 // pred_region
    _
  $region13: #{speech_model_forward.18} parent=0 // pred_fallthru
    _
  %v14 = vld [vmem:[%s0] sm:$0xff]
  %v15 = vld [vmem:[%s0 + $0x8] sm:$0xff]
  %v16 = vld [vmem:[%s0 + $0x10] sm:$0xff]
  %v17 = vld [vmem:[%s0 + $0x18] sm:$0xff]
  %v18 = vld [vmem:[%s0 + $0x20] sm:$0xff]
  %v19 = vld [vmem:[%s0 + $0x28] sm:$0xff]
  %v20 = vld [vmem:[%s0 + $0x30] sm:$0xff]
  %v21 = vld [vmem:[%s0 + $0x38] sm:$0xff]
  %v22 = vld [vmem:[%s0 + $0x40] sm:$0xff]
  %v23 = vld [vmem:[%s0 + $0x48] sm:$0xff]
  %v24 = vld [vmem:[%s0 + $0x50] sm:$0xff]
  %v25 = vld [vmem:[%s0 + $0x58] sm:$0xff]
  %v26 = vld [vmem:[%s0 + $0x60] sm:$0xff]
  %v27 = vld [vmem:[%s0 + $0x68] sm:$0xff]
  %v28 = vld [vmem:[%s0 + $0x70] sm:$0xff]
  %v29 = vld [vmem:[%s0 + $0x78] sm:$0xff]
  %v30 = vld [vmem:[%s0 + $0x80] sm:$0xff]
  %v31 = vld [vmem:[%s0 + $0x88] sm:$0xff]
  %v32 = vld [vmem:[%s0 + $0x90] sm:$0xff]
  %v33 = vld [vmem:[%s0 + $0x98] sm:$0xff]
  %v34 = vld [vmem:[%s0 + $0xa0] sm:$0xff]
  %v35 = vld [vmem:[%s0 + $0xa8] sm:$0xff]
  %v36 = vld [vmem:[%s0 + $0xb0] sm:$0xff]
  %v37 = vld [vmem:[%s0 + $0xb8] sm:$0xff]
  %v38 = vld [vmem:[%s0 + $0xc0] sm:$0xff]
  %v39 = vld [vmem:[%s0 + $0xc8] sm:$0xff]
  %v40 = vld [vmem:[%s0 + $0xd0] sm:$0xff]
  %v41 = vld [vmem:[%s0 + $0xd8] sm:$0xff]
  %v42 = vld [vmem:[%s0 + $0xe0] sm:$0xff]
  %v43 = vld [vmem:[%s0 + $0xe8] sm:$0xff]
  %v44 = vld [vmem:[%s0 + $0xf0] sm:$0xff]
  %v45 = vld [vmem:[%s0 + $0xf8] sm:$0xff]
  %v46 = vld [vmem:[%s0 + $0x100] sm:$0xff]
  %v47 = vld [vmem:[%s0 + $0x108] sm:$0xff]
  %v48 = vld [vmem:[%s0 + $0x110] sm:$0xff]
  %v49 = vld [vmem:[%s0 + $0x118] sm:$0xff]
  %v50 = vld [vmem:[%s0 + $0x120] sm:$0xff]
  %v51 = vld [vmem:[%s0 + $0x128] sm:$0xff]
  %v52 = vld [vmem:[%s0 + $0x130] sm:$0xff]
  %v53 = vld [vmem:[%s0 + $0x138] sm:$0xff]
  %v54 = vld [vmem:[%s0 + $0x140] sm:$0xff]
  %v55 = vld [vmem:[%s0 + $0x148] sm:$0xff]
  %v56 = vld [vmem:[%s0 + $0x150] sm:$0xff]
  %v57 = vld [vmem:[%s0 + $0x158] sm:$0xff]
  %v58 = vld [vmem:[%s0 + $0x160] sm:$0xff]
  %v59 = vld [vmem:[%s0 + $0x168] sm:$0xff]
  %v60 = vld [vmem:[%s0 + $0x170] sm:$0xff]
  %v61 = vld [vmem:[%s0 + $0x178] sm:$0xff]
  %v62 = vld [vmem:[%s0 + $0x180] sm:$0xff]
  %v63 = vld [vmem:[%s0 + $0x188] sm:$0xff]
  %v64 = vld [vmem:[%s0 + $0x190] sm:$0xff]
  %v65 = vld [vmem:[%s0 + $0x198] sm:$0xff]
  %v66 = vld [vmem:[%s0 + $0x1a0] sm:$0xff]
  %v67 = vld [vmem:[%s0 + $0x1a8] sm:$0xff]
  %v68 = vld [vmem:[%s0 + $0x1b0] sm:$0xff]
  %v69 = vld [vmem:[%s0 + $0x1b8] sm:$0xff]
  %v70 = vld [vmem:[%s0 + $0x1c0] sm:$0xff]
  %v71 = vld [vmem:[%s0 + $0x1c8] sm:$0xff]
  %v72 = vld [vmem:[%s0 + $0x1d0] sm:$0xff]
  %v73 = vld [vmem:[%s0 + $0x1d8] sm:$0xff]
  %v74 = vld [vmem:[%s0 + $0x1e0] sm:$0xff]
  %v75 = vld [vmem:[%s0 + $0x1e8] sm:$0xff]
  %v76 = vld [vmem:[%s0 + $0x1f0] sm:$0xff]
  %v77 = vld [vmem:[%s0 + $0x1f8] sm:$0xff]
  %vm78 = vcmask 64512
  %v79 = vsel %vm78, %v14, 0.0
  %80 = vadd.xlane.f32.xlu0 %v79
  %v81 = vpop.xlane.xlu0 %80
  %v82 = vsel %vm78, %v15, 0.0
  %83 = vadd.xlane.f32.xlu0 %v82
  %v84 = vpop.xlane.xlu0 %83
  %v85 = vsel %vm78, %v16, 0.0
  %86 = vadd.xlane.f32.xlu0 %v85
  %v87 = vpop.xlane.xlu0 %86
  %v88 = vsel %vm78, %v17, 0.0
  %89 = vadd.xlane.f32.xlu0 %v88
  %v90 = vpop.xlane.xlu0 %89
  %v91 = vsel %vm78, %v18, 0.0
  %92 = vadd.xlane.f32.xlu0 %v91
  %v93 = vpop.xlane.xlu0 %92
  %v94 = vsel %vm78, %v19, 0.0
  %95 = vadd.xlane.f32.xlu0 %v94
  %v96 = vpop.xlane.xlu0 %95
  %v97 = vsel %vm78, %v20, 0.0
  %98 = vadd.xlane.f32.xlu0 %v97
  %v99 = vpop.xlane.xlu0 %98
  %v100 = vsel %vm78, %v21, 0.0
  %101 = vadd.xlane.f32.xlu0 %v100
  %v102 = vpop.xlane.xlu0 %101
  %v103 = vsel %vm78, %v22, 0.0
  %104 = vadd.xlane.f32.xlu0 %v103
  %v105 = vpop.xlane.xlu0 %104
  %v106 = vsel %vm78, %v23, 0.0
  %107 = vadd.xlane.f32.xlu0 %v106
  %v108 = vpop.xlane.xlu0 %107
  %v109 = vsel %vm78, %v24, 0.0
  %110 = vadd.xlane.f32.xlu0 %v109
  %v111 = vpop.xlane.xlu0 %110
  %v112 = vsel %vm78, %v25, 0.0
  %113 = vadd.xlane.f32.xlu0 %v112
  %v114 = vpop.xlane.xlu0 %113
  %v115 = vsel %vm78, %v26, 0.0
  %116 = vadd.xlane.f32.xlu0 %v115
  %v117 = vpop.xlane.xlu0 %116
  %v118 = vsel %vm78, %v27, 0.0
  %119 = vadd.xlane.f32.xlu0 %v118
  %v120 = vpop.xlane.xlu0 %119
  %v121 = vsel %vm78, %v28, 0.0
  %122 = vadd.xlane.f32.xlu0 %v121
  %v123 = vpop.xlane.xlu0 %122
  %v124 = vsel %vm78, %v29, 0.0
  %125 = vadd.xlane.f32.xlu0 %v124
  %v126 = vpop.xlane.xlu0 %125
  %v127 = vsel %vm78, %v30, 0.0
  %128 = vadd.xlane.f32.xlu0 %v127
  %v129 = vpop.xlane.xlu0 %128
  %v130 = vsel %vm78, %v31, 0.0
  %131 = vadd.xlane.f32.xlu0 %v130
  %v132 = vpop.xlane.xlu0 %131
  %v133 = vsel %vm78, %v32, 0.0
  %134 = vadd.xlane.f32.xlu0 %v133
  %v135 = vpop.xlane.xlu0 %134
  %v136 = vsel %vm78, %v33, 0.0
  %137 = vadd.xlane.f32.xlu0 %v136
  %v138 = vpop.xlane.xlu0 %137
  %v139 = vsel %vm78, %v34, 0.0
  %140 = vadd.xlane.f32.xlu0 %v139
  %v141 = vpop.xlane.xlu0 %140
  %v142 = vsel %vm78, %v35, 0.0
  %143 = vadd.xlane.f32.xlu0 %v142
  %v144 = vpop.xlane.xlu0 %143
  %v145 = vsel %vm78, %v36, 0.0
  %146 = vadd.xlane.f32.xlu0 %v145
  %v147 = vpop.xlane.xlu0 %146
  %v148 = vsel %vm78, %v37, 0.0
  %149 = vadd.xlane.f32.xlu0 %v148
  %v150 = vpop.xlane.xlu0 %149
  %v151 = vsel %vm78, %v38, 0.0
  %152 = vadd.xlane.f32.xlu0 %v151
  %v153 = vpop.xlane.xlu0 %152
  %v154 = vsel %vm78, %v39, 0.0
  %155 = vadd.xlane.f32.xlu0 %v154
  %v156 = vpop.xlane.xlu0 %155
  %v157 = vsel %vm78, %v40, 0.0
  %158 = vadd.xlane.f32.xlu0 %v157
  %v159 = vpop.xlane.xlu0 %158
  %v160 = vsel %vm78, %v41, 0.0
  %161 = vadd.xlane.f32.xlu0 %v160
  %v162 = vpop.xlane.xlu0 %161
  %v163 = vsel %vm78, %v42, 0.0
  %164 = vadd.xlane.f32.xlu0 %v163
  %v165 = vpop.xlane.xlu0 %164
  %v166 = vsel %vm78, %v43, 0.0
  %167 = vadd.xlane.f32.xlu0 %v166
  %v168 = vpop.xlane.xlu0 %167
  %v169 = vsel %vm78, %v44, 0.0
  %170 = vadd.xlane.f32.xlu0 %v169
  %v171 = vpop.xlane.xlu0 %170
  %v172 = vsel %vm78, %v45, 0.0
  %173 = vadd.xlane.f32.xlu0 %v172
  %v174 = vpop.xlane.xlu0 %173
  %v175 = vsel %vm78, %v46, 0.0
  %176 = vadd.xlane.f32.xlu0 %v175
  %v177 = vpop.xlane.xlu0 %176
  %v178 = vsel %vm78, %v47, 0.0
  %179 = vadd.xlane.f32.xlu0 %v178
  %v180 = vpop.xlane.xlu0 %179
  %v181 = vsel %vm78, %v48, 0.0
  %182 = vadd.xlane.f32.xlu0 %v181
  %v183 = vpop.xlane.xlu0 %182
  %v184 = vsel %vm78, %v49, 0.0
  %185 = vadd.xlane.f32.xlu0 %v184
  %v186 = vpop.xlane.xlu0 %185
  %v187 = vsel %vm78, %v50, 0.0
  %188 = vadd.xlane.f32.xlu0 %v187
  %v189 = vpop.xlane.xlu0 %188
  %v190 = vsel %vm78, %v51, 0.0
  %191 = vadd.xlane.f32.xlu0 %v190
  %v192 = vpop.xlane.xlu0 %191
  %v193 = vsel %vm78, %v52, 0.0
  %194 = vadd.xlane.f32.xlu0 %v193
  %v195 = vpop.xlane.xlu0 %194
  %v196 = vsel %vm78, %v53, 0.0
  %197 = vadd.xlane.f32.xlu0 %v196
  %v198 = vpop.xlane.xlu0 %197
  %v199 = vsel %vm78, %v54, 0.0
  %200 = vadd.xlane.f32.xlu0 %v199
  %v201 = vpop.xlane.xlu0 %200
  %v202 = vsel %vm78, %v55, 0.0
  %203 = vadd.xlane.f32.xlu0 %v202
  %v204 = vpop.xlane.xlu0 %203
  %v205 = vsel %vm78, %v56, 0.0
  %206 = vadd.xlane.f32.xlu0 %v205
  %v207 = vpop.xlane.xlu0 %206
  %v208 = vsel %vm78, %v57, 0.0
  %209 = vadd.xlane.f32.xlu0 %v208
  %v210 = vpop.xlane.xlu0 %209
  %v211 = vsel %vm78, %v58, 0.0
  %212 = vadd.xlane.f32.xlu0 %v211
  %v213 = vpop.xlane.xlu0 %212
  %v214 = vsel %vm78, %v59, 0.0
  %215 = vadd.xlane.f32.xlu0 %v214
  %v216 = vpop.xlane.xlu0 %215
  %v217 = vsel %vm78, %v60, 0.0
  %218 = vadd.xlane.f32.xlu0 %v217
  %v219 = vpop.xlane.xlu0 %218
  %v220 = vsel %vm78, %v61, 0.0
  %221 = vadd.xlane.f32.xlu0 %v220
  %v222 = vpop.xlane.xlu0 %221
  %v223 = vsel %vm78, %v62, 0.0
  %224 = vadd.xlane.f32.xlu0 %v223
  %v225 = vpop.xlane.xlu0 %224
  %v226 = vsel %vm78, %v63, 0.0
  %227 = vadd.xlane.f32.xlu0 %v226
  %v228 = vpop.xlane.xlu0 %227
  %v229 = vsel %vm78, %v64, 0.0
  %230 = vadd.xlane.f32.xlu0 %v229
  %v231 = vpop.xlane.xlu0 %230
  %v232 = vsel %vm78, %v65, 0.0
  %233 = vadd.xlane.f32.xlu0 %v232
  %v234 = vpop.xlane.xlu0 %233
  %v235 = vsel %vm78, %v66, 0.0
  %236 = vadd.xlane.f32.xlu0 %v235
  %v237 = vpop.xlane.xlu0 %236
  %v238 = vsel %vm78, %v67, 0.0
  %239 = vadd.xlane.f32.xlu0 %v238
  %v240 = vpop.xlane.xlu0 %239
  %v241 = vsel %vm78, %v68, 0.0
  %242 = vadd.xlane.f32.xlu0 %v241
  %v243 = vpop.xlane.xlu0 %242
  %v244 = vsel %vm78, %v69, 0.0
  %245 = vadd.xlane.f32.xlu0 %v244
  %v246 = vpop.xlane.xlu0 %245
  %v247 = vsel %vm78, %v70, 0.0
  %248 = vadd.xlane.f32.xlu0 %v247
  %v249 = vpop.xlane.xlu0 %248
  %v250 = vsel %vm78, %v71, 0.0
  %251 = vadd.xlane.f32.xlu0 %v250
  %v252 = vpop.xlane.xlu0 %251
  %v253 = vsel %vm78, %v72, 0.0
  %254 = vadd.xlane.f32.xlu0 %v253
  %v255 = vpop.xlane.xlu0 %254
  %v256 = vsel %vm78, %v73, 0.0
  %257 = vadd.xlane.f32.xlu0 %v256
  %v258 = vpop.xlane.xlu0 %257
  %v259 = vsel %vm78, %v74, 0.0
  %260 = vadd.xlane.f32.xlu0 %v259
  %v261 = vpop.xlane.xlu0 %260
  %v262 = vsel %vm78, %v75, 0.0
  %263 = vadd.xlane.f32.xlu0 %v262
  %v264 = vpop.xlane.xlu0 %263
  %v265 = vsel %vm78, %v76, 0.0
  %266 = vadd.xlane.f32.xlu0 %v265
  %v267 = vpop.xlane.xlu0 %266
  %v268 = vsel %vm78, %v77, 0.0
  %269 = vadd.xlane.f32.xlu0 %v268
  %v270 = vpop.xlane.xlu0 %269
  %v271 = vrcp.pop 8.0
  %v272 = vmul.f32 %v81, %v271
  %v273 = vmul.f32 %v84, %v271
  %v274 = vmul.f32 %v87, %v271
  %v275 = vmul.f32 %v90, %v271
  %v276 = vmul.f32 %v93, %v271
  %v277 = vmul.f32 %v96, %v271
  %v278 = vmul.f32 %v99, %v271
  %v279 = vmul.f32 %v102, %v271
  %v280 = vmul.f32 %v105, %v271
  %v281 = vmul.f32 %v108, %v271
  %v282 = vmul.f32 %v111, %v271
  %v283 = vmul.f32 %v114, %v271
  %v284 = vmul.f32 %v117, %v271
  %v285 = vmul.f32 %v120, %v271
  %v286 = vmul.f32 %v123, %v271
  %v287 = vmul.f32 %v126, %v271
  %v288 = vmul.f32 %v129, %v271
  %v289 = vmul.f32 %v132, %v271
  %v290 = vmul.f32 %v135, %v271
  %v291 = vmul.f32 %v138, %v271
  %v292 = vmul.f32 %v141, %v271
  %v293 = vmul.f32 %v144, %v271
  %v294 = vmul.f32 %v147, %v271
  %v295 = vmul.f32 %v150, %v271
  %v296 = vmul.f32 %v153, %v271
  %v297 = vmul.f32 %v156, %v271
  %v298 = vmul.f32 %v159, %v271
  %v299 = vmul.f32 %v162, %v271
  %v300 = vmul.f32 %v165, %v271
  %v301 = vmul.f32 %v168, %v271
  %v302 = vmul.f32 %v171, %v271
  %v303 = vmul.f32 %v174, %v271
  %v304 = vmul.f32 %v177, %v271
  %v305 = vmul.f32 %v180, %v271
  %v306 = vmul.f32 %v183, %v271
  %v307 = vmul.f32 %v186, %v271
  %v308 = vmul.f32 %v189, %v271
  %v309 = vmul.f32 %v192, %v271
  %v310 = vmul.f32 %v195, %v271
  %v311 = vmul.f32 %v198, %v271
  %v312 = vmul.f32 %v201, %v271
  %v313 = vmul.f32 %v204, %v271
  %v314 = vmul.f32 %v207, %v271
  %v315 = vmul.f32 %v210, %v271
  %v316 = vmul.f32 %v213, %v271
  %v317 = vmul.f32 %v216, %v271
  %v318 = vmul.f32 %v219, %v271
  %v319 = vmul.f32 %v222, %v271
  %v320 = vmul.f32 %v225, %v271
  %v321 = vmul.f32 %v228, %v271
  %v322 = vmul.f32 %v231, %v271
  %v323 = vmul.f32 %v234, %v271
  %v324 = vmul.f32 %v237, %v271
  %v325 = vmul.f32 %v240, %v271
  %v326 = vmul.f32 %v243, %v271
  %v327 = vmul.f32 %v246, %v271
  %v328 = vmul.f32 %v249, %v271
  %v329 = vmul.f32 %v252, %v271
  %v330 = vmul.f32 %v255, %v271
  %v331 = vmul.f32 %v258, %v271
  %v332 = vmul.f32 %v261, %v271
  %v333 = vmul.f32 %v264, %v271
  %v334 = vmul.f32 %v267, %v271
  %v335 = vmul.f32 %v270, %v271
  %v336 = vsub.f32 %v14, %v272
  %v337 = vsub.f32 %v15, %v273
  %v338 = vsub.f32 %v16, %v274
  %v339 = vsub.f32 %v17, %v275
  %v340 = vsub.f32 %v18, %v276
  %v341 = vsub.f32 %v19, %v277
  %v342 = vsub.f32 %v20, %v278
  %v343 = vsub.f32 %v21, %v279
  %v344 = vsub.f32 %v22, %v280
  %v345 = vsub.f32 %v23, %v281
  %v346 = vsub.f32 %v24, %v282
  %v347 = vsub.f32 %v25, %v283
  %v348 = vsub.f32 %v26, %v284
  %v349 = vsub.f32 %v27, %v285
  %v350 = vsub.f32 %v28, %v286
  %v351 = vsub.f32 %v29, %v287
  %v352 = vsub.f32 %v30, %v288
  %v353 = vsub.f32 %v31, %v289
  %v354 = vsub.f32 %v32, %v290
  %v355 = vsub.f32 %v33, %v291
  %v356 = vsub.f32 %v34, %v292
  %v357 = vsub.f32 %v35, %v293
  %v358 = vsub.f32 %v36, %v294
  %v359 = vsub.f32 %v37, %v295
  %v360 = vsub.f32 %v38, %v296
  %v361 = vsub.f32 %v39, %v297
  %v362 = vsub.f32 %v40, %v298
  %v363 = vsub.f32 %v41, %v299
  %v364 = vsub.f32 %v42, %v300
  %v365 = vsub.f32 %v43, %v301
  %v366 = vsub.f32 %v44, %v302
  %v367 = vsub.f32 %v45, %v303
  %v368 = vsub.f32 %v46, %v304
  %v369 = vsub.f32 %v47, %v305
  %v370 = vsub.f32 %v48, %v306
  %v371 = vsub.f32 %v49, %v307
  %v372 = vsub.f32 %v50, %v308
  %v373 = vsub.f32 %v51, %v309
  %v374 = vsub.f32 %v52, %v310
  %v375 = vsub.f32 %v53, %v311
  %v376 = vsub.f32 %v54, %v312
  %v377 = vsub.f32 %v55, %v313
  %v378 = vsub.f32 %v56, %v314
  %v379 = vsub.f32 %v57, %v315
  %v380 = vsub.f32 %v58, %v316
  %v381 = vsub.f32 %v59, %v317
  %v382 = vsub.f32 %v60, %v318
  %v383 = vsub.f32 %v61, %v319
  %v384 = vsub.f32 %v62, %v320
  %v385 = vsub.f32 %v63, %v321
  %v386 = vsub.f32 %v64, %v322
  %v387 = vsub.f32 %v65, %v323
  %v388 = vsub.f32 %v66, %v324
  %v389 = vsub.f32 %v67, %v325
  %v390 = vsub.f32 %v68, %v326
  %v391 = vsub.f32 %v69, %v327
  %v392 = vsub.f32 %v70, %v328
  %v393 = vsub.f32 %v71, %v329
  %v394 = vsub.f32 %v72, %v330
  %v395 = vsub.f32 %v73, %v331
  %v396 = vsub.f32 %v74, %v332
  %v397 = vsub.f32 %v75, %v333
  %v398 = vsub.f32 %v76, %v334
  %v399 = vsub.f32 %v77, %v335
  %v400 = vmul.f32 %v336, %v336
  %v401 = vmul.f32 %v337, %v337
  %v402 = vmul.f32 %v338, %v338
  %v403 = vmul.f32 %v339, %v339
  %v404 = vmul.f32 %v340, %v340
  %v405 = vmul.f32 %v341, %v341
  %v406 = vmul.f32 %v342, %v342
  %v407 = vmul.f32 %v343, %v343
  %v408 = vmul.f32 %v344, %v344
  %v409 = vmul.f32 %v345, %v345
  %v410 = vmul.f32 %v346, %v346
  %v411 = vmul.f32 %v347, %v347
  %v412 = vmul.f32 %v348, %v348
  %v413 = vmul.f32 %v349, %v349
  %v414 = vmul.f32 %v350, %v350
  %v415 = vmul.f32 %v351, %v351
  %v416 = vmul.f32 %v352, %v352
  %v417 = vmul.f32 %v353, %v353
  %v418 = vmul.f32 %v354, %v354
  %v419 = vmul.f32 %v355, %v355
  %v420 = vmul.f32 %v356, %v356
  %v421 = vmul.f32 %v357, %v357
  %v422 = vmul.f32 %v358, %v358
  %v423 = vmul.f32 %v359, %v359
  %v424 = vmul.f32 %v360, %v360
  %v425 = vmul.f32 %v361, %v361
  %v426 = vmul.f32 %v362, %v362
  %v427 = vmul.f32 %v363, %v363
  %v428 = vmul.f32 %v364, %v364
  %v429 = vmul.f32 %v365, %v365
  %v430 = vmul.f32 %v366, %v366
  %v431 = vmul.f32 %v367, %v367
  %v432 = vmul.f32 %v368, %v368
  %v433 = vmul.f32 %v369, %v369
  %v434 = vmul.f32 %v370, %v370
  %v435 = vmul.f32 %v371, %v371
  %v436 = vmul.f32 %v372, %v372
  %v437 = vmul.f32 %v373, %v373
  %v438 = vmul.f32 %v374, %v374
  %v439 = vmul.f32 %v375, %v375
  %v440 = vmul.f32 %v376, %v376
  %v441 = vmul.f32 %v377, %v377
  %v442 = vmul.f32 %v378, %v378
  %v443 = vmul.f32 %v379, %v379
  %v444 = vmul.f32 %v380, %v380
  %v445 = vmul.f32 %v381, %v381
  %v446 = vmul.f32 %v382, %v382
  %v447 = vmul.f32 %v383, %v383
  %v448 = vmul.f32 %v384, %v384
  %v449 = vmul.f32 %v385, %v385
  %v450 = vmul.f32 %v386, %v386
  %v451 = vmul.f32 %v387, %v387
  %v452 = vmul.f32 %v388, %v388
  %v453 = vmul.f32 %v389, %v389
  %v454 = vmul.f32 %v390, %v390
  %v455 = vmul.f32 %v391, %v391
  %v456 = vmul.f32 %v392, %v392
  %v457 = vmul.f32 %v393, %v393
  %v458 = vmul.f32 %v394, %v394
  %v459 = vmul.f32 %v395, %v395
  %v460 = vmul.f32 %v396, %v396
  %v461 = vmul.f32 %v397, %v397
  %v462 = vmul.f32 %v398, %v398
  %v463 = vmul.f32 %v399, %v399
  %v464 = vsel %vm78, %v400, 0.0
  %465 = vadd.xlane.f32.xlu0 %v464
  %v466 = vpop.xlane.xlu0 %465
  %v467 = vsel %vm78, %v401, 0.0
  %468 = vadd.xlane.f32.xlu0 %v467
  %v469 = vpop.xlane.xlu0 %468
  %v470 = vsel %vm78, %v402, 0.0
  %471 = vadd.xlane.f32.xlu0 %v470
  %v472 = vpop.xlane.xlu0 %471
  %v473 = vsel %vm78, %v403, 0.0
  %474 = vadd.xlane.f32.xlu0 %v473
  %v475 = vpop.xlane.xlu0 %474
  %v476 = vsel %vm78, %v404, 0.0
  %477 = vadd.xlane.f32.xlu0 %v476
  %v478 = vpop.xlane.xlu0 %477
  %v479 = vsel %vm78, %v405, 0.0
  %480 = vadd.xlane.f32.xlu0 %v479
  %v481 = vpop.xlane.xlu0 %480
  %v482 = vsel %vm78, %v406, 0.0
  %483 = vadd.xlane.f32.xlu0 %v482
  %v484 = vpop.xlane.xlu0 %483
  %v485 = vsel %vm78, %v407, 0.0
  %486 = vadd.xlane.f32.xlu0 %v485
  %v487 = vpop.xlane.xlu0 %486
  %v488 = vsel %vm78, %v408, 0.0
  %489 = vadd.xlane.f32.xlu0 %v488
  %v490 = vpop.xlane.xlu0 %489
  %v491 = vsel %vm78, %v409, 0.0
  %492 = vadd.xlane.f32.xlu0 %v491
  %v493 = vpop.xlane.xlu0 %492
  %v494 = vsel %vm78, %v410, 0.0
  %495 = vadd.xlane.f32.xlu0 %v494
  %v496 = vpop.xlane.xlu0 %495
  %v497 = vsel %vm78, %v411, 0.0
  %498 = vadd.xlane.f32.xlu0 %v497
  %v499 = vpop.xlane.xlu0 %498
  %v500 = vsel %vm78, %v412, 0.0
  %501 = vadd.xlane.f32.xlu0 %v500
  %v502 = vpop.xlane.xlu0 %501
  %v503 = vsel %vm78, %v413, 0.0
  %504 = vadd.xlane.f32.xlu0 %v503
  %v505 = vpop.xlane.xlu0 %504
  %v506 = vsel %vm78, %v414, 0.0
  %507 = vadd.xlane.f32.xlu0 %v506
  %v508 = vpop.xlane.xlu0 %507
  %v509 = vsel %vm78, %v415, 0.0
  %510 = vadd.xlane.f32.xlu0 %v509
  %v511 = vpop.xlane.xlu0 %510
  %v512 = vsel %vm78, %v416, 0.0
  %513 = vadd.xlane.f32.xlu0 %v512
  %v514 = vpop.xlane.xlu0 %513
  %v515 = vsel %vm78, %v417, 0.0
  %516 = vadd.xlane.f32.xlu0 %v515
  %v517 = vpop.xlane.xlu0 %516
  %v518 = vsel %vm78, %v418, 0.0
  %519 = vadd.xlane.f32.xlu0 %v518
  %v520 = vpop.xlane.xlu0 %519
  %v521 = vsel %vm78, %v419, 0.0
  %522 = vadd.xlane.f32.xlu0 %v521
  %v523 = vpop.xlane.xlu0 %522
  %v524 = vsel %vm78, %v420, 0.0
  %525 = vadd.xlane.f32.xlu0 %v524
  %v526 = vpop.xlane.xlu0 %525
  %v527 = vsel %vm78, %v421, 0.0
  %528 = vadd.xlane.f32.xlu0 %v527
  %v529 = vpop.xlane.xlu0 %528
  %v530 = vsel %vm78, %v422, 0.0
  %531 = vadd.xlane.f32.xlu0 %v530
  %v532 = vpop.xlane.xlu0 %531
  %v533 = vsel %vm78, %v423, 0.0
  %534 = vadd.xlane.f32.xlu0 %v533
  %v535 = vpop.xlane.xlu0 %534
  %v536 = vsel %vm78, %v424, 0.0
  %537 = vadd.xlane.f32.xlu0 %v536
  %v538 = vpop.xlane.xlu0 %537
  %v539 = vsel %vm78, %v425, 0.0
  %540 = vadd.xlane.f32.xlu0 %v539
  %v541 = vpop.xlane.xlu0 %540
  %v542 = vsel %vm78, %v426, 0.0
  %543 = vadd.xlane.f32.xlu0 %v542
  %v544 = vpop.xlane.xlu0 %543
  %v545 = vsel %vm78, %v427, 0.0
  %546 = vadd.xlane.f32.xlu0 %v545
  %v547 = vpop.xlane.xlu0 %546
  %v548 = vsel %vm78, %v428, 0.0
  %549 = vadd.xlane.f32.xlu0 %v548
  %v550 = vpop.xlane.xlu0 %549
  %v551 = vsel %vm78, %v429, 0.0
  %552 = vadd.xlane.f32.xlu0 %v551
  %v553 = vpop.xlane.xlu0 %552
  %v554 = vsel %vm78, %v430, 0.0
  %555 = vadd.xlane.f32.xlu0 %v554
  %v556 = vpop.xlane.xlu0 %555
  %v557 = vsel %vm78, %v431, 0.0
  %558 = vadd.xlane.f32.xlu0 %v557
  %v559 = vpop.xlane.xlu0 %558
  %v560 = vsel %vm78, %v432, 0.0
  %561 = vadd.xlane.f32.xlu0 %v560
  %v562 = vpop.xlane.xlu0 %561
  %v563 = vsel %vm78, %v433, 0.0
  %564 = vadd.xlane.f32.xlu0 %v563
  %v565 = vpop.xlane.xlu0 %564
  %v566 = vsel %vm78, %v434, 0.0
  %567 = vadd.xlane.f32.xlu0 %v566
  %v568 = vpop.xlane.xlu0 %567
  %v569 = vsel %vm78, %v435, 0.0
  %570 = vadd.xlane.f32.xlu0 %v569
  %v571 = vpop.xlane.xlu0 %570
  %v572 = vsel %vm78, %v436, 0.0
  %573 = vadd.xlane.f32.xlu0 %v572
  %v574 = vpop.xlane.xlu0 %573
  %v575 = vsel %vm78, %v437, 0.0
  %576 = vadd.xlane.f32.xlu0 %v575
  %v577 = vpop.xlane.xlu0 %576
  %v578 = vsel %vm78, %v438, 0.0
  %579 = vadd.xlane.f32.xlu0 %v578
  %v580 = vpop.xlane.xlu0 %579
  %v581 = vsel %vm78, %v439, 0.0
  %582 = vadd.xlane.f32.xlu0 %v581
  %v583 = vpop.xlane.xlu0 %582
  %v584 = vsel %vm78, %v440, 0.0
  %585 = vadd.xlane.f32.xlu0 %v584
  %v586 = vpop.xlane.xlu0 %585
  %v587 = vsel %vm78, %v441, 0.0
  %588 = vadd.xlane.f32.xlu0 %v587
  %v589 = vpop.xlane.xlu0 %588
  %v590 = vsel %vm78, %v442, 0.0
  %591 = vadd.xlane.f32.xlu0 %v590
  %v592 = vpop.xlane.xlu0 %591
  %v593 = vsel %vm78, %v443, 0.0
  %594 = vadd.xlane.f32.xlu0 %v593
  %v595 = vpop.xlane.xlu0 %594
  %v596 = vsel %vm78, %v444, 0.0
  %597 = vadd.xlane.f32.xlu0 %v596
  %v598 = vpop.xlane.xlu0 %597
  %v599 = vsel %vm78, %v445, 0.0
  %600 = vadd.xlane.f32.xlu0 %v599
  %v601 = vpop.xlane.xlu0 %600
  %v602 = vsel %vm78, %v446, 0.0
  %603 = vadd.xlane.f32.xlu0 %v602
  %v604 = vpop.xlane.xlu0 %603
  %v605 = vsel %vm78, %v447, 0.0
  %606 = vadd.xlane.f32.xlu0 %v605
  %v607 = vpop.xlane.xlu0 %606
  %v608 = vsel %vm78, %v448, 0.0
  %609 = vadd.xlane.f32.xlu0 %v608
  %v610 = vpop.xlane.xlu0 %609
  %v611 = vsel %vm78, %v449, 0.0
  %612 = vadd.xlane.f32.xlu0 %v611
  %v613 = vpop.xlane.xlu0 %612
  %v614 = vsel %vm78, %v450, 0.0
  %615 = vadd.xlane.f32.xlu0 %v614
  %v616 = vpop.xlane.xlu0 %615
  %v617 = vsel %vm78, %v451, 0.0
  %618 = vadd.xlane.f32.xlu0 %v617
  %v619 = vpop.xlane.xlu0 %618
  %v620 = vsel %vm78, %v452, 0.0
  %621 = vadd.xlane.f32.xlu0 %v620
  %v622 = vpop.xlane.xlu0 %621
  %v623 = vsel %vm78, %v453, 0.0
  %624 = vadd.xlane.f32.xlu0 %v623
  %v625 = vpop.xlane.xlu0 %624
  %v626 = vsel %vm78, %v454, 0.0
  %627 = vadd.xlane.f32.xlu0 %v626
  %v628 = vpop.xlane.xlu0 %627
  %v629 = vsel %vm78, %v455, 0.0
  %630 = vadd.xlane.f32.xlu0 %v629
  %v631 = vpop.xlane.xlu0 %630
  %v632 = vsel %vm78, %v456, 0.0
  %633 = vadd.xlane.f32.xlu0 %v632
  %v634 = vpop.xlane.xlu0 %633
  %v635 = vsel %vm78, %v457, 0.0
  %636 = vadd.xlane.f32.xlu0 %v635
  %v637 = vpop.xlane.xlu0 %636
  %v638 = vsel %vm78, %v458, 0.0
  %639 = vadd.xlane.f32.xlu0 %v638
  %v640 = vpop.xlane.xlu0 %639
  %v641 = vsel %vm78, %v459, 0.0
  %642 = vadd.xlane.f32.xlu0 %v641
  %v643 = vpop.xlane.xlu0 %642
  %v644 = vsel %vm78, %v460, 0.0
  %645 = vadd.xlane.f32.xlu0 %v644
  %v646 = vpop.xlane.xlu0 %645
  %v647 = vsel %vm78, %v461, 0.0
  %648 = vadd.xlane.f32.xlu0 %v647
  %v649 = vpop.xlane.xlu0 %648
  %v650 = vsel %vm78, %v462, 0.0
  %651 = vadd.xlane.f32.xlu0 %v650
  %v652 = vpop.xlane.xlu0 %651
  %v653 = vsel %vm78, %v463, 0.0
  %654 = vadd.xlane.f32.xlu0 %v653
  %v655 = vpop.xlane.xlu0 %654
  %v656 = vmul.f32 %v466, %v271
  %v657 = vmul.f32 %v469, %v271
  %v658 = vmul.f32 %v472, %v271
  %v659 = vmul.f32 %v475, %v271
  %v660 = vmul.f32 %v478, %v271
  %v661 = vmul.f32 %v481, %v271
  %v662 = vmul.f32 %v484, %v271
  %v663 = vmul.f32 %v487, %v271
  %v664 = vmul.f32 %v490, %v271
  %v665 = vmul.f32 %v493, %v271
  %v666 = vmul.f32 %v496, %v271
  %v667 = vmul.f32 %v499, %v271
  %v668 = vmul.f32 %v502, %v271
  %v669 = vmul.f32 %v505, %v271
  %v670 = vmul.f32 %v508, %v271
  %v671 = vmul.f32 %v511, %v271
  %v672 = vmul.f32 %v514, %v271
  %v673 = vmul.f32 %v517, %v271
  %v674 = vmul.f32 %v520, %v271
  %v675 = vmul.f32 %v523, %v271
  %v676 = vmul.f32 %v526, %v271
  %v677 = vmul.f32 %v529, %v271
  %v678 = vmul.f32 %v532, %v271
  %v679 = vmul.f32 %v535, %v271
  %v680 = vmul.f32 %v538, %v271
  %v681 = vmul.f32 %v541, %v271
  %v682 = vmul.f32 %v544, %v271
  %v683 = vmul.f32 %v547, %v271
  %v684 = vmul.f32 %v550, %v271
  %v685 = vmul.f32 %v553, %v271
  %v686 = vmul.f32 %v556, %v271
  %v687 = vmul.f32 %v559, %v271
  %v688 = vmul.f32 %v562, %v271
  %v689 = vmul.f32 %v565, %v271
  %v690 = vmul.f32 %v568, %v271
  %v691 = vmul.f32 %v571, %v271
  %v692 = vmul.f32 %v574, %v271
  %v693 = vmul.f32 %v577, %v271
  %v694 = vmul.f32 %v580, %v271
  %v695 = vmul.f32 %v583, %v271
  %v696 = vmul.f32 %v586, %v271
  %v697 = vmul.f32 %v589, %v271
  %v698 = vmul.f32 %v592, %v271
  %v699 = vmul.f32 %v595, %v271
  %v700 = vmul.f32 %v598, %v271
  %v701 = vmul.f32 %v601, %v271
  %v702 = vmul.f32 %v604, %v271
  %v703 = vmul.f32 %v607, %v271
  %v704 = vmul.f32 %v610, %v271
  %v705 = vmul.f32 %v613, %v271
  %v706 = vmul.f32 %v616, %v271
  %v707 = vmul.f32 %v619, %v271
  %v708 = vmul.f32 %v622, %v271
  %v709 = vmul.f32 %v625, %v271
  %v710 = vmul.f32 %v628, %v271
  %v711 = vmul.f32 %v631, %v271
  %v712 = vmul.f32 %v634, %v271
  %v713 = vmul.f32 %v637, %v271
  %v714 = vmul.f32 %v640, %v271
  %v715 = vmul.f32 %v643, %v271
  %v716 = vmul.f32 %v646, %v271
  %v717 = vmul.f32 %v649, %v271
  %v718 = vmul.f32 %v652, %v271
  %v719 = vmul.f32 %v655, %v271
  %v720 = vadd.f32 %v656, 1e-05
  %v721 = vadd.f32 %v657, 1e-05
  %v722 = vadd.f32 %v658, 1e-05
  %v723 = vadd.f32 %v659, 1e-05
  %v724 = vadd.f32 %v660, 1e-05
  %v725 = vadd.f32 %v661, 1e-05
  %v726 = vadd.f32 %v662, 1e-05
  %v727 = vadd.f32 %v663, 1e-05
  %v728 = vadd.f32 %v664, 1e-05
  %v729 = vadd.f32 %v665, 1e-05
  %v730 = vadd.f32 %v666, 1e-05
  %v731 = vadd.f32 %v667, 1e-05
  %v732 = vadd.f32 %v668, 1e-05
  %v733 = vadd.f32 %v669, 1e-05
  %v734 = vadd.f32 %v670, 1e-05
  %v735 = vadd.f32 %v671, 1e-05
  %v736 = vadd.f32 %v672, 1e-05
  %v737 = vadd.f32 %v673, 1e-05
  %v738 = vadd.f32 %v674, 1e-05
  %v739 = vadd.f32 %v675, 1e-05
  %v740 = vadd.f32 %v676, 1e-05
  %v741 = vadd.f32 %v677, 1e-05
  %v742 = vadd.f32 %v678, 1e-05
  %v743 = vadd.f32 %v679, 1e-05
  %v744 = vadd.f32 %v680, 1e-05
  %v745 = vadd.f32 %v681, 1e-05
  %v746 = vadd.f32 %v682, 1e-05
  %v747 = vadd.f32 %v683, 1e-05
  %v748 = vadd.f32 %v684, 1e-05
  %v749 = vadd.f32 %v685, 1e-05
  %v750 = vadd.f32 %v686, 1e-05
  %v751 = vadd.f32 %v687, 1e-05
  %v752 = vadd.f32 %v688, 1e-05
  %v753 = vadd.f32 %v689, 1e-05
  %v754 = vadd.f32 %v690, 1e-05
  %v755 = vadd.f32 %v691, 1e-05
  %v756 = vadd.f32 %v692, 1e-05
  %v757 = vadd.f32 %v693, 1e-05
  %v758 = vadd.f32 %v694, 1e-05
  %v759 = vadd.f32 %v695, 1e-05
  %v760 = vadd.f32 %v696, 1e-05
  %v761 = vadd.f32 %v697, 1e-05
  %v762 = vadd.f32 %v698, 1e-05
  %v763 = vadd.f32 %v699, 1e-05
  %v764 = vadd.f32 %v700, 1e-05
  %v765 = vadd.f32 %v701, 1e-05
  %v766 = vadd.f32 %v702, 1e-05
  %v767 = vadd.f32 %v703, 1e-05
  %v768 = vadd.f32 %v704, 1e-05
  %v769 = vadd.f32 %v705, 1e-05
  %v770 = vadd.f32 %v706, 1e-05
  %v771 = vadd.f32 %v707, 1e-05
  %v772 = vadd.f32 %v708, 1e-05
  %v773 = vadd.f32 %v709, 1e-05
  %v774 = vadd.f32 %v710, 1e-05
  %v775 = vadd.f32 %v711, 1e-05
  %v776 = vadd.f32 %v712, 1e-05
  %v777 = vadd.f32 %v713, 1e-05
  %v778 = vadd.f32 %v714, 1e-05
  %v779 = vadd.f32 %v715, 1e-05
  %v780 = vadd.f32 %v716, 1e-05
  %v781 = vadd.f32 %v717, 1e-05
  %v782 = vadd.f32 %v718, 1e-05
  %v783 = vadd.f32 %v719, 1e-05
  %v784 = vrsqrt.pop %v720
  %v785 = vrsqrt.pop %v721
  %v786 = vrsqrt.pop %v722
  %v787 = vrsqrt.pop %v723
  %v788 = vrsqrt.pop %v724
  %v789 = vrsqrt.pop %v725
  %v790 = vrsqrt.pop %v726
  %v791 = vrsqrt.pop %v727
  %v792 = vrsqrt.pop %v728
  %v793 = vrsqrt.pop %v729
  %v794 = vrsqrt.pop %v730
  %v795 = vrsqrt.pop %v731
  %v796 = vrsqrt.pop %v732
  %v797 = vrsqrt.pop %v733
  %v798 = vrsqrt.pop %v734
  %v799 = vrsqrt.pop %v735
  %v800 = vrsqrt.pop %v736
  %v801 = vrsqrt.pop %v737
  %v802 = vrsqrt.pop %v738
  %v803 = vrsqrt.pop %v739
  %v804 = vrsqrt.pop %v740
  %v805 = vrsqrt.pop %v741
  %v806 = vrsqrt.pop %v742
  %v807 = vrsqrt.pop %v743
  %v808 = vrsqrt.pop %v744
  %v809 = vrsqrt.pop %v745
  %v810 = vrsqrt.pop %v746
  %v811 = vrsqrt.pop %v747
  %v812 = vrsqrt.pop %v748
  %v813 = vrsqrt.pop %v749
  %v814 = vrsqrt.pop %v750
  %v815 = vrsqrt.pop %v751
  %v816 = vrsqrt.pop %v752
  %v817 = vrsqrt.pop %v753
  %v818 = vrsqrt.pop %v754
  %v819 = vrsqrt.pop %v755
  %v820 = vrsqrt.pop %v756
  %v821 = vrsqrt.pop %v757
  %v822 = vrsqrt.pop %v758
  %v823 = vrsqrt.pop %v759
  %v824 = vrsqrt.pop %v760
  %v825 = vrsqrt.pop %v761
  %v826 = vrsqrt.pop %v762
  %v827 = vrsqrt.pop %v763
  %v828 = vrsqrt.pop %v764
  %v829 = vrsqrt.pop %v765
  %v830 = vrsqrt.pop %v766
  %v831 = vrsqrt.pop %v767
  %v832 = vrsqrt.pop %v768
  %v833 = vrsqrt.pop %v769
  %v834 = vrsqrt.pop %v770
  %v835 = vrsqrt.pop %v771
  %v836 = vrsqrt.pop %v772
  %v837 = vrsqrt.pop %v773
  %v838 = vrsqrt.pop %v774
  %v839 = vrsqrt.pop %v775
  %v840 = vrsqrt.pop %v776
  %v841 = vrsqrt.pop %v777
  %v842 = vrsqrt.pop %v778
  %v843 = vrsqrt.pop %v779
  %v844 = vrsqrt.pop %v780
  %v845 = vrsqrt.pop %v781
  %v846 = vrsqrt.pop %v782
  %v847 = vrsqrt.pop %v783
  %v848 = vmul.f32 %v336, %v784
  %v849 = vmul.f32 %v337, %v785
  %v850 = vmul.f32 %v338, %v786
  %v851 = vmul.f32 %v339, %v787
  %v852 = vmul.f32 %v340, %v788
  %v853 = vmul.f32 %v341, %v789
  %v854 = vmul.f32 %v342, %v790
  %v855 = vmul.f32 %v343, %v791
  %v856 = vmul.f32 %v344, %v792
  %v857 = vmul.f32 %v345, %v793
  %v858 = vmul.f32 %v346, %v794
  %v859 = vmul.f32 %v347, %v795
  %v860 = vmul.f32 %v348, %v796
  %v861 = vmul.f32 %v349, %v797
  %v862 = vmul.f32 %v350, %v798
  %v863 = vmul.f32 %v351, %v799
  %v864 = vmul.f32 %v352, %v800
  %v865 = vmul.f32 %v353, %v801
  %v866 = vmul.f32 %v354, %v802
  %v867 = vmul.f32 %v355, %v803
  %v868 = vmul.f32 %v356, %v804
  %v869 = vmul.f32 %v357, %v805
  %v870 = vmul.f32 %v358, %v806
  %v871 = vmul.f32 %v359, %v807
  %v872 = vmul.f32 %v360, %v808
  %v873 = vmul.f32 %v361, %v809
  %v874 = vmul.f32 %v362, %v810
  %v875 = vmul.f32 %v363, %v811
  %v876 = vmul.f32 %v364, %v812
  %v877 = vmul.f32 %v365, %v813
  %v878 = vmul.f32 %v366, %v814
  %v879 = vmul.f32 %v367, %v815
  %v880 = vmul.f32 %v368, %v816
  %v881 = vmul.f32 %v369, %v817
  %v882 = vmul.f32 %v370, %v818
  %v883 = vmul.f32 %v371, %v819
  %v884 = vmul.f32 %v372, %v820
  %v885 = vmul.f32 %v373, %v821
  %v886 = vmul.f32 %v374, %v822
  %v887 = vmul.f32 %v375, %v823
  %v888 = vmul.f32 %v376, %v824
  %v889 = vmul.f32 %v377, %v825
  %v890 = vmul.f32 %v378, %v826
  %v891 = vmul.f32 %v379, %v827
  %v892 = vmul.f32 %v380, %v828
  %v893 = vmul.f32 %v381, %v829
  %v894 = vmul.f32 %v382, %v830
  %v895 = vmul.f32 %v383, %v831
  %v896 = vmul.f32 %v384, %v832
  %v897 = vmul.f32 %v385, %v833
  %v898 = vmul.f32 %v386, %v834
  %v899 = vmul.f32 %v387, %v835
  %v900 = vmul.f32 %v388, %v836
  %v901 = vmul.f32 %v389, %v837
  %v902 = vmul.f32 %v390, %v838
  %v903 = vmul.f32 %v391, %v839
  %v904 = vmul.f32 %v392, %v840
  %v905 = vmul.f32 %v393, %v841
  %v906 = vmul.f32 %v394, %v842
  %v907 = vmul.f32 %v395, %v843
  %v908 = vmul.f32 %v396, %v844
  %v909 = vmul.f32 %v397, %v845
  %v910 = vmul.f32 %v398, %v846
  %v911 = vmul.f32 %v399, %v847
  %v912 = vld [vmem:[%s1] sm:$0x1]
  %v914 = vlaneseq
  %v915 = vshrl.u32 %v914, 7
  %v916 = vsub.s32 0, %v915
  %v917 = vrot.slane %v912, %v916
  %v919 = vmul.f32 %v848, %v917
  %v920 = vmul.f32 %v849, %v917
  %v921 = vmul.f32 %v850, %v917
  %v922 = vmul.f32 %v851, %v917
  %v923 = vmul.f32 %v852, %v917
  %v924 = vmul.f32 %v853, %v917
  %v925 = vmul.f32 %v854, %v917
  %v926 = vmul.f32 %v855, %v917
  %v927 = vmul.f32 %v856, %v917
  %v928 = vmul.f32 %v857, %v917
  %v929 = vmul.f32 %v858, %v917
  %v930 = vmul.f32 %v859, %v917
  %v931 = vmul.f32 %v860, %v917
  %v932 = vmul.f32 %v861, %v917
  %v933 = vmul.f32 %v862, %v917
  %v934 = vmul.f32 %v863, %v917
  %v935 = vmul.f32 %v864, %v917
  %v936 = vmul.f32 %v865, %v917
  %v937 = vmul.f32 %v866, %v917
  %v938 = vmul.f32 %v867, %v917
  %v939 = vmul.f32 %v868, %v917
  %v940 = vmul.f32 %v869, %v917
  %v941 = vmul.f32 %v870, %v917
  %v942 = vmul.f32 %v871, %v917
  %v943 = vmul.f32 %v872, %v917
  %v944 = vmul.f32 %v873, %v917
  %v945 = vmul.f32 %v874, %v917
  %v946 = vmul.f32 %v875, %v917
  %v947 = vmul.f32 %v876, %v917
  %v948 = vmul.f32 %v877, %v917
  %v949 = vmul.f32 %v878, %v917
  %v950 = vmul.f32 %v879, %v917
  %v951 = vmul.f32 %v880, %v917
  %v952 = vmul.f32 %v881, %v917
  %v953 = vmul.f32 %v882, %v917
  %v954 = vmul.f32 %v883, %v917
  %v955 = vmul.f32 %v884, %v917
  %v956 = vmul.f32 %v885, %v917
  %v957 = vmul.f32 %v886, %v917
  %v958 = vmul.f32 %v887, %v917
  %v959 = vmul.f32 %v888, %v917
  %v960 = vmul.f32 %v889, %v917
  %v961 = vmul.f32 %v890, %v917
  %v962 = vmul.f32 %v891, %v917
  %v963 = vmul.f32 %v892, %v917
  %v964 = vmul.f32 %v893, %v917
  %v965 = vmul.f32 %v894, %v917
  %v966 = vmul.f32 %v895, %v917
  %v967 = vmul.f32 %v896, %v917
  %v968 = vmul.f32 %v897, %v917
  %v969 = vmul.f32 %v898, %v917
  %v970 = vmul.f32 %v899, %v917
  %v971 = vmul.f32 %v900, %v917
  %v972 = vmul.f32 %v901, %v917
  %v973 = vmul.f32 %v902, %v917
  %v974 = vmul.f32 %v903, %v917
  %v975 = vmul.f32 %v904, %v917
  %v976 = vmul.f32 %v905, %v917
  %v977 = vmul.f32 %v906, %v917
  %v978 = vmul.f32 %v907, %v917
  %v979 = vmul.f32 %v908, %v917
  %v980 = vmul.f32 %v909, %v917
  %v981 = vmul.f32 %v910, %v917
  %v982 = vmul.f32 %v911, %v917
  %v983 = vld [vmem:[%s2] sm:$0x1]
  %v985 = vlaneseq
  %v986 = vshrl.u32 %v985, 7
  %v987 = vsub.s32 0, %v986
  %v988 = vrot.slane %v983, %v987
  %v990 = vadd.f32 %v919, %v988
  %v991 = vadd.f32 %v920, %v988
  %v992 = vadd.f32 %v921, %v988
  %v993 = vadd.f32 %v922, %v988
  %v994 = vadd.f32 %v923, %v988
  %v995 = vadd.f32 %v924, %v988
  %v996 = vadd.f32 %v925, %v988
  %v997 = vadd.f32 %v926, %v988
  %v998 = vadd.f32 %v927, %v988
  %v999 = vadd.f32 %v928, %v988
  %v1000 = vadd.f32 %v929, %v988
  %v1001 = vadd.f32 %v930, %v988
  %v1002 = vadd.f32 %v931, %v988
  %v1003 = vadd.f32 %v932, %v988
  %v1004 = vadd.f32 %v933, %v988
  %v1005 = vadd.f32 %v934, %v988
  %v1006 = vadd.f32 %v935, %v988
  %v1007 = vadd.f32 %v936, %v988
  %v1008 = vadd.f32 %v937, %v988
  %v1009 = vadd.f32 %v938, %v988
  %v1010 = vadd.f32 %v939, %v988
  %v1011 = vadd.f32 %v940, %v988
  %v1012 = vadd.f32 %v941, %v988
  %v1013 = vadd.f32 %v942, %v988
  %v1014 = vadd.f32 %v943, %v988
  %v1015 = vadd.f32 %v944, %v988
  %v1016 = vadd.f32 %v945, %v988
  %v1017 = vadd.f32 %v946, %v988
  %v1018 = vadd.f32 %v947, %v988
  %v1019 = vadd.f32 %v948, %v988
  %v1020 = vadd.f32 %v949, %v988
  %v1021 = vadd.f32 %v950, %v988
  %v1022 = vadd.f32 %v951, %v988
  %v1023 = vadd.f32 %v952, %v988
  %v1024 = vadd.f32 %v953, %v988
  %v1025 = vadd.f32 %v954, %v988
  %v1026 = vadd.f32 %v955, %v988
  %v1027 = vadd.f32 %v956, %v988
  %v1028 = vadd.f32 %v957, %v988
  %v1029 = vadd.f32 %v958, %v988
  %v1030 = vadd.f32 %v959, %v988
  %v1031 = vadd.f32 %v960, %v988
  %v1032 = vadd.f32 %v961, %v988
  %v1033 = vadd.f32 %v962, %v988
  %v1034 = vadd.f32 %v963, %v988
  %v1035 = vadd.f32 %v964, %v988
  %v1036 = vadd.f32 %v965, %v988
  %v1037 = vadd.f32 %v966, %v988
  %v1038 = vadd.f32 %v967, %v988
  %v1039 = vadd.f32 %v968, %v988
  %v1040 = vadd.f32 %v969, %v988
  %v1041 = vadd.f32 %v970, %v988
  %v1042 = vadd.f32 %v971, %v988
  %v1043 = vadd.f32 %v972, %v988
  %v1044 = vadd.f32 %v973, %v988
  %v1045 = vadd.f32 %v974, %v988
  %v1046 = vadd.f32 %v975, %v988
  %v1047 = vadd.f32 %v976, %v988
  %v1048 = vadd.f32 %v977, %v988
  %v1049 = vadd.f32 %v978, %v988
  %v1050 = vadd.f32 %v979, %v988
  %v1051 = vadd.f32 %v980, %v988
  %v1052 = vadd.f32 %v981, %v988
  %v1053 = vadd.f32 %v982, %v988
  %v1054 = vmul.f32 %v990, 0.5
  %v1055 = vmul.f32 %v991, 0.5
  %v1056 = vmul.f32 %v992, 0.5
  %v1057 = vmul.f32 %v993, 0.5
  %v1058 = vmul.f32 %v994, 0.5
  %v1059 = vmul.f32 %v995, 0.5
  %v1060 = vmul.f32 %v996, 0.5
  %v1061 = vmul.f32 %v997, 0.5
  %v1062 = vmul.f32 %v998, 0.5
  %v1063 = vmul.f32 %v999, 0.5
  %v1064 = vmul.f32 %v1000, 0.5
  %v1065 = vmul.f32 %v1001, 0.5
  %v1066 = vmul.f32 %v1002, 0.5
  %v1067 = vmul.f32 %v1003, 0.5
  %v1068 = vmul.f32 %v1004, 0.5
  %v1069 = vmul.f32 %v1005, 0.5
  %v1070 = vmul.f32 %v1006, 0.5
  %v1071 = vmul.f32 %v1007, 0.5
  %v1072 = vmul.f32 %v1008, 0.5
  %v1073 = vmul.f32 %v1009, 0.5
  %v1074 = vmul.f32 %v1010, 0.5
  %v1075 = vmul.f32 %v1011, 0.5
  %v1076 = vmul.f32 %v1012, 0.5
  %v1077 = vmul.f32 %v1013, 0.5
  %v1078 = vmul.f32 %v1014, 0.5
  %v1079 = vmul.f32 %v1015, 0.5
  %v1080 = vmul.f32 %v1016, 0.5
  %v1081 = vmul.f32 %v1017, 0.5
  %v1082 = vmul.f32 %v1018, 0.5
  %v1083 = vmul.f32 %v1019, 0.5
  %v1084 = vmul.f32 %v1020, 0.5
  %v1085 = vmul.f32 %v1021, 0.5
  %v1086 = vmul.f32 %v1022, 0.5
  %v1087 = vmul.f32 %v1023, 0.5
  %v1088 = vmul.f32 %v1024, 0.5
  %v1089 = vmul.f32 %v1025, 0.5
  %v1090 = vmul.f32 %v1026, 0.5
  %v1091 = vmul.f32 %v1027, 0.5
  %v1092 = vmul.f32 %v1028, 0.5
  %v1093 = vmul.f32 %v1029, 0.5
  %v1094 = vmul.f32 %v1030, 0.5
  %v1095 = vmul.f32 %v1031, 0.5
  %v1096 = vmul.f32 %v1032, 0.5
  %v1097 = vmul.f32 %v1033, 0.5
  %v1098 = vmul.f32 %v1034, 0.5
  %v1099 = vmul.f32 %v1035, 0.5
  %v1100 = vmul.f32 %v1036, 0.5
  %v1101 = vmul.f32 %v1037, 0.5
  %v1102 = vmul.f32 %v1038, 0.5
  %v1103 = vmul.f32 %v1039, 0.5
  %v1104 = vmul.f32 %v1040, 0.5
  %v1105 = vmul.f32 %v1041, 0.5
  %v1106 = vmul.f32 %v1042, 0.5
  %v1107 = vmul.f32 %v1043, 0.5
  %v1108 = vmul.f32 %v1044, 0.5
  %v1109 = vmul.f32 %v1045, 0.5
  %v1110 = vmul.f32 %v1046, 0.5
  %v1111 = vmul.f32 %v1047, 0.5
  %v1112 = vmul.f32 %v1048, 0.5
  %v1113 = vmul.f32 %v1049, 0.5
  %v1114 = vmul.f32 %v1050, 0.5
  %v1115 = vmul.f32 %v1051, 0.5
  %v1116 = vmul.f32 %v1052, 0.5
  %v1117 = vmul.f32 %v1053, 0.5
  %v1118 = vmul.f32 %v990, 0.044715
  %v1119 = vmul.f32 %v991, 0.044715
  %v1120 = vmul.f32 %v992, 0.044715
  %v1121 = vmul.f32 %v993, 0.044715
  %v1122 = vmul.f32 %v994, 0.044715
  %v1123 = vmul.f32 %v995, 0.044715
  %v1124 = vmul.f32 %v996, 0.044715
  %v1125 = vmul.f32 %v997, 0.044715
  %v1126 = vmul.f32 %v998, 0.044715
  %v1127 = vmul.f32 %v999, 0.044715
  %v1128 = vmul.f32 %v1000, 0.044715
  %v1129 = vmul.f32 %v1001, 0.044715
  %v1130 = vmul.f32 %v1002, 0.044715
  %v1131 = vmul.f32 %v1003, 0.044715
  %v1132 = vmul.f32 %v1004, 0.044715
  %v1133 = vmul.f32 %v1005, 0.044715
  %v1134 = vmul.f32 %v1006, 0.044715
  %v1135 = vmul.f32 %v1007, 0.044715
  %v1136 = vmul.f32 %v1008, 0.044715
  %v1137 = vmul.f32 %v1009, 0.044715
  %v1138 = vmul.f32 %v1010, 0.044715
  %v1139 = vmul.f32 %v1011, 0.044715
  %v1140 = vmul.f32 %v1012, 0.044715
  %v1141 = vmul.f32 %v1013, 0.044715
  %v1142 = vmul.f32 %v1014, 0.044715
  %v1143 = vmul.f32 %v1015, 0.044715
  %v1144 = vmul.f32 %v1016, 0.044715
  %v1145 = vmul.f32 %v1017, 0.044715
  %v1146 = vmul.f32 %v1018, 0.044715
  %v1147 = vmul.f32 %v1019, 0.044715
  %v1148 = vmul.f32 %v1020, 0.044715
  %v1149 = vmul.f32 %v1021, 0.044715
  %v1150 = vmul.f32 %v1022, 0.044715
  %v1151 = vmul.f32 %v1023, 0.044715
  %v1152 = vmul.f32 %v1024, 0.044715
  %v1153 = vmul.f32 %v1025, 0.044715
  %v1154 = vmul.f32 %v1026, 0.044715
  %v1155 = vmul.f32 %v1027, 0.044715
  %v1156 = vmul.f32 %v1028, 0.044715
  %v1157 = vmul.f32 %v1029, 0.044715
  %v1158 = vmul.f32 %v1030, 0.044715
  %v1159 = vmul.f32 %v1031, 0.044715
  %v1160 = vmul.f32 %v1032, 0.044715
  %v1161 = vmul.f32 %v1033, 0.044715
  %v1162 = vmul.f32 %v1034, 0.044715
  %v1163 = vmul.f32 %v1035, 0.044715
  %v1164 = vmul.f32 %v1036, 0.044715
  %v1165 = vmul.f32 %v1037, 0.044715
  %v1166 = vmul.f32 %v1038, 0.044715
  %v1167 = vmul.f32 %v1039, 0.044715
  %v1168 = vmul.f32 %v1040, 0.044715
  %v1169 = vmul.f32 %v1041, 0.044715
  %v1170 = vmul.f32 %v1042, 0.044715
  %v1171 = vmul.f32 %v1043, 0.044715
  %v1172 = vmul.f32 %v1044, 0.044715
  %v1173 = vmul.f32 %v1045, 0.044715
  %v1174 = vmul.f32 %v1046, 0.044715
  %v1175 = vmul.f32 %v1047, 0.044715
  %v1176 = vmul.f32 %v1048, 0.044715
  %v1177 = vmul.f32 %v1049, 0.044715
  %v1178 = vmul.f32 %v1050, 0.044715
  %v1179 = vmul.f32 %v1051, 0.044715
  %v1180 = vmul.f32 %v1052, 0.044715
  %v1181 = vmul.f32 %v1053, 0.044715
  %v1182 = vmul.f32 %v1118, %v990
  %v1183 = vmul.f32 %v1119, %v991
  %v1184 = vmul.f32 %v1120, %v992
  %v1185 = vmul.f32 %v1121, %v993
  %v1186 = vmul.f32 %v1122, %v994
  %v1187 = vmul.f32 %v1123, %v995
  %v1188 = vmul.f32 %v1124, %v996
  %v1189 = vmul.f32 %v1125, %v997
  %v1190 = vmul.f32 %v1126, %v998
  %v1191 = vmul.f32 %v1127, %v999
  %v1192 = vmul.f32 %v1128, %v1000
  %v1193 = vmul.f32 %v1129, %v1001
  %v1194 = vmul.f32 %v1130, %v1002
  %v1195 = vmul.f32 %v1131, %v1003
  %v1196 = vmul.f32 %v1132, %v1004
  %v1197 = vmul.f32 %v1133, %v1005
  %v1198 = vmul.f32 %v1134, %v1006
  %v1199 = vmul.f32 %v1135, %v1007
  %v1200 = vmul.f32 %v1136, %v1008
  %v1201 = vmul.f32 %v1137, %v1009
  %v1202 = vmul.f32 %v1138, %v1010
  %v1203 = vmul.f32 %v1139, %v1011
  %v1204 = vmul.f32 %v1140, %v1012
  %v1205 = vmul.f32 %v1141, %v1013
  %v1206 = vmul.f32 %v1142, %v1014
  %v1207 = vmul.f32 %v1143, %v1015
  %v1208 = vmul.f32 %v1144, %v1016
  %v1209 = vmul.f32 %v1145, %v1017
  %v1210 = vmul.f32 %v1146, %v1018
  %v1211 = vmul.f32 %v1147, %v1019
  %v1212 = vmul.f32 %v1148, %v1020
  %v1213 = vmul.f32 %v1149, %v1021
  %v1214 = vmul.f32 %v1150, %v1022
  %v1215 = vmul.f32 %v1151, %v1023
  %v1216 = vmul.f32 %v1152, %v1024
  %v1217 = vmul.f32 %v1153, %v1025
  %v1218 = vmul.f32 %v1154, %v1026
  %v1219 = vmul.f32 %v1155, %v1027
  %v1220 = vmul.f32 %v1156, %v1028
  %v1221 = vmul.f32 %v1157, %v1029
  %v1222 = vmul.f32 %v1158, %v1030
  %v1223 = vmul.f32 %v1159, %v1031
  %v1224 = vmul.f32 %v1160, %v1032
  %v1225 = vmul.f32 %v1161, %v1033
  %v1226 = vmul.f32 %v1162, %v1034
  %v1227 = vmul.f32 %v1163, %v1035
  %v1228 = vmul.f32 %v1164, %v1036
  %v1229 = vmul.f32 %v1165, %v1037
  %v1230 = vmul.f32 %v1166, %v1038
  %v1231 = vmul.f32 %v1167, %v1039
  %v1232 = vmul.f32 %v1168, %v1040
  %v1233 = vmul.f32 %v1169, %v1041
  %v1234 = vmul.f32 %v1170, %v1042
  %v1235 = vmul.f32 %v1171, %v1043
  %v1236 = vmul.f32 %v1172, %v1044
  %v1237 = vmul.f32 %v1173, %v1045
  %v1238 = vmul.f32 %v1174, %v1046
  %v1239 = vmul.f32 %v1175, %v1047
  %v1240 = vmul.f32 %v1176, %v1048
  %v1241 = vmul.f32 %v1177, %v1049
  %v1242 = vmul.f32 %v1178, %v1050
  %v1243 = vmul.f32 %v1179, %v1051
  %v1244 = vmul.f32 %v1180, %v1052
  %v1245 = vmul.f32 %v1181, %v1053
  %v1246 = vmul.f32 %v1182, %v990
  %v1247 = vmul.f32 %v1183, %v991
  %v1248 = vmul.f32 %v1184, %v992
  %v1249 = vmul.f32 %v1185, %v993
  %v1250 = vmul.f32 %v1186, %v994
  %v1251 = vmul.f32 %v1187, %v995
  %v1252 = vmul.f32 %v1188, %v996
  %v1253 = vmul.f32 %v1189, %v997
  %v1254 = vmul.f32 %v1190, %v998
  %v1255 = vmul.f32 %v1191, %v999
  %v1256 = vmul.f32 %v1192, %v1000
  %v1257 = vmul.f32 %v1193, %v1001
  %v1258 = vmul.f32 %v1194, %v1002
  %v1259 = vmul.f32 %v1195, %v1003
  %v1260 = vmul.f32 %v1196, %v1004
  %v1261 = vmul.f32 %v1197, %v1005
  %v1262 = vmul.f32 %v1198, %v1006
  %v1263 = vmul.f32 %v1199, %v1007
  %v1264 = vmul.f32 %v1200, %v1008
  %v1265 = vmul.f32 %v1201, %v1009
  %v1266 = vmul.f32 %v1202, %v1010
  %v1267 = vmul.f32 %v1203, %v1011
  %v1268 = vmul.f32 %v1204, %v1012
  %v1269 = vmul.f32 %v1205, %v1013
  %v1270 = vmul.f32 %v1206, %v1014
  %v1271 = vmul.f32 %v1207, %v1015
  %v1272 = vmul.f32 %v1208, %v1016
  %v1273 = vmul.f32 %v1209, %v1017
  %v1274 = vmul.f32 %v1210, %v1018
  %v1275 = vmul.f32 %v1211, %v1019
  %v1276 = vmul.f32 %v1212, %v1020
  %v1277 = vmul.f32 %v1213, %v1021
  %v1278 = vmul.f32 %v1214, %v1022
  %v1279 = vmul.f32 %v1215, %v1023
  %v1280 = vmul.f32 %v1216, %v1024
  %v1281 = vmul.f32 %v1217, %v1025
  %v1282 = vmul.f32 %v1218, %v1026
  %v1283 = vmul.f32 %v1219, %v1027
  %v1284 = vmul.f32 %v1220, %v1028
  %v1285 = vmul.f32 %v1221, %v1029
  %v1286 = vmul.f32 %v1222, %v1030
  %v1287 = vmul.f32 %v1223, %v1031
  %v1288 = vmul.f32 %v1224, %v1032
  %v1289 = vmul.f32 %v1225, %v1033
  %v1290 = vmul.f32 %v1226, %v1034
  %v1291 = vmul.f32 %v1227, %v1035
  %v1292 = vmul.f32 %v1228, %v1036
  %v1293 = vmul.f32 %v1229, %v1037
  %v1294 = vmul.f32 %v1230, %v1038
  %v1295 = vmul.f32 %v1231, %v1039
  %v1296 = vmul.f32 %v1232, %v1040
  %v1297 = vmul.f32 %v1233, %v1041
  %v1298 = vmul.f32 %v1234, %v1042
  %v1299 = vmul.f32 %v1235, %v1043
  %v1300 = vmul.f32 %v1236, %v1044
  %v1301 = vmul.f32 %v1237, %v1045
  %v1302 = vmul.f32 %v1238, %v1046
  %v1303 = vmul.f32 %v1239, %v1047
  %v1304 = vmul.f32 %v1240, %v1048
  %v1305 = vmul.f32 %v1241, %v1049
  %v1306 = vmul.f32 %v1242, %v1050
  %v1307 = vmul.f32 %v1243, %v1051
  %v1308 = vmul.f32 %v1244, %v1052
  %v1309 = vmul.f32 %v1245, %v1053
  %v1310 = vadd.f32 %v990, %v1246
  %v1311 = vadd.f32 %v991, %v1247
  %v1312 = vadd.f32 %v992, %v1248
  %v1313 = vadd.f32 %v993, %v1249
  %v1314 = vadd.f32 %v994, %v1250
  %v1315 = vadd.f32 %v995, %v1251
  %v1316 = vadd.f32 %v996, %v1252
  %v1317 = vadd.f32 %v997, %v1253
  %v1318 = vadd.f32 %v998, %v1254
  %v1319 = vadd.f32 %v999, %v1255
  %v1320 = vadd.f32 %v1000, %v1256
  %v1321 = vadd.f32 %v1001, %v1257
  %v1322 = vadd.f32 %v1002, %v1258
  %v1323 = vadd.f32 %v1003, %v1259
  %v1324 = vadd.f32 %v1004, %v1260
  %v1325 = vadd.f32 %v1005, %v1261
  %v1326 = vadd.f32 %v1006, %v1262
  %v1327 = vadd.f32 %v1007, %v1263
  %v1328 = vadd.f32 %v1008, %v1264
  %v1329 = vadd.f32 %v1009, %v1265
  %v1330 = vadd.f32 %v1010, %v1266
  %v1331 = vadd.f32 %v1011, %v1267
  %v1332 = vadd.f32 %v1012, %v1268
  %v1333 = vadd.f32 %v1013, %v1269
  %v1334 = vadd.f32 %v1014, %v1270
  %v1335 = vadd.f32 %v1015, %v1271
  %v1336 = vadd.f32 %v1016, %v1272
  %v1337 = vadd.f32 %v1017, %v1273
  %v1338 = vadd.f32 %v1018, %v1274
  %v1339 = vadd.f32 %v1019, %v1275
  %v1340 = vadd.f32 %v1020, %v1276
  %v1341 = vadd.f32 %v1021, %v1277
  %v1342 = vadd.f32 %v1022, %v1278
  %v1343 = vadd.f32 %v1023, %v1279
  %v1344 = vadd.f32 %v1024, %v1280
  %v1345 = vadd.f32 %v1025, %v1281
  %v1346 = vadd.f32 %v1026, %v1282
  %v1347 = vadd.f32 %v1027, %v1283
  %v1348 = vadd.f32 %v1028, %v1284
  %v1349 = vadd.f32 %v1029, %v1285
  %v1350 = vadd.f32 %v1030, %v1286
  %v1351 = vadd.f32 %v1031, %v1287
  %v1352 = vadd.f32 %v1032, %v1288
  %v1353 = vadd.f32 %v1033, %v1289
  %v1354 = vadd.f32 %v1034, %v1290
  %v1355 = vadd.f32 %v1035, %v1291
  %v1356 = vadd.f32 %v1036, %v1292
  %v1357 = vadd.f32 %v1037, %v1293
  %v1358 = vadd.f32 %v1038, %v1294
  %v1359 = vadd.f32 %v1039, %v1295
  %v1360 = vadd.f32 %v1040, %v1296
  %v1361 = vadd.f32 %v1041, %v1297
  %v1362 = vadd.f32 %v1042, %v1298
  %v1363 = vadd.f32 %v1043, %v1299
  %v1364 = vadd.f32 %v1044, %v1300
  %v1365 = vadd.f32 %v1045, %v1301
  %v1366 = vadd.f32 %v1046, %v1302
  %v1367 = vadd.f32 %v1047, %v1303
  %v1368 = vadd.f32 %v1048, %v1304
  %v1369 = vadd.f32 %v1049, %v1305
  %v1370 = vadd.f32 %v1050, %v1306
  %v1371 = vadd.f32 %v1051, %v1307
  %v1372 = vadd.f32 %v1052, %v1308
  %v1373 = vadd.f32 %v1053, %v1309
  %v1374 = vmul.f32 %v1310, 0.7978846
  %v1375 = vmul.f32 %v1311, 0.7978846
  %v1376 = vmul.f32 %v1312, 0.7978846
  %v1377 = vmul.f32 %v1313, 0.7978846
  %v1378 = vmul.f32 %v1314, 0.7978846
  %v1379 = vmul.f32 %v1315, 0.7978846
  %v1380 = vmul.f32 %v1316, 0.7978846
  %v1381 = vmul.f32 %v1317, 0.7978846
  %v1382 = vmul.f32 %v1318, 0.7978846
  %v1383 = vmul.f32 %v1319, 0.7978846
  %v1384 = vmul.f32 %v1320, 0.7978846
  %v1385 = vmul.f32 %v1321, 0.7978846
  %v1386 = vmul.f32 %v1322, 0.7978846
  %v1387 = vmul.f32 %v1323, 0.7978846
  %v1388 = vmul.f32 %v1324, 0.7978846
  %v1389 = vmul.f32 %v1325, 0.7978846
  %v1390 = vmul.f32 %v1326, 0.7978846
  %v1391 = vmul.f32 %v1327, 0.7978846
  %v1392 = vmul.f32 %v1328, 0.7978846
  %v1393 = vmul.f32 %v1329, 0.7978846
  %v1394 = vmul.f32 %v1330, 0.7978846
  %v1395 = vmul.f32 %v1331, 0.7978846
  %v1396 = vmul.f32 %v1332, 0.7978846
  %v1397 = vmul.f32 %v1333, 0.7978846
  %v1398 = vmul.f32 %v1334, 0.7978846
  %v1399 = vmul.f32 %v1335, 0.7978846
  %v1400 = vmul.f32 %v1336, 0.7978846
  %v1401 = vmul.f32 %v1337, 0.7978846
  %v1402 = vmul.f32 %v1338, 0.7978846
  %v1403 = vmul.f32 %v1339, 0.7978846
  %v1404 = vmul.f32 %v1340, 0.7978846
  %v1405 = vmul.f32 %v1341, 0.7978846
  %v1406 = vmul.f32 %v1342, 0.7978846
  %v1407 = vmul.f32 %v1343, 0.7978846
  %v1408 = vmul.f32 %v1344, 0.7978846
  %v1409 = vmul.f32 %v1345, 0.7978846
  %v1410 = vmul.f32 %v1346, 0.7978846
  %v1411 = vmul.f32 %v1347, 0.7978846
  %v1412 = vmul.f32 %v1348, 0.7978846
  %v1413 = vmul.f32 %v1349, 0.7978846
  %v1414 = vmul.f32 %v1350, 0.7978846
  %v1415 = vmul.f32 %v1351, 0.7978846
  %v1416 = vmul.f32 %v1352, 0.7978846
  %v1417 = vmul.f32 %v1353, 0.7978846
  %v1418 = vmul.f32 %v1354, 0.7978846
  %v1419 = vmul.f32 %v1355, 0.7978846
  %v1420 = vmul.f32 %v1356, 0.7978846
  %v1421 = vmul.f32 %v1357, 0.7978846
  %v1422 = vmul.f32 %v1358, 0.7978846
  %v1423 = vmul.f32 %v1359, 0.7978846
  %v1424 = vmul.f32 %v1360, 0.7978846
  %v1425 = vmul.f32 %v1361, 0.7978846
  %v1426 = vmul.f32 %v1362, 0.7978846
  %v1427 = vmul.f32 %v1363, 0.7978846
  %v1428 = vmul.f32 %v1364, 0.7978846
  %v1429 = vmul.f32 %v1365, 0.7978846
  %v1430 = vmul.f32 %v1366, 0.7978846
  %v1431 = vmul.f32 %v1367, 0.7978846
  %v1432 = vmul.f32 %v1368, 0.7978846
  %v1433 = vmul.f32 %v1369, 0.7978846
  %v1434 = vmul.f32 %v1370, 0.7978846
  %v1435 = vmul.f32 %v1371, 0.7978846
  %v1436 = vmul.f32 %v1372, 0.7978846
  %v1437 = vmul.f32 %v1373, 0.7978846
  %v1438 = vtanh.pop %v1374
  %v1439 = vtanh.pop %v1375
  %v1440 = vtanh.pop %v1376
  %v1441 = vtanh.pop %v1377
  %v1442 = vtanh.pop %v1378
  %v1443 = vtanh.pop %v1379
  %v1444 = vtanh.pop %v1380
  %v1445 = vtanh.pop %v1381
  %v1446 = vtanh.pop %v1382
  %v1447 = vtanh.pop %v1383
  %v1448 = vtanh.pop %v1384
  %v1449 = vtanh.pop %v1385
  %v1450 = vtanh.pop %v1386
  %v1451 = vtanh.pop %v1387
  %v1452 = vtanh.pop %v1388
  %v1453 = vtanh.pop %v1389
  %v1454 = vtanh.pop %v1390
  %v1455 = vtanh.pop %v1391
  %v1456 = vtanh.pop %v1392
  %v1457 = vtanh.pop %v1393
  %v1458 = vtanh.pop %v1394
  %v1459 = vtanh.pop %v1395
  %v1460 = vtanh.pop %v1396
  %v1461 = vtanh.pop %v1397
  %v1462 = vtanh.pop %v1398
  %v1463 = vtanh.pop %v1399
  %v1464 = vtanh.pop %v1400
  %v1465 = vtanh.pop %v1401
  %v1466 = vtanh.pop %v1402
  %v1467 = vtanh.pop %v1403
  %v1468 = vtanh.pop %v1404
  %v1469 = vtanh.pop %v1405
  %v1470 = vtanh.pop %v1406
  %v1471 = vtanh.pop %v1407
  %v1472 = vtanh.pop %v1408
  %v1473 = vtanh.pop %v1409
  %v1474 = vtanh.pop %v1410
  %v1475 = vtanh.pop %v1411
  %v1476 = vtanh.pop %v1412
  %v1477 = vtanh.pop %v1413
  %v1478 = vtanh.pop %v1414
  %v1479 = vtanh.pop %v1415
  %v1480 = vtanh.pop %v1416
  %v1481 = vtanh.pop %v1417
  %v1482 = vtanh.pop %v1418
  %v1483 = vtanh.pop %v1419
  %v1484 = vtanh.pop %v1420
  %v1485 = vtanh.pop %v1421
  %v1486 = vtanh.pop %v1422
  %v1487 = vtanh.pop %v1423
  %v1488 = vtanh.pop %v1424
  %v1489 = vtanh.pop %v1425
  %v1490 = vtanh.pop %v1426
  %v1491 = vtanh.pop %v1427
  %v1492 = vtanh.pop %v1428
  %v1493 = vtanh.pop %v1429
  %v1494 = vtanh.pop %v1430
  %v1495 = vtanh.pop %v1431
  %v1496 = vtanh.pop %v1432
  %v1497 = vtanh.pop %v1433
  %v1498 = vtanh.pop %v1434
  %v1499 = vtanh.pop %v1435
  %v1500 = vtanh.pop %v1436
  %v1501 = vtanh.pop %v1437
  %v1502 = vadd.f32 %v1438, 1.0
  %v1503 = vadd.f32 %v1439, 1.0
  %v1504 = vadd.f32 %v1440, 1.0
  %v1505 = vadd.f32 %v1441, 1.0
  %v1506 = vadd.f32 %v1442, 1.0
  %v1507 = vadd.f32 %v1443, 1.0
  %v1508 = vadd.f32 %v1444, 1.0
  %v1509 = vadd.f32 %v1445, 1.0
  %v1510 = vadd.f32 %v1446, 1.0
  %v1511 = vadd.f32 %v1447, 1.0
  %v1512 = vadd.f32 %v1448, 1.0
  %v1513 = vadd.f32 %v1449, 1.0
  %v1514 = vadd.f32 %v1450, 1.0
  %v1515 = vadd.f32 %v1451, 1.0
  %v1516 = vadd.f32 %v1452, 1.0
  %v1517 = vadd.f32 %v1453, 1.0
  %v1518 = vadd.f32 %v1454, 1.0
  %v1519 = vadd.f32 %v1455, 1.0
  %v1520 = vadd.f32 %v1456, 1.0
  %v1521 = vadd.f32 %v1457, 1.0
  %v1522 = vadd.f32 %v1458, 1.0
  %v1523 = vadd.f32 %v1459, 1.0
  %v1524 = vadd.f32 %v1460, 1.0
  %v1525 = vadd.f32 %v1461, 1.0
  %v1526 = vadd.f32 %v1462, 1.0
  %v1527 = vadd.f32 %v1463, 1.0
  %v1528 = vadd.f32 %v1464, 1.0
  %v1529 = vadd.f32 %v1465, 1.0
  %v1530 = vadd.f32 %v1466, 1.0
  %v1531 = vadd.f32 %v1467, 1.0
  %v1532 = vadd.f32 %v1468, 1.0
  %v1533 = vadd.f32 %v1469, 1.0
  %v1534 = vadd.f32 %v1470, 1.0
  %v1535 = vadd.f32 %v1471, 1.0
  %v1536 = vadd.f32 %v1472, 1.0
  %v1537 = vadd.f32 %v1473, 1.0
  %v1538 = vadd.f32 %v1474, 1.0
  %v1539 = vadd.f32 %v1475, 1.0
  %v1540 = vadd.f32 %v1476, 1.0
  %v1541 = vadd.f32 %v1477, 1.0
  %v1542 = vadd.f32 %v1478, 1.0
  %v1543 = vadd.f32 %v1479, 1.0
  %v1544 = vadd.f32 %v1480, 1.0
  %v1545 = vadd.f32 %v1481, 1.0
  %v1546 = vadd.f32 %v1482, 1.0
  %v1547 = vadd.f32 %v1483, 1.0
  %v1548 = vadd.f32 %v1484, 1.0
  %v1549 = vadd.f32 %v1485, 1.0
  %v1550 = vadd.f32 %v1486, 1.0
  %v1551 = vadd.f32 %v1487, 1.0
  %v1552 = vadd.f32 %v1488, 1.0
  %v1553 = vadd.f32 %v1489, 1.0
  %v1554 = vadd.f32 %v1490, 1.0
  %v1555 = vadd.f32 %v1491, 1.0
  %v1556 = vadd.f32 %v1492, 1.0
  %v1557 = vadd.f32 %v1493, 1.0
  %v1558 = vadd.f32 %v1494, 1.0
  %v1559 = vadd.f32 %v1495, 1.0
  %v1560 = vadd.f32 %v1496, 1.0
  %v1561 = vadd.f32 %v1497, 1.0
  %v1562 = vadd.f32 %v1498, 1.0
  %v1563 = vadd.f32 %v1499, 1.0
  %v1564 = vadd.f32 %v1500, 1.0
  %v1565 = vadd.f32 %v1501, 1.0
  %v1566 = vmul.f32 %v1054, %v1502
  %v1567 = vmul.f32 %v1055, %v1503
  %v1568 = vmul.f32 %v1056, %v1504
  %v1569 = vmul.f32 %v1057, %v1505
  %v1570 = vmul.f32 %v1058, %v1506
  %v1571 = vmul.f32 %v1059, %v1507
  %v1572 = vmul.f32 %v1060, %v1508
  %v1573 = vmul.f32 %v1061, %v1509
  %v1574 = vmul.f32 %v1062, %v1510
  %v1575 = vmul.f32 %v1063, %v1511
  %v1576 = vmul.f32 %v1064, %v1512
  %v1577 = vmul.f32 %v1065, %v1513
  %v1578 = vmul.f32 %v1066, %v1514
  %v1579 = vmul.f32 %v1067, %v1515
  %v1580 = vmul.f32 %v1068, %v1516
  %v1581 = vmul.f32 %v1069, %v1517
  %v1582 = vmul.f32 %v1070, %v1518
  %v1583 = vmul.f32 %v1071, %v1519
  %v1584 = vmul.f32 %v1072, %v1520
  %v1585 = vmul.f32 %v1073, %v1521
  %v1586 = vmul.f32 %v1074, %v1522
  %v1587 = vmul.f32 %v1075, %v1523
  %v1588 = vmul.f32 %v1076, %v1524
  %v1589 = vmul.f32 %v1077, %v1525
  %v1590 = vmul.f32 %v1078, %v1526
  %v1591 = vmul.f32 %v1079, %v1527
  %v1592 = vmul.f32 %v1080, %v1528
  %v1593 = vmul.f32 %v1081, %v1529
  %v1594 = vmul.f32 %v1082, %v1530
  %v1595 = vmul.f32 %v1083, %v1531
  %v1596 = vmul.f32 %v1084, %v1532
  %v1597 = vmul.f32 %v1085, %v1533
  %v1598 = vmul.f32 %v1086, %v1534
  %v1599 = vmul.f32 %v1087, %v1535
  %v1600 = vmul.f32 %v1088, %v1536
  %v1601 = vmul.f32 %v1089, %v1537
  %v1602 = vmul.f32 %v1090, %v1538
  %v1603 = vmul.f32 %v1091, %v1539
  %v1604 = vmul.f32 %v1092, %v1540
  %v1605 = vmul.f32 %v1093, %v1541
  %v1606 = vmul.f32 %v1094, %v1542
  %v1607 = vmul.f32 %v1095, %v1543
  %v1608 = vmul.f32 %v1096, %v1544
  %v1609 = vmul.f32 %v1097, %v1545
  %v1610 = vmul.f32 %v1098, %v1546
  %v1611 = vmul.f32 %v1099, %v1547
  %v1612 = vmul.f32 %v1100, %v1548
  %v1613 = vmul.f32 %v1101, %v1549
  %v1614 = vmul.f32 %v1102, %v1550
  %v1615 = vmul.f32 %v1103, %v1551
  %v1616 = vmul.f32 %v1104, %v1552
  %v1617 = vmul.f32 %v1105, %v1553
  %v1618 = vmul.f32 %v1106, %v1554
  %v1619 = vmul.f32 %v1107, %v1555
  %v1620 = vmul.f32 %v1108, %v1556
  %v1621 = vmul.f32 %v1109, %v1557
  %v1622 = vmul.f32 %v1110, %v1558
  %v1623 = vmul.f32 %v1111, %v1559
  %v1624 = vmul.f32 %v1112, %v1560
  %v1625 = vmul.f32 %v1113, %v1561
  %v1626 = vmul.f32 %v1114, %v1562
  %v1627 = vmul.f32 %v1115, %v1563
  %v1628 = vmul.f32 %v1116, %v1564
  %v1629 = vmul.f32 %v1117, %v1565
  %1630 = vst.msk [vmem:[%s3] sm:$0xff] %vm78, %v1566
  %1631 = vst.msk [vmem:[%s3 + $0x8] sm:$0xff] %vm78, %v1567
  %1632 = vst.msk [vmem:[%s3 + $0x10] sm:$0xff] %vm78, %v1568
  %1633 = vst.msk [vmem:[%s3 + $0x18] sm:$0xff] %vm78, %v1569
  %1634 = vst.msk [vmem:[%s3 + $0x20] sm:$0xff] %vm78, %v1570
  %1635 = vst.msk [vmem:[%s3 + $0x28] sm:$0xff] %vm78, %v1571
  %1636 = vst.msk [vmem:[%s3 + $0x30] sm:$0xff] %vm78, %v1572
  %1637 = vst.msk [vmem:[%s3 + $0x38] sm:$0xff] %vm78, %v1573
  %1638 = vst.msk [vmem:[%s3 + $0x40] sm:$0xff] %vm78, %v1574
  %1639 = vst.msk [vmem:[%s3 + $0x48] sm:$0xff] %vm78, %v1575
  %1640 = vst.msk [vmem:[%s3 + $0x50] sm:$0xff] %vm78, %v1576
  %1641 = vst.msk [vmem:[%s3 + $0x58] sm:$0xff] %vm78, %v1577
  %1642 = vst.msk [vmem:[%s3 + $0x60] sm:$0xff] %vm78, %v1578
  %1643 = vst.msk [vmem:[%s3 + $0x68] sm:$0xff] %vm78, %v1579
  %1644 = vst.msk [vmem:[%s3 + $0x70] sm:$0xff] %vm78, %v1580
  %1645 = vst.msk [vmem:[%s3 + $0x78] sm:$0xff] %vm78, %v1581
  %1646 = vst.msk [vmem:[%s3 + $0x80] sm:$0xff] %vm78, %v1582
  %1647 = vst.msk [vmem:[%s3 + $0x88] sm:$0xff] %vm78, %v1583
  %1648 = vst.msk [vmem:[%s3 + $0x90] sm:$0xff] %vm78, %v1584
  %1649 = vst.msk [vmem:[%s3 + $0x98] sm:$0xff] %vm78, %v1585
  %1650 = vst.msk [vmem:[%s3 + $0xa0] sm:$0xff] %vm78, %v1586
  %1651 = vst.msk [vmem:[%s3 + $0xa8] sm:$0xff] %vm78, %v1587
  %1652 = vst.msk [vmem:[%s3 + $0xb0] sm:$0xff] %vm78, %v1588
  %1653 = vst.msk [vmem:[%s3 + $0xb8] sm:$0xff] %vm78, %v1589
  %1654 = vst.msk [vmem:[%s3 + $0xc0] sm:$0xff] %vm78, %v1590
  %1655 = vst.msk [vmem:[%s3 + $0xc8] sm:$0xff] %vm78, %v1591
  %1656 = vst.msk [vmem:[%s3 + $0xd0] sm:$0xff] %vm78, %v1592
  %1657 = vst.msk [vmem:[%s3 + $0xd8] sm:$0xff] %vm78, %v1593
  %1658 = vst.msk [vmem:[%s3 + $0xe0] sm:$0xff] %vm78, %v1594
  %1659 = vst.msk [vmem:[%s3 + $0xe8] sm:$0xff] %vm78, %v1595
  %1660 = vst.msk [vmem:[%s3 + $0xf0] sm:$0xff] %vm78, %v1596
  %1661 = vst.msk [vmem:[%s3 + $0xf8] sm:$0xff] %vm78, %v1597
  %1662 = vst.msk [vmem:[%s3 + $0x100] sm:$0xff] %vm78, %v1598
  %1663 = vst.msk [vmem:[%s3 + $0x108] sm:$0xff] %vm78, %v1599
  %1664 = vst.msk [vmem:[%s3 + $0x110] sm:$0xff] %vm78, %v1600
  %1665 = vst.msk [vmem:[%s3 + $0x118] sm:$0xff] %vm78, %v1601
  %1666 = vst.msk [vmem:[%s3 + $0x120] sm:$0xff] %vm78, %v1602
  %1667 = vst.msk [vmem:[%s3 + $0x128] sm:$0xff] %vm78, %v1603
  %1668 = vst.msk [vmem:[%s3 + $0x130] sm:$0xff] %vm78, %v1604
  %1669 = vst.msk [vmem:[%s3 + $0x138] sm:$0xff] %vm78, %v1605
  %1670 = vst.msk [vmem:[%s3 + $0x140] sm:$0xff] %vm78, %v1606
  %1671 = vst.msk [vmem:[%s3 + $0x148] sm:$0xff] %vm78, %v1607
  %1672 = vst.msk [vmem:[%s3 + $0x150] sm:$0xff] %vm78, %v1608
  %1673 = vst.msk [vmem:[%s3 + $0x158] sm:$0xff] %vm78, %v1609
  %1674 = vst.msk [vmem:[%s3 + $0x160] sm:$0xff] %vm78, %v1610
  %1675 = vst.msk [vmem:[%s3 + $0x168] sm:$0xff] %vm78, %v1611
  %1676 = vst.msk [vmem:[%s3 + $0x170] sm:$0xff] %vm78, %v1612
  %1677 = vst.msk [vmem:[%s3 + $0x178] sm:$0xff] %vm78, %v1613
  %1678 = vst.msk [vmem:[%s3 + $0x180] sm:$0xff] %vm78, %v1614
  %1679 = vst.msk [vmem:[%s3 + $0x188] sm:$0xff] %vm78, %v1615
  %1680 = vst.msk [vmem:[%s3 + $0x190] sm:$0xff] %vm78, %v1616
  %1681 = vst.msk [vmem:[%s3 + $0x198] sm:$0xff] %vm78, %v1617
  %1682 = vst.msk [vmem:[%s3 + $0x1a0] sm:$0xff] %vm78, %v1618
  %1683 = vst.msk [vmem:[%s3 + $0x1a8] sm:$0xff] %vm78, %v1619
  %1684 = vst.msk [vmem:[%s3 + $0x1b0] sm:$0xff] %vm78, %v1620
  %1685 = vst.msk [vmem:[%s3 + $0x1b8] sm:$0xff] %vm78, %v1621
  %1686 = vst.msk [vmem:[%s3 + $0x1c0] sm:$0xff] %vm78, %v1622
  %1687 = vst.msk [vmem:[%s3 + $0x1c8] sm:$0xff] %vm78, %v1623
  %1688 = vst.msk [vmem:[%s3 + $0x1d0] sm:$0xff] %vm78, %v1624
  %1689 = vst.msk [vmem:[%s3 + $0x1d8] sm:$0xff] %vm78, %v1625
  %1690 = vst.msk [vmem:[%s3 + $0x1e0] sm:$0xff] %vm78, %v1626
  %1691 = vst.msk [vmem:[%s3 + $0x1e8] sm:$0xff] %vm78, %v1627
  %1692 = vst.msk [vmem:[%s3 + $0x1f0] sm:$0xff] %vm78, %v1628
  %1693 = vst.msk [vmem:[%s3 + $0x1f8] sm:$0xff] %vm78, %v1629
  // Predicated region
  $region14: #{speech_model_forward.18} parent=0 // pred_check
    _
  $region15: #{speech_model_forward.18} parent=0 // pred_check_branch
    %1695 = sbr.rel (0) target = $region17
  $region16: #{speech_model_forward.18} parent=0 // pred_region
    _
  $region17: #{speech_model_forward.18} parent=0 // pred_fallthru
    _
  // Predicated region
  $region18: #{speech_model_forward.18} parent=0 // pred_check
    _
  $region19: #{speech_model_forward.18} parent=0 // pred_check_branch
    %1697 = sbr.rel (0) target = $region21
  $region20: #{speech_model_forward.18} parent=0 // pred_region
    _
  $region21: #{speech_model_forward.18} parent=0 // pred_fallthru
    _

// kernel: speech_model_forward.19
$region0: #{speech_model_forward.19}
  #allocation0 [shape = 'u32[]', space=smem, size = 0x4, offset = 0x4, fixed_abs, tag = 'smem constant byte address 0x4 - core index']
  #allocation1 [shape = 'u32[144,128]{1,0:T(1,128)}', space=vmem, size = 0x12000, scoped, tag = 'internal scratch']
  #allocation2 [shape = 'f32[128,128]{1,0:T(8,128)}', space=vmem, size = 0x10000, scoped, tag = 'scratch operand']
  %s0 = inlined_call_operand.vmem [shape: f32[128,288], index: 0, kind: input, shape index: {}]
  %s1 = inlined_call_operand.vmem [shape: f32[288,128], index: 1, kind: input, shape index: {}]
  %s2 = inlined_call_operand.vmem [shape: f32[1,128], index: 2, kind: input, shape index: {}]
  %s3 = inlined_call_operand.vmem [shape: f32[128,128], index: 3, kind: input, shape index: {}]
  %s4 = inlined_call_operand.vmem [shape: f32[128,128], index: 4, kind: output, shape index: {}]
  %s5 = sld [smem:[#allocation0]]
  $region34: #{speech_model_forward.19} parent=0
    _
  %s7 = ssub.s32 1, %s5
  %s8 = scalar_select 0, %s7, %s5
  // Predicated region
  $region2: #{speech_model_forward.19} parent=0 // pred_check
    _
  $region3: #{speech_model_forward.19} parent=0 // pred_check_branch
    %10 = sbr.rel (0) target = $region5
  $region4: #{speech_model_forward.19} parent=0 // pred_region
    _
  $region5: #{speech_model_forward.19} parent=0 // pred_fallthru
    _
  // Predicated region
  $region6: #{speech_model_forward.19} parent=0 // pred_check
    _
  $region7: #{speech_model_forward.19} parent=0 // pred_check_branch
    %12 = sbr.rel (0) target = $region9
  $region8: #{speech_model_forward.19} parent=0 // pred_region
    _
  $region9: #{speech_model_forward.19} parent=0 // pred_fallthru
    _
  // Predicated region
  $region10: #{speech_model_forward.19} parent=0 // pred_check
    _
  $region11: #{speech_model_forward.19} parent=0 // pred_check_branch
    %14 = sbr.rel (0) target = $region13
  $region12: #{speech_model_forward.19} parent=0 // pred_region
    _
  $region13: #{speech_model_forward.19} parent=0 // pred_fallthru
    _
  // Predicated region
  $region14: #{speech_model_forward.19} parent=0 // pred_check
    _
  $region15: #{speech_model_forward.19} parent=0 // pred_check_branch
    %16 = sbr.rel (0) target = $region17
  $region16: #{speech_model_forward.19} parent=0 // pred_region
    _
  $region17: #{speech_model_forward.19} parent=0 // pred_fallthru
    _
  %p17 = scmp.eq.s32.totalorder 0, 0
  // Predicated region
  $region18: #{speech_model_forward.19} parent=0 // pred_check
    %p18 = pneg %p17
  $region19: #{speech_model_forward.19} parent=0 // pred_check_branch
    %20 = sbr.rel (%p18) target = $region21
  $region20: #{speech_model_forward.19} parent=0 // pred_region
    %21 = vst [vmem:[#allocation2] sm:$0xff] 0.0
    %22 = vst [vmem:[#allocation2 + $0x8] sm:$0xff] 0.0
    %23 = vst [vmem:[#allocation2 + $0x10] sm:$0xff] 0.0
    %24 = vst [vmem:[#allocation2 + $0x18] sm:$0xff] 0.0
    %25 = vst [vmem:[#allocation2 + $0x20] sm:$0xff] 0.0
    %26 = vst [vmem:[#allocation2 + $0x28] sm:$0xff] 0.0
    %27 = vst [vmem:[#allocation2 + $0x30] sm:$0xff] 0.0
    %28 = vst [vmem:[#allocation2 + $0x38] sm:$0xff] 0.0
    %29 = vst [vmem:[#allocation2 + $0x40] sm:$0xff] 0.0
    %30 = vst [vmem:[#allocation2 + $0x48] sm:$0xff] 0.0
    %31 = vst [vmem:[#allocation2 + $0x50] sm:$0xff] 0.0
    %32 = vst [vmem:[#allocation2 + $0x58] sm:$0xff] 0.0
    %33 = vst [vmem:[#allocation2 + $0x60] sm:$0xff] 0.0
    %34 = vst [vmem:[#allocation2 + $0x68] sm:$0xff] 0.0
    %35 = vst [vmem:[#allocation2 + $0x70] sm:$0xff] 0.0
    %36 = vst [vmem:[#allocation2 + $0x78] sm:$0xff] 0.0
  $region21: #{speech_model_forward.19} parent=0 // pred_fallthru
    _
  %v37 = vld [vmem:[#allocation2] sm:$0xff]
  %v38 = vld [vmem:[#allocation2 + $0x8] sm:$0xff]
  %v39 = vld [vmem:[#allocation2 + $0x10] sm:$0xff]
  %v40 = vld [vmem:[#allocation2 + $0x18] sm:$0xff]
  %v41 = vld [vmem:[#allocation2 + $0x20] sm:$0xff]
  %v42 = vld [vmem:[#allocation2 + $0x28] sm:$0xff]
  %v43 = vld [vmem:[#allocation2 + $0x30] sm:$0xff]
  %v44 = vld [vmem:[#allocation2 + $0x38] sm:$0xff]
  %v45 = vld [vmem:[#allocation2 + $0x40] sm:$0xff]
  %v46 = vld [vmem:[#allocation2 + $0x48] sm:$0xff]
  %v47 = vld [vmem:[#allocation2 + $0x50] sm:$0xff]
  %v48 = vld [vmem:[#allocation2 + $0x58] sm:$0xff]
  %v49 = vld [vmem:[#allocation2 + $0x60] sm:$0xff]
  %v50 = vld [vmem:[#allocation2 + $0x68] sm:$0xff]
  %v51 = vld [vmem:[#allocation2 + $0x70] sm:$0xff]
  %v52 = vld [vmem:[#allocation2 + $0x78] sm:$0xff]
  %v53 = vld [vmem:[%s0] sm:$0xff]
  %v54 = vld [vmem:[%s0 + $0x8] sm:$0xff]
  %v55 = vld [vmem:[%s0 + $0x10] sm:$0xff]
  %v56 = vld [vmem:[%s0 + $0x18] sm:$0xff]
  %v57 = vld [vmem:[%s0 + $0x20] sm:$0xff]
  %v58 = vld [vmem:[%s0 + $0x28] sm:$0xff]
  %v59 = vld [vmem:[%s0 + $0x30] sm:$0xff]
  %v60 = vld [vmem:[%s0 + $0x38] sm:$0xff]
  %v61 = vld [vmem:[%s0 + $0x40] sm:$0xff]
  %v62 = vld [vmem:[%s0 + $0x48] sm:$0xff]
  %v63 = vld [vmem:[%s0 + $0x50] sm:$0xff]
  %v64 = vld [vmem:[%s0 + $0x58] sm:$0xff]
  %v65 = vld [vmem:[%s0 + $0x60] sm:$0xff]
  %v66 = vld [vmem:[%s0 + $0x68] sm:$0xff]
  %v67 = vld [vmem:[%s0 + $0x70] sm:$0xff]
  %v68 = vld [vmem:[%s0 + $0x78] sm:$0xff]
  %v69 = vld [vmem:[%s0 + $0x80] sm:$0xff]
  %v70 = vld [vmem:[%s0 + $0x88] sm:$0xff]
  %v71 = vld [vmem:[%s0 + $0x90] sm:$0xff]
  %v72 = vld [vmem:[%s0 + $0x98] sm:$0xff]
  %v73 = vld [vmem:[%s0 + $0xa0] sm:$0xff]
  %v74 = vld [vmem:[%s0 + $0xa8] sm:$0xff]
  %v75 = vld [vmem:[%s0 + $0xb0] sm:$0xff]
  %v76 = vld [vmem:[%s0 + $0xb8] sm:$0xff]
  %v77 = vld [vmem:[%s0 + $0xc0] sm:$0xff]
  %v78 = vld [vmem:[%s0 + $0xc8] sm:$0xff]
  %v79 = vld [vmem:[%s0 + $0xd0] sm:$0xff]
  %v80 = vld [vmem:[%s0 + $0xd8] sm:$0xff]
  %v81 = vld [vmem:[%s0 + $0xe0] sm:$0xff]
  %v82 = vld [vmem:[%s0 + $0xe8] sm:$0xff]
  %v83 = vld [vmem:[%s0 + $0xf0] sm:$0xff]
  %v84 = vld [vmem:[%s0 + $0xf8] sm:$0xff]
  %v85 = vld [vmem:[%s0 + $0x100] sm:$0xff]
  %v86 = vld [vmem:[%s0 + $0x108] sm:$0xff]
  %v87 = vld [vmem:[%s0 + $0x110] sm:$0xff]
  %v88 = vld [vmem:[%s0 + $0x118] sm:$0xff]
  %v89 = vld [vmem:[%s0 + $0x120] sm:$0xff]
  %v90 = vld [vmem:[%s0 + $0x128] sm:$0xff]
  %v91 = vld [vmem:[%s0 + $0x130] sm:$0xff]
  %v92 = vld [vmem:[%s0 + $0x138] sm:$0xff]
  %v93 = vld [vmem:[%s0 + $0x140] sm:$0xff]
  %v94 = vld [vmem:[%s0 + $0x148] sm:$0xff]
  %v95 = vld [vmem:[%s0 + $0x150] sm:$0xff]
  %v96 = vld [vmem:[%s0 + $0x158] sm:$0xff]
  %v97 = vld [vmem:[%s0 + $0x160] sm:$0xff]
  %v98 = vld [vmem:[%s0 + $0x168] sm:$0xff]
  %v99 = vld [vmem:[%s0 + $0x170] sm:$0xff]
  %v100 = vld [vmem:[%s0 + $0x178] sm:$0xff]
  %v101 = vld [vmem:[%s1] sm:$0xff]
  %v102 = vld [vmem:[%s1 + $0x8] sm:$0xff]
  %v103 = vld [vmem:[%s1 + $0x10] sm:$0xff]
  %v104 = vld [vmem:[%s1 + $0x18] sm:$0xff]
  %v105 = vld [vmem:[%s1 + $0x20] sm:$0xff]
  %v106 = vld [vmem:[%s1 + $0x28] sm:$0xff]
  %v107 = vld [vmem:[%s1 + $0x30] sm:$0xff]
  %v108 = vld [vmem:[%s1 + $0x38] sm:$0xff]
  %v109 = vld [vmem:[%s1 + $0x40] sm:$0xff]
  %v110 = vld [vmem:[%s1 + $0x48] sm:$0xff]
  %v111 = vld [vmem:[%s1 + $0x50] sm:$0xff]
  %v112 = vld [vmem:[%s1 + $0x58] sm:$0xff]
  %v113 = vld [vmem:[%s1 + $0x60] sm:$0xff]
  %v114 = vld [vmem:[%s1 + $0x68] sm:$0xff]
  %v115 = vld [vmem:[%s1 + $0x70] sm:$0xff]
  %v116 = vld [vmem:[%s1 + $0x78] sm:$0xff]
  %v117 = vld [vmem:[%s1 + $0x80] sm:$0xff]
  %v118 = vld [vmem:[%s1 + $0x88] sm:$0xff]
  %v119 = vld [vmem:[%s1 + $0x90] sm:$0xff]
  %v120 = vld [vmem:[%s1 + $0x98] sm:$0xff]
  %v121 = vld [vmem:[%s1 + $0xa0] sm:$0xff]
  %v122 = vld [vmem:[%s1 + $0xa8] sm:$0xff]
  %v123 = vld [vmem:[%s1 + $0xb0] sm:$0xff]
  %v124 = vld [vmem:[%s1 + $0xb8] sm:$0xff]
  %v125 = vld [vmem:[%s1 + $0xc0] sm:$0xff]
  %v126 = vld [vmem:[%s1 + $0xc8] sm:$0xff]
  %v127 = vld [vmem:[%s1 + $0xd0] sm:$0xff]
  %v128 = vld [vmem:[%s1 + $0xd8] sm:$0xff]
  %v129 = vld [vmem:[%s1 + $0xe0] sm:$0xff]
  %v130 = vld [vmem:[%s1 + $0xe8] sm:$0xff]
  %v131 = vld [vmem:[%s1 + $0xf0] sm:$0xff]
  %v132 = vld [vmem:[%s1 + $0xf8] sm:$0xff]
  %v133 = vld [vmem:[%s1 + $0x100] sm:$0xff]
  %v134 = vld [vmem:[%s1 + $0x108] sm:$0xff]
  %v135 = vld [vmem:[%s1 + $0x110] sm:$0xff]
  %v136 = vld [vmem:[%s1 + $0x118] sm:$0xff]
  %vm137 = vcmask 261120
  %v139 = vsel %vm137, %v55, 0
  %v142 = vsel %vm137, %v58, 0
  %v145 = vsel %vm137, %v61, 0
  %v148 = vsel %vm137, %v64, 0
  %v151 = vsel %vm137, %v67, 0
  %v154 = vsel %vm137, %v70, 0
  %v157 = vsel %vm137, %v73, 0
  %v160 = vsel %vm137, %v76, 0
  %v163 = vsel %vm137, %v79, 0
  %v166 = vsel %vm137, %v82, 0
  %v169 = vsel %vm137, %v85, 0
  %v172 = vsel %vm137, %v88, 0
  %v175 = vsel %vm137, %v91, 0
  %v178 = vsel %vm137, %v94, 0
  %v181 = vsel %vm137, %v97, 0
  %v184 = vsel %vm137, %v100, 0
  %186 = vmatprep.subr.mxu0 0.0
  %187 = vmatpush1.msra.mxu0 %v116
  %188 = vmatprep.subr.mxu0 0.0
  %189 = vmatpush1.msra.mxu0 %v115
  %190 = vmatprep.subr.mxu0 0.0
  %191 = vmatpush1.msra.mxu0 %v114
  %192 = vmatprep.subr.mxu0 0.0
  %193 = vmatpush1.msra.mxu0 %v113
  %194 = vmatprep.subr.mxu0 0.0
  %195 = vmatpush1.msra.mxu0 %v112
  %196 = vmatprep.subr.mxu0 0.0
  %197 = vmatpush1.msra.mxu0 %v111
  %198 = vmatprep.subr.mxu0 0.0
  %199 = vmatpush1.msra.mxu0 %v110
  %200 = vmatprep.subr.mxu0 0.0
  %201 = vmatpush1.msra.mxu0 %v109
  %202 = vmatprep.subr.mxu0 0.0
  %203 = vmatpush1.msra.mxu0 %v108
  %204 = vmatprep.subr.mxu0 0.0
  %205 = vmatpush1.msra.mxu0 %v107
  %206 = vmatprep.subr.mxu0 0.0
  %207 = vmatpush1.msra.mxu0 %v106
  %208 = vmatprep.subr.mxu0 0.0
  %209 = vmatpush1.msra.mxu0 %v105
  %210 = vmatprep.subr.mxu0 0.0
  %211 = vmatpush1.msra.mxu0 %v104
  %212 = vmatprep.subr.mxu0 0.0
  %213 = vmatpush1.msra.mxu0 %v103
  %214 = vmatprep.subr.mxu0 0.0
  %215 = vmatpush1.msra.mxu0 %v102
  %216 = vmatprep.subr.mxu0 0.0
  %217 = vmatpush1.msra.mxu0 %v101
  %218 = vmatprep.subr.mxu0 0.0
  %219 = vmatpush2.msra.mxu0 %v132
  %220 = vmatprep.subr.mxu0 0.0
  %221 = vmatpush2.msra.mxu0 %v131
  %222 = vmatprep.subr.mxu0 0.0
  %223 = vmatpush2.msra.mxu0 %v130
  %224 = vmatprep.subr.mxu0 0.0
  %225 = vmatpush2.msra.mxu0 %v129
  %226 = vmatprep.subr.mxu0 0.0
  %227 = vmatpush2.msra.mxu0 %v128
  %228 = vmatprep.subr.mxu0 0.0
  %229 = vmatpush2.msra.mxu0 %v127
  %230 = vmatprep.subr.mxu0 0.0
  %231 = vmatpush2.msra.mxu0 %v126
  %232 = vmatprep.subr.mxu0 0.0
  %233 = vmatpush2.msra.mxu0 %v125
  %234 = vmatprep.subr.mxu0 0.0
  %235 = vmatpush2.msra.mxu0 %v124
  %236 = vmatprep.subr.mxu0 0.0
  %237 = vmatpush2.msra.mxu0 %v123
  %238 = vmatprep.subr.mxu0 0.0
  %239 = vmatpush2.msra.mxu0 %v122
  %240 = vmatprep.subr.mxu0 0.0
  %241 = vmatpush2.msra.mxu0 %v121
  %242 = vmatprep.subr.mxu0 0.0
  %243 = vmatpush2.msra.mxu0 %v120
  %244 = vmatprep.subr.mxu0 0.0
  %245 = vmatpush2.msra.mxu0 %v119
  %246 = vmatprep.subr.mxu0 0.0
  %247 = vmatpush2.msra.mxu0 %v118
  %248 = vmatprep.subr.mxu0 0.0
  %249 = vmatpush2.msra.mxu0 %v117
  %250 = vmatprep.mubr.f32.mxu0 %v54
  %251 = vmatmul.mubr.f32.gmra.mxu0 %v53
  %v252 = vpop.f32.mrf.mxu0
  %v253 = vadd.f32 0.0, %v252
  %v254 = vpop.f32.mrf.mxu0
  %255 = vmatprep.mubr.f32.mxu0 %v57
  %256 = vmatmul.mubr.f32.gmra.mxu0 %v56
  %v257 = vpop.f32.mrf.mxu0
  %v258 = vadd.f32 0.0, %v257
  %v259 = vpop.f32.mrf.mxu0
  %260 = vmatprep.mubr.f32.mxu0 %v60
  %261 = vmatmul.mubr.f32.gmra.mxu0 %v59
  %v262 = vpop.f32.mrf.mxu0
  %v263 = vadd.f32 0.0, %v262
  %v264 = vpop.f32.mrf.mxu0
  %265 = vmatprep.mubr.f32.mxu0 %v63
  %266 = vmatmul.mubr.f32.gmra.mxu0 %v62
  %v267 = vpop.f32.mrf.mxu0
  %v268 = vadd.f32 0.0, %v267
  %v269 = vpop.f32.mrf.mxu0
  %270 = vmatprep.mubr.f32.mxu0 %v66
  %271 = vmatmul.mubr.f32.gmra.mxu0 %v65
  %v272 = vpop.f32.mrf.mxu0
  %v273 = vadd.f32 0.0, %v272
  %v274 = vpop.f32.mrf.mxu0
  %275 = vmatprep.mubr.f32.mxu0 %v69
  %276 = vmatmul.mubr.f32.gmra.mxu0 %v68
  %v277 = vpop.f32.mrf.mxu0
  %v278 = vadd.f32 0.0, %v277
  %v279 = vpop.f32.mrf.mxu0
  %280 = vmatprep.mubr.f32.mxu0 %v72
  %281 = vmatmul.mubr.f32.gmra.mxu0 %v71
  %v282 = vpop.f32.mrf.mxu0
  %v283 = vadd.f32 0.0, %v282
  %v284 = vpop.f32.mrf.mxu0
  %285 = vmatprep.mubr.f32.mxu0 %v75
  %286 = vmatmul.mubr.f32.gmra.mxu0 %v74
  %v287 = vpop.f32.mrf.mxu0
  %v288 = vadd.f32 0.0, %v287
  %v289 = vpop.f32.mrf.mxu0
  %290 = vmatprep.mubr.f32.mxu0 %v78
  %291 = vmatmul.mubr.f32.gmra.mxu0 %v77
  %v292 = vpop.f32.mrf.mxu0
  %v293 = vadd.f32 0.0, %v292
  %v294 = vpop.f32.mrf.mxu0
  %295 = vmatprep.mubr.f32.mxu0 %v81
  %296 = vmatmul.mubr.f32.gmra.mxu0 %v80
  %v297 = vpop.f32.mrf.mxu0
  %v298 = vadd.f32 0.0, %v297
  %v299 = vpop.f32.mrf.mxu0
  %300 = vmatprep.mubr.f32.mxu0 %v84
  %301 = vmatmul.mubr.f32.gmra.mxu0 %v83
  %v302 = vpop.f32.mrf.mxu0
  %v303 = vadd.f32 0.0, %v302
  %v304 = vpop.f32.mrf.mxu0
  %305 = vmatprep.mubr.f32.mxu0 %v87
  %306 = vmatmul.mubr.f32.gmra.mxu0 %v86
  %v307 = vpop.f32.mrf.mxu0
  %v308 = vadd.f32 0.0, %v307
  %v309 = vpop.f32.mrf.mxu0
  %310 = vmatprep.mubr.f32.mxu0 %v90
  %311 = vmatmul.mubr.f32.gmra.mxu0 %v89
  %v312 = vpop.f32.mrf.mxu0
  %v313 = vadd.f32 0.0, %v312
  %v314 = vpop.f32.mrf.mxu0
  %315 = vmatprep.mubr.f32.mxu0 %v93
  %316 = vmatmul.mubr.f32.gmra.mxu0 %v92
  %v317 = vpop.f32.mrf.mxu0
  %v318 = vadd.f32 0.0, %v317
  %v319 = vpop.f32.mrf.mxu0
  %320 = vmatprep.mubr.f32.mxu0 %v96
  %321 = vmatmul.mubr.f32.gmra.mxu0 %v95
  %v322 = vpop.f32.mrf.mxu0
  %v323 = vadd.f32 0.0, %v322
  %v324 = vpop.f32.mrf.mxu0
  %325 = vmatprep.mubr.f32.mxu0 %v99
  %326 = vmatmul.mubr.f32.gmra.mxu0 %v98
  %v327 = vpop.f32.mrf.mxu0
  %v328 = vadd.f32 0.0, %v327
  %v329 = vpop.f32.mrf.mxu0
  %330 = vdwg.mxu0
  %331 = vmatprep.subr.mxu0 0.0
  %332 = vmatpush1.msra.mxu0 0.0
  %333 = vmatprep.subr.mxu0 0.0
  %334 = vmatpush1.msra.mxu0 0.0
  %335 = vmatprep.subr.mxu0 0.0
  %336 = vmatpush1.msra.mxu0 0.0
  %337 = vmatprep.subr.mxu0 0.0
  %338 = vmatpush1.msra.mxu0 0.0
  %339 = vmatprep.subr.mxu0 0.0
  %340 = vmatpush1.msra.mxu0 0.0
  %341 = vmatprep.subr.mxu0 0.0
  %342 = vmatpush1.msra.mxu0 0.0
  %343 = vmatprep.subr.mxu0 0.0
  %344 = vmatpush1.msra.mxu0 0.0
  %345 = vmatprep.subr.mxu0 0.0
  %346 = vmatpush1.msra.mxu0 0.0
  %347 = vmatprep.subr.mxu0 0.0
  %348 = vmatpush1.msra.mxu0 0.0
  %349 = vmatprep.subr.mxu0 0.0
  %350 = vmatpush1.msra.mxu0 0.0
  %351 = vmatprep.subr.mxu0 0.0
  %352 = vmatpush1.msra.mxu0 0.0
  %353 = vmatprep.subr.mxu0 0.0
  %354 = vmatpush1.msra.mxu0 0.0
  %355 = vmatprep.subr.mxu0 0.0
  %356 = vmatpush1.msra.mxu0 %v136
  %357 = vmatprep.subr.mxu0 0.0
  %358 = vmatpush1.msra.mxu0 %v135
  %359 = vmatprep.subr.mxu0 0.0
  %360 = vmatpush1.msra.mxu0 %v134
  %361 = vmatprep.subr.mxu0 0.0
  %362 = vmatpush1.msra.mxu0 %v133
  %363 = vmatprep.subr.mxu0 0.0
  %364 = vmatpush2.msra.mxu0 0.0
  %365 = vmatprep.subr.mxu0 0.0
  %366 = vmatpush2.msra.mxu0 0.0
  %367 = vmatprep.subr.mxu0 0.0
  %368 = vmatpush2.msra.mxu0 0.0
  %369 = vmatprep.subr.mxu0 0.0
  %370 = vmatpush2.msra.mxu0 0.0
  %371 = vmatprep.subr.mxu0 0.0
  %372 = vmatpush2.msra.mxu0 0.0
  %373 = vmatprep.subr.mxu0 0.0
  %374 = vmatpush2.msra.mxu0 0.0
  %375 = vmatprep.subr.mxu0 0.0
  %376 = vmatpush2.msra.mxu0 0.0
  %377 = vmatprep.subr.mxu0 0.0
  %378 = vmatpush2.msra.mxu0 0.0
  %379 = vmatprep.subr.mxu0 0.0
  %380 = vmatpush2.msra.mxu0 0.0
  %381 = vmatprep.subr.mxu0 0.0
  %382 = vmatpush2.msra.mxu0 0.0
  %383 = vmatprep.subr.mxu0 0.0
  %384 = vmatpush2.msra.mxu0 0.0
  %385 = vmatprep.subr.mxu0 0.0
  %386 = vmatpush2.msra.mxu0 0.0
  %387 = vmatprep.subr.mxu0 0.0
  %388 = vmatpush2.msra.mxu0 0.0
  %389 = vmatprep.subr.mxu0 0.0
  %390 = vmatpush2.msra.mxu0 0.0
  %391 = vmatprep.subr.mxu0 0.0
  %392 = vmatpush2.msra.mxu0 0.0
  %393 = vmatprep.subr.mxu0 0.0
  %394 = vmatpush2.msra.mxu0 0.0
  %395 = vmatprep.mubr.f32.mxu0 0.0
  %396 = vmatmul.mubr.f32.gmra.mxu0 %v139
  %v397 = vpop.f32.mrf.mxu0
  %v398 = vadd.f32 %v253, %v397
  %v399 = vpop.f32.mrf.mxu0
  %400 = vmatprep.mubr.f32.mxu0 0.0
  %401 = vmatmul.mubr.f32.gmra.mxu0 %v142
  %v402 = vpop.f32.mrf.mxu0
  %v403 = vadd.f32 %v258, %v402
  %v404 = vpop.f32.mrf.mxu0
  %405 = vmatprep.mubr.f32.mxu0 0.0
  %406 = vmatmul.mubr.f32.gmra.mxu0 %v145
  %v407 = vpop.f32.mrf.mxu0
  %v408 = vadd.f32 %v263, %v407
  %v409 = vpop.f32.mrf.mxu0
  %410 = vmatprep.mubr.f32.mxu0 0.0
  %411 = vmatmul.mubr.f32.gmra.mxu0 %v148
  %v412 = vpop.f32.mrf.mxu0
  %v413 = vadd.f32 %v268, %v412
  %v414 = vpop.f32.mrf.mxu0
  %415 = vmatprep.mubr.f32.mxu0 0.0
  %416 = vmatmul.mubr.f32.gmra.mxu0 %v151
  %v417 = vpop.f32.mrf.mxu0
  %v418 = vadd.f32 %v273, %v417
  %v419 = vpop.f32.mrf.mxu0
  %420 = vmatprep.mubr.f32.mxu0 0.0
  %421 = vmatmul.mubr.f32.gmra.mxu0 %v154
  %v422 = vpop.f32.mrf.mxu0
  %v423 = vadd.f32 %v278, %v422
  %v424 = vpop.f32.mrf.mxu0
  %425 = vmatprep.mubr.f32.mxu0 0.0
  %426 = vmatmul.mubr.f32.gmra.mxu0 %v157
  %v427 = vpop.f32.mrf.mxu0
  %v428 = vadd.f32 %v283, %v427
  %v429 = vpop.f32.mrf.mxu0
  %430 = vmatprep.mubr.f32.mxu0 0.0
  %431 = vmatmul.mubr.f32.gmra.mxu0 %v160
  %v432 = vpop.f32.mrf.mxu0
  %v433 = vadd.f32 %v288, %v432
  %v434 = vpop.f32.mrf.mxu0
  %435 = vmatprep.mubr.f32.mxu0 0.0
  %436 = vmatmul.mubr.f32.gmra.mxu0 %v163
  %v437 = vpop.f32.mrf.mxu0
  %v438 = vadd.f32 %v293, %v437
  %v439 = vpop.f32.mrf.mxu0
  %440 = vmatprep.mubr.f32.mxu0 0.0
  %441 = vmatmul.mubr.f32.gmra.mxu0 %v166
  %v442 = vpop.f32.mrf.mxu0
  %v443 = vadd.f32 %v298, %v442
  %v444 = vpop.f32.mrf.mxu0
  %445 = vmatprep.mubr.f32.mxu0 0.0
  %446 = vmatmul.mubr.f32.gmra.mxu0 %v169
  %v447 = vpop.f32.mrf.mxu0
  %v448 = vadd.f32 %v303, %v447
  %v449 = vpop.f32.mrf.mxu0
  %450 = vmatprep.mubr.f32.mxu0 0.0
  %451 = vmatmul.mubr.f32.gmra.mxu0 %v172
  %v452 = vpop.f32.mrf.mxu0
  %v453 = vadd.f32 %v308, %v452
  %v454 = vpop.f32.mrf.mxu0
  %455 = vmatprep.mubr.f32.mxu0 0.0
  %456 = vmatmul.mubr.f32.gmra.mxu0 %v175
  %v457 = vpop.f32.mrf.mxu0
  %v458 = vadd.f32 %v313, %v457
  %v459 = vpop.f32.mrf.mxu0
  %460 = vmatprep.mubr.f32.mxu0 0.0
  %461 = vmatmul.mubr.f32.gmra.mxu0 %v178
  %v462 = vpop.f32.mrf.mxu0
  %v463 = vadd.f32 %v318, %v462
  %v464 = vpop.f32.mrf.mxu0
  %465 = vmatprep.mubr.f32.mxu0 0.0
  %466 = vmatmul.mubr.f32.gmra.mxu0 %v181
  %v467 = vpop.f32.mrf.mxu0
  %v468 = vadd.f32 %v323, %v467
  %v469 = vpop.f32.mrf.mxu0
  %470 = vmatprep.mubr.f32.mxu0 0.0
  %471 = vmatmul.mubr.f32.gmra.mxu0 %v184
  %v472 = vpop.f32.mrf.mxu0
  %v473 = vadd.f32 %v328, %v472
  %v474 = vpop.f32.mrf.mxu0
  %475 = vdwg.mxu0
  %v476 = vadd.f32 %v37, %v398
  %v477 = vadd.f32 %v38, %v403
  %v478 = vadd.f32 %v39, %v408
  %v479 = vadd.f32 %v40, %v413
  %v480 = vadd.f32 %v41, %v418
  %v481 = vadd.f32 %v42, %v423
  %v482 = vadd.f32 %v43, %v428
  %v483 = vadd.f32 %v44, %v433
  %v484 = vadd.f32 %v45, %v438
  %v485 = vadd.f32 %v46, %v443
  %v486 = vadd.f32 %v47, %v448
  %v487 = vadd.f32 %v48, %v453
  %v488 = vadd.f32 %v49, %v458
  %v489 = vadd.f32 %v50, %v463
  %v490 = vadd.f32 %v51, %v468
  %v491 = vadd.f32 %v52, %v473
  %492 = vst [vmem:[#allocation2] sm:$0xff] %v476
  %493 = vst [vmem:[#allocation2 + $0x8] sm:$0xff] %v477
  %494 = vst [vmem:[#allocation2 + $0x10] sm:$0xff] %v478
  %495 = vst [vmem:[#allocation2 + $0x18] sm:$0xff] %v479
  %496 = vst [vmem:[#allocation2 + $0x20] sm:$0xff] %v480
  %497 = vst [vmem:[#allocation2 + $0x28] sm:$0xff] %v481
  %498 = vst [vmem:[#allocation2 + $0x30] sm:$0xff] %v482
  %499 = vst [vmem:[#allocation2 + $0x38] sm:$0xff] %v483
  %500 = vst [vmem:[#allocation2 + $0x40] sm:$0xff] %v484
  %501 = vst [vmem:[#allocation2 + $0x48] sm:$0xff] %v485
  %502 = vst [vmem:[#allocation2 + $0x50] sm:$0xff] %v486
  %503 = vst [vmem:[#allocation2 + $0x58] sm:$0xff] %v487
  %504 = vst [vmem:[#allocation2 + $0x60] sm:$0xff] %v488
  %505 = vst [vmem:[#allocation2 + $0x68] sm:$0xff] %v489
  %506 = vst [vmem:[#allocation2 + $0x70] sm:$0xff] %v490
  %507 = vst [vmem:[#allocation2 + $0x78] sm:$0xff] %v491
  // Predicated region
  $region22: #{speech_model_forward.19} parent=0 // pred_check
    %p508 = pneg %p17
  $region23: #{speech_model_forward.19} parent=0 // pred_check_branch
    %510 = sbr.rel (%p508) target = $region25
  $region24: #{speech_model_forward.19} parent=0 // pred_region
    %v511 = vld [vmem:[#allocation2] sm:$0xff]
    %v512 = vld [vmem:[#allocation2 + $0x8] sm:$0xff]
    %v513 = vld [vmem:[#allocation2 + $0x10] sm:$0xff]
    %v514 = vld [vmem:[#allocation2 + $0x18] sm:$0xff]
    %v515 = vld [vmem:[#allocation2 + $0x20] sm:$0xff]
    %v516 = vld [vmem:[#allocation2 + $0x28] sm:$0xff]
    %v517 = vld [vmem:[#allocation2 + $0x30] sm:$0xff]
    %v518 = vld [vmem:[#allocation2 + $0x38] sm:$0xff]
    %v519 = vld [vmem:[#allocation2 + $0x40] sm:$0xff]
    %v520 = vld [vmem:[#allocation2 + $0x48] sm:$0xff]
    %v521 = vld [vmem:[#allocation2 + $0x50] sm:$0xff]
    %v522 = vld [vmem:[#allocation2 + $0x58] sm:$0xff]
    %v523 = vld [vmem:[#allocation2 + $0x60] sm:$0xff]
    %v524 = vld [vmem:[#allocation2 + $0x68] sm:$0xff]
    %v525 = vld [vmem:[#allocation2 + $0x70] sm:$0xff]
    %v526 = vld [vmem:[#allocation2 + $0x78] sm:$0xff]
    %v527 = vld [vmem:[%s2] sm:$0x1]
    %v529 = vlaneseq
    %v530 = vshrl.u32 %v529, 7
    %v531 = vsub.s32 0, %v530
    %v532 = vrot.slane %v527, %v531
    %v534 = vadd.f32 %v511, %v532
    %v535 = vadd.f32 %v512, %v532
    %v536 = vadd.f32 %v513, %v532
    %v537 = vadd.f32 %v514, %v532
    %v538 = vadd.f32 %v515, %v532
    %v539 = vadd.f32 %v516, %v532
    %v540 = vadd.f32 %v517, %v532
    %v541 = vadd.f32 %v518, %v532
    %v542 = vadd.f32 %v519, %v532
    %v543 = vadd.f32 %v520, %v532
    %v544 = vadd.f32 %v521, %v532
    %v545 = vadd.f32 %v522, %v532
    %v546 = vadd.f32 %v523, %v532
    %v547 = vadd.f32 %v524, %v532
    %v548 = vadd.f32 %v525, %v532
    %v549 = vadd.f32 %v526, %v532
    %v550 = vld [vmem:[%s3] sm:$0xff]
    %v551 = vld [vmem:[%s3 + $0x8] sm:$0xff]
    %v552 = vld [vmem:[%s3 + $0x10] sm:$0xff]
    %v553 = vld [vmem:[%s3 + $0x18] sm:$0xff]
    %v554 = vld [vmem:[%s3 + $0x20] sm:$0xff]
    %v555 = vld [vmem:[%s3 + $0x28] sm:$0xff]
    %v556 = vld [vmem:[%s3 + $0x30] sm:$0xff]
    %v557 = vld [vmem:[%s3 + $0x38] sm:$0xff]
    %v558 = vld [vmem:[%s3 + $0x40] sm:$0xff]
    %v559 = vld [vmem:[%s3 + $0x48] sm:$0xff]
    %v560 = vld [vmem:[%s3 + $0x50] sm:$0xff]
    %v561 = vld [vmem:[%s3 + $0x58] sm:$0xff]
    %v562 = vld [vmem:[%s3 + $0x60] sm:$0xff]
    %v563 = vld [vmem:[%s3 + $0x68] sm:$0xff]
    %v564 = vld [vmem:[%s3 + $0x70] sm:$0xff]
    %v565 = vld [vmem:[%s3 + $0x78] sm:$0xff]
    %v566 = vadd.f32 %v534, %v550
    %v567 = vadd.f32 %v535, %v551
    %v568 = vadd.f32 %v536, %v552
    %v569 = vadd.f32 %v537, %v553
    %v570 = vadd.f32 %v538, %v554
    %v571 = vadd.f32 %v539, %v555
    %v572 = vadd.f32 %v540, %v556
    %v573 = vadd.f32 %v541, %v557
    %v574 = vadd.f32 %v542, %v558
    %v575 = vadd.f32 %v543, %v559
    %v576 = vadd.f32 %v544, %v560
    %v577 = vadd.f32 %v545, %v561
    %v578 = vadd.f32 %v546, %v562
    %v579 = vadd.f32 %v547, %v563
    %v580 = vadd.f32 %v548, %v564
    %v581 = vadd.f32 %v549, %v565
    %582 = vst [vmem:[%s4] sm:$0xff] %v566
    %583 = vst [vmem:[%s4 + $0x8] sm:$0xff] %v567
    %584 = vst [vmem:[%s4 + $0x10] sm:$0xff] %v568
    %585 = vst [vmem:[%s4 + $0x18] sm:$0xff] %v569
    %586 = vst [vmem:[%s4 + $0x20] sm:$0xff] %v570
    %587 = vst [vmem:[%s4 + $0x28] sm:$0xff] %v571
    %588 = vst [vmem:[%s4 + $0x30] sm:$0xff] %v572
    %589 = vst [vmem:[%s4 + $0x38] sm:$0xff] %v573
    %590 = vst [vmem:[%s4 + $0x40] sm:$0xff] %v574
    %591 = vst [vmem:[%s4 + $0x48] sm:$0xff] %v575
    %592 = vst [vmem:[%s4 + $0x50] sm:$0xff] %v576
    %593 = vst [vmem:[%s4 + $0x58] sm:$0xff] %v577
    %594 = vst [vmem:[%s4 + $0x60] sm:$0xff] %v578
    %595 = vst [vmem:[%s4 + $0x68] sm:$0xff] %v579
    %596 = vst [vmem:[%s4 + $0x70] sm:$0xff] %v580
    %597 = vst [vmem:[%s4 + $0x78] sm:$0xff] %v581
  $region25: #{speech_model_forward.19} parent=0 // pred_fallthru
    _
  // Predicated region
  $region26: #{speech_model_forward.19} parent=0 // pred_check
    _
  $region27: #{speech_model_forward.19} parent=0 // pred_check_branch
    %599 = sbr.rel (0) target = $region29
  $region28: #{speech_model_forward.19} parent=0 // pred_region
    _
  $region29: #{speech_model_forward.19} parent=0 // pred_fallthru
    _
  // Predicated region
  $region30: #{speech_model_forward.19} parent=0 // pred_check
    _
  $region31: #{speech_model_forward.19} parent=0 // pred_check_branch
    %601 = sbr.rel (0) target = $region33
  $region32: #{speech_model_forward.19} parent=0 // pred_region
    _
  $region33: #{speech_model_forward.19} parent=0 // pred_fallthru
    _

// kernel: speech_model_forward.24
$region0: #{speech_model_forward.24}
  #allocation0 [shape = 'u32[]', space=smem, size = 0x4, offset = 0x4, fixed_abs, tag = 'smem constant byte address 0x4 - core index']
  #allocation1 [shape = 'u32[144,128]{1,0:T(1,128)}', space=vmem, size = 0x12000, scoped, tag = 'internal scratch']
  #allocation2 [shape = 'f32[16,128]{1,0:T(8,128)}', space=vmem, size = 0x2000, scoped, tag = 'scratch operand']
  %s0 = inlined_call_operand.vmem [shape: f32[16,256], index: 0, kind: input, shape index: {}]
  %s1 = inlined_call_operand.vmem [shape: f32[256,128], index: 1, kind: input, shape index: {}]
  %s2 = inlined_call_operand.vmem [shape: f32[1,128], index: 2, kind: input, shape index: {}]
  %s3 = inlined_call_operand.vmem [shape: f32[16,128], index: 3, kind: output, shape index: {}]
  %s4 = sld [smem:[#allocation0]]
  $region30: #{speech_model_forward.24} parent=0
    _
  %s6 = ssub.s32 1, %s4
  %s7 = scalar_select 0, %s6, %s4
  // Predicated region
  $region2: #{speech_model_forward.24} parent=0 // pred_check
    _
  $region3: #{speech_model_forward.24} parent=0 // pred_check_branch
    %9 = sbr.rel (0) target = $region5
  $region4: #{speech_model_forward.24} parent=0 // pred_region
    _
  $region5: #{speech_model_forward.24} parent=0 // pred_fallthru
    _
  // Predicated region
  $region6: #{speech_model_forward.24} parent=0 // pred_check
    _
  $region7: #{speech_model_forward.24} parent=0 // pred_check_branch
    %11 = sbr.rel (0) target = $region9
  $region8: #{speech_model_forward.24} parent=0 // pred_region
    _
  $region9: #{speech_model_forward.24} parent=0 // pred_fallthru
    _
  // Predicated region
  $region10: #{speech_model_forward.24} parent=0 // pred_check
    _
  $region11: #{speech_model_forward.24} parent=0 // pred_check_branch
    %13 = sbr.rel (0) target = $region13
  $region12: #{speech_model_forward.24} parent=0 // pred_region
    _
  $region13: #{speech_model_forward.24} parent=0 // pred_fallthru
    _
  %p14 = scmp.eq.s32.totalorder 0, 0
  // Predicated region
  $region14: #{speech_model_forward.24} parent=0 // pred_check
    %p15 = pneg %p14
  $region15: #{speech_model_forward.24} parent=0 // pred_check_branch
    %17 = sbr.rel (%p15) target = $region17
  $region16: #{speech_model_forward.24} parent=0 // pred_region
    %18 = vst [vmem:[#allocation2] sm:$0xff] 0.0
    %19 = vst [vmem:[#allocation2 + $0x8] sm:$0xff] 0.0
  $region17: #{speech_model_forward.24} parent=0 // pred_fallthru
    _
  %v20 = vld [vmem:[#allocation2] sm:$0xff]
  %v21 = vld [vmem:[#allocation2 + $0x8] sm:$0xff]
  %v22 = vld [vmem:[%s0] sm:$0xff]
  %v23 = vld [vmem:[%s0 + $0x8] sm:$0xff]
  %v24 = vld [vmem:[%s0 + $0x10] sm:$0xff]
  %v25 = vld [vmem:[%s0 + $0x18] sm:$0xff]
  %v26 = vld [vmem:[%s1] sm:$0xff]
  %v27 = vld [vmem:[%s1 + $0x8] sm:$0xff]
  %v28 = vld [vmem:[%s1 + $0x10] sm:$0xff]
  %v29 = vld [vmem:[%s1 + $0x18] sm:$0xff]
  %v30 = vld [vmem:[%s1 + $0x20] sm:$0xff]
  %v31 = vld [vmem:[%s1 + $0x28] sm:$0xff]
  %v32 = vld [vmem:[%s1 + $0x30] sm:$0xff]
  %v33 = vld [vmem:[%s1 + $0x38] sm:$0xff]
  %v34 = vld [vmem:[%s1 + $0x40] sm:$0xff]
  %v35 = vld [vmem:[%s1 + $0x48] sm:$0xff]
  %v36 = vld [vmem:[%s1 + $0x50] sm:$0xff]
  %v37 = vld [vmem:[%s1 + $0x58] sm:$0xff]
  %v38 = vld [vmem:[%s1 + $0x60] sm:$0xff]
  %v39 = vld [vmem:[%s1 + $0x68] sm:$0xff]
  %v40 = vld [vmem:[%s1 + $0x70] sm:$0xff]
  %v41 = vld [vmem:[%s1 + $0x78] sm:$0xff]
  %v42 = vld [vmem:[%s1 + $0x80] sm:$0xff]
  %v43 = vld [vmem:[%s1 + $0x88] sm:$0xff]
  %v44 = vld [vmem:[%s1 + $0x90] sm:$0xff]
  %v45 = vld [vmem:[%s1 + $0x98] sm:$0xff]
  %v46 = vld [vmem:[%s1 + $0xa0] sm:$0xff]
  %v47 = vld [vmem:[%s1 + $0xa8] sm:$0xff]
  %v48 = vld [vmem:[%s1 + $0xb0] sm:$0xff]
  %v49 = vld [vmem:[%s1 + $0xb8] sm:$0xff]
  %v50 = vld [vmem:[%s1 + $0xc0] sm:$0xff]
  %v51 = vld [vmem:[%s1 + $0xc8] sm:$0xff]
  %v52 = vld [vmem:[%s1 + $0xd0] sm:$0xff]
  %v53 = vld [vmem:[%s1 + $0xd8] sm:$0xff]
  %v54 = vld [vmem:[%s1 + $0xe0] sm:$0xff]
  %v55 = vld [vmem:[%s1 + $0xe8] sm:$0xff]
  %v56 = vld [vmem:[%s1 + $0xf0] sm:$0xff]
  %v57 = vld [vmem:[%s1 + $0xf8] sm:$0xff]
  %58 = vmatprep.subr.mxu0 0.0
  %59 = vmatpush1.msra.mxu0 %v41
  %60 = vmatprep.subr.mxu0 0.0
  %61 = vmatpush1.msra.mxu0 %v40
  %62 = vmatprep.subr.mxu0 0.0
  %63 = vmatpush1.msra.mxu0 %v39
  %64 = vmatprep.subr.mxu0 0.0
  %65 = vmatpush1.msra.mxu0 %v38
  %66 = vmatprep.subr.mxu0 0.0
  %67 = vmatpush1.msra.mxu0 %v37
  %68 = vmatprep.subr.mxu0 0.0
  %69 = vmatpush1.msra.mxu0 %v36
  %70 = vmatprep.subr.mxu0 0.0
  %71 = vmatpush1.msra.mxu0 %v35
  %72 = vmatprep.subr.mxu0 0.0
  %73 = vmatpush1.msra.mxu0 %v34
  %74 = vmatprep.subr.mxu0 0.0
  %75 = vmatpush1.msra.mxu0 %v33
  %76 = vmatprep.subr.mxu0 0.0
  %77 = vmatpush1.msra.mxu0 %v32
  %78 = vmatprep.subr.mxu0 0.0
  %79 = vmatpush1.msra.mxu0 %v31
  %80 = vmatprep.subr.mxu0 0.0
  %81 = vmatpush1.msra.mxu0 %v30
  %82 = vmatprep.subr.mxu0 0.0
  %83 = vmatpush1.msra.mxu0 %v29
  %84 = vmatprep.subr.mxu0 0.0
  %85 = vmatpush1.msra.mxu0 %v28
  %86 = vmatprep.subr.mxu0 0.0
  %87 = vmatpush1.msra.mxu0 %v27
  %88 = vmatprep.subr.mxu0 0.0
  %89 = vmatpush1.msra.mxu0 %v26
  %90 = vmatprep.subr.mxu0 0.0
  %91 = vmatpush2.msra.mxu0 %v57
  %92 = vmatprep.subr.mxu0 0.0
  %93 = vmatpush2.msra.mxu0 %v56
  %94 = vmatprep.subr.mxu0 0.0
  %95 = vmatpush2.msra.mxu0 %v55
  %96 = vmatprep.subr.mxu0 0.0
  %97 = vmatpush2.msra.mxu0 %v54
  %98 = vmatprep.subr.mxu0 0.0
  %99 = vmatpush2.msra.mxu0 %v53
  %100 = vmatprep.subr.mxu0 0.0
  %101 = vmatpush2.msra.mxu0 %v52
  %102 = vmatprep.subr.mxu0 0.0
  %103 = vmatpush2.msra.mxu0 %v51
  %104 = vmatprep.subr.mxu0 0.0
  %105 = vmatpush2.msra.mxu0 %v50
  %106 = vmatprep.subr.mxu0 0.0
  %107 = vmatpush2.msra.mxu0 %v49
  %108 = vmatprep.subr.mxu0 0.0
  %109 = vmatpush2.msra.mxu0 %v48
  %110 = vmatprep.subr.mxu0 0.0
  %111 = vmatpush2.msra.mxu0 %v47
  %112 = vmatprep.subr.mxu0 0.0
  %113 = vmatpush2.msra.mxu0 %v46
  %114 = vmatprep.subr.mxu0 0.0
  %115 = vmatpush2.msra.mxu0 %v45
  %116 = vmatprep.subr.mxu0 0.0
  %117 = vmatpush2.msra.mxu0 %v44
  %118 = vmatprep.subr.mxu0 0.0
  %119 = vmatpush2.msra.mxu0 %v43
  %120 = vmatprep.subr.mxu0 0.0
  %121 = vmatpush2.msra.mxu0 %v42
  %122 = vmatprep.mubr.f32.mxu0 %v23
  %123 = vmatmul.mubr.f32.gmra.mxu0 %v22
  %v124 = vpop.f32.mrf.mxu0
  %v125 = vadd.f32 0.0, %v124
  %v126 = vpop.f32.mrf.mxu0
  %127 = vmatprep.mubr.f32.mxu0 %v25
  %128 = vmatmul.mubr.f32.gmra.mxu0 %v24
  %v129 = vpop.f32.mrf.mxu0
  %v130 = vadd.f32 0.0, %v129
  %v131 = vpop.f32.mrf.mxu0
  %132 = vdwg.mxu0
  %v133 = vadd.f32 %v20, %v125
  %v134 = vadd.f32 %v21, %v130
  %135 = vst [vmem:[#allocation2] sm:$0xff] %v133
  %136 = vst [vmem:[#allocation2 + $0x8] sm:$0xff] %v134
  // Predicated region
  $region18: #{speech_model_forward.24} parent=0 // pred_check
    %p137 = pneg %p14
  $region19: #{speech_model_forward.24} parent=0 // pred_check_branch
    %139 = sbr.rel (%p137) target = $region21
  $region20: #{speech_model_forward.24} parent=0 // pred_region
    %v140 = vld [vmem:[#allocation2] sm:$0xff]
    %v141 = vld [vmem:[#allocation2 + $0x8] sm:$0xff]
    %v142 = vld [vmem:[%s2] sm:$0x1]
    %v144 = vlaneseq
    %v145 = vshrl.u32 %v144, 7
    %v146 = vsub.s32 0, %v145
    %v147 = vrot.slane %v142, %v146
    %v149 = vadd.f32 %v140, %v147
    %v150 = vadd.f32 %v141, %v147
    %151 = vst [vmem:[%s3] sm:$0xff] %v149
    %152 = vst [vmem:[%s3 + $0x8] sm:$0xff] %v150
  $region21: #{speech_model_forward.24} parent=0 // pred_fallthru
    _
  // Predicated region
  $region22: #{speech_model_forward.24} parent=0 // pred_check
    _
  $region23: #{speech_model_forward.24} parent=0 // pred_check_branch
    %154 = sbr.rel (0) target = $region25
  $region24: #{speech_model_forward.24} parent=0 // pred_region
    _
  $region25: #{speech_model_forward.24} parent=0 // pred_fallthru
    _
  // Predicated region
  $region26: #{speech_model_forward.24} parent=0 // pred_check
    _
  $region27: #{speech_model_forward.24} parent=0 // pred_check_branch
    %156 = sbr.rel (0) target = $region29
  $region28: #{speech_model_forward.24} parent=0 // pred_region
    _
  $region29: #{speech_model_forward.24} parent=0 // pred_fallthru
    _

// kernel: speech_model_forward.25
$region0: #{speech_model_forward.25}
  #allocation0 [shape = 'u32[]', space=smem, size = 0x4, offset = 0x4, fixed_abs, tag = 'smem constant byte address 0x4 - core index']
  #allocation1 [shape = 'u32[144,128]{1,0:T(1,128)}', space=vmem, size = 0x12000, scoped, tag = 'internal scratch']
  %s0 = inlined_call_operand.vmem [shape: f32[16,32], index: 0, kind: input, shape index: {}]
  %s1 = inlined_call_operand.vmem [shape: f32[1,32], index: 1, kind: input, shape index: {}]
  %s2 = inlined_call_operand.vmem [shape: f32[1,32], index: 2, kind: input, shape index: {}]
  %s3 = inlined_call_operand.vmem [shape: f32[32,768], index: 3, kind: input, shape index: {}]
  %s4 = inlined_call_operand.vmem [shape: f32[1,768], index: 4, kind: input, shape index: {}]
  %s5 = inlined_call_operand.vmem [shape: f32[16,768], index: 5, kind: output, shape index: {}]
  %s6 = sld [smem:[#allocation0]]
  $region95: #{speech_model_forward.25} parent=0
    _
  %s8 = ssub.s32 1, %s6
  %s9 = scalar_select 0, %s8, %s6
  $region1: #{speech_model_forward.25} parent=0
    #allocation2 [shape = 'u8[65536]{0}', space=vmem, size = 0x10000, scoped, tag = 'input window, operand 3']
    #allocation3 [shape = 'u8[32768]{0}', space=vmem, size = 0x8000, scoped, tag = 'output window, operand 0']
    loop: start=0, step=1, limit=5
    $region2: #{speech_model_forward.25} parent=1 // loop_pre_header
      _
    $region3: #{speech_model_forward.25} parent=1 // loop_header
      %s11 = sphi 0, %s15
      %p12 = scmp.ge.s32.totalorder %s11, 5
      %s18 = sphi 0, %s30
      %s19 = sphi 0, %s26
      %s20 = sphi 0, %s18
      %s21 = sphi 0, %s19
      %s22 = sphi 0, %s20
      %s23 = sphi 0, %s21
      %s33 = sphi 0, %s35
      %s36 = sphi 0, %s33
      %s37 = sphi 0, %s36
      %s53 = sphi 0, %s37
      %s57 = sphi 0, %s57
      %s59 = sphi 0, %s57
      %s60 = sphi 0, %s59
      %s74 = sphi 0, %s60
      %s78 = sphi 0, %s78
      %s80 = sphi 0, %s78
      %s81 = sphi 0, %s80
      %s95 = sphi 0, %s81
      %s101 = sphi 0, %s103
      %s104 = sphi 0, %s101
      %s105 = sphi 0, %s104
      %s121 = sphi 0, %s105
      %s127 = sphi 0, %s129
      %s130 = sphi 0, %s127
      %s131 = sphi 0, %s130
      %s147 = sphi 0, %s131
      %s155 = sphi 0, %s157
      %s158 = sphi 0, %s155
      %s159 = sphi 0, %s158
      %s175 = sphi 0, %s159
    $region4: #{speech_model_forward.25} parent=1 // loop_header_branch
      %14 = sbr.rel (%p12) target = $region8
    $region5: #{speech_model_forward.25} parent=1 // loop_body
      %s16 = ssub.s32 %s11, 1
      %s17 = ssub.s32 %s11, 2
      %s24 = sadd.s32 1, %s19
      %p25 = scmp.ge.s32.totalorder %s24, 3
      %s26 = scalar_select %p25, 0, %s24
      %s27 = sadd.s32 1, %s18
      %s28 = scalar_select %p25, %s27, %s18
      %p29 = scmp.ge.s32.totalorder %s28, 1
      %s30 = scalar_select %p29, 0, %s28
      %s31 = ssub.s32 %s18, %s30
      %p32 = scmp.eq.s32.totalorder %s31, 0
      %s34 = sadd.s32 %s33, 1
      %s35 = scalar_select %p32, %s33, %s34
      %p38 = pneg %p32
      %p39 = scmp.eq.s32.totalorder %s11, 2
      %p40 = por %p38, %p39
      %p41 = scmp.ne.s32.totalorder %s33, %s36
      %p42 = scmp.eq.s32.totalorder %s11, 0
      %p43 = por %p41, %p42
      %p44 = scmp.ne.s32.totalorder %s33, %s36
      %p45 = scmp.eq.s32.totalorder %s16, 2
      %p46 = por %p44, %p45
      %p47 = scmp.ne.s32.totalorder %s36, %s37
      %p48 = scmp.eq.s32.totalorder %s16, 0
      %p49 = por %p47, %p48
      %p50 = scmp.ne.s32.totalorder %s36, %s37
      %p51 = scmp.eq.s32.totalorder %s17, 2
      %p52 = por %p50, %p51
      %p54 = scmp.ne.s32.totalorder %s37, %s53
      %p55 = scmp.eq.s32.totalorder %s17, 0
      %p56 = por %p54, %p55
      %s58 = sadd.s32 %s57, 1
      %p61 = scmp.eq.s32.totalorder %s11, 2
      %p62 = scmp.ne.s32.totalorder %s57, %s59
      %p63 = scmp.eq.s32.totalorder %s11, 0
      %p64 = por %p62, %p63
      %p65 = scmp.ne.s32.totalorder %s57, %s59
      %p66 = scmp.eq.s32.totalorder %s16, 2
      %p67 = por %p65, %p66
      %p68 = scmp.ne.s32.totalorder %s59, %s60
      %p69 = scmp.eq.s32.totalorder %s16, 0
      %p70 = por %p68, %p69
      %p71 = scmp.ne.s32.totalorder %s59, %s60
      %p72 = scmp.eq.s32.totalorder %s17, 2
      %p73 = por %p71, %p72
      %p75 = scmp.ne.s32.totalorder %s60, %s74
      %p76 = scmp.eq.s32.totalorder %s17, 0
      %p77 = por %p75, %p76
      %s79 = sadd.s32 %s78, 1
      %p82 = scmp.eq.s32.totalorder %s11, 2
      %p83 = scmp.ne.s32.totalorder %s78, %s80
      %p84 = scmp.eq.s32.totalorder %s11, 0
      %p85 = por %p83, %p84
      %p86 = scmp.ne.s32.totalorder %s78, %s80
      %p87 = scmp.eq.s32.totalorder %s16, 2
      %p88 = por %p86, %p87
      %p89 = scmp.ne.s32.totalorder %s80, %s81
      %p90 = scmp.eq.s32.totalorder %s16, 0
      %p91 = por %p89, %p90
      %p92 = scmp.ne.s32.totalorder %s80, %s81
      %p93 = scmp.eq.s32.totalorder %s17, 2
      %p94 = por %p92, %p93
      %p96 = scmp.ne.s32.totalorder %s81, %s95
      %p97 = scmp.eq.s32.totalorder %s17, 0
      %p98 = por %p96, %p97
      %s99 = ssub.s32 %s19, %s26
      %p100 = scmp.eq.s32.totalorder %s99, 0
      %s102 = sadd.s32 %s101, 1
      %s103 = scalar_select %p100, %s101, %s102
      %p106 = pneg %p100
      %p107 = scmp.eq.s32.totalorder %s11, 2
      %p108 = por %p106, %p107
      %p109 = scmp.ne.s32.totalorder %s101, %s104
      %p110 = scmp.eq.s32.totalorder %s11, 0
      %p111 = por %p109, %p110
      %p112 = scmp.ne.s32.totalorder %s101, %s104
      %p113 = scmp.eq.s32.totalorder %s16, 2
      %p114 = por %p112, %p113
      %p115 = scmp.ne.s32.totalorder %s104, %s105
      %p116 = scmp.eq.s32.totalorder %s16, 0
      %p117 = por %p115, %p116
      %p118 = scmp.ne.s32.totalorder %s104, %s105
      %p119 = scmp.eq.s32.totalorder %s17, 2
      %p120 = por %p118, %p119
      %p122 = scmp.ne.s32.totalorder %s105, %s121
      %p123 = scmp.eq.s32.totalorder %s17, 0
      %p124 = por %p122, %p123
      %s125 = ssub.s32 %s19, %s26
      %p126 = scmp.eq.s32.totalorder %s125, 0
      %s128 = sadd.s32 %s127, 1
      %s129 = scalar_select %p126, %s127, %s128
      %p132 = pneg %p126
      %p133 = scmp.eq.s32.totalorder %s11, 2
      %p134 = por %p132, %p133
      %p135 = scmp.ne.s32.totalorder %s127, %s130
      %p136 = scmp.eq.s32.totalorder %s11, 0
      %p137 = por %p135, %p136
      %p138 = scmp.ne.s32.totalorder %s127, %s130
      %p139 = scmp.eq.s32.totalorder %s16, 2
      %p140 = por %p138, %p139
      %p141 = scmp.ne.s32.totalorder %s130, %s131
      %p142 = scmp.eq.s32.totalorder %s16, 0
      %p143 = por %p141, %p142
      %p144 = scmp.ne.s32.totalorder %s130, %s131
      %p145 = scmp.eq.s32.totalorder %s17, 2
      %p146 = por %p144, %p145
      %p148 = scmp.ne.s32.totalorder %s131, %s147
      %p149 = scmp.eq.s32.totalorder %s17, 0
      %p150 = por %p148, %p149
      %s151 = ssub.s32 %s18, %s30
      %s152 = ssub.s32 %s19, %s26
      %s153 = sor.u32 %s151, %s152
      %p154 = scmp.eq.s32.totalorder %s153, 0
      %s156 = sadd.s32 %s155, 1
      %s157 = scalar_select %p154, %s155, %s156
      %p160 = pneg %p154
      %p161 = scmp.eq.s32.totalorder %s11, 2
      %p162 = por %p160, %p161
      %p163 = scmp.ne.s32.totalorder %s155, %s158
      %p164 = scmp.eq.s32.totalorder %s11, 0
      %p165 = por %p163, %p164
      %p166 = scmp.ne.s32.totalorder %s155, %s158
      %p167 = scmp.eq.s32.totalorder %s16, 2
      %p168 = por %p166, %p167
      %p169 = scmp.ne.s32.totalorder %s158, %s159
      %p170 = scmp.eq.s32.totalorder %s16, 0
      %p171 = por %p169, %p170
      %p172 = scmp.ne.s32.totalorder %s158, %s159
      %p173 = scmp.eq.s32.totalorder %s17, 2
      %p174 = por %p172, %p173
      %p176 = scmp.ne.s32.totalorder %s159, %s175
      %p177 = scmp.eq.s32.totalorder %s17, 0
      %p178 = por %p176, %p177
      %p179 = scmp.le.s32.totalorder 1, %s11
      %p180 = scmp.lt.s32.totalorder %s11, 4
      %p181 = pnand %p179, %p180
      %p182 = pneg %p181
      // Predicated region
      $region9: #{speech_model_forward.25} parent=5 // pred_check
        _
      $region10: #{speech_model_forward.25} parent=5 // pred_check_branch
        %184 = sbr.rel (%p181) target = $region12
      $region11: #{speech_model_forward.25} parent=5 // pred_region
        %s185 = ssub.s32 %s11, 1
        // Predicated region
        $region13: #{speech_model_forward.25} parent=11 // pred_check
          %p186 = pneg %p49
        $region14: #{speech_model_forward.25} parent=11 // pred_check_branch
          %188 = sbr.rel (%p186) target = $region16
        $region15: #{speech_model_forward.25} parent=11 // pred_region
          %s189 = smul.u32 2, %s20
          %p190 = scmp.lt.s32.totalorder %s189, 1
          %s191 = scalar_select %p190, %s189, 1
          %s192 = smul.addr %s191, 8
          %s193 = scalar_lea.vmem %s0, %s192
          %s194 = smul.u32 2, %s20
        $region16: #{speech_model_forward.25} parent=11 // pred_fallthru
          _
        // Predicated region
        $region17: #{speech_model_forward.25} parent=11 // pred_check
          %p195 = pneg %p70
        $region18: #{speech_model_forward.25} parent=11 // pred_check_branch
          %197 = sbr.rel (%p195) target = $region20
        $region19: #{speech_model_forward.25} parent=11 // pred_region
          _
        $region20: #{speech_model_forward.25} parent=11 // pred_fallthru
          _
        // Predicated region
        $region21: #{speech_model_forward.25} parent=11 // pred_check
          %p198 = pneg %p91
        $region22: #{speech_model_forward.25} parent=11 // pred_check_branch
          %200 = sbr.rel (%p198) target = $region24
        $region23: #{speech_model_forward.25} parent=11 // pred_region
          _
        $region24: #{speech_model_forward.25} parent=11 // pred_fallthru
          _
      $region12: #{speech_model_forward.25} parent=5 // pred_fallthru
        _
      %p201 = scmp.lt.s32.totalorder %s11, 3
      // Predicated region
      $region25: #{speech_model_forward.25} parent=5 // pred_check
        %p202 = pneg %p201
      $region26: #{speech_model_forward.25} parent=5 // pred_check_branch
        %204 = sbr.rel (%p202) target = $region28
      $region27: #{speech_model_forward.25} parent=5 // pred_region
        // Predicated region
        $region29: #{speech_model_forward.25} parent=27 // pred_check
          %p205 = pneg %p111
        $region30: #{speech_model_forward.25} parent=27 // pred_check_branch
          %207 = sbr.rel (%p205) target = $region32
        $region31: #{speech_model_forward.25} parent=27 // pred_region
          %s208 = sand.u32 %s101, 1
          %s209 = sand.u32 %s101, 1
          %s210 = smul.addr %s209, 64
          %s211 = scalar_lea.vmem [#allocation2], %s210
          %s212 = smul.u32 2, %s19
          %s213 = smul.addr %s212, 8
          %s214 = scalar_lea.vmem %s3, %s213
          // Predicated region
          $region33: #{speech_model_forward.25} parent=31 // pred_check
            _
          $region34: #{speech_model_forward.25} parent=31 // pred_check_branch
            %216 = sbr.rel (0) target = $region36
          $region35: #{speech_model_forward.25} parent=31 // pred_region
            // Predicated region
            $region37: #{speech_model_forward.25} parent=35 // pred_check
              _
            $region38: #{speech_model_forward.25} parent=35 // pred_check_branch
              %218 = sbr.rel (0) target = $region40
            $region39: #{speech_model_forward.25} parent=35 // pred_region
              loop: start=0, step=1, limit=1
              $region41: #{speech_model_forward.25} parent=39 // loop_pre_header
                _
              $region42: #{speech_model_forward.25} parent=39 // loop_header
                %s220 = sphi 0, %s224
                %p221 = scmp.ge.s32.totalorder %s220, 1
                %s225 = sphi %s214, %s214
                %s226 = sphi %s211, %s211
              $region43: #{speech_model_forward.25} parent=39 // loop_header_branch
                %223 = sbr.rel (%p221) target = $region47
              $region44: #{speech_model_forward.25} parent=39 // loop_body
                %v227 = vld [vmem:[%s225] sm:$0xff]
                %228 = vst [vmem:[%s226] sm:$0xff] %v227
                %v229 = vld [vmem:[%s225 + $0x8] sm:$0xff]
                %230 = vst [vmem:[%s226 + $0x8] sm:$0xff] %v229
                %v231 = vld [vmem:[%s225 + $0x30] sm:$0xff]
                %232 = vst [vmem:[%s226 + $0x10] sm:$0xff] %v231
                %v233 = vld [vmem:[%s225 + $0x38] sm:$0xff]
                %234 = vst [vmem:[%s226 + $0x18] sm:$0xff] %v233
                %v235 = vld [vmem:[%s225 + $0x60] sm:$0xff]
                %236 = vst [vmem:[%s226 + $0x20] sm:$0xff] %v235
                %v237 = vld [vmem:[%s225 + $0x68] sm:$0xff]
                %238 = vst [vmem:[%s226 + $0x28] sm:$0xff] %v237
                %v239 = vld [vmem:[%s225 + $0x90] sm:$0xff]
                %240 = vst [vmem:[%s226 + $0x30] sm:$0xff] %v239
                %v241 = vld [vmem:[%s225 + $0x98] sm:$0xff]
                %242 = vst [vmem:[%s226 + $0x38] sm:$0xff] %v241
              $region45: #{speech_model_forward.25} parent=39 // loop_footer
                %s224 = sadd.s32 1, %s220
              $region46: #{speech_model_forward.25} parent=39 // loop_footer_branch
                %219 = sbr.rel target = $region42
              $region47: #{speech_model_forward.25} parent=39 // loop_exit
                _
            $region40: #{speech_model_forward.25} parent=35 // pred_fallthru
              _
            // Predicated region
            $region48: #{speech_model_forward.25} parent=35 // pred_check
              _
            $region49: #{speech_model_forward.25} parent=35 // pred_check_branch
              %244 = sbr.rel target = $region51
            $region50: #{speech_model_forward.25} parent=35 // pred_region
              _
            $region51: #{speech_model_forward.25} parent=35 // pred_fallthru
              _
          $region36: #{speech_model_forward.25} parent=31 // pred_fallthru
            _
          %245 = vnop
        $region32: #{speech_model_forward.25} parent=27 // pred_fallthru
          _
        // Predicated region
        $region52: #{speech_model_forward.25} parent=27 // pred_check
          %p246 = pneg %p137
        $region53: #{speech_model_forward.25} parent=27 // pred_check_branch
          %248 = sbr.rel (%p246) target = $region55
        $region54: #{speech_model_forward.25} parent=27 // pred_region
          %s249 = smul.u32 2, %s19
          %p250 = scmp.lt.s32.totalorder %s249, 5
          %s251 = scalar_select %p250, %s249, 5
          %s252 = scalar_lea.vmem %s4, %s251
          %s253 = smul.u32 2, %s19
        $region55: #{speech_model_forward.25} parent=27 // pred_fallthru
          _
      $region28: #{speech_model_forward.25} parent=5 // pred_fallthru
        _
      %p254 = scmp.le.s32.totalorder 1, %s11
      %p255 = scmp.lt.s32.totalorder %s11, 4
      %p256 = pnand %p254, %p255
      %p257 = pneg %p256
      // Predicated region
      $region56: #{speech_model_forward.25} parent=5 // pred_check
        _
      $region57: #{speech_model_forward.25} parent=5 // pred_check_branch
        %259 = sbr.rel (%p256) target = $region59
      $region58: #{speech_model_forward.25} parent=5 // pred_region
        %s260 = ssub.s32 %s11, 1
        %s261 = sand.u32 %s104, 1
        %s262 = sand.u32 %s104, 1
        %s263 = smul.addr %s262, 64
        %s264 = scalar_lea.vmem [#allocation2], %s263
        // Predicated region
        $region60: #{speech_model_forward.25} parent=58 // pred_check
          %p265 = pneg %p117
        $region61: #{speech_model_forward.25} parent=58 // pred_check_branch
          %267 = sbr.rel (%p265) target = $region63
        $region62: #{speech_model_forward.25} parent=58 // pred_region
          _
        $region63: #{speech_model_forward.25} parent=58 // pred_fallthru
          _
        %s268 = smul.u32 2, %s20
        %p269 = scmp.lt.s32.totalorder %s268, 1
        %s270 = scalar_select %p269, %s268, 1
        %s271 = smul.addr %s270, 8
        %s272 = scalar_lea.vmem %s0, %s271
        %p273 = pneg %p49
        %p274 = pneg %p46
        %p275 = pneg %p70
        %p276 = pneg %p67
        %p277 = pneg %p91
        %p278 = pneg %p88
        %s279 = sand.u32 %s104, 1
        %s280 = sand.u32 %s104, 1
        %s281 = smul.addr %s280, 64
        %s282 = scalar_lea.vmem [#allocation2], %s281
        %p283 = pneg %p117
        %p284 = pneg %p114
        %s285 = smul.u32 2, %s21
        %p286 = scmp.lt.s32.totalorder %s285, 5
        %s287 = scalar_select %p286, %s285, 5
        %s288 = scalar_lea.vmem %s4, %s287
        %p289 = pneg %p143
        %p290 = pneg %p140
        %p291 = pneg %p171
        %p292 = pneg %p168
        %s293 = sand.u32 %s158, 1
        %s294 = sand.u32 %s158, 1
        %s295 = smul.addr %s294, 32
        %s296 = scalar_lea.vmem [#allocation3], %s295
        %s297 = smul.u32 2, %s20
        %p298 = scmp.lt.s32.totalorder %s297, 1
        %s299 = scalar_select %p298, %s297, 1
        %s300 = smul.addr %s299, 8
        %s301 = scalar_lea.vmem %s0, %s300
        %s302 = smul.u32 2, %s20
        %s303 = smul.u32 2, %s21
        %s304 = smul.u32 2, %s21
        %p305 = scmp.lt.s32.totalorder %s304, 5
        %s306 = scalar_select %p305, %s304, 5
        %s307 = scalar_lea.vmem %s4, %s306
        %s308 = smul.u32 2, %s21
        %s309 = smul.u32 2, %s20
        %s310 = smul.u32 2, %s21
        %v311 = vld [vmem:[%s301] sm:$0xff]
        %v312 = vld [vmem:[%s301 + $0x8] sm:$0xff]
        %vm313 = vcmask 261120
        %v314 = vsel %vm313, %v311, 0.0
        %315 = vadd.xlane.f32.xlu0 %v314
        %v316 = vpop.xlane.xlu0 %315
        %v317 = vsel %vm313, %v312, 0.0
        %318 = vadd.xlane.f32.xlu0 %v317
        %v319 = vpop.xlane.xlu0 %318
        %v320 = vrcp.pop 32.0
        %v321 = vmul.f32 %v316, %v320
        %v322 = vmul.f32 %v319, %v320
        %v323 = vsub.f32 %v311, %v321
        %v324 = vsub.f32 %v312, %v322
        %v325 = vmul.f32 %v323, %v323
        %v326 = vmul.f32 %v324, %v324
        %v327 = vsel %vm313, %v325, 0.0
        %328 = vadd.xlane.f32.xlu0 %v327
        %v329 = vpop.xlane.xlu0 %328
        %v330 = vsel %vm313, %v326, 0.0
        %331 = vadd.xlane.f32.xlu0 %v330
        %v332 = vpop.xlane.xlu0 %331
        %v333 = vmul.f32 %v329, %v320
        %v334 = vmul.f32 %v332, %v320
        %v335 = vadd.f32 %v333, 1e-05
        %v336 = vadd.f32 %v334, 1e-05
        %v337 = vrsqrt.pop %v335
        %v338 = vrsqrt.pop %v336
        %v339 = vmul.f32 %v323, %v337
        %v340 = vmul.f32 %v324, %v338
        %v341 = vld [vmem:[%s1] sm:$0x1]
        %v343 = vlaneseq
        %v344 = vshrl.u32 %v343, 7
        %v345 = vsub.s32 0, %v344
        %v346 = vrot.slane %v341, %v345
        %v348 = vmul.f32 %v339, %v346
        %v349 = vmul.f32 %v340, %v346
        %v350 = vld [vmem:[%s2] sm:$0x1]
        %v352 = vlaneseq
        %v353 = vshrl.u32 %v352, 7
        %v354 = vsub.s32 0, %v353
        %v355 = vrot.slane %v350, %v354
        %v357 = vadd.f32 %v348, %v355
        %v358 = vadd.f32 %v349, %v355
        %v359 = vmul.f32 %v357, 0.5
        %v360 = vmul.f32 %v358, 0.5
        %v361 = vmul.f32 %v357, 0.044715
        %v362 = vmul.f32 %v358, 0.044715
        %v363 = vmul.f32 %v361, %v357
        %v364 = vmul.f32 %v362, %v358
        %v365 = vmul.f32 %v363, %v357
        %v366 = vmul.f32 %v364, %v358
        %v367 = vadd.f32 %v357, %v365
        %v368 = vadd.f32 %v358, %v366
        %v369 = vmul.f32 %v367, 0.7978846
        %v370 = vmul.f32 %v368, 0.7978846
        %v371 = vtanh.pop %v369
        %v372 = vtanh.pop %v370
        %v373 = vadd.f32 %v371, 1.0
        %v374 = vadd.f32 %v372, 1.0
        %v375 = vmul.f32 %v359, %v373
        %v376 = vmul.f32 %v360, %v374
        %v377 = vld [vmem:[%s264] sm:$0xff]
        %v378 = vld [vmem:[%s264 + $0x8] sm:$0xff]
        %v379 = vld [vmem:[%s264 + $0x10] sm:$0xff]
        %v380 = vld [vmem:[%s264 + $0x18] sm:$0xff]
        %v381 = vld [vmem:[%s264 + $0x20] sm:$0xff]
        %v382 = vld [vmem:[%s264 + $0x28] sm:$0xff]
        %v383 = vld [vmem:[%s264 + $0x30] sm:$0xff]
        %v384 = vld [vmem:[%s264 + $0x38] sm:$0xff]
        %v385 = vld [vmem:[%s307] sm:$0x3]
        %v387 = vlaneseq
        %v388 = vshrl.u32 %v387, 7
        %v389 = vsub.s32 0, %v388
        %v390 = vrot.slane %v385, %v389
        %v391 = vlaneseq
        %v392 = vshrl.u32 %v391, 7
        %v393 = vsub.s32 1, %v392
        %v394 = vrot.slane %v385, %v393
        %v398 = vsel %vm313, %v375, 0
        %v401 = vsel %vm313, %v376, 0
        %403 = vmatprep.subr.mxu0 0.0
        %404 = vmatpush1.msra.mxu0 0.0
        %405 = vmatprep.subr.mxu0 0.0
        %406 = vmatpush1.msra.mxu0 0.0
        %407 = vmatprep.subr.mxu0 0.0
        %408 = vmatpush1.msra.mxu0 0.0
        %409 = vmatprep.subr.mxu0 0.0
        %410 = vmatpush1.msra.mxu0 0.0
        %411 = vmatprep.subr.mxu0 0.0
        %412 = vmatpush1.msra.mxu0 0.0
        %413 = vmatprep.subr.mxu0 0.0
        %414 = vmatpush1.msra.mxu0 0.0
        %415 = vmatprep.subr.mxu0 0.0
        %416 = vmatpush1.msra.mxu0 0.0
        %417 = vmatprep.subr.mxu0 0.0
        %418 = vmatpush1.msra.mxu0 0.0
        %419 = vmatprep.subr.mxu0 0.0
        %420 = vmatpush1.msra.mxu0 0.0
        %421 = vmatprep.subr.mxu0 0.0
        %422 = vmatpush1.msra.mxu0 0.0
        %423 = vmatprep.subr.mxu0 0.0
        %424 = vmatpush1.msra.mxu0 0.0
        %425 = vmatprep.subr.mxu0 0.0
        %426 = vmatpush1.msra.mxu0 0.0
        %427 = vmatprep.subr.mxu0 %v384
        %428 = vmatpush1.msra.mxu0 %v383
        %429 = vmatprep.subr.mxu0 %v382
        %430 = vmatpush1.msra.mxu0 %v381
        %431 = vmatprep.subr.mxu0 %v380
        %432 = vmatpush1.msra.mxu0 %v379
        %433 = vmatprep.subr.mxu0 %v378
        %434 = vmatpush1.msra.mxu0 %v377
        %435 = vmatprep.subr.mxu0 0.0
        %436 = vmatpush2.msra.mxu0 0.0
        %437 = vmatprep.subr.mxu0 0.0
        %438 = vmatpush2.msra.mxu0 0.0
        %439 = vmatprep.subr.mxu0 0.0
        %440 = vmatpush2.msra.mxu0 0.0
        %441 = vmatprep.subr.mxu0 0.0
        %442 = vmatpush2.msra.mxu0 0.0
        %443 = vmatprep.subr.mxu0 0.0
        %444 = vmatpush2.msra.mxu0 0.0
        %445 = vmatprep.subr.mxu0 0.0
        %446 = vmatpush2.msra.mxu0 0.0
        %447 = vmatprep.subr.mxu0 0.0
        %448 = vmatpush2.msra.mxu0 0.0
        %449 = vmatprep.subr.mxu0 0.0
        %450 = vmatpush2.msra.mxu0 0.0
        %451 = vmatprep.subr.mxu0 0.0
        %452 = vmatpush2.msra.mxu0 0.0
        %453 = vmatprep.subr.mxu0 0.0
        %454 = vmatpush2.msra.mxu0 0.0
        %455 = vmatprep.subr.mxu0 0.0
        %456 = vmatpush2.msra.mxu0 0.0
        %457 = vmatprep.subr.mxu0 0.0
        %458 = vmatpush2.msra.mxu0 0.0
        %459 = vmatprep.subr.mxu0 0.0
        %460 = vmatpush2.msra.mxu0 0.0
        %461 = vmatprep.subr.mxu0 0.0
        %462 = vmatpush2.msra.mxu0 0.0
        %463 = vmatprep.subr.mxu0 0.0
        %464 = vmatpush2.msra.mxu0 0.0
        %465 = vmatprep.subr.mxu0 0.0
        %466 = vmatpush2.msra.mxu0 0.0
        %467 = vmatprep.mubr.f32.mxu0 0.0
        %468 = vmatmul.mubr.f32.gmra.mxu0 %v398
        %v469 = vpop.f32.mrf.mxu0
        %v470 = vadd.f32 %v390, %v469
        %v471 = vpop.f32.mrf.mxu0
        %v472 = vadd.f32 %v394, %v471
        %473 = vmatprep.mubr.f32.mxu0 0.0
        %474 = vmatmul.mubr.f32.gmra.mxu0 %v401
        %v475 = vpop.f32.mrf.mxu0
        %v476 = vadd.f32 %v390, %v475
        %v477 = vpop.f32.mrf.mxu0
        %v478 = vadd.f32 %v394, %v477
        %479 = vdwg.mxu0
        %480 = vst [vmem:[%s296] sm:$0xff] %v470
        %481 = vst [vmem:[%s296 + $0x8] sm:$0xff] %v472
        %482 = vst [vmem:[%s296 + $0x10] sm:$0xff] %v476
        %483 = vst [vmem:[%s296 + $0x18] sm:$0xff] %v478
        %s484 = sand.u32 %s158, 1
        %s485 = sand.u32 %s158, 1
        %s486 = smul.addr %s485, 32
        %s487 = scalar_lea.vmem [#allocation3], %s486
        // Predicated region
        $region64: #{speech_model_forward.25} parent=58 // pred_check
          %p488 = pneg %p168
        $region65: #{speech_model_forward.25} parent=58 // pred_check_branch
          %490 = sbr.rel (%p488) target = $region67
        $region66: #{speech_model_forward.25} parent=58 // pred_region
          %s491 = smul.u32 2, %s20
          %s492 = smul.u32 2, %s21
          %s493 = smul.addr %s491, 6
          %s494 = sadd.s32 %s492, %s493
          %s495 = smul.addr %s494, 8
          %s496 = scalar_lea.vmem %s5, %s495
          // Predicated region
          $region68: #{speech_model_forward.25} parent=66 // pred_check
            _
          $region69: #{speech_model_forward.25} parent=66 // pred_check_branch
            %498 = sbr.rel (0) target = $region71
          $region70: #{speech_model_forward.25} parent=66 // pred_region
            // Predicated region
            $region72: #{speech_model_forward.25} parent=70 // pred_check
              _
            $region73: #{speech_model_forward.25} parent=70 // pred_check_branch
              %500 = sbr.rel (0) target = $region75
            $region74: #{speech_model_forward.25} parent=70 // pred_region
              loop: start=0, step=1, limit=1
              $region76: #{speech_model_forward.25} parent=74 // loop_pre_header
                _
              $region77: #{speech_model_forward.25} parent=74 // loop_header
                %s502 = sphi 0, %s506
                %p503 = scmp.ge.s32.totalorder %s502, 1
                %s507 = sphi %s487, %s487
                %s508 = sphi %s496, %s496
              $region78: #{speech_model_forward.25} parent=74 // loop_header_branch
                %505 = sbr.rel (%p503) target = $region82
              $region79: #{speech_model_forward.25} parent=74 // loop_body
                %v509 = vld [vmem:[%s507] sm:$0xff]
                %510 = vst [vmem:[%s508] sm:$0xff] %v509
                %v511 = vld [vmem:[%s507 + $0x8] sm:$0xff]
                %512 = vst [vmem:[%s508 + $0x8] sm:$0xff] %v511
                %v513 = vld [vmem:[%s507 + $0x10] sm:$0xff]
                %514 = vst [vmem:[%s508 + $0x30] sm:$0xff] %v513
                %v515 = vld [vmem:[%s507 + $0x18] sm:$0xff]
                %516 = vst [vmem:[%s508 + $0x38] sm:$0xff] %v515
              $region80: #{speech_model_forward.25} parent=74 // loop_footer
                %s506 = sadd.s32 1, %s502
              $region81: #{speech_model_forward.25} parent=74 // loop_footer_branch
                %501 = sbr.rel target = $region77
              $region82: #{speech_model_forward.25} parent=74 // loop_exit
                _
            $region75: #{speech_model_forward.25} parent=70 // pred_fallthru
              _
            // Predicated region
            $region83: #{speech_model_forward.25} parent=70 // pred_check
              _
            $region84: #{speech_model_forward.25} parent=70 // pred_check_branch
              %518 = sbr.rel target = $region86
            $region85: #{speech_model_forward.25} parent=70 // pred_region
              _
            $region86: #{speech_model_forward.25} parent=70 // pred_fallthru
              _
          $region71: #{speech_model_forward.25} parent=66 // pred_fallthru
            _
          %519 = vnop
        $region67: #{speech_model_forward.25} parent=58 // pred_fallthru
          _
      $region59: #{speech_model_forward.25} parent=5 // pred_fallthru
        _
      %p520 = scmp.le.s32.totalorder 2, %s11
      // Predicated region
      $region87: #{speech_model_forward.25} parent=5 // pred_check
        %p521 = pneg %p520
      $region88: #{speech_model_forward.25} parent=5 // pred_check_branch
        %523 = sbr.rel (%p521) target = $region90
      $region89: #{speech_model_forward.25} parent=5 // pred_region
        %s524 = ssub.s32 %s11, 2
        // Predicated region
        $region91: #{speech_model_forward.25} parent=89 // pred_check
          %p525 = pneg %p174
        $region92: #{speech_model_forward.25} parent=89 // pred_check_branch
          %527 = sbr.rel (%p525) target = $region94
        $region93: #{speech_model_forward.25} parent=89 // pred_region
          %s528 = sand.u32 %s159, 1
          %s529 = sand.u32 %s159, 1
          %s530 = smul.addr %s529, 32
          %s531 = scalar_lea.vmem [#allocation3], %s530
        $region94: #{speech_model_forward.25} parent=89 // pred_fallthru
          _
      $region90: #{speech_model_forward.25} parent=5 // pred_fallthru
        _
    $region6: #{speech_model_forward.25} parent=1 // loop_footer
      %s15 = sadd.s32 1, %s11
    $region7: #{speech_model_forward.25} parent=1 // loop_footer_branch
      %10 = sbr.rel target = $region3
    $region8: #{speech_model_forward.25} parent=1 // loop_exit
      _

// kernel: speech_model_forward.27
$region0: #{speech_model_forward.27}
  #allocation0 [shape = 'u32[]', space=smem, size = 0x4, offset = 0x4, fixed_abs, tag = 'smem constant byte address 0x4 - core index']
  #allocation1 [shape = 'u32[144,128]{1,0:T(1,128)}', space=vmem, size = 0x12000, scoped, tag = 'internal scratch']
  %s0 = inlined_call_operand.vmem [shape: f32[16,64], index: 0, kind: input, shape index: {}]
  %s1 = inlined_call_operand.vmem [shape: f32[1,64], index: 1, kind: input, shape index: {}]
  %s2 = inlined_call_operand.vmem [shape: f32[1,64], index: 2, kind: input, shape index: {}]
  %s3 = inlined_call_operand.vmem [shape: f32[64,768], index: 3, kind: input, shape index: {}]
  %s4 = inlined_call_operand.vmem [shape: f32[1,768], index: 4, kind: input, shape index: {}]
  %s5 = inlined_call_operand.vmem [shape: f32[16,768], index: 5, kind: output, shape index: {}]
  %s6 = sld [smem:[#allocation0]]
  $region95: #{speech_model_forward.27} parent=0
    _
  %s8 = ssub.s32 1, %s6
  %s9 = scalar_select 0, %s8, %s6
  $region1: #{speech_model_forward.27} parent=0
    #allocation2 [shape = 'u8[131072]{0}', space=vmem, size = 0x20000, scoped, tag = 'input window, operand 3']
    #allocation3 [shape = 'u8[32768]{0}', space=vmem, size = 0x8000, scoped, tag = 'output window, operand 0']
    loop: start=0, step=1, limit=5
    $region2: #{speech_model_forward.27} parent=1 // loop_pre_header
      _
    $region3: #{speech_model_forward.27} parent=1 // loop_header
      %s11 = sphi 0, %s15
      %p12 = scmp.ge.s32.totalorder %s11, 5
      %s18 = sphi 0, %s30
      %s19 = sphi 0, %s26
      %s20 = sphi 0, %s18
      %s21 = sphi 0, %s19
      %s22 = sphi 0, %s20
      %s23 = sphi 0, %s21
      %s33 = sphi 0, %s35
      %s36 = sphi 0, %s33
      %s37 = sphi 0, %s36
      %s53 = sphi 0, %s37
      %s57 = sphi 0, %s57
      %s59 = sphi 0, %s57
      %s60 = sphi 0, %s59
      %s74 = sphi 0, %s60
      %s78 = sphi 0, %s78
      %s80 = sphi 0, %s78
      %s81 = sphi 0, %s80
      %s95 = sphi 0, %s81
      %s101 = sphi 0, %s103
      %s104 = sphi 0, %s101
      %s105 = sphi 0, %s104
      %s121 = sphi 0, %s105
      %s127 = sphi 0, %s129
      %s130 = sphi 0, %s127
      %s131 = sphi 0, %s130
      %s147 = sphi 0, %s131
      %s155 = sphi 0, %s157
      %s158 = sphi 0, %s155
      %s159 = sphi 0, %s158
      %s175 = sphi 0, %s159
    $region4: #{speech_model_forward.27} parent=1 // loop_header_branch
      %14 = sbr.rel (%p12) target = $region8
    $region5: #{speech_model_forward.27} parent=1 // loop_body
      %s16 = ssub.s32 %s11, 1
      %s17 = ssub.s32 %s11, 2
      %s24 = sadd.s32 1, %s19
      %p25 = scmp.ge.s32.totalorder %s24, 3
      %s26 = scalar_select %p25, 0, %s24
      %s27 = sadd.s32 1, %s18
      %s28 = scalar_select %p25, %s27, %s18
      %p29 = scmp.ge.s32.totalorder %s28, 1
      %s30 = scalar_select %p29, 0, %s28
      %s31 = ssub.s32 %s18, %s30
      %p32 = scmp.eq.s32.totalorder %s31, 0
      %s34 = sadd.s32 %s33, 1
      %s35 = scalar_select %p32, %s33, %s34
      %p38 = pneg %p32
      %p39 = scmp.eq.s32.totalorder %s11, 2
      %p40 = por %p38, %p39
      %p41 = scmp.ne.s32.totalorder %s33, %s36
      %p42 = scmp.eq.s32.totalorder %s11, 0
      %p43 = por %p41, %p42
      %p44 = scmp.ne.s32.totalorder %s33, %s36
      %p45 = scmp.eq.s32.totalorder %s16, 2
      %p46 = por %p44, %p45
      %p47 = scmp.ne.s32.totalorder %s36, %s37
      %p48 = scmp.eq.s32.totalorder %s16, 0
      %p49 = por %p47, %p48
      %p50 = scmp.ne.s32.totalorder %s36, %s37
      %p51 = scmp.eq.s32.totalorder %s17, 2
      %p52 = por %p50, %p51
      %p54 = scmp.ne.s32.totalorder %s37, %s53
      %p55 = scmp.eq.s32.totalorder %s17, 0
      %p56 = por %p54, %p55
      %s58 = sadd.s32 %s57, 1
      %p61 = scmp.eq.s32.totalorder %s11, 2
      %p62 = scmp.ne.s32.totalorder %s57, %s59
      %p63 = scmp.eq.s32.totalorder %s11, 0
      %p64 = por %p62, %p63
      %p65 = scmp.ne.s32.totalorder %s57, %s59
      %p66 = scmp.eq.s32.totalorder %s16, 2
      %p67 = por %p65, %p66
      %p68 = scmp.ne.s32.totalorder %s59, %s60
      %p69 = scmp.eq.s32.totalorder %s16, 0
      %p70 = por %p68, %p69
      %p71 = scmp.ne.s32.totalorder %s59, %s60
      %p72 = scmp.eq.s32.totalorder %s17, 2
      %p73 = por %p71, %p72
      %p75 = scmp.ne.s32.totalorder %s60, %s74
      %p76 = scmp.eq.s32.totalorder %s17, 0
      %p77 = por %p75, %p76
      %s79 = sadd.s32 %s78, 1
      %p82 = scmp.eq.s32.totalorder %s11, 2
      %p83 = scmp.ne.s32.totalorder %s78, %s80
      %p84 = scmp.eq.s32.totalorder %s11, 0
      %p85 = por %p83, %p84
      %p86 = scmp.ne.s32.totalorder %s78, %s80
      %p87 = scmp.eq.s32.totalorder %s16, 2
      %p88 = por %p86, %p87
      %p89 = scmp.ne.s32.totalorder %s80, %s81
      %p90 = scmp.eq.s32.totalorder %s16, 0
      %p91 = por %p89, %p90
      %p92 = scmp.ne.s32.totalorder %s80, %s81
      %p93 = scmp.eq.s32.totalorder %s17, 2
      %p94 = por %p92, %p93
      %p96 = scmp.ne.s32.totalorder %s81, %s95
      %p97 = scmp.eq.s32.totalorder %s17, 0
      %p98 = por %p96, %p97
      %s99 = ssub.s32 %s19, %s26
      %p100 = scmp.eq.s32.totalorder %s99, 0
      %s102 = sadd.s32 %s101, 1
      %s103 = scalar_select %p100, %s101, %s102
      %p106 = pneg %p100
      %p107 = scmp.eq.s32.totalorder %s11, 2
      %p108 = por %p106, %p107
      %p109 = scmp.ne.s32.totalorder %s101, %s104
      %p110 = scmp.eq.s32.totalorder %s11, 0
      %p111 = por %p109, %p110
      %p112 = scmp.ne.s32.totalorder %s101, %s104
      %p113 = scmp.eq.s32.totalorder %s16, 2
      %p114 = por %p112, %p113
      %p115 = scmp.ne.s32.totalorder %s104, %s105
      %p116 = scmp.eq.s32.totalorder %s16, 0
      %p117 = por %p115, %p116
      %p118 = scmp.ne.s32.totalorder %s104, %s105
      %p119 = scmp.eq.s32.totalorder %s17, 2
      %p120 = por %p118, %p119
      %p122 = scmp.ne.s32.totalorder %s105, %s121
      %p123 = scmp.eq.s32.totalorder %s17, 0
      %p124 = por %p122, %p123
      %s125 = ssub.s32 %s19, %s26
      %p126 = scmp.eq.s32.totalorder %s125, 0
      %s128 = sadd.s32 %s127, 1
      %s129 = scalar_select %p126, %s127, %s128
      %p132 = pneg %p126
      %p133 = scmp.eq.s32.totalorder %s11, 2
      %p134 = por %p132, %p133
      %p135 = scmp.ne.s32.totalorder %s127, %s130
      %p136 = scmp.eq.s32.totalorder %s11, 0
      %p137 = por %p135, %p136
      %p138 = scmp.ne.s32.totalorder %s127, %s130
      %p139 = scmp.eq.s32.totalorder %s16, 2
      %p140 = por %p138, %p139
      %p141 = scmp.ne.s32.totalorder %s130, %s131
      %p142 = scmp.eq.s32.totalorder %s16, 0
      %p143 = por %p141, %p142
      %p144 = scmp.ne.s32.totalorder %s130, %s131
      %p145 = scmp.eq.s32.totalorder %s17, 2
      %p146 = por %p144, %p145
      %p148 = scmp.ne.s32.totalorder %s131, %s147
      %p149 = scmp.eq.s32.totalorder %s17, 0
      %p150 = por %p148, %p149
      %s151 = ssub.s32 %s18, %s30
      %s152 = ssub.s32 %s19, %s26
      %s153 = sor.u32 %s151, %s152
      %p154 = scmp.eq.s32.totalorder %s153, 0
      %s156 = sadd.s32 %s155, 1
      %s157 = scalar_select %p154, %s155, %s156
      %p160 = pneg %p154
      %p161 = scmp.eq.s32.totalorder %s11, 2
      %p162 = por %p160, %p161
      %p163 = scmp.ne.s32.totalorder %s155, %s158
      %p164 = scmp.eq.s32.totalorder %s11, 0
      %p165 = por %p163, %p164
      %p166 = scmp.ne.s32.totalorder %s155, %s158
      %p167 = scmp.eq.s32.totalorder %s16, 2
      %p168 = por %p166, %p167
      %p169 = scmp.ne.s32.totalorder %s158, %s159
      %p170 = scmp.eq.s32.totalorder %s16, 0
      %p171 = por %p169, %p170
      %p172 = scmp.ne.s32.totalorder %s158, %s159
      %p173 = scmp.eq.s32.totalorder %s17, 2
      %p174 = por %p172, %p173
      %p176 = scmp.ne.s32.totalorder %s159, %s175
      %p177 = scmp.eq.s32.totalorder %s17, 0
      %p178 = por %p176, %p177
      %p179 = scmp.le.s32.totalorder 1, %s11
      %p180 = scmp.lt.s32.totalorder %s11, 4
      %p181 = pnand %p179, %p180
      %p182 = pneg %p181
      // Predicated region
      $region9: #{speech_model_forward.27} parent=5 // pred_check
        _
      $region10: #{speech_model_forward.27} parent=5 // pred_check_branch
        %184 = sbr.rel (%p181) target = $region12
      $region11: #{speech_model_forward.27} parent=5 // pred_region
        %s185 = ssub.s32 %s11, 1
        // Predicated region
        $region13: #{speech_model_forward.27} parent=11 // pred_check
          %p186 = pneg %p49
        $region14: #{speech_model_forward.27} parent=11 // pred_check_branch
          %188 = sbr.rel (%p186) target = $region16
        $region15: #{speech_model_forward.27} parent=11 // pred_region
          %s189 = smul.u32 2, %s20
          %p190 = scmp.lt.s32.totalorder %s189, 1
          %s191 = scalar_select %p190, %s189, 1
          %s192 = smul.addr %s191, 8
          %s193 = scalar_lea.vmem %s0, %s192
          %s194 = smul.u32 2, %s20
        $region16: #{speech_model_forward.27} parent=11 // pred_fallthru
          _
        // Predicated region
        $region17: #{speech_model_forward.27} parent=11 // pred_check
          %p195 = pneg %p70
        $region18: #{speech_model_forward.27} parent=11 // pred_check_branch
          %197 = sbr.rel (%p195) target = $region20
        $region19: #{speech_model_forward.27} parent=11 // pred_region
          _
        $region20: #{speech_model_forward.27} parent=11 // pred_fallthru
          _
        // Predicated region
        $region21: #{speech_model_forward.27} parent=11 // pred_check
          %p198 = pneg %p91
        $region22: #{speech_model_forward.27} parent=11 // pred_check_branch
          %200 = sbr.rel (%p198) target = $region24
        $region23: #{speech_model_forward.27} parent=11 // pred_region
          _
        $region24: #{speech_model_forward.27} parent=11 // pred_fallthru
          _
      $region12: #{speech_model_forward.27} parent=5 // pred_fallthru
        _
      %p201 = scmp.lt.s32.totalorder %s11, 3
      // Predicated region
      $region25: #{speech_model_forward.27} parent=5 // pred_check
        %p202 = pneg %p201
      $region26: #{speech_model_forward.27} parent=5 // pred_check_branch
        %204 = sbr.rel (%p202) target = $region28
      $region27: #{speech_model_forward.27} parent=5 // pred_region
        // Predicated region
        $region29: #{speech_model_forward.27} parent=27 // pred_check
          %p205 = pneg %p111
        $region30: #{speech_model_forward.27} parent=27 // pred_check_branch
          %207 = sbr.rel (%p205) target = $region32
        $region31: #{speech_model_forward.27} parent=27 // pred_region
          %s208 = sand.u32 %s101, 1
          %s209 = sand.u32 %s101, 1
          %s210 = smul.addr %s209, 128
          %s211 = scalar_lea.vmem [#allocation2], %s210
          %s212 = smul.u32 2, %s19
          %s213 = smul.addr %s212, 8
          %s214 = scalar_lea.vmem %s3, %s213
          // Predicated region
          $region33: #{speech_model_forward.27} parent=31 // pred_check
            _
          $region34: #{speech_model_forward.27} parent=31 // pred_check_branch
            %216 = sbr.rel (0) target = $region36
          $region35: #{speech_model_forward.27} parent=31 // pred_region
            // Predicated region
            $region37: #{speech_model_forward.27} parent=35 // pred_check
              _
            $region38: #{speech_model_forward.27} parent=35 // pred_check_branch
              %218 = sbr.rel (0) target = $region40
            $region39: #{speech_model_forward.27} parent=35 // pred_region
              loop: start=0, step=1, limit=1
              $region41: #{speech_model_forward.27} parent=39 // loop_pre_header
                _
              $region42: #{speech_model_forward.27} parent=39 // loop_header
                %s220 = sphi 0, %s224
                %p221 = scmp.ge.s32.totalorder %s220, 1
                %s225 = sphi %s214, %s214
                %s226 = sphi %s211, %s211
              $region43: #{speech_model_forward.27} parent=39 // loop_header_branch
                %223 = sbr.rel (%p221) target = $region47
              $region44: #{speech_model_forward.27} parent=39 // loop_body
                %v227 = vld [vmem:[%s225] sm:$0xff]
                %228 = vst [vmem:[%s226] sm:$0xff] %v227
                %v229 = vld [vmem:[%s225 + $0x8] sm:$0xff]
                %230 = vst [vmem:[%s226 + $0x8] sm:$0xff] %v229
                %v231 = vld [vmem:[%s225 + $0x30] sm:$0xff]
                %232 = vst [vmem:[%s226 + $0x10] sm:$0xff] %v231
                %v233 = vld [vmem:[%s225 + $0x38] sm:$0xff]
                %234 = vst [vmem:[%s226 + $0x18] sm:$0xff] %v233
                %v235 = vld [vmem:[%s225 + $0x60] sm:$0xff]
                %236 = vst [vmem:[%s226 + $0x20] sm:$0xff] %v235
                %v237 = vld [vmem:[%s225 + $0x68] sm:$0xff]
                %238 = vst [vmem:[%s226 + $0x28] sm:$0xff] %v237
                %v239 = vld [vmem:[%s225 + $0x90] sm:$0xff]
                %240 = vst [vmem:[%s226 + $0x30] sm:$0xff] %v239
                %v241 = vld [vmem:[%s225 + $0x98] sm:$0xff]
                %242 = vst [vmem:[%s226 + $0x38] sm:$0xff] %v241
                %v243 = vld [vmem:[%s225 + $0xc0] sm:$0xff]
                %244 = vst [vmem:[%s226 + $0x40] sm:$0xff] %v243
                %v245 = vld [vmem:[%s225 + $0xc8] sm:$0xff]
                %246 = vst [vmem:[%s226 + $0x48] sm:$0xff] %v245
                %v247 = vld [vmem:[%s225 + $0xf0] sm:$0xff]
                %248 = vst [vmem:[%s226 + $0x50] sm:$0xff] %v247
                %v249 = vld [vmem:[%s225 + $0xf8] sm:$0xff]
                %250 = vst [vmem:[%s226 + $0x58] sm:$0xff] %v249
                %v251 = vld [vmem:[%s225 + $0x120] sm:$0xff]
                %252 = vst [vmem:[%s226 + $0x60] sm:$0xff] %v251
                %v253 = vld [vmem:[%s225 + $0x128] sm:$0xff]
                %254 = vst [vmem:[%s226 + $0x68] sm:$0xff] %v253
                %v255 = vld [vmem:[%s225 + $0x150] sm:$0xff]
                %256 = vst [vmem:[%s226 + $0x70] sm:$0xff] %v255
                %v257 = vld [vmem:[%s225 + $0x158] sm:$0xff]
                %258 = vst [vmem:[%s226 + $0x78] sm:$0xff] %v257
              $region45: #{speech_model_forward.27} parent=39 // loop_footer
                %s224 = sadd.s32 1, %s220
              $region46: #{speech_model_forward.27} parent=39 // loop_footer_branch
                %219 = sbr.rel target = $region42
              $region47: #{speech_model_forward.27} parent=39 // loop_exit
                _
            $region40: #{speech_model_forward.27} parent=35 // pred_fallthru
              _
            // Predicated region
            $region48: #{speech_model_forward.27} parent=35 // pred_check
              _
            $region49: #{speech_model_forward.27} parent=35 // pred_check_branch
              %260 = sbr.rel target = $region51
            $region50: #{speech_model_forward.27} parent=35 // pred_region
              _
            $region51: #{speech_model_forward.27} parent=35 // pred_fallthru
              _
          $region36: #{speech_model_forward.27} parent=31 // pred_fallthru
            _
          %261 = vnop
        $region32: #{speech_model_forward.27} parent=27 // pred_fallthru
          _
        // Predicated region
        $region52: #{speech_model_forward.27} parent=27 // pred_check
          %p262 = pneg %p137
        $region53: #{speech_model_forward.27} parent=27 // pred_check_branch
          %264 = sbr.rel (%p262) target = $region55
        $region54: #{speech_model_forward.27} parent=27 // pred_region
          %s265 = smul.u32 2, %s19
          %p266 = scmp.lt.s32.totalorder %s265, 5
          %s267 = scalar_select %p266, %s265, 5
          %s268 = scalar_lea.vmem %s4, %s267
          %s269 = smul.u32 2, %s19
        $region55: #{speech_model_forward.27} parent=27 // pred_fallthru
          _
      $region28: #{speech_model_forward.27} parent=5 // pred_fallthru
        _
      %p270 = scmp.le.s32.totalorder 1, %s11
      %p271 = scmp.lt.s32.totalorder %s11, 4
      %p272 = pnand %p270, %p271
      %p273 = pneg %p272
      // Predicated region
      $region56: #{speech_model_forward.27} parent=5 // pred_check
        _
      $region57: #{speech_model_forward.27} parent=5 // pred_check_branch
        %275 = sbr.rel (%p272) target = $region59
      $region58: #{speech_model_forward.27} parent=5 // pred_region
        %s276 = ssub.s32 %s11, 1
        %s277 = sand.u32 %s104, 1
        %s278 = sand.u32 %s104, 1
        %s279 = smul.addr %s278, 128
        %s280 = scalar_lea.vmem [#allocation2], %s279
        // Predicated region
        $region60: #{speech_model_forward.27} parent=58 // pred_check
          %p281 = pneg %p117
        $region61: #{speech_model_forward.27} parent=58 // pred_check_branch
          %283 = sbr.rel (%p281) target = $region63
        $region62: #{speech_model_forward.27} parent=58 // pred_region
          _
        $region63: #{speech_model_forward.27} parent=58 // pred_fallthru
          _
        %s284 = smul.u32 2, %s20
        %p285 = scmp.lt.s32.totalorder %s284, 1
        %s286 = scalar_select %p285, %s284, 1
        %s287 = smul.addr %s286, 8
        %s288 = scalar_lea.vmem %s0, %s287
        %p289 = pneg %p49
        %p290 = pneg %p46
        %p291 = pneg %p70
        %p292 = pneg %p67
        %p293 = pneg %p91
        %p294 = pneg %p88
        %s295 = sand.u32 %s104, 1
        %s296 = sand.u32 %s104, 1
        %s297 = smul.addr %s296, 128
        %s298 = scalar_lea.vmem [#allocation2], %s297
        %p299 = pneg %p117
        %p300 = pneg %p114
        %s301 = smul.u32 2, %s21
        %p302 = scmp.lt.s32.totalorder %s301, 5
        %s303 = scalar_select %p302, %s301, 5
        %s304 = scalar_lea.vmem %s4, %s303
        %p305 = pneg %p143
        %p306 = pneg %p140
        %p307 = pneg %p171
        %p308 = pneg %p168
        %s309 = sand.u32 %s158, 1
        %s310 = sand.u32 %s158, 1
        %s311 = smul.addr %s310, 32
        %s312 = scalar_lea.vmem [#allocation3], %s311
        %s313 = smul.u32 2, %s20
        %p314 = scmp.lt.s32.totalorder %s313, 1
        %s315 = scalar_select %p314, %s313, 1
        %s316 = smul.addr %s315, 8
        %s317 = scalar_lea.vmem %s0, %s316
        %s318 = smul.u32 2, %s20
        %s319 = smul.u32 2, %s21
        %s320 = smul.u32 2, %s21
        %p321 = scmp.lt.s32.totalorder %s320, 5
        %s322 = scalar_select %p321, %s320, 5
        %s323 = scalar_lea.vmem %s4, %s322
        %s324 = smul.u32 2, %s21
        %s325 = smul.u32 2, %s20
        %s326 = smul.u32 2, %s21
        %v327 = vld [vmem:[%s317] sm:$0xff]
        %v328 = vld [vmem:[%s317 + $0x8] sm:$0xff]
        %vm329 = vcmask 523264
        %v330 = vsel %vm329, %v327, 0.0
        %331 = vadd.xlane.f32.xlu0 %v330
        %v332 = vpop.xlane.xlu0 %331
        %v333 = vsel %vm329, %v328, 0.0
        %334 = vadd.xlane.f32.xlu0 %v333
        %v335 = vpop.xlane.xlu0 %334
        %v336 = vrcp.pop 64.0
        %v337 = vmul.f32 %v332, %v336
        %v338 = vmul.f32 %v335, %v336
        %v339 = vsub.f32 %v327, %v337
        %v340 = vsub.f32 %v328, %v338
        %v341 = vmul.f32 %v339, %v339
        %v342 = vmul.f32 %v340, %v340
        %v343 = vsel %vm329, %v341, 0.0
        %344 = vadd.xlane.f32.xlu0 %v343
        %v345 = vpop.xlane.xlu0 %344
        %v346 = vsel %vm329, %v342, 0.0
        %347 = vadd.xlane.f32.xlu0 %v346
        %v348 = vpop.xlane.xlu0 %347
        %v349 = vmul.f32 %v345, %v336
        %v350 = vmul.f32 %v348, %v336
        %v351 = vadd.f32 %v349, 1e-05
        %v352 = vadd.f32 %v350, 1e-05
        %v353 = vrsqrt.pop %v351
        %v354 = vrsqrt.pop %v352
        %v355 = vmul.f32 %v339, %v353
        %v356 = vmul.f32 %v340, %v354
        %v357 = vld [vmem:[%s1] sm:$0x1]
        %v359 = vlaneseq
        %v360 = vshrl.u32 %v359, 7
        %v361 = vsub.s32 0, %v360
        %v362 = vrot.slane %v357, %v361
        %v364 = vmul.f32 %v355, %v362
        %v365 = vmul.f32 %v356, %v362
        %v366 = vld [vmem:[%s2] sm:$0x1]
        %v368 = vlaneseq
        %v369 = vshrl.u32 %v368, 7
        %v370 = vsub.s32 0, %v369
        %v371 = vrot.slane %v366, %v370
        %v373 = vadd.f32 %v364, %v371
        %v374 = vadd.f32 %v365, %v371
        %v375 = vmul.f32 %v373, 0.5
        %v376 = vmul.f32 %v374, 0.5
        %v377 = vmul.f32 %v373, 0.044715
        %v378 = vmul.f32 %v374, 0.044715
        %v379 = vmul.f32 %v377, %v373
        %v380 = vmul.f32 %v378, %v374
        %v381 = vmul.f32 %v379, %v373
        %v382 = vmul.f32 %v380, %v374
        %v383 = vadd.f32 %v373, %v381
        %v384 = vadd.f32 %v374, %v382
        %v385 = vmul.f32 %v383, 0.7978846
        %v386 = vmul.f32 %v384, 0.7978846
        %v387 = vtanh.pop %v385
        %v388 = vtanh.pop %v386
        %v389 = vadd.f32 %v387, 1.0
        %v390 = vadd.f32 %v388, 1.0
        %v391 = vmul.f32 %v375, %v389
        %v392 = vmul.f32 %v376, %v390
        %v393 = vld [vmem:[%s280] sm:$0xff]
        %v394 = vld [vmem:[%s280 + $0x8] sm:$0xff]
        %v395 = vld [vmem:[%s280 + $0x10] sm:$0xff]
        %v396 = vld [vmem:[%s280 + $0x18] sm:$0xff]
        %v397 = vld [vmem:[%s280 + $0x20] sm:$0xff]
        %v398 = vld [vmem:[%s280 + $0x28] sm:$0xff]
        %v399 = vld [vmem:[%s280 + $0x30] sm:$0xff]
        %v400 = vld [vmem:[%s280 + $0x38] sm:$0xff]
        %v401 = vld [vmem:[%s280 + $0x40] sm:$0xff]
        %v402 = vld [vmem:[%s280 + $0x48] sm:$0xff]
        %v403 = vld [vmem:[%s280 + $0x50] sm:$0xff]
        %v404 = vld [vmem:[%s280 + $0x58] sm:$0xff]
        %v405 = vld [vmem:[%s280 + $0x60] sm:$0xff]
        %v406 = vld [vmem:[%s280 + $0x68] sm:$0xff]
        %v407 = vld [vmem:[%s280 + $0x70] sm:$0xff]
        %v408 = vld [vmem:[%s280 + $0x78] sm:$0xff]
        %v409 = vld [vmem:[%s323] sm:$0x3]
        %v411 = vlaneseq
        %v412 = vshrl.u32 %v411, 7
        %v413 = vsub.s32 0, %v412
        %v414 = vrot.slane %v409, %v413
        %v415 = vlaneseq
        %v416 = vshrl.u32 %v415, 7
        %v417 = vsub.s32 1, %v416
        %v418 = vrot.slane %v409, %v417
        %v422 = vsel %vm329, %v391, 0
        %v425 = vsel %vm329, %v392, 0
        %427 = vmatprep.subr.mxu0 0.0
        %428 = vmatpush1.msra.mxu0 0.0
        %429 = vmatprep.subr.mxu0 0.0
        %430 = vmatpush1.msra.mxu0 0.0
        %431 = vmatprep.subr.mxu0 0.0
        %432 = vmatpush1.msra.mxu0 0.0
        %433 = vmatprep.subr.mxu0 0.0
        %434 = vmatpush1.msra.mxu0 0.0
        %435 = vmatprep.subr.mxu0 0.0
        %436 = vmatpush1.msra.mxu0 0.0
        %437 = vmatprep.subr.mxu0 0.0
        %438 = vmatpush1.msra.mxu0 0.0
        %439 = vmatprep.subr.mxu0 0.0
        %440 = vmatpush1.msra.mxu0 0.0
        %441 = vmatprep.subr.mxu0 0.0
        %442 = vmatpush1.msra.mxu0 0.0
        %443 = vmatprep.subr.mxu0 %v408
        %444 = vmatpush1.msra.mxu0 %v407
        %445 = vmatprep.subr.mxu0 %v406
        %446 = vmatpush1.msra.mxu0 %v405
        %447 = vmatprep.subr.mxu0 %v404
        %448 = vmatpush1.msra.mxu0 %v403
        %449 = vmatprep.subr.mxu0 %v402
        %450 = vmatpush1.msra.mxu0 %v401
        %451 = vmatprep.subr.mxu0 %v400
        %452 = vmatpush1.msra.mxu0 %v399
        %453 = vmatprep.subr.mxu0 %v398
        %454 = vmatpush1.msra.mxu0 %v397
        %455 = vmatprep.subr.mxu0 %v396
        %456 = vmatpush1.msra.mxu0 %v395
        %457 = vmatprep.subr.mxu0 %v394
        %458 = vmatpush1.msra.mxu0 %v393
        %459 = vmatprep.subr.mxu0 0.0
        %460 = vmatpush2.msra.mxu0 0.0
        %461 = vmatprep.subr.mxu0 0.0
        %462 = vmatpush2.msra.mxu0 0.0
        %463 = vmatprep.subr.mxu0 0.0
        %464 = vmatpush2.msra.mxu0 0.0
        %465 = vmatprep.subr.mxu0 0.0
        %466 = vmatpush2.msra.mxu0 0.0
        %467 = vmatprep.subr.mxu0 0.0
        %468 = vmatpush2.msra.mxu0 0.0
        %469 = vmatprep.subr.mxu0 0.0
        %470 = vmatpush2.msra.mxu0 0.0
        %471 = vmatprep.subr.mxu0 0.0
        %472 = vmatpush2.msra.mxu0 0.0
        %473 = vmatprep.subr.mxu0 0.0
        %474 = vmatpush2.msra.mxu0 0.0
        %475 = vmatprep.subr.mxu0 0.0
        %476 = vmatpush2.msra.mxu0 0.0
        %477 = vmatprep.subr.mxu0 0.0
        %478 = vmatpush2.msra.mxu0 0.0
        %479 = vmatprep.subr.mxu0 0.0
        %480 = vmatpush2.msra.mxu0 0.0
        %481 = vmatprep.subr.mxu0 0.0
        %482 = vmatpush2.msra.mxu0 0.0
        %483 = vmatprep.subr.mxu0 0.0
        %484 = vmatpush2.msra.mxu0 0.0
        %485 = vmatprep.subr.mxu0 0.0
        %486 = vmatpush2.msra.mxu0 0.0
        %487 = vmatprep.subr.mxu0 0.0
        %488 = vmatpush2.msra.mxu0 0.0
        %489 = vmatprep.subr.mxu0 0.0
        %490 = vmatpush2.msra.mxu0 0.0
        %491 = vmatprep.mubr.f32.mxu0 0.0
        %492 = vmatmul.mubr.f32.gmra.mxu0 %v422
        %v493 = vpop.f32.mrf.mxu0
        %v494 = vadd.f32 %v414, %v493
        %v495 = vpop.f32.mrf.mxu0
        %v496 = vadd.f32 %v418, %v495
        %497 = vmatprep.mubr.f32.mxu0 0.0
        %498 = vmatmul.mubr.f32.gmra.mxu0 %v425
        %v499 = vpop.f32.mrf.mxu0
        %v500 = vadd.f32 %v414, %v499
        %v501 = vpop.f32.mrf.mxu0
        %v502 = vadd.f32 %v418, %v501
        %503 = vdwg.mxu0
        %504 = vst [vmem:[%s312] sm:$0xff] %v494
        %505 = vst [vmem:[%s312 + $0x8] sm:$0xff] %v496
        %506 = vst [vmem:[%s312 + $0x10] sm:$0xff] %v500
        %507 = vst [vmem:[%s312 + $0x18] sm:$0xff] %v502
        %s508 = sand.u32 %s158, 1
        %s509 = sand.u32 %s158, 1
        %s510 = smul.addr %s509, 32
        %s511 = scalar_lea.vmem [#allocation3], %s510
        // Predicated region
        $region64: #{speech_model_forward.27} parent=58 // pred_check
          %p512 = pneg %p168
        $region65: #{speech_model_forward.27} parent=58 // pred_check_branch
          %514 = sbr.rel (%p512) target = $region67
        $region66: #{speech_model_forward.27} parent=58 // pred_region
          %s515 = smul.u32 2, %s20
          %s516 = smul.u32 2, %s21
          %s517 = smul.addr %s515, 6
          %s518 = sadd.s32 %s516, %s517
          %s519 = smul.addr %s518, 8
          %s520 = scalar_lea.vmem %s5, %s519
          // Predicated region
          $region68: #{speech_model_forward.27} parent=66 // pred_check
            _
          $region69: #{speech_model_forward.27} parent=66 // pred_check_branch
            %522 = sbr.rel (0) target = $region71
          $region70: #{speech_model_forward.27} parent=66 // pred_region
            // Predicated region
            $region72: #{speech_model_forward.27} parent=70 // pred_check
              _
            $region73: #{speech_model_forward.27} parent=70 // pred_check_branch
              %524 = sbr.rel (0) target = $region75
            $region74: #{speech_model_forward.27} parent=70 // pred_region
              loop: start=0, step=1, limit=1
              $region76: #{speech_model_forward.27} parent=74 // loop_pre_header
                _
              $region77: #{speech_model_forward.27} parent=74 // loop_header
                %s526 = sphi 0, %s530
                %p527 = scmp.ge.s32.totalorder %s526, 1
                %s531 = sphi %s511, %s511
                %s532 = sphi %s520, %s520
              $region78: #{speech_model_forward.27} parent=74 // loop_header_branch
                %529 = sbr.rel (%p527) target = $region82
              $region79: #{speech_model_forward.27} parent=74 // loop_body
                %v533 = vld [vmem:[%s531] sm:$0xff]
                %534 = vst [vmem:[%s532] sm:$0xff] %v533
                %v535 = vld [vmem:[%s531 + $0x8] sm:$0xff]
                %536 = vst [vmem:[%s532 + $0x8] sm:$0xff] %v535
                %v537 = vld [vmem:[%s531 + $0x10] sm:$0xff]
                %538 = vst [vmem:[%s532 + $0x30] sm:$0xff] %v537
                %v539 = vld [vmem:[%s531 + $0x18] sm:$0xff]
                %540 = vst [vmem:[%s532 + $0x38] sm:$0xff] %v539
              $region80: #{speech_model_forward.27} parent=74 // loop_footer
                %s530 = sadd.s32 1, %s526
              $region81: #{speech_model_forward.27} parent=74 // loop_footer_branch
                %525 = sbr.rel target = $region77
              $region82: #{speech_model_forward.27} parent=74 // loop_exit
                _
            $region75: #{speech_model_forward.27} parent=70 // pred_fallthru
              _
            // Predicated region
            $region83: #{speech_model_forward.27} parent=70 // pred_check
              _
            $region84: #{speech_model_forward.27} parent=70 // pred_check_branch
              %542 = sbr.rel target = $region86
            $region85: #{speech_model_forward.27} parent=70 // pred_region
              _
            $region86: #{speech_model_forward.27} parent=70 // pred_fallthru
              _
          $region71: #{speech_model_forward.27} parent=66 // pred_fallthru
            _
          %543 = vnop
        $region67: #{speech_model_forward.27} parent=58 // pred_fallthru
          _
      $region59: #{speech_model_forward.27} parent=5 // pred_fallthru
        _
      %p544 = scmp.le.s32.totalorder 2, %s11
      // Predicated region
      $region87: #{speech_model_forward.27} parent=5 // pred_check
        %p545 = pneg %p544
      $region88: #{speech_model_forward.27} parent=5 // pred_check_branch
        %547 = sbr.rel (%p545) target = $region90
      $region89: #{speech_model_forward.27} parent=5 // pred_region
        %s548 = ssub.s32 %s11, 2
        // Predicated region
        $region91: #{speech_model_forward.27} parent=89 // pred_check
          %p549 = pneg %p174
        $region92: #{speech_model_forward.27} parent=89 // pred_check_branch
          %551 = sbr.rel (%p549) target = $region94
        $region93: #{speech_model_forward.27} parent=89 // pred_region
          %s552 = sand.u32 %s159, 1
          %s553 = sand.u32 %s159, 1
          %s554 = smul.addr %s553, 32
          %s555 = scalar_lea.vmem [#allocation3], %s554
        $region94: #{speech_model_forward.27} parent=89 // pred_fallthru
          _
      $region90: #{speech_model_forward.27} parent=5 // pred_fallthru
        _
    $region6: #{speech_model_forward.27} parent=1 // loop_footer
      %s15 = sadd.s32 1, %s11
    $region7: #{speech_model_forward.27} parent=1 // loop_footer_branch
      %10 = sbr.rel target = $region3
    $region8: #{speech_model_forward.27} parent=1 // loop_exit
      _

// kernel: speech_model_forward.28
$region0: #{speech_model_forward.28}
  #allocation0 [shape = 'u32[]', space=smem, size = 0x4, offset = 0x4, fixed_abs, tag = 'smem constant byte address 0x4 - core index']
  #allocation1 [shape = 'u32[144,128]{1,0:T(1,128)}', space=vmem, size = 0x12000, scoped, tag = 'internal scratch']
  #allocation2 [shape = 'f32[8,128]{1,0:T(8,128)}', space=vmem, size = 0x1000, scoped, tag = 'scratch operand']
  %s0 = inlined_call_operand.vmem [shape: f32[2,2,8,384], index: 0, kind: input, shape index: {}]
  %s1 = inlined_call_operand.vmem [shape: f32[2,128,384], index: 1, kind: input, shape index: {}]
  %s2 = inlined_call_operand.vmem [shape: f32[2,1,384], index: 2, kind: input, shape index: {}]
  %s3 = inlined_call_operand.vmem [shape: f32[2,2,8,128], index: 3, kind: output, shape index: {}]
  %s4 = sld [smem:[#allocation0]]
  $region49: #{speech_model_forward.28} parent=0
    _
  %s6 = ssub.s32 1, %s4
  %s7 = scalar_select 0, %s6, %s4
  loop: start=0, step=1, limit=4
  $region2: #{speech_model_forward.28} parent=0 // loop_pre_header
    _
  $region3: #{speech_model_forward.28} parent=0 // loop_header
    %s9 = sphi 0, %s13
    %p10 = scmp.ge.s32.totalorder %s9, 4
    %s16 = sphi 0, %s28
    %s17 = sphi 0, %s24
    %s18 = sphi 0, %s16
    %s19 = sphi 0, %s17
    %s20 = sphi 0, %s18
    %s21 = sphi 0, %s19
    %s41 = sphi 0, %s43
    %s44 = sphi 0, %s41
    %s45 = sphi 0, %s44
    %s61 = sphi 0, %s45
    %s67 = sphi 0, %s69
    %s70 = sphi 0, %s67
    %s71 = sphi 0, %s70
    %s87 = sphi 0, %s71
    %s93 = sphi 0, %s95
    %s96 = sphi 0, %s93
    %s97 = sphi 0, %s96
    %s113 = sphi 0, %s97
    %s129 = sphi 0, %s131
    %s132 = sphi 0, %s129
    %s133 = sphi 0, %s132
    %s149 = sphi 0, %s133
  $region4: #{speech_model_forward.28} parent=0 // loop_header_branch
    %12 = sbr.rel (%p10) target = $region8
  $region5: #{speech_model_forward.28} parent=0 // loop_body
    %s14 = ssub.s32 %s9, 1
    %s15 = ssub.s32 %s9, 2
    %s22 = sadd.s32 1, %s17
    %p23 = scmp.ge.s32.totalorder %s22, 1
    %s24 = scalar_select %p23, 0, %s22
    %s25 = sadd.s32 1, %s16
    %s26 = scalar_select %p23, %s25, %s16
    %p27 = scmp.ge.s32.totalorder %s26, 2
    %s28 = scalar_select %p27, 0, %s26
    %s29 = smul.u32 %s17, 2
    %s30 = ssub.s32 0, %s29
    %s31 = smul.u32 %s16, %s30
    %s32 = sadd.s32 %s17, %s31
    %s33 = smul.u32 %s24, 2
    %s34 = ssub.s32 0, %s33
    %s35 = smul.u32 %s28, %s34
    %s36 = sadd.s32 %s24, %s35
    %s37 = ssub.s32 %s16, %s28
    %s38 = ssub.s32 %s32, %s36
    %s39 = sor.u32 %s37, %s38
    %p40 = scmp.eq.s32.totalorder %s39, 0
    %s42 = sadd.s32 %s41, 1
    %s43 = scalar_select %p40, %s41, %s42
    %p46 = pneg %p40
    %p47 = scmp.eq.s32.totalorder %s9, 1
    %p48 = por %p46, %p47
    %p49 = scmp.ne.s32.totalorder %s41, %s44
    %p50 = scmp.eq.s32.totalorder %s9, 0
    %p51 = por %p49, %p50
    %p52 = scmp.ne.s32.totalorder %s41, %s44
    %p53 = scmp.eq.s32.totalorder %s14, 1
    %p54 = por %p52, %p53
    %p55 = scmp.ne.s32.totalorder %s44, %s45
    %p56 = scmp.eq.s32.totalorder %s14, 0
    %p57 = por %p55, %p56
    %p58 = scmp.ne.s32.totalorder %s44, %s45
    %p59 = scmp.eq.s32.totalorder %s15, 1
    %p60 = por %p58, %p59
    %p62 = scmp.ne.s32.totalorder %s45, %s61
    %p63 = scmp.eq.s32.totalorder %s15, 0
    %p64 = por %p62, %p63
    %s65 = ssub.s32 %s16, %s28
    %p66 = scmp.eq.s32.totalorder %s65, 0
    %s68 = sadd.s32 %s67, 1
    %s69 = scalar_select %p66, %s67, %s68
    %p72 = pneg %p66
    %p73 = scmp.eq.s32.totalorder %s9, 1
    %p74 = por %p72, %p73
    %p75 = scmp.ne.s32.totalorder %s67, %s70
    %p76 = scmp.eq.s32.totalorder %s9, 0
    %p77 = por %p75, %p76
    %p78 = scmp.ne.s32.totalorder %s67, %s70
    %p79 = scmp.eq.s32.totalorder %s14, 1
    %p80 = por %p78, %p79
    %p81 = scmp.ne.s32.totalorder %s70, %s71
    %p82 = scmp.eq.s32.totalorder %s14, 0
    %p83 = por %p81, %p82
    %p84 = scmp.ne.s32.totalorder %s70, %s71
    %p85 = scmp.eq.s32.totalorder %s15, 1
    %p86 = por %p84, %p85
    %p88 = scmp.ne.s32.totalorder %s71, %s87
    %p89 = scmp.eq.s32.totalorder %s15, 0
    %p90 = por %p88, %p89
    %s91 = ssub.s32 %s16, %s28
    %p92 = scmp.eq.s32.totalorder %s91, 0
    %s94 = sadd.s32 %s93, 1
    %s95 = scalar_select %p92, %s93, %s94
    %p98 = pneg %p92
    %p99 = scmp.eq.s32.totalorder %s9, 1
    %p100 = por %p98, %p99
    %p101 = scmp.ne.s32.totalorder %s93, %s96
    %p102 = scmp.eq.s32.totalorder %s9, 0
    %p103 = por %p101, %p102
    %p104 = scmp.ne.s32.totalorder %s93, %s96
    %p105 = scmp.eq.s32.totalorder %s14, 1
    %p106 = por %p104, %p105
    %p107 = scmp.ne.s32.totalorder %s96, %s97
    %p108 = scmp.eq.s32.totalorder %s14, 0
    %p109 = por %p107, %p108
    %p110 = scmp.ne.s32.totalorder %s96, %s97
    %p111 = scmp.eq.s32.totalorder %s15, 1
    %p112 = por %p110, %p111
    %p114 = scmp.ne.s32.totalorder %s97, %s113
    %p115 = scmp.eq.s32.totalorder %s15, 0
    %p116 = por %p114, %p115
    %s117 = smul.u32 %s17, 2
    %s118 = ssub.s32 0, %s117
    %s119 = smul.u32 %s16, %s118
    %s120 = sadd.s32 %s17, %s119
    %s121 = smul.u32 %s24, 2
    %s122 = ssub.s32 0, %s121
    %s123 = smul.u32 %s28, %s122
    %s124 = sadd.s32 %s24, %s123
    %s125 = ssub.s32 %s16, %s28
    %s126 = ssub.s32 %s120, %s124
    %s127 = sor.u32 %s125, %s126
    %p128 = scmp.eq.s32.totalorder %s127, 0
    %s130 = sadd.s32 %s129, 1
    %s131 = scalar_select %p128, %s129, %s130
    %p134 = pneg %p128
    %p135 = scmp.eq.s32.totalorder %s9, 1
    %p136 = por %p134, %p135
    %p137 = scmp.ne.s32.totalorder %s129, %s132
    %p138 = scmp.eq.s32.totalorder %s9, 0
    %p139 = por %p137, %p138
    %p140 = scmp.ne.s32.totalorder %s129, %s132
    %p141 = scmp.eq.s32.totalorder %s14, 1
    %p142 = por %p140, %p141
    %p143 = scmp.ne.s32.totalorder %s132, %s133
    %p144 = scmp.eq.s32.totalorder %s14, 0
    %p145 = por %p143, %p144
    %p146 = scmp.ne.s32.totalorder %s132, %s133
    %p147 = scmp.eq.s32.totalorder %s15, 1
    %p148 = por %p146, %p147
    %p150 = scmp.ne.s32.totalorder %s133, %s149
    %p151 = scmp.eq.s32.totalorder %s15, 0
    %p152 = por %p150, %p151
    %p153 = scmp.le.s32.totalorder 1, %s9
    %p154 = scmp.lt.s32.totalorder %s9, 3
    %p155 = pnand %p153, %p154
    %p156 = pneg %p155
    // Predicated region
    $region9: #{speech_model_forward.28} parent=5 // pred_check
      _
    $region10: #{speech_model_forward.28} parent=5 // pred_check_branch
      %158 = sbr.rel (%p155) target = $region12
    $region11: #{speech_model_forward.28} parent=5 // pred_region
      %s159 = ssub.s32 %s9, 1
    $region12: #{speech_model_forward.28} parent=5 // pred_fallthru
      _
    %p160 = scmp.lt.s32.totalorder %s9, 2
    // Predicated region
    $region13: #{speech_model_forward.28} parent=5 // pred_check
      %p161 = pneg %p160
    $region14: #{speech_model_forward.28} parent=5 // pred_check_branch
      %163 = sbr.rel (%p161) target = $region16
    $region15: #{speech_model_forward.28} parent=5 // pred_region
      // Predicated region
      $region17: #{speech_model_forward.28} parent=15 // pred_check
        %p164 = pneg %p51
      $region18: #{speech_model_forward.28} parent=15 // pred_check_branch
        %166 = sbr.rel (%p164) target = $region20
      $region19: #{speech_model_forward.28} parent=15 // pred_region
        %s167 = smul.u32 %s17, 2
        %s168 = ssub.s32 0, %s167
        %s169 = smul.u32 %s16, %s168
        %s170 = sadd.s32 %s17, %s169
        %s171 = smul.u32 2, %s170
        %p172 = scmp.lt.s32.totalorder %s16, 1
        %s173 = scalar_select %p172, %s16, 1
        %p174 = scmp.lt.s32.totalorder %s171, 1
        %s175 = scalar_select %p174, %s171, 1
        %s176 = smul.addr %s175, 3
        %s177 = smul.addr %s173, 6
        %s178 = sadd.s32 %s176, %s177
        %s179 = smul.addr %s178, 8
        %s180 = scalar_lea.vmem %s0, %s179
        %s181 = smul.u32 %s17, 2
        %s182 = ssub.s32 0, %s181
        %s183 = smul.u32 %s16, %s182
        %s184 = sadd.s32 %s17, %s183
        %s185 = smul.u32 2, %s184
      $region20: #{speech_model_forward.28} parent=15 // pred_fallthru
        _
      // Predicated region
      $region21: #{speech_model_forward.28} parent=15 // pred_check
        %p186 = pneg %p77
      $region22: #{speech_model_forward.28} parent=15 // pred_check_branch
        %188 = sbr.rel (%p186) target = $region24
      $region23: #{speech_model_forward.28} parent=15 // pred_region
        %p189 = scmp.lt.s32.totalorder %s16, 1
        %s190 = scalar_select %p189, %s16, 1
        %s191 = smul.addr %s190, 48
        %s192 = smul.addr %s191, 8
        %s193 = scalar_lea.vmem %s1, %s192
      $region24: #{speech_model_forward.28} parent=15 // pred_fallthru
        _
      // Predicated region
      $region25: #{speech_model_forward.28} parent=15 // pred_check
        %p194 = pneg %p103
      $region26: #{speech_model_forward.28} parent=15 // pred_check_branch
        %196 = sbr.rel (%p194) target = $region28
      $region27: #{speech_model_forward.28} parent=15 // pred_region
        %p197 = scmp.lt.s32.totalorder %s16, 1
        %s198 = scalar_select %p197, %s16, 1
        %s199 = smul.addr %s198, 3
        %s200 = scalar_lea.vmem %s2, %s199
      $region28: #{speech_model_forward.28} parent=15 // pred_fallthru
        _
    $region16: #{speech_model_forward.28} parent=5 // pred_fallthru
      _
    %p201 = scmp.le.s32.totalorder 1, %s9
    %p202 = scmp.lt.s32.totalorder %s9, 3
    %p203 = pnand %p201, %p202
    %p204 = pneg %p203
    // Predicated region
    $region29: #{speech_model_forward.28} parent=5 // pred_check
      _
    $region30: #{speech_model_forward.28} parent=5 // pred_check_branch
      %206 = sbr.rel (%p203) target = $region32
    $region31: #{speech_model_forward.28} parent=5 // pred_region
      %s207 = ssub.s32 %s9, 1
      %s208 = smul.u32 %s19, 2
      %s209 = ssub.s32 0, %s208
      %s210 = smul.u32 %s18, %s209
      %s211 = sadd.s32 %s19, %s210
      %s212 = smul.u32 2, %s211
      %p213 = scmp.lt.s32.totalorder %s18, 1
      %s214 = scalar_select %p213, %s18, 1
      %p215 = scmp.lt.s32.totalorder %s212, 1
      %s216 = scalar_select %p215, %s212, 1
      %s217 = smul.addr %s216, 3
      %s218 = smul.addr %s214, 6
      %s219 = sadd.s32 %s217, %s218
      %s220 = smul.addr %s219, 8
      %s221 = scalar_lea.vmem %s0, %s220
      %p222 = pneg %p57
      %p223 = pneg %p54
      %p224 = scmp.lt.s32.totalorder %s18, 1
      %s225 = scalar_select %p224, %s18, 1
      %s226 = smul.addr %s225, 48
      %s227 = smul.addr %s226, 8
      %s228 = scalar_lea.vmem %s1, %s227
      %p229 = pneg %p83
      %p230 = pneg %p80
      %p231 = scmp.lt.s32.totalorder %s18, 1
      %s232 = scalar_select %p231, %s18, 1
      %s233 = smul.addr %s232, 3
      %s234 = scalar_lea.vmem %s2, %s233
      %p235 = pneg %p109
      %p236 = pneg %p106
      %p237 = pneg %p145
      %p238 = pneg %p142
      %s239 = smul.u32 %s19, 2
      %s240 = ssub.s32 0, %s239
      %s241 = smul.u32 %s18, %s240
      %s242 = sadd.s32 %s19, %s241
      %s243 = smul.u32 2, %s242
      %p244 = scmp.lt.s32.totalorder %s18, 1
      %s245 = scalar_select %p244, %s18, 1
      %p246 = scmp.lt.s32.totalorder %s243, 1
      %s247 = scalar_select %p246, %s243, 1
      %s248 = smul.addr %s245, 2
      %s249 = sadd.s32 %s247, %s248
      %s250 = smul.addr %s249, 8
      %s251 = scalar_lea.vmem %s3, %s250
      %s252 = smul.u32 %s19, 2
      %s253 = ssub.s32 0, %s252
      %s254 = smul.u32 %s18, %s253
      %s255 = sadd.s32 %s19, %s254
      %s256 = smul.u32 2, %s255
      %p257 = scmp.lt.s32.totalorder %s18, 1
      %s258 = scalar_select %p257, %s18, 1
      %p259 = scmp.lt.s32.totalorder %s256, 1
      %s260 = scalar_select %p259, %s256, 1
      %s261 = smul.addr %s260, 3
      %s262 = smul.addr %s258, 6
      %s263 = sadd.s32 %s261, %s262
      %s264 = smul.addr %s263, 8
      %s265 = scalar_lea.vmem %s0, %s264
      %s266 = smul.u32 %s19, 2
      %s267 = ssub.s32 0, %s266
      %s268 = smul.u32 %s18, %s267
      %s269 = sadd.s32 %s19, %s268
      %s270 = smul.u32 2, %s269
      %p271 = scmp.lt.s32.totalorder %s18, 1
      %s272 = scalar_select %p271, %s18, 1
      %s273 = smul.addr %s272, 48
      %s274 = smul.addr %s273, 8
      %s275 = scalar_lea.vmem %s1, %s274
      %p276 = scmp.lt.s32.totalorder %s18, 1
      %s277 = scalar_select %p276, %s18, 1
      %s278 = smul.addr %s277, 3
      %s279 = scalar_lea.vmem %s2, %s278
      %s280 = smul.u32 %s19, 2
      %s281 = ssub.s32 0, %s280
      %s282 = smul.u32 %s18, %s281
      %s283 = sadd.s32 %s19, %s282
      %s284 = smul.u32 2, %s283
      %p285 = scmp.lt.s32.totalorder %s18, 1
      %s286 = scalar_select %p285, %s18, 1
      %p287 = scmp.lt.s32.totalorder %s284, 1
      %s288 = scalar_select %p287, %s284, 1
      %s289 = smul.addr %s286, 2
      %s290 = sadd.s32 %s288, %s289
      %s291 = smul.addr %s290, 8
      %s292 = scalar_lea.vmem %s3, %s291
      %s293 = smul.u32 %s19, 2
      %s294 = ssub.s32 0, %s293
      %s295 = smul.u32 %s18, %s294
      %s296 = sadd.s32 %s19, %s295
      %s297 = smul.u32 2, %s296
      %p298 = scmp.eq.s32.totalorder %s19, 0
      // Predicated region
      $region33: #{speech_model_forward.28} parent=31 // pred_check
        %p299 = pneg %p298
      $region34: #{speech_model_forward.28} parent=31 // pred_check_branch
        %301 = sbr.rel (%p299) target = $region36
      $region35: #{speech_model_forward.28} parent=31 // pred_region
        %302 = vst [vmem:[#allocation2] sm:$0xff] 0.0
      $region36: #{speech_model_forward.28} parent=31 // pred_fallthru
        _
      %v303 = vld [vmem:[%s275] sm:$0xff]
      %v304 = vld [vmem:[%s275 + $0x8] sm:$0xff]
      %v305 = vld [vmem:[%s275 + $0x10] sm:$0xff]
      %v306 = vld [vmem:[%s275 + $0x18] sm:$0xff]
      %v307 = vld [vmem:[%s275 + $0x20] sm:$0xff]
      %v308 = vld [vmem:[%s275 + $0x28] sm:$0xff]
      %v309 = vld [vmem:[%s275 + $0x30] sm:$0xff]
      %v310 = vld [vmem:[%s275 + $0x38] sm:$0xff]
      %v311 = vld [vmem:[%s275 + $0x40] sm:$0xff]
      %v312 = vld [vmem:[%s275 + $0x48] sm:$0xff]
      %v313 = vld [vmem:[%s275 + $0x50] sm:$0xff]
      %v314 = vld [vmem:[%s275 + $0x58] sm:$0xff]
      %v315 = vld [vmem:[%s275 + $0x60] sm:$0xff]
      %v316 = vld [vmem:[%s275 + $0x68] sm:$0xff]
      %v317 = vld [vmem:[%s275 + $0x70] sm:$0xff]
      %v318 = vld [vmem:[%s275 + $0x78] sm:$0xff]
      %v319 = vld [vmem:[%s275 + $0x80] sm:$0xff]
      %v320 = vld [vmem:[%s275 + $0x88] sm:$0xff]
      %v321 = vld [vmem:[%s275 + $0x90] sm:$0xff]
      %v322 = vld [vmem:[%s275 + $0x98] sm:$0xff]
      %v323 = vld [vmem:[%s275 + $0xa0] sm:$0xff]
      %v324 = vld [vmem:[%s275 + $0xa8] sm:$0xff]
      %v325 = vld [vmem:[%s275 + $0xb0] sm:$0xff]
      %v326 = vld [vmem:[%s275 + $0xb8] sm:$0xff]
      %v327 = vld [vmem:[%s275 + $0xc0] sm:$0xff]
      %v328 = vld [vmem:[%s275 + $0xc8] sm:$0xff]
      %v329 = vld [vmem:[%s275 + $0xd0] sm:$0xff]
      %v330 = vld [vmem:[%s275 + $0xd8] sm:$0xff]
      %v331 = vld [vmem:[%s275 + $0xe0] sm:$0xff]
      %v332 = vld [vmem:[%s275 + $0xe8] sm:$0xff]
      %v333 = vld [vmem:[%s275 + $0xf0] sm:$0xff]
      %v334 = vld [vmem:[%s275 + $0xf8] sm:$0xff]
      %v335 = vld [vmem:[%s275 + $0x100] sm:$0xff]
      %v336 = vld [vmem:[%s275 + $0x108] sm:$0xff]
      %v337 = vld [vmem:[%s275 + $0x110] sm:$0xff]
      %v338 = vld [vmem:[%s275 + $0x118] sm:$0xff]
      %v339 = vld [vmem:[%s275 + $0x120] sm:$0xff]
      %v340 = vld [vmem:[%s275 + $0x128] sm:$0xff]
      %v341 = vld [vmem:[%s275 + $0x130] sm:$0xff]
      %v342 = vld [vmem:[%s275 + $0x138] sm:$0xff]
      %v343 = vld [vmem:[%s275 + $0x140] sm:$0xff]
      %v344 = vld [vmem:[%s275 + $0x148] sm:$0xff]
      %v345 = vld [vmem:[%s275 + $0x150] sm:$0xff]
      %v346 = vld [vmem:[%s275 + $0x158] sm:$0xff]
      %v347 = vld [vmem:[%s275 + $0x160] sm:$0xff]
      %v348 = vld [vmem:[%s275 + $0x168] sm:$0xff]
      %v349 = vld [vmem:[%s275 + $0x170] sm:$0xff]
      %v350 = vld [vmem:[%s275 + $0x178] sm:$0xff]
      %v351 = vld [vmem:[%s279] sm:$0x7]
      %p352 = scmp.eq.s32.totalorder %s18, 1
      %s353 = scalar_select %p352, 1, 0
      %v354 = vld [vmem:[#allocation2] sm:$0xff]
      %v356 = vlaneseq
      %v357 = vshrl.u32 %v356, 7
      %v358 = vsub.s32 0, %v357
      %v359 = vrot.slane %v351, %v358
      %v360 = vlaneseq
      %v361 = vshrl.u32 %v360, 7
      %v362 = vsub.s32 1, %v361
      %v363 = vrot.slane %v351, %v362
      %v364 = vlaneseq
      %v365 = vshrl.u32 %v364, 7
      %v366 = vsub.s32 2, %v365
      %v367 = vrot.slane %v351, %v366
      %371 = vmatprep.subr.mxu0 %v349
      %372 = vmatpush1.msra.mxu0 %v348
      %373 = vmatprep.subr.mxu0 %v346
      %374 = vmatpush1.msra.mxu0 %v345
      %375 = vmatprep.subr.mxu0 %v343
      %376 = vmatpush1.msra.mxu0 %v342
      %377 = vmatprep.subr.mxu0 %v340
      %378 = vmatpush1.msra.mxu0 %v339
      %379 = vmatprep.subr.mxu0 %v337
      %380 = vmatpush1.msra.mxu0 %v336
      %381 = vmatprep.subr.mxu0 %v334
      %382 = vmatpush1.msra.mxu0 %v333
      %383 = vmatprep.subr.mxu0 %v331
      %384 = vmatpush1.msra.mxu0 %v330
      %385 = vmatprep.subr.mxu0 %v328
      %386 = vmatpush1.msra.mxu0 %v327
      %387 = vmatprep.subr.mxu0 %v325
      %388 = vmatpush1.msra.mxu0 %v324
      %389 = vmatprep.subr.mxu0 %v322
      %390 = vmatpush1.msra.mxu0 %v321
      %391 = vmatprep.subr.mxu0 %v319
      %392 = vmatpush1.msra.mxu0 %v318
      %393 = vmatprep.subr.mxu0 %v316
      %394 = vmatpush1.msra.mxu0 %v315
      %395 = vmatprep.subr.mxu0 %v313
      %396 = vmatpush1.msra.mxu0 %v312
      %397 = vmatprep.subr.mxu0 %v310
      %398 = vmatpush1.msra.mxu0 %v309
      %399 = vmatprep.subr.mxu0 %v307
      %400 = vmatpush1.msra.mxu0 %v306
      %401 = vmatprep.subr.mxu0 %v304
      %402 = vmatpush1.msra.mxu0 %v303
      %403 = vmatprep.subr.mxu0 0.0
      %404 = vmatpush2.msra.mxu0 0.0
      %405 = vmatprep.subr.mxu0 0.0
      %406 = vmatpush2.msra.mxu0 0.0
      %407 = vmatprep.subr.mxu0 0.0
      %408 = vmatpush2.msra.mxu0 0.0
      %409 = vmatprep.subr.mxu0 0.0
      %410 = vmatpush2.msra.mxu0 0.0
      %411 = vmatprep.subr.mxu0 0.0
      %412 = vmatpush2.msra.mxu0 0.0
      %413 = vmatprep.subr.mxu0 0.0
      %414 = vmatpush2.msra.mxu0 0.0
      %415 = vmatprep.subr.mxu0 0.0
      %416 = vmatpush2.msra.mxu0 0.0
      %417 = vmatprep.subr.mxu0 0.0
      %418 = vmatpush2.msra.mxu0 0.0
      %419 = vmatprep.subr.mxu0 0.0
      %420 = vmatpush2.msra.mxu0 0.0
      %421 = vmatprep.subr.mxu0 0.0
      %422 = vmatpush2.msra.mxu0 0.0
      %423 = vmatprep.subr.mxu0 0.0
      %424 = vmatpush2.msra.mxu0 0.0
      %425 = vmatprep.subr.mxu0 0.0
      %426 = vmatpush2.msra.mxu0 0.0
      %427 = vmatprep.subr.mxu0 0.0
      %428 = vmatpush2.msra.mxu0 0.0
      %429 = vmatprep.subr.mxu0 0.0
      %430 = vmatpush2.msra.mxu0 0.0
      %431 = vmatprep.subr.mxu0 0.0
      %432 = vmatpush2.msra.mxu0 0.0
      %433 = vmatprep.subr.mxu0 0.0
      %434 = vmatpush2.msra.mxu0 0.0
      %435 = vmatprep.mubr.f32.mxu0 0.0
      %436 = vmatmul.mubr.f32.gmra.mxu0 %v354
      %v437 = vpop.f32.mrf.mxu0
      %v438 = vadd.f32 %v359, %v437
      %v439 = vpop.f32.mrf.mxu0
      %v440 = vadd.f32 %v363, %v439
      %441 = vdwg.mxu0
      %442 = vmatprep.subr.mxu0 0.0
      %443 = vmatpush1.msra.mxu0 %v350
      %444 = vmatprep.subr.mxu0 0.0
      %445 = vmatpush1.msra.mxu0 %v347
      %446 = vmatprep.subr.mxu0 0.0
      %447 = vmatpush1.msra.mxu0 %v344
      %448 = vmatprep.subr.mxu0 0.0
      %449 = vmatpush1.msra.mxu0 %v341
      %450 = vmatprep.subr.mxu0 0.0
      %451 = vmatpush1.msra.mxu0 %v338
      %452 = vmatprep.subr.mxu0 0.0
      %453 = vmatpush1.msra.mxu0 %v335
      %454 = vmatprep.subr.mxu0 0.0
      %455 = vmatpush1.msra.mxu0 %v332
      %456 = vmatprep.subr.mxu0 0.0
      %457 = vmatpush1.msra.mxu0 %v329
      %458 = vmatprep.subr.mxu0 0.0
      %459 = vmatpush1.msra.mxu0 %v326
      %460 = vmatprep.subr.mxu0 0.0
      %461 = vmatpush1.msra.mxu0 %v323
      %462 = vmatprep.subr.mxu0 0.0
      %463 = vmatpush1.msra.mxu0 %v320
      %464 = vmatprep.subr.mxu0 0.0
      %465 = vmatpush1.msra.mxu0 %v317
      %466 = vmatprep.subr.mxu0 0.0
      %467 = vmatpush1.msra.mxu0 %v314
      %468 = vmatprep.subr.mxu0 0.0
      %469 = vmatpush1.msra.mxu0 %v311
      %470 = vmatprep.subr.mxu0 0.0
      %471 = vmatpush1.msra.mxu0 %v308
      %472 = vmatprep.subr.mxu0 0.0
      %473 = vmatpush1.msra.mxu0 %v305
      %474 = vmatprep.subr.mxu0 0.0
      %475 = vmatpush2.msra.mxu0 0.0
      %476 = vmatprep.subr.mxu0 0.0
      %477 = vmatpush2.msra.mxu0 0.0
      %478 = vmatprep.subr.mxu0 0.0
      %479 = vmatpush2.msra.mxu0 0.0
      %480 = vmatprep.subr.mxu0 0.0
      %481 = vmatpush2.msra.mxu0 0.0
      %482 = vmatprep.subr.mxu0 0.0
      %483 = vmatpush2.msra.mxu0 0.0
      %484 = vmatprep.subr.mxu0 0.0
      %485 = vmatpush2.msra.mxu0 0.0
      %486 = vmatprep.subr.mxu0 0.0
      %487 = vmatpush2.msra.mxu0 0.0
      %488 = vmatprep.subr.mxu0 0.0
      %489 = vmatpush2.msra.mxu0 0.0
      %490 = vmatprep.subr.mxu0 0.0
      %491 = vmatpush2.msra.mxu0 0.0
      %492 = vmatprep.subr.mxu0 0.0
      %493 = vmatpush2.msra.mxu0 0.0
      %494 = vmatprep.subr.mxu0 0.0
      %495 = vmatpush2.msra.mxu0 0.0
      %496 = vmatprep.subr.mxu0 0.0
      %497 = vmatpush2.msra.mxu0 0.0
      %498 = vmatprep.subr.mxu0 0.0
      %499 = vmatpush2.msra.mxu0 0.0
      %500 = vmatprep.subr.mxu0 0.0
      %501 = vmatpush2.msra.mxu0 0.0
      %502 = vmatprep.subr.mxu0 0.0
      %503 = vmatpush2.msra.mxu0 0.0
      %504 = vmatprep.subr.mxu0 0.0
      %505 = vmatpush2.msra.mxu0 0.0
      %506 = vmatprep.mubr.f32.mxu0 0.0
      %507 = vmatmul.mubr.f32.gmra.mxu0 %v354
      %v508 = vpop.f32.mrf.mxu0
      %v509 = vadd.f32 %v367, %v508
      %v510 = vpop.f32.mrf.mxu0
      %511 = vdwg.mxu0
      %s512 = smul.u32 %s353, 3
      %s513 = smul.addr %s512, 8
      %s514 = scalar_lea.vmem %s265, %s513
      %v515 = vld [vmem:[%s514] sm:$0xff]
      %v516 = vld [vmem:[%s514 + $0x8] sm:$0xff]
      %v517 = vld [vmem:[%s514 + $0x10] sm:$0xff]
      %v518 = vadd.f32 %v515, %v438
      %v519 = vxor.u32 %v518, 2147483648
      %v520 = vmul.f32 %v519, 1.442695
      %v521 = vpow.pop %v520
      %v522 = vadd.f32 %v521, 1.0
      %v523 = vrcp.pop %v522
      %v524 = vmul.f32 1.0, %v523
      %v525 = vadd.f32 %v516, %v440
      %v526 = vxor.u32 %v525, 2147483648
      %v527 = vmul.f32 %v526, 1.442695
      %v528 = vpow.pop %v527
      %v529 = vadd.f32 %v528, 1.0
      %v530 = vrcp.pop %v529
      %v531 = vmul.f32 1.0, %v530
      %v532 = vmul.f32 %v524, %v509
      %v533 = vadd.f32 %v517, %v532
      %v534 = vtanh.pop %v533
      %v535 = vsub.f32 1.0, %v531
      %v536 = vmul.f32 %v535, %v534
      %v537 = vmul.f32 %v531, %v354
      %v538 = vadd.f32 %v536, %v537
      %539 = vst [vmem:[#allocation2] sm:$0xff] %v538
      %s540 = smul.u32 %s353, 8
      %s541 = scalar_lea.vmem %s292, %s540
      %542 = vst [vmem:[%s541] sm:$0xff] %v538
      %p543 = scmp.ne.s32.totalorder %s18, 1
      %s544 = scalar_select %p543, 1, 0
      %v545 = vld [vmem:[#allocation2] sm:$0xff]
      %546 = vmatprep.subr.mxu0 %v349
      %547 = vmatpush1.msra.mxu0 %v348
      %548 = vmatprep.subr.mxu0 %v346
      %549 = vmatpush1.msra.mxu0 %v345
      %550 = vmatprep.subr.mxu0 %v343
      %551 = vmatpush1.msra.mxu0 %v342
      %552 = vmatprep.subr.mxu0 %v340
      %553 = vmatpush1.msra.mxu0 %v339
      %554 = vmatprep.subr.mxu0 %v337
      %555 = vmatpush1.msra.mxu0 %v336
      %556 = vmatprep.subr.mxu0 %v334
      %557 = vmatpush1.msra.mxu0 %v333
      %558 = vmatprep.subr.mxu0 %v331
      %559 = vmatpush1.msra.mxu0 %v330
      %560 = vmatprep.subr.mxu0 %v328
      %561 = vmatpush1.msra.mxu0 %v327
      %562 = vmatprep.subr.mxu0 %v325
      %563 = vmatpush1.msra.mxu0 %v324
      %564 = vmatprep.subr.mxu0 %v322
      %565 = vmatpush1.msra.mxu0 %v321
      %566 = vmatprep.subr.mxu0 %v319
      %567 = vmatpush1.msra.mxu0 %v318
      %568 = vmatprep.subr.mxu0 %v316
      %569 = vmatpush1.msra.mxu0 %v315
      %570 = vmatprep.subr.mxu0 %v313
      %571 = vmatpush1.msra.mxu0 %v312
      %572 = vmatprep.subr.mxu0 %v310
      %573 = vmatpush1.msra.mxu0 %v309
      %574 = vmatprep.subr.mxu0 %v307
      %575 = vmatpush1.msra.mxu0 %v306
      %576 = vmatprep.subr.mxu0 %v304
      %577 = vmatpush1.msra.mxu0 %v303
      %578 = vmatprep.subr.mxu0 0.0
      %579 = vmatpush2.msra.mxu0 0.0
      %580 = vmatprep.subr.mxu0 0.0
      %581 = vmatpush2.msra.mxu0 0.0
      %582 = vmatprep.subr.mxu0 0.0
      %583 = vmatpush2.msra.mxu0 0.0
      %584 = vmatprep.subr.mxu0 0.0
      %585 = vmatpush2.msra.mxu0 0.0
      %586 = vmatprep.subr.mxu0 0.0
      %587 = vmatpush2.msra.mxu0 0.0
      %588 = vmatprep.subr.mxu0 0.0
      %589 = vmatpush2.msra.mxu0 0.0
      %590 = vmatprep.subr.mxu0 0.0
      %591 = vmatpush2.msra.mxu0 0.0
      %592 = vmatprep.subr.mxu0 0.0
      %593 = vmatpush2.msra.mxu0 0.0
      %594 = vmatprep.subr.mxu0 0.0
      %595 = vmatpush2.msra.mxu0 0.0
      %596 = vmatprep.subr.mxu0 0.0
      %597 = vmatpush2.msra.mxu0 0.0
      %598 = vmatprep.subr.mxu0 0.0
      %599 = vmatpush2.msra.mxu0 0.0
      %600 = vmatprep.subr.mxu0 0.0
      %601 = vmatpush2.msra.mxu0 0.0
      %602 = vmatprep.subr.mxu0 0.0
      %603 = vmatpush2.msra.mxu0 0.0
      %604 = vmatprep.subr.mxu0 0.0
      %605 = vmatpush2.msra.mxu0 0.0
      %606 = vmatprep.subr.mxu0 0.0
      %607 = vmatpush2.msra.mxu0 0.0
      %608 = vmatprep.subr.mxu0 0.0
      %609 = vmatpush2.msra.mxu0 0.0
      %610 = vmatprep.mubr.f32.mxu0 0.0
      %611 = vmatmul.mubr.f32.gmra.mxu0 %v545
      %v612 = vpop.f32.mrf.mxu0
      %v613 = vadd.f32 %v359, %v612
      %v614 = vpop.f32.mrf.mxu0
      %v615 = vadd.f32 %v363, %v614
      %616 = vdwg.mxu0
      %617 = vmatprep.subr.mxu0 0.0
      %618 = vmatpush1.msra.mxu0 %v350
      %619 = vmatprep.subr.mxu0 0.0
      %620 = vmatpush1.msra.mxu0 %v347
      %621 = vmatprep.subr.mxu0 0.0
      %622 = vmatpush1.msra.mxu0 %v344
      %623 = vmatprep.subr.mxu0 0.0
      %624 = vmatpush1.msra.mxu0 %v341
      %625 = vmatprep.subr.mxu0 0.0
      %626 = vmatpush1.msra.mxu0 %v338
      %627 = vmatprep.subr.mxu0 0.0
      %628 = vmatpush1.msra.mxu0 %v335
      %629 = vmatprep.subr.mxu0 0.0
      %630 = vmatpush1.msra.mxu0 %v332
      %631 = vmatprep.subr.mxu0 0.0
      %632 = vmatpush1.msra.mxu0 %v329
      %633 = vmatprep.subr.mxu0 0.0
      %634 = vmatpush1.msra.mxu0 %v326
      %635 = vmatprep.subr.mxu0 0.0
      %636 = vmatpush1.msra.mxu0 %v323
      %637 = vmatprep.subr.mxu0 0.0
      %638 = vmatpush1.msra.mxu0 %v320
      %639 = vmatprep.subr.mxu0 0.0
      %640 = vmatpush1.msra.mxu0 %v317
      %641 = vmatprep.subr.mxu0 0.0
      %642 = vmatpush1.msra.mxu0 %v314
      %643 = vmatprep.subr.mxu0 0.0
      %644 = vmatpush1.msra.mxu0 %v311
      %645 = vmatprep.subr.mxu0 0.0
      %646 = vmatpush1.msra.mxu0 %v308
      %647 = vmatprep.subr.mxu0 0.0
      %648 = vmatpush1.msra.mxu0 %v305
      %649 = vmatprep.subr.mxu0 0.0
      %650 = vmatpush2.msra.mxu0 0.0
      %651 = vmatprep.subr.mxu0 0.0
      %652 = vmatpush2.msra.mxu0 0.0
      %653 = vmatprep.subr.mxu0 0.0
      %654 = vmatpush2.msra.mxu0 0.0
      %655 = vmatprep.subr.mxu0 0.0
      %656 = vmatpush2.msra.mxu0 0.0
      %657 = vmatprep.subr.mxu0 0.0
      %658 = vmatpush2.msra.mxu0 0.0
      %659 = vmatprep.subr.mxu0 0.0
      %660 = vmatpush2.msra.mxu0 0.0
      %661 = vmatprep.subr.mxu0 0.0
      %662 = vmatpush2.msra.mxu0 0.0
      %663 = vmatprep.subr.mxu0 0.0
      %664 = vmatpush2.msra.mxu0 0.0
      %665 = vmatprep.subr.mxu0 0.0
      %666 = vmatpush2.msra.mxu0 0.0
      %667 = vmatprep.subr.mxu0 0.0
      %668 = vmatpush2.msra.mxu0 0.0
      %669 = vmatprep.subr.mxu0 0.0
      %670 = vmatpush2.msra.mxu0 0.0
      %671 = vmatprep.subr.mxu0 0.0
      %672 = vmatpush2.msra.mxu0 0.0
      %673 = vmatprep.subr.mxu0 0.0
      %674 = vmatpush2.msra.mxu0 0.0
      %675 = vmatprep.subr.mxu0 0.0
      %676 = vmatpush2.msra.mxu0 0.0
      %677 = vmatprep.subr.mxu0 0.0
      %678 = vmatpush2.msra.mxu0 0.0
      %679 = vmatprep.subr.mxu0 0.0
      %680 = vmatpush2.msra.mxu0 0.0
      %681 = vmatprep.mubr.f32.mxu0 0.0
      %682 = vmatmul.mubr.f32.gmra.mxu0 %v545
      %v683 = vpop.f32.mrf.mxu0
      %v684 = vadd.f32 %v367, %v683
      %v685 = vpop.f32.mrf.mxu0
      %686 = vdwg.mxu0
      %s687 = smul.u32 %s544, 3
      %s688 = smul.addr %s687, 8
      %s689 = scalar_lea.vmem %s265, %s688
      %v690 = vld [vmem:[%s689] sm:$0xff]
      %v691 = vld [vmem:[%s689 + $0x8] sm:$0xff]
      %v692 = vld [vmem:[%s689 + $0x10] sm:$0xff]
      %v693 = vadd.f32 %v690, %v613
      %v694 = vxor.u32 %v693, 2147483648
      %v695 = vmul.f32 %v694, 1.442695
      %v696 = vpow.pop %v695
      %v697 = vadd.f32 %v696, 1.0
      %v698 = vrcp.pop %v697
      %v699 = vmul.f32 1.0, %v698
      %v700 = vadd.f32 %v691, %v615
      %v701 = vxor.u32 %v700, 2147483648
      %v702 = vmul.f32 %v701, 1.442695
      %v703 = vpow.pop %v702
      %v704 = vadd.f32 %v703, 1.0
      %v705 = vrcp.pop %v704
      %v706 = vmul.f32 1.0, %v705
      %v707 = vmul.f32 %v699, %v684
      %v708 = vadd.f32 %v692, %v707
      %v709 = vtanh.pop %v708
      %v710 = vsub.f32 1.0, %v706
      %v711 = vmul.f32 %v710, %v709
      %v712 = vmul.f32 %v706, %v545
      %v713 = vadd.f32 %v711, %v712
      %714 = vst [vmem:[#allocation2] sm:$0xff] %v713
      %s715 = smul.u32 %s544, 8
      %s716 = scalar_lea.vmem %s292, %s715
      %717 = vst [vmem:[%s716] sm:$0xff] %v713
      %s718 = smul.u32 %s19, 2
      %s719 = ssub.s32 0, %s718
      %s720 = smul.u32 %s18, %s719
      %s721 = sadd.s32 %s19, %s720
      %s722 = smul.u32 2, %s721
      %p723 = scmp.lt.s32.totalorder %s18, 1
      %s724 = scalar_select %p723, %s18, 1
      %p725 = scmp.lt.s32.totalorder %s722, 1
      %s726 = scalar_select %p725, %s722, 1
      %s727 = smul.addr %s724, 2
      %s728 = sadd.s32 %s726, %s727
      %s729 = smul.addr %s728, 8
      %s730 = scalar_lea.vmem %s3, %s729
      // Predicated region
      $region37: #{speech_model_forward.28} parent=31 // pred_check
        %p731 = pneg %p142
      $region38: #{speech_model_forward.28} parent=31 // pred_check_branch
        %733 = sbr.rel (%p731) target = $region40
      $region39: #{speech_model_forward.28} parent=31 // pred_region
        %s734 = smul.u32 %s19, 2
        %s735 = ssub.s32 0, %s734
        %s736 = smul.u32 %s18, %s735
        %s737 = sadd.s32 %s19, %s736
        %s738 = smul.u32 2, %s737
      $region40: #{speech_model_forward.28} parent=31 // pred_fallthru
        _
    $region32: #{speech_model_forward.28} parent=5 // pred_fallthru
      _
    %p739 = scmp.le.s32.totalorder 2, %s9
    // Predicated region
    $region41: #{speech_model_forward.28} parent=5 // pred_check
      %p740 = pneg %p739
    $region42: #{speech_model_forward.28} parent=5 // pred_check_branch
      %742 = sbr.rel (%p740) target = $region44
    $region43: #{speech_model_forward.28} parent=5 // pred_region
      %s743 = ssub.s32 %s9, 2
      // Predicated region
      $region45: #{speech_model_forward.28} parent=43 // pred_check
        %p744 = pneg %p148
      $region46: #{speech_model_forward.28} parent=43 // pred_check_branch
        %746 = sbr.rel (%p744) target = $region48
      $region47: #{speech_model_forward.28} parent=43 // pred_region
        %s747 = smul.u32 %s21, 2
        %s748 = ssub.s32 0, %s747
        %s749 = smul.u32 %s20, %s748
        %s750 = sadd.s32 %s21, %s749
        %s751 = smul.u32 2, %s750
        %p752 = scmp.lt.s32.totalorder %s20, 1
        %s753 = scalar_select %p752, %s20, 1
        %p754 = scmp.lt.s32.totalorder %s751, 1
        %s755 = scalar_select %p754, %s751, 1
        %s756 = smul.addr %s753, 2
        %s757 = sadd.s32 %s755, %s756
        %s758 = smul.addr %s757, 8
        %s759 = scalar_lea.vmem %s3, %s758
      $region48: #{speech_model_forward.28} parent=43 // pred_fallthru
        _
    $region44: #{speech_model_forward.28} parent=5 // pred_fallthru
      _
  $region6: #{speech_model_forward.28} parent=0 // loop_footer
    %s13 = sadd.s32 1, %s9
  $region7: #{speech_model_forward.28} parent=0 // loop_footer_branch
    %8 = sbr.rel target = $region3
  $region8: #{speech_model_forward.28} parent=0 // loop_exit
    _

// kernel: speech_model_forward.26
$region0: #{speech_model_forward.26}
  #allocation0 [shape = 'u32[]', space=smem, size = 0x4, offset = 0x4, fixed_abs, tag = 'smem constant byte address 0x4 - core index']
  #allocation1 [shape = 'u32[144,128]{1,0:T(1,128)}', space=vmem, size = 0x12000, scoped, tag = 'internal scratch']
  #allocation2 [shape = 'f32[2,128]{1,0:T(2,128)}', space=vmem, size = 0x400, scoped, tag = 'scratch operand']
  %s0 = inlined_call_operand.vmem [shape: f32[2,8,2,384], index: 0, kind: input, shape index: {}]
  %s1 = inlined_call_operand.vmem [shape: f32[2,128,384], index: 1, kind: input, shape index: {}]
  %s2 = inlined_call_operand.vmem [shape: f32[2,1,384], index: 2, kind: input, shape index: {}]
  %s3 = inlined_call_operand.vmem [shape: f32[2,8,2,128], index: 3, kind: output, shape index: {}]
  %s4 = sld [smem:[#allocation0]]
  $region49: #{speech_model_forward.26} parent=0
    _
  %s6 = ssub.s32 1, %s4
  %s7 = scalar_select 0, %s6, %s4
  loop: start=0, step=1, limit=4
  $region2: #{speech_model_forward.26} parent=0 // loop_pre_header
    _
  $region3: #{speech_model_forward.26} parent=0 // loop_header
    %s9 = sphi 0, %s13
    %p10 = scmp.ge.s32.totalorder %s9, 4
    %s16 = sphi 0, %s28
    %s17 = sphi 0, %s24
    %s18 = sphi 0, %s16
    %s19 = sphi 0, %s17
    %s20 = sphi 0, %s18
    %s21 = sphi 0, %s19
    %s41 = sphi 0, %s43
    %s44 = sphi 0, %s41
    %s45 = sphi 0, %s44
    %s61 = sphi 0, %s45
    %s67 = sphi 0, %s69
    %s70 = sphi 0, %s67
    %s71 = sphi 0, %s70
    %s87 = sphi 0, %s71
    %s93 = sphi 0, %s95
    %s96 = sphi 0, %s93
    %s97 = sphi 0, %s96
    %s113 = sphi 0, %s97
    %s129 = sphi 0, %s131
    %s132 = sphi 0, %s129
    %s133 = sphi 0, %s132
    %s149 = sphi 0, %s133
  $region4: #{speech_model_forward.26} parent=0 // loop_header_branch
    %12 = sbr.rel (%p10) target = $region8
  $region5: #{speech_model_forward.26} parent=0 // loop_body
    %s14 = ssub.s32 %s9, 1
    %s15 = ssub.s32 %s9, 2
    %s22 = sadd.s32 1, %s17
    %p23 = scmp.ge.s32.totalorder %s22, 1
    %s24 = scalar_select %p23, 0, %s22
    %s25 = sadd.s32 1, %s16
    %s26 = scalar_select %p23, %s25, %s16
    %p27 = scmp.ge.s32.totalorder %s26, 2
    %s28 = scalar_select %p27, 0, %s26
    %s29 = smul.u32 %s17, 2
    %s30 = ssub.s32 0, %s29
    %s31 = smul.u32 %s16, %s30
    %s32 = sadd.s32 %s17, %s31
    %s33 = smul.u32 %s24, 2
    %s34 = ssub.s32 0, %s33
    %s35 = smul.u32 %s28, %s34
    %s36 = sadd.s32 %s24, %s35
    %s37 = ssub.s32 %s16, %s28
    %s38 = ssub.s32 %s32, %s36
    %s39 = sor.u32 %s37, %s38
    %p40 = scmp.eq.s32.totalorder %s39, 0
    %s42 = sadd.s32 %s41, 1
    %s43 = scalar_select %p40, %s41, %s42
    %p46 = pneg %p40
    %p47 = scmp.eq.s32.totalorder %s9, 1
    %p48 = por %p46, %p47
    %p49 = scmp.ne.s32.totalorder %s41, %s44
    %p50 = scmp.eq.s32.totalorder %s9, 0
    %p51 = por %p49, %p50
    %p52 = scmp.ne.s32.totalorder %s41, %s44
    %p53 = scmp.eq.s32.totalorder %s14, 1
    %p54 = por %p52, %p53
    %p55 = scmp.ne.s32.totalorder %s44, %s45
    %p56 = scmp.eq.s32.totalorder %s14, 0
    %p57 = por %p55, %p56
    %p58 = scmp.ne.s32.totalorder %s44, %s45
    %p59 = scmp.eq.s32.totalorder %s15, 1
    %p60 = por %p58, %p59
    %p62 = scmp.ne.s32.totalorder %s45, %s61
    %p63 = scmp.eq.s32.totalorder %s15, 0
    %p64 = por %p62, %p63
    %s65 = ssub.s32 %s16, %s28
    %p66 = scmp.eq.s32.totalorder %s65, 0
    %s68 = sadd.s32 %s67, 1
    %s69 = scalar_select %p66, %s67, %s68
    %p72 = pneg %p66
    %p73 = scmp.eq.s32.totalorder %s9, 1
    %p74 = por %p72, %p73
    %p75 = scmp.ne.s32.totalorder %s67, %s70
    %p76 = scmp.eq.s32.totalorder %s9, 0
    %p77 = por %p75, %p76
    %p78 = scmp.ne.s32.totalorder %s67, %s70
    %p79 = scmp.eq.s32.totalorder %s14, 1
    %p80 = por %p78, %p79
    %p81 = scmp.ne.s32.totalorder %s70, %s71
    %p82 = scmp.eq.s32.totalorder %s14, 0
    %p83 = por %p81, %p82
    %p84 = scmp.ne.s32.totalorder %s70, %s71
    %p85 = scmp.eq.s32.totalorder %s15, 1
    %p86 = por %p84, %p85
    %p88 = scmp.ne.s32.totalorder %s71, %s87
    %p89 = scmp.eq.s32.totalorder %s15, 0
    %p90 = por %p88, %p89
    %s91 = ssub.s32 %s16, %s28
    %p92 = scmp.eq.s32.totalorder %s91, 0
    %s94 = sadd.s32 %s93, 1
    %s95 = scalar_select %p92, %s93, %s94
    %p98 = pneg %p92
    %p99 = scmp.eq.s32.totalorder %s9, 1
    %p100 = por %p98, %p99
    %p101 = scmp.ne.s32.totalorder %s93, %s96
    %p102 = scmp.eq.s32.totalorder %s9, 0
    %p103 = por %p101, %p102
    %p104 = scmp.ne.s32.totalorder %s93, %s96
    %p105 = scmp.eq.s32.totalorder %s14, 1
    %p106 = por %p104, %p105
    %p107 = scmp.ne.s32.totalorder %s96, %s97
    %p108 = scmp.eq.s32.totalorder %s14, 0
    %p109 = por %p107, %p108
    %p110 = scmp.ne.s32.totalorder %s96, %s97
    %p111 = scmp.eq.s32.totalorder %s15, 1
    %p112 = por %p110, %p111
    %p114 = scmp.ne.s32.totalorder %s97, %s113
    %p115 = scmp.eq.s32.totalorder %s15, 0
    %p116 = por %p114, %p115
    %s117 = smul.u32 %s17, 2
    %s118 = ssub.s32 0, %s117
    %s119 = smul.u32 %s16, %s118
    %s120 = sadd.s32 %s17, %s119
    %s121 = smul.u32 %s24, 2
    %s122 = ssub.s32 0, %s121
    %s123 = smul.u32 %s28, %s122
    %s124 = sadd.s32 %s24, %s123
    %s125 = ssub.s32 %s16, %s28
    %s126 = ssub.s32 %s120, %s124
    %s127 = sor.u32 %s125, %s126
    %p128 = scmp.eq.s32.totalorder %s127, 0
    %s130 = sadd.s32 %s129, 1
    %s131 = scalar_select %p128, %s129, %s130
    %p134 = pneg %p128
    %p135 = scmp.eq.s32.totalorder %s9, 1
    %p136 = por %p134, %p135
    %p137 = scmp.ne.s32.totalorder %s129, %s132
    %p138 = scmp.eq.s32.totalorder %s9, 0
    %p139 = por %p137, %p138
    %p140 = scmp.ne.s32.totalorder %s129, %s132
    %p141 = scmp.eq.s32.totalorder %s14, 1
    %p142 = por %p140, %p141
    %p143 = scmp.ne.s32.totalorder %s132, %s133
    %p144 = scmp.eq.s32.totalorder %s14, 0
    %p145 = por %p143, %p144
    %p146 = scmp.ne.s32.totalorder %s132, %s133
    %p147 = scmp.eq.s32.totalorder %s15, 1
    %p148 = por %p146, %p147
    %p150 = scmp.ne.s32.totalorder %s133, %s149
    %p151 = scmp.eq.s32.totalorder %s15, 0
    %p152 = por %p150, %p151
    %p153 = scmp.le.s32.totalorder 1, %s9
    %p154 = scmp.lt.s32.totalorder %s9, 3
    %p155 = pnand %p153, %p154
    %p156 = pneg %p155
    // Predicated region
    $region9: #{speech_model_forward.26} parent=5 // pred_check
      _
    $region10: #{speech_model_forward.26} parent=5 // pred_check_branch
      %158 = sbr.rel (%p155) target = $region12
    $region11: #{speech_model_forward.26} parent=5 // pred_region
      %s159 = ssub.s32 %s9, 1
    $region12: #{speech_model_forward.26} parent=5 // pred_fallthru
      _
    %p160 = scmp.lt.s32.totalorder %s9, 2
    // Predicated region
    $region13: #{speech_model_forward.26} parent=5 // pred_check
      %p161 = pneg %p160
    $region14: #{speech_model_forward.26} parent=5 // pred_check_branch
      %163 = sbr.rel (%p161) target = $region16
    $region15: #{speech_model_forward.26} parent=5 // pred_region
      // Predicated region
      $region17: #{speech_model_forward.26} parent=15 // pred_check
        %p164 = pneg %p51
      $region18: #{speech_model_forward.26} parent=15 // pred_check_branch
        %166 = sbr.rel (%p164) target = $region20
      $region19: #{speech_model_forward.26} parent=15 // pred_region
        %s167 = smul.u32 %s17, 2
        %s168 = ssub.s32 0, %s167
        %s169 = smul.u32 %s16, %s168
        %s170 = sadd.s32 %s17, %s169
        %s171 = smul.u32 8, %s170
        %p172 = scmp.lt.s32.totalorder %s16, 1
        %s173 = scalar_select %p172, %s16, 1
        %p174 = scmp.lt.s32.totalorder %s171, 7
        %s175 = scalar_select %p174, %s171, 7
        %s176 = smul.addr %s175, 3
        %s177 = smul.addr %s173, 24
        %s178 = sadd.s32 %s176, %s177
        %s179 = smul.addr %s178, 2
        %s180 = scalar_lea.vmem %s0, %s179
        %s181 = smul.u32 %s17, 2
        %s182 = ssub.s32 0, %s181
        %s183 = smul.u32 %s16, %s182
        %s184 = sadd.s32 %s17, %s183
        %s185 = smul.u32 8, %s184
      $region20: #{speech_model_forward.26} parent=15 // pred_fallthru
        _
      // Predicated region
      $region21: #{speech_model_forward.26} parent=15 // pred_check
        %p186 = pneg %p77
      $region22: #{speech_model_forward.26} parent=15 // pred_check_branch
        %188 = sbr.rel (%p186) target = $region24
      $region23: #{speech_model_forward.26} parent=15 // pred_region
        %p189 = scmp.lt.s32.totalorder %s16, 1
        %s190 = scalar_select %p189, %s16, 1
        %s191 = smul.addr %s190, 48
        %s192 = smul.addr %s191, 8
        %s193 = scalar_lea.vmem %s1, %s192
      $region24: #{speech_model_forward.26} parent=15 // pred_fallthru
        _
      // Predicated region
      $region25: #{speech_model_forward.26} parent=15 // pred_check
        %p194 = pneg %p103
      $region26: #{speech_model_forward.26} parent=15 // pred_check_branch
        %196 = sbr.rel (%p194) target = $region28
      $region27: #{speech_model_forward.26} parent=15 // pred_region
        %p197 = scmp.lt.s32.totalorder %s16, 1
        %s198 = scalar_select %p197, %s16, 1
        %s199 = smul.addr %s198, 3
        %s200 = scalar_lea.vmem %s2, %s199
      $region28: #{speech_model_forward.26} parent=15 // pred_fallthru
        _
    $region16: #{speech_model_forward.26} parent=5 // pred_fallthru
      _
    %p201 = scmp.le.s32.totalorder 1, %s9
    %p202 = scmp.lt.s32.totalorder %s9, 3
    %p203 = pnand %p201, %p202
    %p204 = pneg %p203
    // Predicated region
    $region29: #{speech_model_forward.26} parent=5 // pred_check
      _
    $region30: #{speech_model_forward.26} parent=5 // pred_check_branch
      %206 = sbr.rel (%p203) target = $region32
    $region31: #{speech_model_forward.26} parent=5 // pred_region
      %s207 = ssub.s32 %s9, 1
      %s208 = smul.u32 %s19, 2
      %s209 = ssub.s32 0, %s208
      %s210 = smul.u32 %s18, %s209
      %s211 = sadd.s32 %s19, %s210
      %s212 = smul.u32 8, %s211
      %p213 = scmp.lt.s32.totalorder %s18, 1
      %s214 = scalar_select %p213, %s18, 1
      %p215 = scmp.lt.s32.totalorder %s212, 7
      %s216 = scalar_select %p215, %s212, 7
      %s217 = smul.addr %s216, 3
      %s218 = smul.addr %s214, 24
      %s219 = sadd.s32 %s217, %s218
      %s220 = smul.addr %s219, 2
      %s221 = scalar_lea.vmem %s0, %s220
      %p222 = pneg %p57
      %p223 = pneg %p54
      %p224 = scmp.lt.s32.totalorder %s18, 1
      %s225 = scalar_select %p224, %s18, 1
      %s226 = smul.addr %s225, 48
      %s227 = smul.addr %s226, 8
      %s228 = scalar_lea.vmem %s1, %s227
      %p229 = pneg %p83
      %p230 = pneg %p80
      %p231 = scmp.lt.s32.totalorder %s18, 1
      %s232 = scalar_select %p231, %s18, 1
      %s233 = smul.addr %s232, 3
      %s234 = scalar_lea.vmem %s2, %s233
      %p235 = pneg %p109
      %p236 = pneg %p106
      %p237 = pneg %p145
      %p238 = pneg %p142
      %s239 = smul.u32 %s19, 2
      %s240 = ssub.s32 0, %s239
      %s241 = smul.u32 %s18, %s240
      %s242 = sadd.s32 %s19, %s241
      %s243 = smul.u32 8, %s242
      %p244 = scmp.lt.s32.totalorder %s18, 1
      %s245 = scalar_select %p244, %s18, 1
      %p246 = scmp.lt.s32.totalorder %s243, 7
      %s247 = scalar_select %p246, %s243, 7
      %s248 = smul.addr %s245, 8
      %s249 = sadd.s32 %s247, %s248
      %s250 = smul.addr %s249, 2
      %s251 = scalar_lea.vmem %s3, %s250
      %s252 = smul.u32 %s19, 2
      %s253 = ssub.s32 0, %s252
      %s254 = smul.u32 %s18, %s253
      %s255 = sadd.s32 %s19, %s254
      %s256 = smul.u32 8, %s255
      %p257 = scmp.lt.s32.totalorder %s18, 1
      %s258 = scalar_select %p257, %s18, 1
      %p259 = scmp.lt.s32.totalorder %s256, 7
      %s260 = scalar_select %p259, %s256, 7
      %s261 = smul.addr %s260, 3
      %s262 = smul.addr %s258, 24
      %s263 = sadd.s32 %s261, %s262
      %s264 = smul.addr %s263, 2
      %s265 = scalar_lea.vmem %s0, %s264
      %s266 = smul.u32 %s19, 2
      %s267 = ssub.s32 0, %s266
      %s268 = smul.u32 %s18, %s267
      %s269 = sadd.s32 %s19, %s268
      %s270 = smul.u32 8, %s269
      %p271 = scmp.lt.s32.totalorder %s18, 1
      %s272 = scalar_select %p271, %s18, 1
      %s273 = smul.addr %s272, 48
      %s274 = smul.addr %s273, 8
      %s275 = scalar_lea.vmem %s1, %s274
      %p276 = scmp.lt.s32.totalorder %s18, 1
      %s277 = scalar_select %p276, %s18, 1
      %s278 = smul.addr %s277, 3
      %s279 = scalar_lea.vmem %s2, %s278
      %s280 = smul.u32 %s19, 2
      %s281 = ssub.s32 0, %s280
      %s282 = smul.u32 %s18, %s281
      %s283 = sadd.s32 %s19, %s282
      %s284 = smul.u32 8, %s283
      %p285 = scmp.lt.s32.totalorder %s18, 1
      %s286 = scalar_select %p285, %s18, 1
      %p287 = scmp.lt.s32.totalorder %s284, 7
      %s288 = scalar_select %p287, %s284, 7
      %s289 = smul.addr %s286, 8
      %s290 = sadd.s32 %s288, %s289
      %s291 = smul.addr %s290, 2
      %s292 = scalar_lea.vmem %s3, %s291
      %s293 = smul.u32 %s19, 2
      %s294 = ssub.s32 0, %s293
      %s295 = smul.u32 %s18, %s294
      %s296 = sadd.s32 %s19, %s295
      %s297 = smul.u32 8, %s296
      %p298 = scmp.eq.s32.totalorder %s19, 0
      // Predicated region
      $region33: #{speech_model_forward.26} parent=31 // pred_check
        %p299 = pneg %p298
      $region34: #{speech_model_forward.26} parent=31 // pred_check_branch
        %301 = sbr.rel (%p299) target = $region36
      $region35: #{speech_model_forward.26} parent=31 // pred_region
        %302 = vst [vmem:[#allocation2] sm:$0x3] 0.0
      $region36: #{speech_model_forward.26} parent=31 // pred_fallthru
        _
      %v303 = vld [vmem:[%s275] sm:$0xff]
      %v304 = vld [vmem:[%s275 + $0x8] sm:$0xff]
      %v305 = vld [vmem:[%s275 + $0x10] sm:$0xff]
      %v306 = vld [vmem:[%s275 + $0x18] sm:$0xff]
      %v307 = vld [vmem:[%s275 + $0x20] sm:$0xff]
      %v308 = vld [vmem:[%s275 + $0x28] sm:$0xff]
      %v309 = vld [vmem:[%s275 + $0x30] sm:$0xff]
      %v310 = vld [vmem:[%s275 + $0x38] sm:$0xff]
      %v311 = vld [vmem:[%s275 + $0x40] sm:$0xff]
      %v312 = vld [vmem:[%s275 + $0x48] sm:$0xff]
      %v313 = vld [vmem:[%s275 + $0x50] sm:$0xff]
      %v314 = vld [vmem:[%s275 + $0x58] sm:$0xff]
      %v315 = vld [vmem:[%s275 + $0x60] sm:$0xff]
      %v316 = vld [vmem:[%s275 + $0x68] sm:$0xff]
      %v317 = vld [vmem:[%s275 + $0x70] sm:$0xff]
      %v318 = vld [vmem:[%s275 + $0x78] sm:$0xff]
      %v319 = vld [vmem:[%s275 + $0x80] sm:$0xff]
      %v320 = vld [vmem:[%s275 + $0x88] sm:$0xff]
      %v321 = vld [vmem:[%s275 + $0x90] sm:$0xff]
      %v322 = vld [vmem:[%s275 + $0x98] sm:$0xff]
      %v323 = vld [vmem:[%s275 + $0xa0] sm:$0xff]
      %v324 = vld [vmem:[%s275 + $0xa8] sm:$0xff]
      %v325 = vld [vmem:[%s275 + $0xb0] sm:$0xff]
      %v326 = vld [vmem:[%s275 + $0xb8] sm:$0xff]
      %v327 = vld [vmem:[%s275 + $0xc0] sm:$0xff]
      %v328 = vld [vmem:[%s275 + $0xc8] sm:$0xff]
      %v329 = vld [vmem:[%s275 + $0xd0] sm:$0xff]
      %v330 = vld [vmem:[%s275 + $0xd8] sm:$0xff]
      %v331 = vld [vmem:[%s275 + $0xe0] sm:$0xff]
      %v332 = vld [vmem:[%s275 + $0xe8] sm:$0xff]
      %v333 = vld [vmem:[%s275 + $0xf0] sm:$0xff]
      %v334 = vld [vmem:[%s275 + $0xf8] sm:$0xff]
      %v335 = vld [vmem:[%s275 + $0x100] sm:$0xff]
      %v336 = vld [vmem:[%s275 + $0x108] sm:$0xff]
      %v337 = vld [vmem:[%s275 + $0x110] sm:$0xff]
      %v338 = vld [vmem:[%s275 + $0x118] sm:$0xff]
      %v339 = vld [vmem:[%s275 + $0x120] sm:$0xff]
      %v340 = vld [vmem:[%s275 + $0x128] sm:$0xff]
      %v341 = vld [vmem:[%s275 + $0x130] sm:$0xff]
      %v342 = vld [vmem:[%s275 + $0x138] sm:$0xff]
      %v343 = vld [vmem:[%s275 + $0x140] sm:$0xff]
      %v344 = vld [vmem:[%s275 + $0x148] sm:$0xff]
      %v345 = vld [vmem:[%s275 + $0x150] sm:$0xff]
      %v346 = vld [vmem:[%s275 + $0x158] sm:$0xff]
      %v347 = vld [vmem:[%s275 + $0x160] sm:$0xff]
      %v348 = vld [vmem:[%s275 + $0x168] sm:$0xff]
      %v349 = vld [vmem:[%s275 + $0x170] sm:$0xff]
      %v350 = vld [vmem:[%s275 + $0x178] sm:$0xff]
      %v351 = vld [vmem:[%s279] sm:$0x7]
      %p352 = scmp.eq.s32.totalorder %s18, 1
      %s353 = scalar_select %p352, 7, 0
      %v354 = vld [vmem:[#allocation2] sm:$0x3]
      %v356 = vlaneseq
      %v357 = vshrl.u32 %v356, 7
      %v358 = vsub.s32 0, %v357
      %v359 = vrot.slane %v351, %v358
      %v360 = vlaneseq
      %v361 = vshrl.u32 %v360, 7
      %v362 = vsub.s32 1, %v361
      %v363 = vrot.slane %v351, %v362
      %v364 = vlaneseq
      %v365 = vshrl.u32 %v364, 7
      %v366 = vsub.s32 2, %v365
      %v367 = vrot.slane %v351, %v366
      %371 = vmatprep.subr.mxu0 %v349
      %372 = vmatpush1.msra.mxu0 %v348
      %373 = vmatprep.subr.mxu0 %v346
      %374 = vmatpush1.msra.mxu0 %v345
      %375 = vmatprep.subr.mxu0 %v343
      %376 = vmatpush1.msra.mxu0 %v342
      %377 = vmatprep.subr.mxu0 %v340
      %378 = vmatpush1.msra.mxu0 %v339
      %379 = vmatprep.subr.mxu0 %v337
      %380 = vmatpush1.msra.mxu0 %v336
      %381 = vmatprep.subr.mxu0 %v334
      %382 = vmatpush1.msra.mxu0 %v333
      %383 = vmatprep.subr.mxu0 %v331
      %384 = vmatpush1.msra.mxu0 %v330
      %385 = vmatprep.subr.mxu0 %v328
      %386 = vmatpush1.msra.mxu0 %v327
      %387 = vmatprep.subr.mxu0 %v325
      %388 = vmatpush1.msra.mxu0 %v324
      %389 = vmatprep.subr.mxu0 %v322
      %390 = vmatpush1.msra.mxu0 %v321
      %391 = vmatprep.subr.mxu0 %v319
      %392 = vmatpush1.msra.mxu0 %v318
      %393 = vmatprep.subr.mxu0 %v316
      %394 = vmatpush1.msra.mxu0 %v315
      %395 = vmatprep.subr.mxu0 %v313
      %396 = vmatpush1.msra.mxu0 %v312
      %397 = vmatprep.subr.mxu0 %v310
      %398 = vmatpush1.msra.mxu0 %v309
      %399 = vmatprep.subr.mxu0 %v307
      %400 = vmatpush1.msra.mxu0 %v306
      %401 = vmatprep.subr.mxu0 %v304
      %402 = vmatpush1.msra.mxu0 %v303
      %403 = vmatprep.subr.mxu0 0.0
      %404 = vmatpush2.msra.mxu0 0.0
      %405 = vmatprep.subr.mxu0 0.0
      %406 = vmatpush2.msra.mxu0 0.0
      %407 = vmatprep.subr.mxu0 0.0
      %408 = vmatpush2.msra.mxu0 0.0
      %409 = vmatprep.subr.mxu0 0.0
      %410 = vmatpush2.msra.mxu0 0.0
      %411 = vmatprep.subr.mxu0 0.0
      %412 = vmatpush2.msra.mxu0 0.0
      %413 = vmatprep.subr.mxu0 0.0
      %414 = vmatpush2.msra.mxu0 0.0
      %415 = vmatprep.subr.mxu0 0.0
      %416 = vmatpush2.msra.mxu0 0.0
      %417 = vmatprep.subr.mxu0 0.0
      %418 = vmatpush2.msra.mxu0 0.0
      %419 = vmatprep.subr.mxu0 0.0
      %420 = vmatpush2.msra.mxu0 0.0
      %421 = vmatprep.subr.mxu0 0.0
      %422 = vmatpush2.msra.mxu0 0.0
      %423 = vmatprep.subr.mxu0 0.0
      %424 = vmatpush2.msra.mxu0 0.0
      %425 = vmatprep.subr.mxu0 0.0
      %426 = vmatpush2.msra.mxu0 0.0
      %427 = vmatprep.subr.mxu0 0.0
      %428 = vmatpush2.msra.mxu0 0.0
      %429 = vmatprep.subr.mxu0 0.0
      %430 = vmatpush2.msra.mxu0 0.0
      %431 = vmatprep.subr.mxu0 0.0
      %432 = vmatpush2.msra.mxu0 0.0
      %433 = vmatprep.subr.mxu0 0.0
      %434 = vmatpush2.msra.mxu0 0.0
      %435 = vmatprep.mubr.f32.mxu0 0.0
      %436 = vmatmul.mubr.f32.gmra.mxu0 %v354
      %v437 = vpop.f32.mrf.mxu0
      %v438 = vadd.f32 %v359, %v437
      %v439 = vpop.f32.mrf.mxu0
      %v440 = vadd.f32 %v363, %v439
      %441 = vdwg.mxu0
      %442 = vmatprep.subr.mxu0 0.0
      %443 = vmatpush1.msra.mxu0 %v350
      %444 = vmatprep.subr.mxu0 0.0
      %445 = vmatpush1.msra.mxu0 %v347
      %446 = vmatprep.subr.mxu0 0.0
      %447 = vmatpush1.msra.mxu0 %v344
      %448 = vmatprep.subr.mxu0 0.0
      %449 = vmatpush1.msra.mxu0 %v341
      %450 = vmatprep.subr.mxu0 0.0
      %451 = vmatpush1.msra.mxu0 %v338
      %452 = vmatprep.subr.mxu0 0.0
      %453 = vmatpush1.msra.mxu0 %v335
      %454 = vmatprep.subr.mxu0 0.0
      %455 = vmatpush1.msra.mxu0 %v332
      %456 = vmatprep.subr.mxu0 0.0
      %457 = vmatpush1.msra.mxu0 %v329
      %458 = vmatprep.subr.mxu0 0.0
      %459 = vmatpush1.msra.mxu0 %v326
      %460 = vmatprep.subr.mxu0 0.0
      %461 = vmatpush1.msra.mxu0 %v323
      %462 = vmatprep.subr.mxu0 0.0
      %463 = vmatpush1.msra.mxu0 %v320
      %464 = vmatprep.subr.mxu0 0.0
      %465 = vmatpush1.msra.mxu0 %v317
      %466 = vmatprep.subr.mxu0 0.0
      %467 = vmatpush1.msra.mxu0 %v314
      %468 = vmatprep.subr.mxu0 0.0
      %469 = vmatpush1.msra.mxu0 %v311
      %470 = vmatprep.subr.mxu0 0.0
      %471 = vmatpush1.msra.mxu0 %v308
      %472 = vmatprep.subr.mxu0 0.0
      %473 = vmatpush1.msra.mxu0 %v305
      %474 = vmatprep.subr.mxu0 0.0
      %475 = vmatpush2.msra.mxu0 0.0
      %476 = vmatprep.subr.mxu0 0.0
      %477 = vmatpush2.msra.mxu0 0.0
      %478 = vmatprep.subr.mxu0 0.0
      %479 = vmatpush2.msra.mxu0 0.0
      %480 = vmatprep.subr.mxu0 0.0
      %481 = vmatpush2.msra.mxu0 0.0
      %482 = vmatprep.subr.mxu0 0.0
      %483 = vmatpush2.msra.mxu0 0.0
      %484 = vmatprep.subr.mxu0 0.0
      %485 = vmatpush2.msra.mxu0 0.0
      %486 = vmatprep.subr.mxu0 0.0
      %487 = vmatpush2.msra.mxu0 0.0
      %488 = vmatprep.subr.mxu0 0.0
      %489 = vmatpush2.msra.mxu0 0.0
      %490 = vmatprep.subr.mxu0 0.0
      %491 = vmatpush2.msra.mxu0 0.0
      %492 = vmatprep.subr.mxu0 0.0
      %493 = vmatpush2.msra.mxu0 0.0
      %494 = vmatprep.subr.mxu0 0.0
      %495 = vmatpush2.msra.mxu0 0.0
      %496 = vmatprep.subr.mxu0 0.0
      %497 = vmatpush2.msra.mxu0 0.0
      %498 = vmatprep.subr.mxu0 0.0
      %499 = vmatpush2.msra.mxu0 0.0
      %500 = vmatprep.subr.mxu0 0.0
      %501 = vmatpush2.msra.mxu0 0.0
      %502 = vmatprep.subr.mxu0 0.0
      %503 = vmatpush2.msra.mxu0 0.0
      %504 = vmatprep.subr.mxu0 0.0
      %505 = vmatpush2.msra.mxu0 0.0
      %506 = vmatprep.mubr.f32.mxu0 0.0
      %507 = vmatmul.mubr.f32.gmra.mxu0 %v354
      %v508 = vpop.f32.mrf.mxu0
      %v509 = vadd.f32 %v367, %v508
      %v510 = vpop.f32.mrf.mxu0
      %511 = vdwg.mxu0
      %s512 = smul.u32 %s353, 3
      %s513 = smul.addr %s512, 2
      %s514 = scalar_lea.vmem %s265, %s513
      %v515 = vld [vmem:[%s514] sm:$0x3f]
      %v516 = vadd.f32 %v515, %v438
      %v517 = vxor.u32 %v516, 2147483648
      %v518 = vmul.f32 %v517, 1.442695
      %v519 = vpow.pop %v518
      %v520 = vadd.f32 %v519, 1.0
      %v521 = vrcp.pop %v520
      %v522 = vmul.f32 1.0, %v521
      %v524 = vrot.slane %v515, 2
      %v526 = vadd.f32 %v524, %v440
      %v527 = vxor.u32 %v526, 2147483648
      %v528 = vmul.f32 %v527, 1.442695
      %v529 = vpow.pop %v528
      %v530 = vadd.f32 %v529, 1.0
      %v531 = vrcp.pop %v530
      %v532 = vmul.f32 1.0, %v531
      %v533 = vmul.f32 %v522, %v509
      %v534 = vrot.slane %v515, 4
      %v536 = vadd.f32 %v534, %v533
      %v537 = vtanh.pop %v536
      %v538 = vsub.f32 1.0, %v532
      %v539 = vmul.f32 %v538, %v537
      %v540 = vmul.f32 %v532, %v354
      %v541 = vadd.f32 %v539, %v540
      %542 = vst [vmem:[#allocation2] sm:$0x3] %v541
      %s543 = smul.u32 %s353, 2
      %s544 = scalar_lea.vmem %s292, %s543
      %545 = vst [vmem:[%s544] sm:$0x3] %v541
      %s546 = scalar_select %p352, 6, 1
      %v547 = vld [vmem:[#allocation2] sm:$0x3]
      %548 = vmatprep.subr.mxu0 %v349
      %549 = vmatpush1.msra.mxu0 %v348
      %550 = vmatprep.subr.mxu0 %v346
      %551 = vmatpush1.msra.mxu0 %v345
      %552 = vmatprep.subr.mxu0 %v343
      %553 = vmatpush1.msra.mxu0 %v342
      %554 = vmatprep.subr.mxu0 %v340
      %555 = vmatpush1.msra.mxu0 %v339
      %556 = vmatprep.subr.mxu0 %v337
      %557 = vmatpush1.msra.mxu0 %v336
      %558 = vmatprep.subr.mxu0 %v334
      %559 = vmatpush1.msra.mxu0 %v333
      %560 = vmatprep.subr.mxu0 %v331
      %561 = vmatpush1.msra.mxu0 %v330
      %562 = vmatprep.subr.mxu0 %v328
      %563 = vmatpush1.msra.mxu0 %v327
      %564 = vmatprep.subr.mxu0 %v325
      %565 = vmatpush1.msra.mxu0 %v324
      %566 = vmatprep.subr.mxu0 %v322
      %567 = vmatpush1.msra.mxu0 %v321
      %568 = vmatprep.subr.mxu0 %v319
      %569 = vmatpush1.msra.mxu0 %v318
      %570 = vmatprep.subr.mxu0 %v316
      %571 = vmatpush1.msra.mxu0 %v315
      %572 = vmatprep.subr.mxu0 %v313
      %573 = vmatpush1.msra.mxu0 %v312
      %574 = vmatprep.subr.mxu0 %v310
      %575 = vmatpush1.msra.mxu0 %v309
      %576 = vmatprep.subr.mxu0 %v307
      %577 = vmatpush1.msra.mxu0 %v306
      %578 = vmatprep.subr.mxu0 %v304
      %579 = vmatpush1.msra.mxu0 %v303
      %580 = vmatprep.subr.mxu0 0.0
      %581 = vmatpush2.msra.mxu0 0.0
      %582 = vmatprep.subr.mxu0 0.0
      %583 = vmatpush2.msra.mxu0 0.0
      %584 = vmatprep.subr.mxu0 0.0
      %585 = vmatpush2.msra.mxu0 0.0
      %586 = vmatprep.subr.mxu0 0.0
      %587 = vmatpush2.msra.mxu0 0.0
      %588 = vmatprep.subr.mxu0 0.0
      %589 = vmatpush2.msra.mxu0 0.0
      %590 = vmatprep.subr.mxu0 0.0
      %591 = vmatpush2.msra.mxu0 0.0
      %592 = vmatprep.subr.mxu0 0.0
      %593 = vmatpush2.msra.mxu0 0.0
      %594 = vmatprep.subr.mxu0 0.0
      %595 = vmatpush2.msra.mxu0 0.0
      %596 = vmatprep.subr.mxu0 0.0
      %597 = vmatpush2.msra.mxu0 0.0
      %598 = vmatprep.subr.mxu0 0.0
      %599 = vmatpush2.msra.mxu0 0.0
      %600 = vmatprep.subr.mxu0 0.0
      %601 = vmatpush2.msra.mxu0 0.0
      %602 = vmatprep.subr.mxu0 0.0
      %603 = vmatpush2.msra.mxu0 0.0
      %604 = vmatprep.subr.mxu0 0.0
      %605 = vmatpush2.msra.mxu0 0.0
      %606 = vmatprep.subr.mxu0 0.0
      %607 = vmatpush2.msra.mxu0 0.0
      %608 = vmatprep.subr.mxu0 0.0
      %609 = vmatpush2.msra.mxu0 0.0
      %610 = vmatprep.subr.mxu0 0.0
      %611 = vmatpush2.msra.mxu0 0.0
      %612 = vmatprep.mubr.f32.mxu0 0.0
      %613 = vmatmul.mubr.f32.gmra.mxu0 %v547
      %v614 = vpop.f32.mrf.mxu0
      %v615 = vadd.f32 %v359, %v614
      %v616 = vpop.f32.mrf.mxu0
      %v617 = vadd.f32 %v363, %v616
      %618 = vdwg.mxu0
      %619 = vmatprep.subr.mxu0 0.0
      %620 = vmatpush1.msra.mxu0 %v350
      %621 = vmatprep.subr.mxu0 0.0
      %622 = vmatpush1.msra.mxu0 %v347
      %623 = vmatprep.subr.mxu0 0.0
      %624 = vmatpush1.msra.mxu0 %v344
      %625 = vmatprep.subr.mxu0 0.0
      %626 = vmatpush1.msra.mxu0 %v341
      %627 = vmatprep.subr.mxu0 0.0
      %628 = vmatpush1.msra.mxu0 %v338
      %629 = vmatprep.subr.mxu0 0.0
      %630 = vmatpush1.msra.mxu0 %v335
      %631 = vmatprep.subr.mxu0 0.0
      %632 = vmatpush1.msra.mxu0 %v332
      %633 = vmatprep.subr.mxu0 0.0
      %634 = vmatpush1.msra.mxu0 %v329
      %635 = vmatprep.subr.mxu0 0.0
      %636 = vmatpush1.msra.mxu0 %v326
      %637 = vmatprep.subr.mxu0 0.0
      %638 = vmatpush1.msra.mxu0 %v323
      %639 = vmatprep.subr.mxu0 0.0
      %640 = vmatpush1.msra.mxu0 %v320
      %641 = vmatprep.subr.mxu0 0.0
      %642 = vmatpush1.msra.mxu0 %v317
      %643 = vmatprep.subr.mxu0 0.0
      %644 = vmatpush1.msra.mxu0 %v314
      %645 = vmatprep.subr.mxu0 0.0
      %646 = vmatpush1.msra.mxu0 %v311
      %647 = vmatprep.subr.mxu0 0.0
      %648 = vmatpush1.msra.mxu0 %v308
      %649 = vmatprep.subr.mxu0 0.0
      %650 = vmatpush1.msra.mxu0 %v305
      %651 = vmatprep.subr.mxu0 0.0
      %652 = vmatpush2.msra.mxu0 0.0
      %653 = vmatprep.subr.mxu0 0.0
      %654 = vmatpush2.msra.mxu0 0.0
      %655 = vmatprep.subr.mxu0 0.0
      %656 = vmatpush2.msra.mxu0 0.0
      %657 = vmatprep.subr.mxu0 0.0
      %658 = vmatpush2.msra.mxu0 0.0
      %659 = vmatprep.subr.mxu0 0.0
      %660 = vmatpush2.msra.mxu0 0.0
      %661 = vmatprep.subr.mxu0 0.0
      %662 = vmatpush2.msra.mxu0 0.0
      %663 = vmatprep.subr.mxu0 0.0
      %664 = vmatpush2.msra.mxu0 0.0
      %665 = vmatprep.subr.mxu0 0.0
      %666 = vmatpush2.msra.mxu0 0.0
      %667 = vmatprep.subr.mxu0 0.0
      %668 = vmatpush2.msra.mxu0 0.0
      %669 = vmatprep.subr.mxu0 0.0
      %670 = vmatpush2.msra.mxu0 0.0
      %671 = vmatprep.subr.mxu0 0.0
      %672 = vmatpush2.msra.mxu0 0.0
      %673 = vmatprep.subr.mxu0 0.0
      %674 = vmatpush2.msra.mxu0 0.0
      %675 = vmatprep.subr.mxu0 0.0
      %676 = vmatpush2.msra.mxu0 0.0
      %677 = vmatprep.subr.mxu0 0.0
      %678 = vmatpush2.msra.mxu0 0.0
      %679 = vmatprep.subr.mxu0 0.0
      %680 = vmatpush2.msra.mxu0 0.0
      %681 = vmatprep.subr.mxu0 0.0
      %682 = vmatpush2.msra.mxu0 0.0
      %683 = vmatprep.mubr.f32.mxu0 0.0
      %684 = vmatmul.mubr.f32.gmra.mxu0 %v547
      %v685 = vpop.f32.mrf.mxu0
      %v686 = vadd.f32 %v367, %v685
      %v687 = vpop.f32.mrf.mxu0
      %688 = vdwg.mxu0
      %s689 = smul.u32 %s546, 3
      %s690 = smul.addr %s689, 2
      %s691 = scalar_lea.vmem %s265, %s690
      %v692 = vld [vmem:[%s691] sm:$0x3f]
      %v693 = vadd.f32 %v692, %v615
      %v694 = vxor.u32 %v693, 2147483648
      %v695 = vmul.f32 %v694, 1.442695
      %v696 = vpow.pop %v695
      %v697 = vadd.f32 %v696, 1.0
      %v698 = vrcp.pop %v697
      %v699 = vmul.f32 1.0, %v698
      %v701 = vrot.slane %v692, 2
      %v703 = vadd.f32 %v701, %v617
      %v704 = vxor.u32 %v703, 2147483648
      %v705 = vmul.f32 %v704, 1.442695
      %v706 = vpow.pop %v705
      %v707 = vadd.f32 %v706, 1.0
      %v708 = vrcp.pop %v707
      %v709 = vmul.f32 1.0, %v708
      %v710 = vmul.f32 %v699, %v686
      %v711 = vrot.slane %v692, 4
      %v713 = vadd.f32 %v711, %v710
      %v714 = vtanh.pop %v713
      %v715 = vsub.f32 1.0, %v709
      %v716 = vmul.f32 %v715, %v714
      %v717 = vmul.f32 %v709, %v547
      %v718 = vadd.f32 %v716, %v717
      %719 = vst [vmem:[#allocation2] sm:$0x3] %v718
      %s720 = smul.u32 %s546, 2
      %s721 = scalar_lea.vmem %s292, %s720
      %722 = vst [vmem:[%s721] sm:$0x3] %v718
      %s723 = scalar_select %p352, 5, 2
      %v724 = vld [vmem:[#allocation2] sm:$0x3]
      %725 = vmatprep.subr.mxu0 %v349
      %726 = vmatpush1.msra.mxu0 %v348
      %727 = vmatprep.subr.mxu0 %v346
      %728 = vmatpush1.msra.mxu0 %v345
      %729 = vmatprep.subr.mxu0 %v343
      %730 = vmatpush1.msra.mxu0 %v342
      %731 = vmatprep.subr.mxu0 %v340
      %732 = vmatpush1.msra.mxu0 %v339
      %733 = vmatprep.subr.mxu0 %v337
      %734 = vmatpush1.msra.mxu0 %v336
      %735 = vmatprep.subr.mxu0 %v334
      %736 = vmatpush1.msra.mxu0 %v333
      %737 = vmatprep.subr.mxu0 %v331
      %738 = vmatpush1.msra.mxu0 %v330
      %739 = vmatprep.subr.mxu0 %v328
      %740 = vmatpush1.msra.mxu0 %v327
      %741 = vmatprep.subr.mxu0 %v325
      %742 = vmatpush1.msra.mxu0 %v324
      %743 = vmatprep.subr.mxu0 %v322
      %744 = vmatpush1.msra.mxu0 %v321
      %745 = vmatprep.subr.mxu0 %v319
      %746 = vmatpush1.msra.mxu0 %v318
      %747 = vmatprep.subr.mxu0 %v316
      %748 = vmatpush1.msra.mxu0 %v315
      %749 = vmatprep.subr.mxu0 %v313
      %750 = vmatpush1.msra.mxu0 %v312
      %751 = vmatprep.subr.mxu0 %v310
      %752 = vmatpush1.msra.mxu0 %v309
      %753 = vmatprep.subr.mxu0 %v307
      %754 = vmatpush1.msra.mxu0 %v306
      %755 = vmatprep.subr.mxu0 %v304
      %756 = vmatpush1.msra.mxu0 %v303
      %757 = vmatprep.subr.mxu0 0.0
      %758 = vmatpush2.msra.mxu0 0.0
      %759 = vmatprep.subr.mxu0 0.0
      %760 = vmatpush2.msra.mxu0 0.0
      %761 = vmatprep.subr.mxu0 0.0
      %762 = vmatpush2.msra.mxu0 0.0
      %763 = vmatprep.subr.mxu0 0.0
      %764 = vmatpush2.msra.mxu0 0.0
      %765 = vmatprep.subr.mxu0 0.0
      %766 = vmatpush2.msra.mxu0 0.0
      %767 = vmatprep.subr.mxu0 0.0
      %768 = vmatpush2.msra.mxu0 0.0
      %769 = vmatprep.subr.mxu0 0.0
      %770 = vmatpush2.msra.mxu0 0.0
      %771 = vmatprep.subr.mxu0 0.0
      %772 = vmatpush2.msra.mxu0 0.0
      %773 = vmatprep.subr.mxu0 0.0
      %774 = vmatpush2.msra.mxu0 0.0
      %775 = vmatprep.subr.mxu0 0.0
      %776 = vmatpush2.msra.mxu0 0.0
      %777 = vmatprep.subr.mxu0 0.0
      %778 = vmatpush2.msra.mxu0 0.0
      %779 = vmatprep.subr.mxu0 0.0
      %780 = vmatpush2.msra.mxu0 0.0
      %781 = vmatprep.subr.mxu0 0.0
      %782 = vmatpush2.msra.mxu0 0.0
      %783 = vmatprep.subr.mxu0 0.0
      %784 = vmatpush2.msra.mxu0 0.0
      %785 = vmatprep.subr.mxu0 0.0
      %786 = vmatpush2.msra.mxu0 0.0
      %787 = vmatprep.subr.mxu0 0.0
      %788 = vmatpush2.msra.mxu0 0.0
      %789 = vmatprep.mubr.f32.mxu0 0.0
      %790 = vmatmul.mubr.f32.gmra.mxu0 %v724
      %v791 = vpop.f32.mrf.mxu0
      %v792 = vadd.f32 %v359, %v791
      %v793 = vpop.f32.mrf.mxu0
      %v794 = vadd.f32 %v363, %v793
      %795 = vdwg.mxu0
      %796 = vmatprep.subr.mxu0 0.0
      %797 = vmatpush1.msra.mxu0 %v350
      %798 = vmatprep.subr.mxu0 0.0
      %799 = vmatpush1.msra.mxu0 %v347
      %800 = vmatprep.subr.mxu0 0.0
      %801 = vmatpush1.msra.mxu0 %v344
      %802 = vmatprep.subr.mxu0 0.0
      %803 = vmatpush1.msra.mxu0 %v341
      %804 = vmatprep.subr.mxu0 0.0
      %805 = vmatpush1.msra.mxu0 %v338
      %806 = vmatprep.subr.mxu0 0.0
      %807 = vmatpush1.msra.mxu0 %v335
      %808 = vmatprep.subr.mxu0 0.0
      %809 = vmatpush1.msra.mxu0 %v332
      %810 = vmatprep.subr.mxu0 0.0
      %811 = vmatpush1.msra.mxu0 %v329
      %812 = vmatprep.subr.mxu0 0.0
      %813 = vmatpush1.msra.mxu0 %v326
      %814 = vmatprep.subr.mxu0 0.0
      %815 = vmatpush1.msra.mxu0 %v323
      %816 = vmatprep.subr.mxu0 0.0
      %817 = vmatpush1.msra.mxu0 %v320
      %818 = vmatprep.subr.mxu0 0.0
      %819 = vmatpush1.msra.mxu0 %v317
      %820 = vmatprep.subr.mxu0 0.0
      %821 = vmatpush1.msra.mxu0 %v314
      %822 = vmatprep.subr.mxu0 0.0
      %823 = vmatpush1.msra.mxu0 %v311
      %824 = vmatprep.subr.mxu0 0.0
      %825 = vmatpush1.msra.mxu0 %v308
      %826 = vmatprep.subr.mxu0 0.0
      %827 = vmatpush1.msra.mxu0 %v305
      %828 = vmatprep.subr.mxu0 0.0
      %829 = vmatpush2.msra.mxu0 0.0
      %830 = vmatprep.subr.mxu0 0.0
      %831 = vmatpush2.msra.mxu0 0.0
      %832 = vmatprep.subr.mxu0 0.0
      %833 = vmatpush2.msra.mxu0 0.0
      %834 = vmatprep.subr.mxu0 0.0
      %835 = vmatpush2.msra.mxu0 0.0
      %836 = vmatprep.subr.mxu0 0.0
      %837 = vmatpush2.msra.mxu0 0.0
      %838 = vmatprep.subr.mxu0 0.0
      %839 = vmatpush2.msra.mxu0 0.0
      %840 = vmatprep.subr.mxu0 0.0
      %841 = vmatpush2.msra.mxu0 0.0
      %842 = vmatprep.subr.mxu0 0.0
      %843 = vmatpush2.msra.mxu0 0.0
      %844 = vmatprep.subr.mxu0 0.0
      %845 = vmatpush2.msra.mxu0 0.0
      %846 = vmatprep.subr.mxu0 0.0
      %847 = vmatpush2.msra.mxu0 0.0
      %848 = vmatprep.subr.mxu0 0.0
      %849 = vmatpush2.msra.mxu0 0.0
      %850 = vmatprep.subr.mxu0 0.0
      %851 = vmatpush2.msra.mxu0 0.0
      %852 = vmatprep.subr.mxu0 0.0
      %853 = vmatpush2.msra.mxu0 0.0
      %854 = vmatprep.subr.mxu0 0.0
      %855 = vmatpush2.msra.mxu0 0.0
      %856 = vmatprep.subr.mxu0 0.0
      %857 = vmatpush2.msra.mxu0 0.0
      %858 = vmatprep.subr.mxu0 0.0
      %859 = vmatpush2.msra.mxu0 0.0
      %860 = vmatprep.mubr.f32.mxu0 0.0
      %861 = vmatmul.mubr.f32.gmra.mxu0 %v724
      %v862 = vpop.f32.mrf.mxu0
      %v863 = vadd.f32 %v367, %v862
      %v864 = vpop.f32.mrf.mxu0
      %865 = vdwg.mxu0
      %s866 = smul.u32 %s723, 3
      %s867 = smul.addr %s866, 2
      %s868 = scalar_lea.vmem %s265, %s867
      %v869 = vld [vmem:[%s868] sm:$0x3f]
      %v870 = vadd.f32 %v869, %v792
      %v871 = vxor.u32 %v870, 2147483648
      %v872 = vmul.f32 %v871, 1.442695
      %v873 = vpow.pop %v872
      %v874 = vadd.f32 %v873, 1.0
      %v875 = vrcp.pop %v874
      %v876 = vmul.f32 1.0, %v875
      %v878 = vrot.slane %v869, 2
      %v880 = vadd.f32 %v878, %v794
      %v881 = vxor.u32 %v880, 2147483648
      %v882 = vmul.f32 %v881, 1.442695
      %v883 = vpow.pop %v882
      %v884 = vadd.f32 %v883, 1.0
      %v885 = vrcp.pop %v884
      %v886 = vmul.f32 1.0, %v885
      %v887 = vmul.f32 %v876, %v863
      %v888 = vrot.slane %v869, 4
      %v890 = vadd.f32 %v888, %v887
      %v891 = vtanh.pop %v890
      %v892 = vsub.f32 1.0, %v886
      %v893 = vmul.f32 %v892, %v891
      %v894 = vmul.f32 %v886, %v724
      %v895 = vadd.f32 %v893, %v894
      %896 = vst [vmem:[#allocation2] sm:$0x3] %v895
      %s897 = smul.u32 %s723, 2
      %s898 = scalar_lea.vmem %s292, %s897
      %899 = vst [vmem:[%s898] sm:$0x3] %v895
      %s900 = scalar_select %p352, 4, 3
      %v901 = vld [vmem:[#allocation2] sm:$0x3]
      %902 = vmatprep.subr.mxu0 %v349
      %903 = vmatpush1.msra.mxu0 %v348
      %904 = vmatprep.subr.mxu0 %v346
      %905 = vmatpush1.msra.mxu0 %v345
      %906 = vmatprep.subr.mxu0 %v343
      %907 = vmatpush1.msra.mxu0 %v342
      %908 = vmatprep.subr.mxu0 %v340
      %909 = vmatpush1.msra.mxu0 %v339
      %910 = vmatprep.subr.mxu0 %v337
      %911 = vmatpush1.msra.mxu0 %v336
      %912 = vmatprep.subr.mxu0 %v334
      %913 = vmatpush1.msra.mxu0 %v333
      %914 = vmatprep.subr.mxu0 %v331
      %915 = vmatpush1.msra.mxu0 %v330
      %916 = vmatprep.subr.mxu0 %v328
      %917 = vmatpush1.msra.mxu0 %v327
      %918 = vmatprep.subr.mxu0 %v325
      %919 = vmatpush1.msra.mxu0 %v324
      %920 = vmatprep.subr.mxu0 %v322
      %921 = vmatpush1.msra.mxu0 %v321
      %922 = vmatprep.subr.mxu0 %v319
      %923 = vmatpush1.msra.mxu0 %v318
      %924 = vmatprep.subr.mxu0 %v316
      %925 = vmatpush1.msra.mxu0 %v315
      %926 = vmatprep.subr.mxu0 %v313
      %927 = vmatpush1.msra.mxu0 %v312
      %928 = vmatprep.subr.mxu0 %v310
      %929 = vmatpush1.msra.mxu0 %v309
      %930 = vmatprep.subr.mxu0 %v307
      %931 = vmatpush1.msra.mxu0 %v306
      %932 = vmatprep.subr.mxu0 %v304
      %933 = vmatpush1.msra.mxu0 %v303
      %934 = vmatprep.subr.mxu0 0.0
      %935 = vmatpush2.msra.mxu0 0.0
      %936 = vmatprep.subr.mxu0 0.0
      %937 = vmatpush2.msra.mxu0 0.0
      %938 = vmatprep.subr.mxu0 0.0
      %939 = vmatpush2.msra.mxu0 0.0
      %940 = vmatprep.subr.mxu0 0.0
      %941 = vmatpush2.msra.mxu0 0.0
      %942 = vmatprep.subr.mxu0 0.0
      %943 = vmatpush2.msra.mxu0 0.0
      %944 = vmatprep.subr.mxu0 0.0
      %945 = vmatpush2.msra.mxu0 0.0
      %946 = vmatprep.subr.mxu0 0.0
      %947 = vmatpush2.msra.mxu0 0.0
      %948 = vmatprep.subr.mxu0 0.0
      %949 = vmatpush2.msra.mxu0 0.0
      %950 = vmatprep.subr.mxu0 0.0
      %951 = vmatpush2.msra.mxu0 0.0
      %952 = vmatprep.subr.mxu0 0.0
      %953 = vmatpush2.msra.mxu0 0.0
      %954 = vmatprep.subr.mxu0 0.0
      %955 = vmatpush2.msra.mxu0 0.0
      %956 = vmatprep.subr.mxu0 0.0
      %957 = vmatpush2.msra.mxu0 0.0
      %958 = vmatprep.subr.mxu0 0.0
      %959 = vmatpush2.msra.mxu0 0.0
      %960 = vmatprep.subr.mxu0 0.0
      %961 = vmatpush2.msra.mxu0 0.0
      %962 = vmatprep.subr.mxu0 0.0
      %963 = vmatpush2.msra.mxu0 0.0
      %964 = vmatprep.subr.mxu0 0.0
      %965 = vmatpush2.msra.mxu0 0.0
      %966 = vmatprep.mubr.f32.mxu0 0.0
      %967 = vmatmul.mubr.f32.gmra.mxu0 %v901
      %v968 = vpop.f32.mrf.mxu0
      %v969 = vadd.f32 %v359, %v968
      %v970 = vpop.f32.mrf.mxu0
      %v971 = vadd.f32 %v363, %v970
      %972 = vdwg.mxu0
      %973 = vmatprep.subr.mxu0 0.0
      %974 = vmatpush1.msra.mxu0 %v350
      %975 = vmatprep.subr.mxu0 0.0
      %976 = vmatpush1.msra.mxu0 %v347
      %977 = vmatprep.subr.mxu0 0.0
      %978 = vmatpush1.msra.mxu0 %v344
      %979 = vmatprep.subr.mxu0 0.0
      %980 = vmatpush1.msra.mxu0 %v341
      %981 = vmatprep.subr.mxu0 0.0
      %982 = vmatpush1.msra.mxu0 %v338
      %983 = vmatprep.subr.mxu0 0.0
      %984 = vmatpush1.msra.mxu0 %v335
      %985 = vmatprep.subr.mxu0 0.0
      %986 = vmatpush1.msra.mxu0 %v332
      %987 = vmatprep.subr.mxu0 0.0
      %988 = vmatpush1.msra.mxu0 %v329
      %989 = vmatprep.subr.mxu0 0.0
      %990 = vmatpush1.msra.mxu0 %v326
      %991 = vmatprep.subr.mxu0 0.0
      %992 = vmatpush1.msra.mxu0 %v323
      %993 = vmatprep.subr.mxu0 0.0
      %994 = vmatpush1.msra.mxu0 %v320
      %995 = vmatprep.subr.mxu0 0.0
      %996 = vmatpush1.msra.mxu0 %v317
      %997 = vmatprep.subr.mxu0 0.0
      %998 = vmatpush1.msra.mxu0 %v314
      %999 = vmatprep.subr.mxu0 0.0
      %1000 = vmatpush1.msra.mxu0 %v311
      %1001 = vmatprep.subr.mxu0 0.0
      %1002 = vmatpush1.msra.mxu0 %v308
      %1003 = vmatprep.subr.mxu0 0.0
      %1004 = vmatpush1.msra.mxu0 %v305
      %1005 = vmatprep.subr.mxu0 0.0
      %1006 = vmatpush2.msra.mxu0 0.0
      %1007 = vmatprep.subr.mxu0 0.0
      %1008 = vmatpush2.msra.mxu0 0.0
      %1009 = vmatprep.subr.mxu0 0.0
      %1010 = vmatpush2.msra.mxu0 0.0
      %1011 = vmatprep.subr.mxu0 0.0
      %1012 = vmatpush2.msra.mxu0 0.0
      %1013 = vmatprep.subr.mxu0 0.0
      %1014 = vmatpush2.msra.mxu0 0.0
      %1015 = vmatprep.subr.mxu0 0.0
      %1016 = vmatpush2.msra.mxu0 0.0
      %1017 = vmatprep.subr.mxu0 0.0
      %1018 = vmatpush2.msra.mxu0 0.0
      %1019 = vmatprep.subr.mxu0 0.0
      %1020 = vmatpush2.msra.mxu0 0.0
      %1021 = vmatprep.subr.mxu0 0.0
      %1022 = vmatpush2.msra.mxu0 0.0
      %1023 = vmatprep.subr.mxu0 0.0
      %1024 = vmatpush2.msra.mxu0 0.0
      %1025 = vmatprep.subr.mxu0 0.0
      %1026 = vmatpush2.msra.mxu0 0.0
      %1027 = vmatprep.subr.mxu0 0.0
      %1028 = vmatpush2.msra.mxu0 0.0
      %1029 = vmatprep.subr.mxu0 0.0
      %1030 = vmatpush2.msra.mxu0 0.0
      %1031 = vmatprep.subr.mxu0 0.0
      %1032 = vmatpush2.msra.mxu0 0.0
      %1033 = vmatprep.subr.mxu0 0.0
      %1034 = vmatpush2.msra.mxu0 0.0
      %1035 = vmatprep.subr.mxu0 0.0
      %1036 = vmatpush2.msra.mxu0 0.0
      %1037 = vmatprep.mubr.f32.mxu0 0.0
      %1038 = vmatmul.mubr.f32.gmra.mxu0 %v901
      %v1039 = vpop.f32.mrf.mxu0
      %v1040 = vadd.f32 %v367, %v1039
      %v1041 = vpop.f32.mrf.mxu0
      %1042 = vdwg.mxu0
      %s1043 = smul.u32 %s900, 3
      %s1044 = smul.addr %s1043, 2
      %s1045 = scalar_lea.vmem %s265, %s1044
      %v1046 = vld [vmem:[%s1045] sm:$0x3f]
      %v1047 = vadd.f32 %v1046, %v969
      %v1048 = vxor.u32 %v1047, 2147483648
      %v1049 = vmul.f32 %v1048, 1.442695
      %v1050 = vpow.pop %v1049
      %v1051 = vadd.f32 %v1050, 1.0
      %v1052 = vrcp.pop %v1051
      %v1053 = vmul.f32 1.0, %v1052
      %v1055 = vrot.slane %v1046, 2
      %v1057 = vadd.f32 %v1055, %v971
      %v1058 = vxor.u32 %v1057, 2147483648
      %v1059 = vmul.f32 %v1058, 1.442695
      %v1060 = vpow.pop %v1059
      %v1061 = vadd.f32 %v1060, 1.0
      %v1062 = vrcp.pop %v1061
      %v1063 = vmul.f32 1.0, %v1062
      %v1064 = vmul.f32 %v1053, %v1040
      %v1065 = vrot.slane %v1046, 4
      %v1067 = vadd.f32 %v1065, %v1064
      %v1068 = vtanh.pop %v1067
      %v1069 = vsub.f32 1.0, %v1063
      %v1070 = vmul.f32 %v1069, %v1068
      %v1071 = vmul.f32 %v1063, %v901
      %v1072 = vadd.f32 %v1070, %v1071
      %1073 = vst [vmem:[#allocation2] sm:$0x3] %v1072
      %s1074 = smul.u32 %s900, 2
      %s1075 = scalar_lea.vmem %s292, %s1074
      %1076 = vst [vmem:[%s1075] sm:$0x3] %v1072
      %s1077 = scalar_select %p352, 3, 4
      %v1078 = vld [vmem:[#allocation2] sm:$0x3]
      %1079 = vmatprep.subr.mxu0 %v349
      %1080 = vmatpush1.msra.mxu0 %v348
      %1081 = vmatprep.subr.mxu0 %v346
      %1082 = vmatpush1.msra.mxu0 %v345
      %1083 = vmatprep.subr.mxu0 %v343
      %1084 = vmatpush1.msra.mxu0 %v342
      %1085 = vmatprep.subr.mxu0 %v340
      %1086 = vmatpush1.msra.mxu0 %v339
      %1087 = vmatprep.subr.mxu0 %v337
      %1088 = vmatpush1.msra.mxu0 %v336
      %1089 = vmatprep.subr.mxu0 %v334
      %1090 = vmatpush1.msra.mxu0 %v333
      %1091 = vmatprep.subr.mxu0 %v331
      %1092 = vmatpush1.msra.mxu0 %v330
      %1093 = vmatprep.subr.mxu0 %v328
      %1094 = vmatpush1.msra.mxu0 %v327
      %1095 = vmatprep.subr.mxu0 %v325
      %1096 = vmatpush1.msra.mxu0 %v324
      %1097 = vmatprep.subr.mxu0 %v322
      %1098 = vmatpush1.msra.mxu0 %v321
      %1099 = vmatprep.subr.mxu0 %v319
      %1100 = vmatpush1.msra.mxu0 %v318
      %1101 = vmatprep.subr.mxu0 %v316
      %1102 = vmatpush1.msra.mxu0 %v315
      %1103 = vmatprep.subr.mxu0 %v313
      %1104 = vmatpush1.msra.mxu0 %v312
      %1105 = vmatprep.subr.mxu0 %v310
      %1106 = vmatpush1.msra.mxu0 %v309
      %1107 = vmatprep.subr.mxu0 %v307
      %1108 = vmatpush1.msra.mxu0 %v306
      %1109 = vmatprep.subr.mxu0 %v304
      %1110 = vmatpush1.msra.mxu0 %v303
      %1111 = vmatprep.subr.mxu0 0.0
      %1112 = vmatpush2.msra.mxu0 0.0
      %1113 = vmatprep.subr.mxu0 0.0
      %1114 = vmatpush2.msra.mxu0 0.0
      %1115 = vmatprep.subr.mxu0 0.0
      %1116 = vmatpush2.msra.mxu0 0.0
      %1117 = vmatprep.subr.mxu0 0.0
      %1118 = vmatpush2.msra.mxu0 0.0
      %1119 = vmatprep.subr.mxu0 0.0
      %1120 = vmatpush2.msra.mxu0 0.0
      %1121 = vmatprep.subr.mxu0 0.0
      %1122 = vmatpush2.msra.mxu0 0.0
      %1123 = vmatprep.subr.mxu0 0.0
      %1124 = vmatpush2.msra.mxu0 0.0
      %1125 = vmatprep.subr.mxu0 0.0
      %1126 = vmatpush2.msra.mxu0 0.0
      %1127 = vmatprep.subr.mxu0 0.0
      %1128 = vmatpush2.msra.mxu0 0.0
      %1129 = vmatprep.subr.mxu0 0.0
      %1130 = vmatpush2.msra.mxu0 0.0
      %1131 = vmatprep.subr.mxu0 0.0
      %1132 = vmatpush2.msra.mxu0 0.0
      %1133 = vmatprep.subr.mxu0 0.0
      %1134 = vmatpush2.msra.mxu0 0.0
      %1135 = vmatprep.subr.mxu0 0.0
      %1136 = vmatpush2.msra.mxu0 0.0
      %1137 = vmatprep.subr.mxu0 0.0
      %1138 = vmatpush2.msra.mxu0 0.0
      %1139 = vmatprep.subr.mxu0 0.0
      %1140 = vmatpush2.msra.mxu0 0.0
      %1141 = vmatprep.subr.mxu0 0.0
      %1142 = vmatpush2.msra.mxu0 0.0
      %1143 = vmatprep.mubr.f32.mxu0 0.0
      %1144 = vmatmul.mubr.f32.gmra.mxu0 %v1078
      %v1145 = vpop.f32.mrf.mxu0
      %v1146 = vadd.f32 %v359, %v1145
      %v1147 = vpop.f32.mrf.mxu0
      %v1148 = vadd.f32 %v363, %v1147
      %1149 = vdwg.mxu0
      %1150 = vmatprep.subr.mxu0 0.0
      %1151 = vmatpush1.msra.mxu0 %v350
      %1152 = vmatprep.subr.mxu0 0.0
      %1153 = vmatpush1.msra.mxu0 %v347
      %1154 = vmatprep.subr.mxu0 0.0
      %1155 = vmatpush1.msra.mxu0 %v344
      %1156 = vmatprep.subr.mxu0 0.0
      %1157 = vmatpush1.msra.mxu0 %v341
      %1158 = vmatprep.subr.mxu0 0.0
      %1159 = vmatpush1.msra.mxu0 %v338
      %1160 = vmatprep.subr.mxu0 0.0
      %1161 = vmatpush1.msra.mxu0 %v335
      %1162 = vmatprep.subr.mxu0 0.0
      %1163 = vmatpush1.msra.mxu0 %v332
      %1164 = vmatprep.subr.mxu0 0.0
      %1165 = vmatpush1.msra.mxu0 %v329
      %1166 = vmatprep.subr.mxu0 0.0
      %1167 = vmatpush1.msra.mxu0 %v326
      %1168 = vmatprep.subr.mxu0 0.0
      %1169 = vmatpush1.msra.mxu0 %v323
      %1170 = vmatprep.subr.mxu0 0.0
      %1171 = vmatpush1.msra.mxu0 %v320
      %1172 = vmatprep.subr.mxu0 0.0
      %1173 = vmatpush1.msra.mxu0 %v317
      %1174 = vmatprep.subr.mxu0 0.0
      %1175 = vmatpush1.msra.mxu0 %v314
      %1176 = vmatprep.subr.mxu0 0.0
      %1177 = vmatpush1.msra.mxu0 %v311
      %1178 = vmatprep.subr.mxu0 0.0
      %1179 = vmatpush1.msra.mxu0 %v308
      %1180 = vmatprep.subr.mxu0 0.0
      %1181 = vmatpush1.msra.mxu0 %v305
      %1182 = vmatprep.subr.mxu0 0.0
      %1183 = vmatpush2.msra.mxu0 0.0
      %1184 = vmatprep.subr.mxu0 0.0
      %1185 = vmatpush2.msra.mxu0 0.0
      %1186 = vmatprep.subr.mxu0 0.0
      %1187 = vmatpush2.msra.mxu0 0.0
      %1188 = vmatprep.subr.mxu0 0.0
      %1189 = vmatpush2.msra.mxu0 0.0
      %1190 = vmatprep.subr.mxu0 0.0
      %1191 = vmatpush2.msra.mxu0 0.0
      %1192 = vmatprep.subr.mxu0 0.0
      %1193 = vmatpush2.msra.mxu0 0.0
      %1194 = vmatprep.subr.mxu0 0.0
      %1195 = vmatpush2.msra.mxu0 0.0
      %1196 = vmatprep.subr.mxu0 0.0
      %1197 = vmatpush2.msra.mxu0 0.0
      %1198 = vmatprep.subr.mxu0 0.0
      %1199 = vmatpush2.msra.mxu0 0.0
      %1200 = vmatprep.subr.mxu0 0.0
      %1201 = vmatpush2.msra.mxu0 0.0
      %1202 = vmatprep.subr.mxu0 0.0
      %1203 = vmatpush2.msra.mxu0 0.0
      %1204 = vmatprep.subr.mxu0 0.0
      %1205 = vmatpush2.msra.mxu0 0.0
      %1206 = vmatprep.subr.mxu0 0.0
      %1207 = vmatpush2.msra.mxu0 0.0
      %1208 = vmatprep.subr.mxu0 0.0
      %1209 = vmatpush2.msra.mxu0 0.0
      %1210 = vmatprep.subr.mxu0 0.0
      %1211 = vmatpush2.msra.mxu0 0.0
      %1212 = vmatprep.subr.mxu0 0.0
      %1213 = vmatpush2.msra.mxu0 0.0
      %1214 = vmatprep.mubr.f32.mxu0 0.0
      %1215 = vmatmul.mubr.f32.gmra.mxu0 %v1078
      %v1216 = vpop.f32.mrf.mxu0
      %v1217 = vadd.f32 %v367, %v1216
      %v1218 = vpop.f32.mrf.mxu0
      %1219 = vdwg.mxu0
      %s1220 = smul.u32 %s1077, 3
      %s1221 = smul.addr %s1220, 2
      %s1222 = scalar_lea.vmem %s265, %s1221
      %v1223 = vld [vmem:[%s1222] sm:$0x3f]
      %v1224 = vadd.f32 %v1223, %v1146
      %v1225 = vxor.u32 %v1224, 2147483648
      %v1226 = vmul.f32 %v1225, 1.442695
      %v1227 = vpow.pop %v1226
      %v1228 = vadd.f32 %v1227, 1.0
      %v1229 = vrcp.pop %v1228
      %v1230 = vmul.f32 1.0, %v1229
      %v1232 = vrot.slane %v1223, 2
      %v1234 = vadd.f32 %v1232, %v1148
      %v1235 = vxor.u32 %v1234, 2147483648
      %v1236 = vmul.f32 %v1235, 1.442695
      %v1237 = vpow.pop %v1236
      %v1238 = vadd.f32 %v1237, 1.0
      %v1239 = vrcp.pop %v1238
      %v1240 = vmul.f32 1.0, %v1239
      %v1241 = vmul.f32 %v1230, %v1217
      %v1242 = vrot.slane %v1223, 4
      %v1244 = vadd.f32 %v1242, %v1241
      %v1245 = vtanh.pop %v1244
      %v1246 = vsub.f32 1.0, %v1240
      %v1247 = vmul.f32 %v1246, %v1245
      %v1248 = vmul.f32 %v1240, %v1078
      %v1249 = vadd.f32 %v1247, %v1248
      %1250 = vst [vmem:[#allocation2] sm:$0x3] %v1249
      %s1251 = smul.u32 %s1077, 2
      %s1252 = scalar_lea.vmem %s292, %s1251
      %1253 = vst [vmem:[%s1252] sm:$0x3] %v1249
      %s1254 = scalar_select %p352, 2, 5
      %v1255 = vld [vmem:[#allocation2] sm:$0x3]
      %1256 = vmatprep.subr.mxu0 %v349
      %1257 = vmatpush1.msra.mxu0 %v348
      %1258 = vmatprep.subr.mxu0 %v346
      %1259 = vmatpush1.msra.mxu0 %v345
      %1260 = vmatprep.subr.mxu0 %v343
      %1261 = vmatpush1.msra.mxu0 %v342
      %1262 = vmatprep.subr.mxu0 %v340
      %1263 = vmatpush1.msra.mxu0 %v339
      %1264 = vmatprep.subr.mxu0 %v337
      %1265 = vmatpush1.msra.mxu0 %v336
      %1266 = vmatprep.subr.mxu0 %v334
      %1267 = vmatpush1.msra.mxu0 %v333
      %1268 = vmatprep.subr.mxu0 %v331
      %1269 = vmatpush1.msra.mxu0 %v330
      %1270 = vmatprep.subr.mxu0 %v328
      %1271 = vmatpush1.msra.mxu0 %v327
      %1272 = vmatprep.subr.mxu0 %v325
      %1273 = vmatpush1.msra.mxu0 %v324
      %1274 = vmatprep.subr.mxu0 %v322
      %1275 = vmatpush1.msra.mxu0 %v321
      %1276 = vmatprep.subr.mxu0 %v319
      %1277 = vmatpush1.msra.mxu0 %v318
      %1278 = vmatprep.subr.mxu0 %v316
      %1279 = vmatpush1.msra.mxu0 %v315
      %1280 = vmatprep.subr.mxu0 %v313
      %1281 = vmatpush1.msra.mxu0 %v312
      %1282 = vmatprep.subr.mxu0 %v310
      %1283 = vmatpush1.msra.mxu0 %v309
      %1284 = vmatprep.subr.mxu0 %v307
      %1285 = vmatpush1.msra.mxu0 %v306
      %1286 = vmatprep.subr.mxu0 %v304
      %1287 = vmatpush1.msra.mxu0 %v303
      %1288 = vmatprep.subr.mxu0 0.0
      %1289 = vmatpush2.msra.mxu0 0.0
      %1290 = vmatprep.subr.mxu0 0.0
      %1291 = vmatpush2.msra.mxu0 0.0
      %1292 = vmatprep.subr.mxu0 0.0
      %1293 = vmatpush2.msra.mxu0 0.0
      %1294 = vmatprep.subr.mxu0 0.0
      %1295 = vmatpush2.msra.mxu0 0.0
      %1296 = vmatprep.subr.mxu0 0.0
      %1297 = vmatpush2.msra.mxu0 0.0
      %1298 = vmatprep.subr.mxu0 0.0
      %1299 = vmatpush2.msra.mxu0 0.0
      %1300 = vmatprep.subr.mxu0 0.0
      %1301 = vmatpush2.msra.mxu0 0.0
      %1302 = vmatprep.subr.mxu0 0.0
      %1303 = vmatpush2.msra.mxu0 0.0
      %1304 = vmatprep.subr.mxu0 0.0
      %1305 = vmatpush2.msra.mxu0 0.0
      %1306 = vmatprep.subr.mxu0 0.0
      %1307 = vmatpush2.msra.mxu0 0.0
      %1308 = vmatprep.subr.mxu0 0.0
      %1309 = vmatpush2.msra.mxu0 0.0
      %1310 = vmatprep.subr.mxu0 0.0
      %1311 = vmatpush2.msra.mxu0 0.0
      %1312 = vmatprep.subr.mxu0 0.0
      %1313 = vmatpush2.msra.mxu0 0.0
      %1314 = vmatprep.subr.mxu0 0.0
      %1315 = vmatpush2.msra.mxu0 0.0
      %1316 = vmatprep.subr.mxu0 0.0
      %1317 = vmatpush2.msra.mxu0 0.0
      %1318 = vmatprep.subr.mxu0 0.0
      %1319 = vmatpush2.msra.mxu0 0.0
      %1320 = vmatprep.mubr.f32.mxu0 0.0
      %1321 = vmatmul.mubr.f32.gmra.mxu0 %v1255
      %v1322 = vpop.f32.mrf.mxu0
      %v1323 = vadd.f32 %v359, %v1322
      %v1324 = vpop.f32.mrf.mxu0
      %v1325 = vadd.f32 %v363, %v1324
      %1326 = vdwg.mxu0
      %1327 = vmatprep.subr.mxu0 0.0
      %1328 = vmatpush1.msra.mxu0 %v350
      %1329 = vmatprep.subr.mxu0 0.0
      %1330 = vmatpush1.msra.mxu0 %v347
      %1331 = vmatprep.subr.mxu0 0.0
      %1332 = vmatpush1.msra.mxu0 %v344
      %1333 = vmatprep.subr.mxu0 0.0
      %1334 = vmatpush1.msra.mxu0 %v341
      %1335 = vmatprep.subr.mxu0 0.0
      %1336 = vmatpush1.msra.mxu0 %v338
      %1337 = vmatprep.subr.mxu0 0.0
      %1338 = vmatpush1.msra.mxu0 %v335
      %1339 = vmatprep.subr.mxu0 0.0
      %1340 = vmatpush1.msra.mxu0 %v332
      %1341 = vmatprep.subr.mxu0 0.0
      %1342 = vmatpush1.msra.mxu0 %v329
      %1343 = vmatprep.subr.mxu0 0.0
      %1344 = vmatpush1.msra.mxu0 %v326
      %1345 = vmatprep.subr.mxu0 0.0
      %1346 = vmatpush1.msra.mxu0 %v323
      %1347 = vmatprep.subr.mxu0 0.0
      %1348 = vmatpush1.msra.mxu0 %v320
      %1349 = vmatprep.subr.mxu0 0.0
      %1350 = vmatpush1.msra.mxu0 %v317
      %1351 = vmatprep.subr.mxu0 0.0
      %1352 = vmatpush1.msra.mxu0 %v314
      %1353 = vmatprep.subr.mxu0 0.0
      %1354 = vmatpush1.msra.mxu0 %v311
      %1355 = vmatprep.subr.mxu0 0.0
      %1356 = vmatpush1.msra.mxu0 %v308
      %1357 = vmatprep.subr.mxu0 0.0
      %1358 = vmatpush1.msra.mxu0 %v305
      %1359 = vmatprep.subr.mxu0 0.0
      %1360 = vmatpush2.msra.mxu0 0.0
      %1361 = vmatprep.subr.mxu0 0.0
      %1362 = vmatpush2.msra.mxu0 0.0
      %1363 = vmatprep.subr.mxu0 0.0
      %1364 = vmatpush2.msra.mxu0 0.0
      %1365 = vmatprep.subr.mxu0 0.0
      %1366 = vmatpush2.msra.mxu0 0.0
      %1367 = vmatprep.subr.mxu0 0.0
      %1368 = vmatpush2.msra.mxu0 0.0
      %1369 = vmatprep.subr.mxu0 0.0
      %1370 = vmatpush2.msra.mxu0 0.0
      %1371 = vmatprep.subr.mxu0 0.0
      %1372 = vmatpush2.msra.mxu0 0.0
      %1373 = vmatprep.subr.mxu0 0.0
      %1374 = vmatpush2.msra.mxu0 0.0
      %1375 = vmatprep.subr.mxu0 0.0
      %1376 = vmatpush2.msra.mxu0 0.0
      %1377 = vmatprep.subr.mxu0 0.0
      %1378 = vmatpush2.msra.mxu0 0.0
      %1379 = vmatprep.subr.mxu0 0.0
      %1380 = vmatpush2.msra.mxu0 0.0
      %1381 = vmatprep.subr.mxu0 0.0
      %1382 = vmatpush2.msra.mxu0 0.0
      %1383 = vmatprep.subr.mxu0 0.0
      %1384 = vmatpush2.msra.mxu0 0.0
      %1385 = vmatprep.subr.mxu0 0.0
      %1386 = vmatpush2.msra.mxu0 0.0
      %1387 = vmatprep.subr.mxu0 0.0
      %1388 = vmatpush2.msra.mxu0 0.0
      %1389 = vmatprep.subr.mxu0 0.0
      %1390 = vmatpush2.msra.mxu0 0.0
      %1391 = vmatprep.mubr.f32.mxu0 0.0
      %1392 = vmatmul.mubr.f32.gmra.mxu0 %v1255
      %v1393 = vpop.f32.mrf.mxu0
      %v1394 = vadd.f32 %v367, %v1393
      %v1395 = vpop.f32.mrf.mxu0
      %1396 = vdwg.mxu0
      %s1397 = smul.u32 %s1254, 3
      %s1398 = smul.addr %s1397, 2
      %s1399 = scalar_lea.vmem %s265, %s1398
      %v1400 = vld [vmem:[%s1399] sm:$0x3f]
      %v1401 = vadd.f32 %v1400, %v1323
      %v1402 = vxor.u32 %v1401, 2147483648
      %v1403 = vmul.f32 %v1402, 1.442695
      %v1404 = vpow.pop %v1403
      %v1405 = vadd.f32 %v1404, 1.0
      %v1406 = vrcp.pop %v1405
      %v1407 = vmul.f32 1.0, %v1406
      %v1409 = vrot.slane %v1400, 2
      %v1411 = vadd.f32 %v1409, %v1325
      %v1412 = vxor.u32 %v1411, 2147483648
      %v1413 = vmul.f32 %v1412, 1.442695
      %v1414 = vpow.pop %v1413
      %v1415 = vadd.f32 %v1414, 1.0
      %v1416 = vrcp.pop %v1415
      %v1417 = vmul.f32 1.0, %v1416
      %v1418 = vmul.f32 %v1407, %v1394
      %v1419 = vrot.slane %v1400, 4
      %v1421 = vadd.f32 %v1419, %v1418
      %v1422 = vtanh.pop %v1421
      %v1423 = vsub.f32 1.0, %v1417
      %v1424 = vmul.f32 %v1423, %v1422
      %v1425 = vmul.f32 %v1417, %v1255
      %v1426 = vadd.f32 %v1424, %v1425
      %1427 = vst [vmem:[#allocation2] sm:$0x3] %v1426
      %s1428 = smul.u32 %s1254, 2
      %s1429 = scalar_lea.vmem %s292, %s1428
      %1430 = vst [vmem:[%s1429] sm:$0x3] %v1426
      %s1431 = scalar_select %p352, 1, 6
      %v1432 = vld [vmem:[#allocation2] sm:$0x3]
      %1433 = vmatprep.subr.mxu0 %v349
      %1434 = vmatpush1.msra.mxu0 %v348
      %1435 = vmatprep.subr.mxu0 %v346
      %1436 = vmatpush1.msra.mxu0 %v345
      %1437 = vmatprep.subr.mxu0 %v343
      %1438 = vmatpush1.msra.mxu0 %v342
      %1439 = vmatprep.subr.mxu0 %v340
      %1440 = vmatpush1.msra.mxu0 %v339
      %1441 = vmatprep.subr.mxu0 %v337
      %1442 = vmatpush1.msra.mxu0 %v336
      %1443 = vmatprep.subr.mxu0 %v334
      %1444 = vmatpush1.msra.mxu0 %v333
      %1445 = vmatprep.subr.mxu0 %v331
      %1446 = vmatpush1.msra.mxu0 %v330
      %1447 = vmatprep.subr.mxu0 %v328
      %1448 = vmatpush1.msra.mxu0 %v327
      %1449 = vmatprep.subr.mxu0 %v325
      %1450 = vmatpush1.msra.mxu0 %v324
      %1451 = vmatprep.subr.mxu0 %v322
      %1452 = vmatpush1.msra.mxu0 %v321
      %1453 = vmatprep.subr.mxu0 %v319
      %1454 = vmatpush1.msra.mxu0 %v318
      %1455 = vmatprep.subr.mxu0 %v316
      %1456 = vmatpush1.msra.mxu0 %v315
      %1457 = vmatprep.subr.mxu0 %v313
      %1458 = vmatpush1.msra.mxu0 %v312
      %1459 = vmatprep.subr.mxu0 %v310
      %1460 = vmatpush1.msra.mxu0 %v309
      %1461 = vmatprep.subr.mxu0 %v307
      %1462 = vmatpush1.msra.mxu0 %v306
      %1463 = vmatprep.subr.mxu0 %v304
      %1464 = vmatpush1.msra.mxu0 %v303
      %1465 = vmatprep.subr.mxu0 0.0
      %1466 = vmatpush2.msra.mxu0 0.0
      %1467 = vmatprep.subr.mxu0 0.0
      %1468 = vmatpush2.msra.mxu0 0.0
      %1469 = vmatprep.subr.mxu0 0.0
      %1470 = vmatpush2.msra.mxu0 0.0
      %1471 = vmatprep.subr.mxu0 0.0
      %1472 = vmatpush2.msra.mxu0 0.0
      %1473 = vmatprep.subr.mxu0 0.0
      %1474 = vmatpush2.msra.mxu0 0.0
      %1475 = vmatprep.subr.mxu0 0.0
      %1476 = vmatpush2.msra.mxu0 0.0
      %1477 = vmatprep.subr.mxu0 0.0
      %1478 = vmatpush2.msra.mxu0 0.0
      %1479 = vmatprep.subr.mxu0 0.0
      %1480 = vmatpush2.msra.mxu0 0.0
      %1481 = vmatprep.subr.mxu0 0.0
      %1482 = vmatpush2.msra.mxu0 0.0
      %1483 = vmatprep.subr.mxu0 0.0
      %1484 = vmatpush2.msra.mxu0 0.0
      %1485 = vmatprep.subr.mxu0 0.0
      %1486 = vmatpush2.msra.mxu0 0.0
      %1487 = vmatprep.subr.mxu0 0.0
      %1488 = vmatpush2.msra.mxu0 0.0
      %1489 = vmatprep.subr.mxu0 0.0
      %1490 = vmatpush2.msra.mxu0 0.0
      %1491 = vmatprep.subr.mxu0 0.0
      %1492 = vmatpush2.msra.mxu0 0.0
      %1493 = vmatprep.subr.mxu0 0.0
      %1494 = vmatpush2.msra.mxu0 0.0
      %1495 = vmatprep.subr.mxu0 0.0
      %1496 = vmatpush2.msra.mxu0 0.0
      %1497 = vmatprep.mubr.f32.mxu0 0.0
      %1498 = vmatmul.mubr.f32.gmra.mxu0 %v1432
      %v1499 = vpop.f32.mrf.mxu0
      %v1500 = vadd.f32 %v359, %v1499
      %v1501 = vpop.f32.mrf.mxu0
      %v1502 = vadd.f32 %v363, %v1501
      %1503 = vdwg.mxu0
      %1504 = vmatprep.subr.mxu0 0.0
      %1505 = vmatpush1.msra.mxu0 %v350
      %1506 = vmatprep.subr.mxu0 0.0
      %1507 = vmatpush1.msra.mxu0 %v347
      %1508 = vmatprep.subr.mxu0 0.0
      %1509 = vmatpush1.msra.mxu0 %v344
      %1510 = vmatprep.subr.mxu0 0.0
      %1511 = vmatpush1.msra.mxu0 %v341
      %1512 = vmatprep.subr.mxu0 0.0
      %1513 = vmatpush1.msra.mxu0 %v338
      %1514 = vmatprep.subr.mxu0 0.0
      %1515 = vmatpush1.msra.mxu0 %v335
      %1516 = vmatprep.subr.mxu0 0.0
      %1517 = vmatpush1.msra.mxu0 %v332
      %1518 = vmatprep.subr.mxu0 0.0
      %1519 = vmatpush1.msra.mxu0 %v329
      %1520 = vmatprep.subr.mxu0 0.0
      %1521 = vmatpush1.msra.mxu0 %v326
      %1522 = vmatprep.subr.mxu0 0.0
      %1523 = vmatpush1.msra.mxu0 %v323
      %1524 = vmatprep.subr.mxu0 0.0
      %1525 = vmatpush1.msra.mxu0 %v320
      %1526 = vmatprep.subr.mxu0 0.0
      %1527 = vmatpush1.msra.mxu0 %v317
      %1528 = vmatprep.subr.mxu0 0.0
      %1529 = vmatpush1.msra.mxu0 %v314
      %1530 = vmatprep.subr.mxu0 0.0
      %1531 = vmatpush1.msra.mxu0 %v311
      %1532 = vmatprep.subr.mxu0 0.0
      %1533 = vmatpush1.msra.mxu0 %v308
      %1534 = vmatprep.subr.mxu0 0.0
      %1535 = vmatpush1.msra.mxu0 %v305
      %1536 = vmatprep.subr.mxu0 0.0
      %1537 = vmatpush2.msra.mxu0 0.0
      %1538 = vmatprep.subr.mxu0 0.0
      %1539 = vmatpush2.msra.mxu0 0.0
      %1540 = vmatprep.subr.mxu0 0.0
      %1541 = vmatpush2.msra.mxu0 0.0
      %1542 = vmatprep.subr.mxu0 0.0
      %1543 = vmatpush2.msra.mxu0 0.0
      %1544 = vmatprep.subr.mxu0 0.0
      %1545 = vmatpush2.msra.mxu0 0.0
      %1546 = vmatprep.subr.mxu0 0.0
      %1547 = vmatpush2.msra.mxu0 0.0
      %1548 = vmatprep.subr.mxu0 0.0
      %1549 = vmatpush2.msra.mxu0 0.0
      %1550 = vmatprep.subr.mxu0 0.0
      %1551 = vmatpush2.msra.mxu0 0.0
      %1552 = vmatprep.subr.mxu0 0.0
      %1553 = vmatpush2.msra.mxu0 0.0
      %1554 = vmatprep.subr.mxu0 0.0
      %1555 = vmatpush2.msra.mxu0 0.0
      %1556 = vmatprep.subr.mxu0 0.0
      %1557 = vmatpush2.msra.mxu0 0.0
      %1558 = vmatprep.subr.mxu0 0.0
      %1559 = vmatpush2.msra.mxu0 0.0
      %1560 = vmatprep.subr.mxu0 0.0
      %1561 = vmatpush2.msra.mxu0 0.0
      %1562 = vmatprep.subr.mxu0 0.0
      %1563 = vmatpush2.msra.mxu0 0.0
      %1564 = vmatprep.subr.mxu0 0.0
      %1565 = vmatpush2.msra.mxu0 0.0
      %1566 = vmatprep.subr.mxu0 0.0
      %1567 = vmatpush2.msra.mxu0 0.0
      %1568 = vmatprep.mubr.f32.mxu0 0.0
      %1569 = vmatmul.mubr.f32.gmra.mxu0 %v1432
      %v1570 = vpop.f32.mrf.mxu0
      %v1571 = vadd.f32 %v367, %v1570
      %v1572 = vpop.f32.mrf.mxu0
      %1573 = vdwg.mxu0
      %s1574 = smul.u32 %s1431, 3
      %s1575 = smul.addr %s1574, 2
      %s1576 = scalar_lea.vmem %s265, %s1575
      %v1577 = vld [vmem:[%s1576] sm:$0x3f]
      %v1578 = vadd.f32 %v1577, %v1500
      %v1579 = vxor.u32 %v1578, 2147483648
      %v1580 = vmul.f32 %v1579, 1.442695
      %v1581 = vpow.pop %v1580
      %v1582 = vadd.f32 %v1581, 1.0
      %v1583 = vrcp.pop %v1582
      %v1584 = vmul.f32 1.0, %v1583
      %v1586 = vrot.slane %v1577, 2
      %v1588 = vadd.f32 %v1586, %v1502
      %v1589 = vxor.u32 %v1588, 2147483648
      %v1590 = vmul.f32 %v1589, 1.442695
      %v1591 = vpow.pop %v1590
      %v1592 = vadd.f32 %v1591, 1.0
      %v1593 = vrcp.pop %v1592
      %v1594 = vmul.f32 1.0, %v1593
      %v1595 = vmul.f32 %v1584, %v1571
      %v1596 = vrot.slane %v1577, 4
      %v1598 = vadd.f32 %v1596, %v1595
      %v1599 = vtanh.pop %v1598
      %v1600 = vsub.f32 1.0, %v1594
      %v1601 = vmul.f32 %v1600, %v1599
      %v1602 = vmul.f32 %v1594, %v1432
      %v1603 = vadd.f32 %v1601, %v1602
      %1604 = vst [vmem:[#allocation2] sm:$0x3] %v1603
      %s1605 = smul.u32 %s1431, 2
      %s1606 = scalar_lea.vmem %s292, %s1605
      %1607 = vst [vmem:[%s1606] sm:$0x3] %v1603
      %s1608 = scalar_select %p352, 0, 7
      %v1609 = vld [vmem:[#allocation2] sm:$0x3]
      %1610 = vmatprep.subr.mxu0 %v349
      %1611 = vmatpush1.msra.mxu0 %v348
      %1612 = vmatprep.subr.mxu0 %v346
      %1613 = vmatpush1.msra.mxu0 %v345
      %1614 = vmatprep.subr.mxu0 %v343
      %1615 = vmatpush1.msra.mxu0 %v342
      %1616 = vmatprep.subr.mxu0 %v340
      %1617 = vmatpush1.msra.mxu0 %v339
      %1618 = vmatprep.subr.mxu0 %v337
      %1619 = vmatpush1.msra.mxu0 %v336
      %1620 = vmatprep.subr.mxu0 %v334
      %1621 = vmatpush1.msra.mxu0 %v333
      %1622 = vmatprep.subr.mxu0 %v331
      %1623 = vmatpush1.msra.mxu0 %v330
      %1624 = vmatprep.subr.mxu0 %v328
      %1625 = vmatpush1.msra.mxu0 %v327
      %1626 = vmatprep.subr.mxu0 %v325
      %1627 = vmatpush1.msra.mxu0 %v324
      %1628 = vmatprep.subr.mxu0 %v322
      %1629 = vmatpush1.msra.mxu0 %v321
      %1630 = vmatprep.subr.mxu0 %v319
      %1631 = vmatpush1.msra.mxu0 %v318
      %1632 = vmatprep.subr.mxu0 %v316
      %1633 = vmatpush1.msra.mxu0 %v315
      %1634 = vmatprep.subr.mxu0 %v313
      %1635 = vmatpush1.msra.mxu0 %v312
      %1636 = vmatprep.subr.mxu0 %v310
      %1637 = vmatpush1.msra.mxu0 %v309
      %1638 = vmatprep.subr.mxu0 %v307
      %1639 = vmatpush1.msra.mxu0 %v306
      %1640 = vmatprep.subr.mxu0 %v304
      %1641 = vmatpush1.msra.mxu0 %v303
      %1642 = vmatprep.subr.mxu0 0.0
      %1643 = vmatpush2.msra.mxu0 0.0
      %1644 = vmatprep.subr.mxu0 0.0
      %1645 = vmatpush2.msra.mxu0 0.0
      %1646 = vmatprep.subr.mxu0 0.0
      %1647 = vmatpush2.msra.mxu0 0.0
      %1648 = vmatprep.subr.mxu0 0.0
      %1649 = vmatpush2.msra.mxu0 0.0
      %1650 = vmatprep.subr.mxu0 0.0
      %1651 = vmatpush2.msra.mxu0 0.0
      %1652 = vmatprep.subr.mxu0 0.0
      %1653 = vmatpush2.msra.mxu0 0.0
      %1654 = vmatprep.subr.mxu0 0.0
      %1655 = vmatpush2.msra.mxu0 0.0
      %1656 = vmatprep.subr.mxu0 0.0
      %1657 = vmatpush2.msra.mxu0 0.0
      %1658 = vmatprep.subr.mxu0 0.0
      %1659 = vmatpush2.msra.mxu0 0.0
      %1660 = vmatprep.subr.mxu0 0.0
      %1661 = vmatpush2.msra.mxu0 0.0
      %1662 = vmatprep.subr.mxu0 0.0
      %1663 = vmatpush2.msra.mxu0 0.0
      %1664 = vmatprep.subr.mxu0 0.0
      %1665 = vmatpush2.msra.mxu0 0.0
      %1666 = vmatprep.subr.mxu0 0.0
      %1667 = vmatpush2.msra.mxu0 0.0
      %1668 = vmatprep.subr.mxu0 0.0
      %1669 = vmatpush2.msra.mxu0 0.0
      %1670 = vmatprep.subr.mxu0 0.0
      %1671 = vmatpush2.msra.mxu0 0.0
      %1672 = vmatprep.subr.mxu0 0.0
      %1673 = vmatpush2.msra.mxu0 0.0
      %1674 = vmatprep.mubr.f32.mxu0 0.0
      %1675 = vmatmul.mubr.f32.gmra.mxu0 %v1609
      %v1676 = vpop.f32.mrf.mxu0
      %v1677 = vadd.f32 %v359, %v1676
      %v1678 = vpop.f32.mrf.mxu0
      %v1679 = vadd.f32 %v363, %v1678
      %1680 = vdwg.mxu0
      %1681 = vmatprep.subr.mxu0 0.0
      %1682 = vmatpush1.msra.mxu0 %v350
      %1683 = vmatprep.subr.mxu0 0.0
      %1684 = vmatpush1.msra.mxu0 %v347
      %1685 = vmatprep.subr.mxu0 0.0
      %1686 = vmatpush1.msra.mxu0 %v344
      %1687 = vmatprep.subr.mxu0 0.0
      %1688 = vmatpush1.msra.mxu0 %v341
      %1689 = vmatprep.subr.mxu0 0.0
      %1690 = vmatpush1.msra.mxu0 %v338
      %1691 = vmatprep.subr.mxu0 0.0
      %1692 = vmatpush1.msra.mxu0 %v335
      %1693 = vmatprep.subr.mxu0 0.0
      %1694 = vmatpush1.msra.mxu0 %v332
      %1695 = vmatprep.subr.mxu0 0.0
      %1696 = vmatpush1.msra.mxu0 %v329
      %1697 = vmatprep.subr.mxu0 0.0
      %1698 = vmatpush1.msra.mxu0 %v326
      %1699 = vmatprep.subr.mxu0 0.0
      %1700 = vmatpush1.msra.mxu0 %v323
      %1701 = vmatprep.subr.mxu0 0.0
      %1702 = vmatpush1.msra.mxu0 %v320
      %1703 = vmatprep.subr.mxu0 0.0
      %1704 = vmatpush1.msra.mxu0 %v317
      %1705 = vmatprep.subr.mxu0 0.0
      %1706 = vmatpush1.msra.mxu0 %v314
      %1707 = vmatprep.subr.mxu0 0.0
      %1708 = vmatpush1.msra.mxu0 %v311
      %1709 = vmatprep.subr.mxu0 0.0
      %1710 = vmatpush1.msra.mxu0 %v308
      %1711 = vmatprep.subr.mxu0 0.0
      %1712 = vmatpush1.msra.mxu0 %v305
      %1713 = vmatprep.subr.mxu0 0.0
      %1714 = vmatpush2.msra.mxu0 0.0
      %1715 = vmatprep.subr.mxu0 0.0
      %1716 = vmatpush2.msra.mxu0 0.0
      %1717 = vmatprep.subr.mxu0 0.0
      %1718 = vmatpush2.msra.mxu0 0.0
      %1719 = vmatprep.subr.mxu0 0.0
      %1720 = vmatpush2.msra.mxu0 0.0
      %1721 = vmatprep.subr.mxu0 0.0
      %1722 = vmatpush2.msra.mxu0 0.0
      %1723 = vmatprep.subr.mxu0 0.0
      %1724 = vmatpush2.msra.mxu0 0.0
      %1725 = vmatprep.subr.mxu0 0.0
      %1726 = vmatpush2.msra.mxu0 0.0
      %1727 = vmatprep.subr.mxu0 0.0
      %1728 = vmatpush2.msra.mxu0 0.0
      %1729 = vmatprep.subr.mxu0 0.0
      %1730 = vmatpush2.msra.mxu0 0.0
      %1731 = vmatprep.subr.mxu0 0.0
      %1732 = vmatpush2.msra.mxu0 0.0
      %1733 = vmatprep.subr.mxu0 0.0
      %1734 = vmatpush2.msra.mxu0 0.0
      %1735 = vmatprep.subr.mxu0 0.0
      %1736 = vmatpush2.msra.mxu0 0.0
      %1737 = vmatprep.subr.mxu0 0.0
      %1738 = vmatpush2.msra.mxu0 0.0
      %1739 = vmatprep.subr.mxu0 0.0
      %1740 = vmatpush2.msra.mxu0 0.0
      %1741 = vmatprep.subr.mxu0 0.0
      %1742 = vmatpush2.msra.mxu0 0.0
      %1743 = vmatprep.subr.mxu0 0.0
      %1744 = vmatpush2.msra.mxu0 0.0
      %1745 = vmatprep.mubr.f32.mxu0 0.0
      %1746 = vmatmul.mubr.f32.gmra.mxu0 %v1609
      %v1747 = vpop.f32.mrf.mxu0
      %v1748 = vadd.f32 %v367, %v1747
      %v1749 = vpop.f32.mrf.mxu0
      %1750 = vdwg.mxu0
      %s1751 = smul.u32 %s1608, 3
      %s1752 = smul.addr %s1751, 2
      %s1753 = scalar_lea.vmem %s265, %s1752
      %v1754 = vld [vmem:[%s1753] sm:$0x3f]
      %v1755 = vadd.f32 %v1754, %v1677
      %v1756 = vxor.u32 %v1755, 2147483648
      %v1757 = vmul.f32 %v1756, 1.442695
      %v1758 = vpow.pop %v1757
      %v1759 = vadd.f32 %v1758, 1.0
      %v1760 = vrcp.pop %v1759
      %v1761 = vmul.f32 1.0, %v1760
      %v1763 = vrot.slane %v1754, 2
      %v1765 = vadd.f32 %v1763, %v1679
      %v1766 = vxor.u32 %v1765, 2147483648
      %v1767 = vmul.f32 %v1766, 1.442695
      %v1768 = vpow.pop %v1767
      %v1769 = vadd.f32 %v1768, 1.0
      %v1770 = vrcp.pop %v1769
      %v1771 = vmul.f32 1.0, %v1770
      %v1772 = vmul.f32 %v1761, %v1748
      %v1773 = vrot.slane %v1754, 4
      %v1775 = vadd.f32 %v1773, %v1772
      %v1776 = vtanh.pop %v1775
      %v1777 = vsub.f32 1.0, %v1771
      %v1778 = vmul.f32 %v1777, %v1776
      %v1779 = vmul.f32 %v1771, %v1609
      %v1780 = vadd.f32 %v1778, %v1779
      %1781 = vst [vmem:[#allocation2] sm:$0x3] %v1780
      %s1782 = smul.u32 %s1608, 2
      %s1783 = scalar_lea.vmem %s292, %s1782
      %1784 = vst [vmem:[%s1783] sm:$0x3] %v1780
      %s1785 = smul.u32 %s19, 2
      %s1786 = ssub.s32 0, %s1785
      %s1787 = smul.u32 %s18, %s1786
      %s1788 = sadd.s32 %s19, %s1787
      %s1789 = smul.u32 8, %s1788
      %p1790 = scmp.lt.s32.totalorder %s18, 1
      %s1791 = scalar_select %p1790, %s18, 1
      %p1792 = scmp.lt.s32.totalorder %s1789, 7
      %s1793 = scalar_select %p1792, %s1789, 7
      %s1794 = smul.addr %s1791, 8
      %s1795 = sadd.s32 %s1793, %s1794
      %s1796 = smul.addr %s1795, 2
      %s1797 = scalar_lea.vmem %s3, %s1796
      // Predicated region
      $region37: #{speech_model_forward.26} parent=31 // pred_check
        %p1798 = pneg %p142
      $region38: #{speech_model_forward.26} parent=31 // pred_check_branch
        %1800 = sbr.rel (%p1798) target = $region40
      $region39: #{speech_model_forward.26} parent=31 // pred_region
        %s1801 = smul.u32 %s19, 2
        %s1802 = ssub.s32 0, %s1801
        %s1803 = smul.u32 %s18, %s1802
        %s1804 = sadd.s32 %s19, %s1803
        %s1805 = smul.u32 8, %s1804
      $region40: #{speech_model_forward.26} parent=31 // pred_fallthru
        _
    $region32: #{speech_model_forward.26} parent=5 // pred_fallthru
      _
    %p1806 = scmp.le.s32.totalorder 2, %s9
    // Predicated region
    $region41: #{speech_model_forward.26} parent=5 // pred_check
      %p1807 = pneg %p1806
    $region42: #{speech_model_forward.26} parent=5 // pred_check_branch
      %1809 = sbr.rel (%p1807) target = $region44
    $region43: #{speech_model_forward.26} parent=5 // pred_region
      %s1810 = ssub.s32 %s9, 2
      // Predicated region
      $region45: #{speech_model_forward.26} parent=43 // pred_check
        %p1811 = pneg %p148
      $region46: #{speech_model_forward.26} parent=43 // pred_check_branch
        %1813 = sbr.rel (%p1811) target = $region48
      $region47: #{speech_model_forward.26} parent=43 // pred_region
        %s1814 = smul.u32 %s21, 2
        %s1815 = ssub.s32 0, %s1814
        %s1816 = smul.u32 %s20, %s1815
        %s1817 = sadd.s32 %s21, %s1816
        %s1818 = smul.u32 8, %s1817
        %p1819 = scmp.lt.s32.totalorder %s20, 1
        %s1820 = scalar_select %p1819, %s20, 1
        %p1821 = scmp.lt.s32.totalorder %s1818, 7
        %s1822 = scalar_select %p1821, %s1818, 7
        %s1823 = smul.addr %s1820, 8
        %s1824 = sadd.s32 %s1822, %s1823
        %s1825 = smul.addr %s1824, 2
        %s1826 = scalar_lea.vmem %s3, %s1825
      $region48: #{speech_model_forward.26} parent=43 // pred_fallthru
        _
    $region44: #{speech_model_forward.26} parent=5 // pred_fallthru
      _
  $region6: #{speech_model_forward.26} parent=0 // loop_footer
    %s13 = sadd.s32 1, %s9
  $region7: #{speech_model_forward.26} parent=0 // loop_footer_branch
    %8 = sbr.rel target = $region3
  $region8: #{speech_model_forward.26} parent=0 // loop_exit
    _

// kernel: speech_model_forward.29
$region0: #{speech_model_forward.29}
  #allocation0 [shape = 'u32[]', space=smem, size = 0x4, offset = 0x4, fixed_abs, tag = 'smem constant byte address 0x4 - core index']
  #allocation1 [shape = 'u32[144,128]{1,0:T(1,128)}', space=vmem, size = 0x12000, scoped, tag = 'internal scratch']
  %s0 = inlined_call_operand.vmem [shape: f32[16,64], index: 0, kind: input, shape index: {}]
  %s1 = inlined_call_operand.vmem [shape: f32[64,128], index: 1, kind: input, shape index: {}]
  %s2 = inlined_call_operand.vmem [shape: f32[1,128], index: 2, kind: input, shape index: {}]
  %s3 = inlined_call_operand.vmem [shape: f32[128,128], index: 3, kind: input, shape index: {}]
  %s4 = inlined_call_operand.vmem [shape: f32[1,128], index: 4, kind: input, shape index: {}]
  %s5 = inlined_call_operand.vmem [shape: f32[16,128], index: 5, kind: output, shape index: {}]
  %s6 = sld [smem:[#allocation0]]
  $region30: #{speech_model_forward.29} parent=0
    _
  %s8 = ssub.s32 1, %s6
  %s9 = scalar_select 0, %s8, %s6
  // Predicated region
  $region2: #{speech_model_forward.29} parent=0 // pred_check
    _
  $region3: #{speech_model_forward.29} parent=0 // pred_check_branch
    %11 = sbr.rel (0) target = $region5
  $region4: #{speech_model_forward.29} parent=0 // pred_region
    _
  $region5: #{speech_model_forward.29} parent=0 // pred_fallthru
    _
  // Predicated region
  $region6: #{speech_model_forward.29} parent=0 // pred_check
    _
  $region7: #{speech_model_forward.29} parent=0 // pred_check_branch
    %13 = sbr.rel (0) target = $region9
  $region8: #{speech_model_forward.29} parent=0 // pred_region
    _
  $region9: #{speech_model_forward.29} parent=0 // pred_fallthru
    _
  // Predicated region
  $region10: #{speech_model_forward.29} parent=0 // pred_check
    _
  $region11: #{speech_model_forward.29} parent=0 // pred_check_branch
    %15 = sbr.rel (0) target = $region13
  $region12: #{speech_model_forward.29} parent=0 // pred_region
    _
  $region13: #{speech_model_forward.29} parent=0 // pred_fallthru
    _
  // Predicated region
  $region14: #{speech_model_forward.29} parent=0 // pred_check
    _
  $region15: #{speech_model_forward.29} parent=0 // pred_check_branch
    %17 = sbr.rel (0) target = $region17
  $region16: #{speech_model_forward.29} parent=0 // pred_region
    _
  $region17: #{speech_model_forward.29} parent=0 // pred_fallthru
    _
  // Predicated region
  $region18: #{speech_model_forward.29} parent=0 // pred_check
    _
  $region19: #{speech_model_forward.29} parent=0 // pred_check_branch
    %19 = sbr.rel (0) target = $region21
  $region20: #{speech_model_forward.29} parent=0 // pred_region
    _
  $region21: #{speech_model_forward.29} parent=0 // pred_fallthru
    _
  %v20 = vld [vmem:[%s0] sm:$0xff]
  %v21 = vld [vmem:[%s0 + $0x8] sm:$0xff]
  %v22 = vld [vmem:[%s1] sm:$0xff]
  %v23 = vld [vmem:[%s1 + $0x8] sm:$0xff]
  %v24 = vld [vmem:[%s1 + $0x10] sm:$0xff]
  %v25 = vld [vmem:[%s1 + $0x18] sm:$0xff]
  %v26 = vld [vmem:[%s1 + $0x20] sm:$0xff]
  %v27 = vld [vmem:[%s1 + $0x28] sm:$0xff]
  %v28 = vld [vmem:[%s1 + $0x30] sm:$0xff]
  %v29 = vld [vmem:[%s1 + $0x38] sm:$0xff]
  %v30 = vld [vmem:[%s2] sm:$0x1]
  %v32 = vlaneseq
  %v33 = vshrl.u32 %v32, 7
  %v34 = vsub.s32 0, %v33
  %v35 = vrot.slane %v30, %v34
  %vm37 = vcmask 523264
  %v39 = vsel %vm37, %v20, 0
  %v42 = vsel %vm37, %v21, 0
  %44 = vmatprep.subr.mxu0 0.0
  %45 = vmatpush1.msra.mxu0 0.0
  %46 = vmatprep.subr.mxu0 0.0
  %47 = vmatpush1.msra.mxu0 0.0
  %48 = vmatprep.subr.mxu0 0.0
  %49 = vmatpush1.msra.mxu0 0.0
  %50 = vmatprep.subr.mxu0 0.0
  %51 = vmatpush1.msra.mxu0 0.0
  %52 = vmatprep.subr.mxu0 0.0
  %53 = vmatpush1.msra.mxu0 0.0
  %54 = vmatprep.subr.mxu0 0.0
  %55 = vmatpush1.msra.mxu0 0.0
  %56 = vmatprep.subr.mxu0 0.0
  %57 = vmatpush1.msra.mxu0 0.0
  %58 = vmatprep.subr.mxu0 0.0
  %59 = vmatpush1.msra.mxu0 0.0
  %60 = vmatprep.subr.mxu0 0.0
  %61 = vmatpush1.msra.mxu0 %v29
  %62 = vmatprep.subr.mxu0 0.0
  %63 = vmatpush1.msra.mxu0 %v28
  %64 = vmatprep.subr.mxu0 0.0
  %65 = vmatpush1.msra.mxu0 %v27
  %66 = vmatprep.subr.mxu0 0.0
  %67 = vmatpush1.msra.mxu0 %v26
  %68 = vmatprep.subr.mxu0 0.0
  %69 = vmatpush1.msra.mxu0 %v25
  %70 = vmatprep.subr.mxu0 0.0
  %71 = vmatpush1.msra.mxu0 %v24
  %72 = vmatprep.subr.mxu0 0.0
  %73 = vmatpush1.msra.mxu0 %v23
  %74 = vmatprep.subr.mxu0 0.0
  %75 = vmatpush1.msra.mxu0 %v22
  %76 = vmatprep.subr.mxu0 0.0
  %77 = vmatpush2.msra.mxu0 0.0
  %78 = vmatprep.subr.mxu0 0.0
  %79 = vmatpush2.msra.mxu0 0.0
  %80 = vmatprep.subr.mxu0 0.0
  %81 = vmatpush2.msra.mxu0 0.0
  %82 = vmatprep.subr.mxu0 0.0
  %83 = vmatpush2.msra.mxu0 0.0
  %84 = vmatprep.subr.mxu0 0.0
  %85 = vmatpush2.msra.mxu0 0.0
  %86 = vmatprep.subr.mxu0 0.0
  %87 = vmatpush2.msra.mxu0 0.0
  %88 = vmatprep.subr.mxu0 0.0
  %89 = vmatpush2.msra.mxu0 0.0
  %90 = vmatprep.subr.mxu0 0.0
  %91 = vmatpush2.msra.mxu0 0.0
  %92 = vmatprep.subr.mxu0 0.0
  %93 = vmatpush2.msra.mxu0 0.0
  %94 = vmatprep.subr.mxu0 0.0
  %95 = vmatpush2.msra.mxu0 0.0
  %96 = vmatprep.subr.mxu0 0.0
  %97 = vmatpush2.msra.mxu0 0.0
  %98 = vmatprep.subr.mxu0 0.0
  %99 = vmatpush2.msra.mxu0 0.0
  %100 = vmatprep.subr.mxu0 0.0
  %101 = vmatpush2.msra.mxu0 0.0
  %102 = vmatprep.subr.mxu0 0.0
  %103 = vmatpush2.msra.mxu0 0.0
  %104 = vmatprep.subr.mxu0 0.0
  %105 = vmatpush2.msra.mxu0 0.0
  %106 = vmatprep.subr.mxu0 0.0
  %107 = vmatpush2.msra.mxu0 0.0
  %108 = vmatprep.mubr.f32.mxu0 0.0
  %109 = vmatmul.mubr.f32.gmra.mxu0 %v39
  %v110 = vpop.f32.mrf.mxu0
  %v111 = vadd.f32 %v35, %v110
  %v112 = vpop.f32.mrf.mxu0
  %113 = vmatprep.mubr.f32.mxu0 0.0
  %114 = vmatmul.mubr.f32.gmra.mxu0 %v42
  %v115 = vpop.f32.mrf.mxu0
  %v116 = vadd.f32 %v35, %v115
  %v117 = vpop.f32.mrf.mxu0
  %118 = vdwg.mxu0
  %v119 = vmul.f32 %v111, 0.5
  %v120 = vmul.f32 %v116, 0.5
  %v121 = vmul.f32 %v111, 0.044715
  %v122 = vmul.f32 %v116, 0.044715
  %v123 = vmul.f32 %v121, %v111
  %v124 = vmul.f32 %v122, %v116
  %v125 = vmul.f32 %v123, %v111
  %v126 = vmul.f32 %v124, %v116
  %v127 = vadd.f32 %v111, %v125
  %v128 = vadd.f32 %v116, %v126
  %v129 = vmul.f32 %v127, 0.7978846
  %v130 = vmul.f32 %v128, 0.7978846
  %v131 = vtanh.pop %v129
  %v132 = vtanh.pop %v130
  %v133 = vadd.f32 %v131, 1.0
  %v134 = vadd.f32 %v132, 1.0
  %v135 = vmul.f32 %v119, %v133
  %v136 = vmul.f32 %v120, %v134
  %v137 = vld [vmem:[%s3] sm:$0xff]
  %v138 = vld [vmem:[%s3 + $0x8] sm:$0xff]
  %v139 = vld [vmem:[%s3 + $0x10] sm:$0xff]
  %v140 = vld [vmem:[%s3 + $0x18] sm:$0xff]
  %v141 = vld [vmem:[%s3 + $0x20] sm:$0xff]
  %v142 = vld [vmem:[%s3 + $0x28] sm:$0xff]
  %v143 = vld [vmem:[%s3 + $0x30] sm:$0xff]
  %v144 = vld [vmem:[%s3 + $0x38] sm:$0xff]
  %v145 = vld [vmem:[%s3 + $0x40] sm:$0xff]
  %v146 = vld [vmem:[%s3 + $0x48] sm:$0xff]
  %v147 = vld [vmem:[%s3 + $0x50] sm:$0xff]
  %v148 = vld [vmem:[%s3 + $0x58] sm:$0xff]
  %v149 = vld [vmem:[%s3 + $0x60] sm:$0xff]
  %v150 = vld [vmem:[%s3 + $0x68] sm:$0xff]
  %v151 = vld [vmem:[%s3 + $0x70] sm:$0xff]
  %v152 = vld [vmem:[%s3 + $0x78] sm:$0xff]
  %v153 = vld [vmem:[%s4] sm:$0x1]
  %v155 = vlaneseq
  %v156 = vshrl.u32 %v155, 7
  %v157 = vsub.s32 0, %v156
  %v158 = vrot.slane %v153, %v157
  %160 = vmatprep.subr.mxu0 0.0
  %161 = vmatpush1.msra.mxu0 %v152
  %162 = vmatprep.subr.mxu0 0.0
  %163 = vmatpush1.msra.mxu0 %v151
  %164 = vmatprep.subr.mxu0 0.0
  %165 = vmatpush1.msra.mxu0 %v150
  %166 = vmatprep.subr.mxu0 0.0
  %167 = vmatpush1.msra.mxu0 %v149
  %168 = vmatprep.subr.mxu0 0.0
  %169 = vmatpush1.msra.mxu0 %v148
  %170 = vmatprep.subr.mxu0 0.0
  %171 = vmatpush1.msra.mxu0 %v147
  %172 = vmatprep.subr.mxu0 0.0
  %173 = vmatpush1.msra.mxu0 %v146
  %174 = vmatprep.subr.mxu0 0.0
  %175 = vmatpush1.msra.mxu0 %v145
  %176 = vmatprep.subr.mxu0 0.0
  %177 = vmatpush1.msra.mxu0 %v144
  %178 = vmatprep.subr.mxu0 0.0
  %179 = vmatpush1.msra.mxu0 %v143
  %180 = vmatprep.subr.mxu0 0.0
  %181 = vmatpush1.msra.mxu0 %v142
  %182 = vmatprep.subr.mxu0 0.0
  %183 = vmatpush1.msra.mxu0 %v141
  %184 = vmatprep.subr.mxu0 0.0
  %185 = vmatpush1.msra.mxu0 %v140
  %186 = vmatprep.subr.mxu0 0.0
  %187 = vmatpush1.msra.mxu0 %v139
  %188 = vmatprep.subr.mxu0 0.0
  %189 = vmatpush1.msra.mxu0 %v138
  %190 = vmatprep.subr.mxu0 0.0
  %191 = vmatpush1.msra.mxu0 %v137
  %192 = vmatprep.subr.mxu0 0.0
  %193 = vmatpush2.msra.mxu0 0.0
  %194 = vmatprep.subr.mxu0 0.0
  %195 = vmatpush2.msra.mxu0 0.0
  %196 = vmatprep.subr.mxu0 0.0
  %197 = vmatpush2.msra.mxu0 0.0
  %198 = vmatprep.subr.mxu0 0.0
  %199 = vmatpush2.msra.mxu0 0.0
  %200 = vmatprep.subr.mxu0 0.0
  %201 = vmatpush2.msra.mxu0 0.0
  %202 = vmatprep.subr.mxu0 0.0
  %203 = vmatpush2.msra.mxu0 0.0
  %204 = vmatprep.subr.mxu0 0.0
  %205 = vmatpush2.msra.mxu0 0.0
  %206 = vmatprep.subr.mxu0 0.0
  %207 = vmatpush2.msra.mxu0 0.0
  %208 = vmatprep.subr.mxu0 0.0
  %209 = vmatpush2.msra.mxu0 0.0
  %210 = vmatprep.subr.mxu0 0.0
  %211 = vmatpush2.msra.mxu0 0.0
  %212 = vmatprep.subr.mxu0 0.0
  %213 = vmatpush2.msra.mxu0 0.0
  %214 = vmatprep.subr.mxu0 0.0
  %215 = vmatpush2.msra.mxu0 0.0
  %216 = vmatprep.subr.mxu0 0.0
  %217 = vmatpush2.msra.mxu0 0.0
  %218 = vmatprep.subr.mxu0 0.0
  %219 = vmatpush2.msra.mxu0 0.0
  %220 = vmatprep.subr.mxu0 0.0
  %221 = vmatpush2.msra.mxu0 0.0
  %222 = vmatprep.subr.mxu0 0.0
  %223 = vmatpush2.msra.mxu0 0.0
  %224 = vmatprep.mubr.f32.mxu0 0.0
  %225 = vmatmul.mubr.f32.gmra.mxu0 %v135
  %v226 = vpop.f32.mrf.mxu0
  %v227 = vadd.f32 %v158, %v226
  %v228 = vpop.f32.mrf.mxu0
  %229 = vmatprep.mubr.f32.mxu0 0.0
  %230 = vmatmul.mubr.f32.gmra.mxu0 %v136
  %v231 = vpop.f32.mrf.mxu0
  %v232 = vadd.f32 %v158, %v231
  %v233 = vpop.f32.mrf.mxu0
  %234 = vdwg.mxu0
  %235 = vst [vmem:[%s5] sm:$0xff] %v227
  %236 = vst [vmem:[%s5 + $0x8] sm:$0xff] %v232
  // Predicated region
  $region22: #{speech_model_forward.29} parent=0 // pred_check
    _
  $region23: #{speech_model_forward.29} parent=0 // pred_check_branch
    %238 = sbr.rel (0) target = $region25
  $region24: #{speech_model_forward.29} parent=0 // pred_region
    _
  $region25: #{speech_model_forward.29} parent=0 // pred_fallthru
    _
  // Predicated region
  $region26: #{speech_model_forward.29} parent=0 // pred_check
    _
  $region27: #{speech_model_forward.29} parent=0 // pred_check_branch
    %240 = sbr.rel (0) target = $region29
  $region28: #{speech_model_forward.29} parent=0 // pred_region
    _
  $region29: #{speech_model_forward.29} parent=0 // pred_fallthru
    _

</llo_original>
